<compile_context>
chip_gen: v5e
topology: v5e:2x2
jax: 0.10.0
libtpu: 0.0.40
codegen_flags: <defaults>
</compile_context>

<pallas_src>
import functools

import jax
import jax.numpy as jnp
from jax import lax
from jax.experimental import pallas as pl
from jax.experimental.pallas import tpu as pltpu

EPS = 1e-5                 # nn.BatchNorm2d default eps
LANES = 128                # padded output-channel count (lane-dense stores / MXU N dim)
MXU_DTYPE = jnp.bfloat16   # MXU operand dtype (f32 accumulation everywhere)


# ------------------------------ fused block kernel ------------------------------ #

def _make_block_kernel(*, s, B, Ho, Wo, Cin, Cp, has_downsample):
    """out = conv2(relu(bn2(conv1(relu(bn1(x)))))) + residual, one batch block per grid step."""
    P = s * s
    M = B * Ho * Wo

    def kernel(x_ref, s1_ref, b1_ref, w1_ref, s2_ref, b2_ref, w2_ref, *rest):
        if has_downsample:
            wds_ref, o_ref, pad1, col1, pad2, col2 = rest
        else:
            o_ref, pad1, col1, pad2, col2 = rest

        # ---- zero only the halo rings (interiors are fully overwritten below);
        #      redone every step so it stays correct under "parallel" (megacore) splits. ----
        zr1 = jnp.zeros((P, B, 1, Wo + 2, Cin), MXU_DTYPE)
        pad1[:, :, pl.ds(0, 1), :, :] = zr1
        pad1[:, :, pl.ds(Ho + 1, 1), :, :] = zr1
        zc1 = jnp.zeros((P, B, Ho + 2, 1, Cin), MXU_DTYPE)
        pad1[:, :, :, pl.ds(0, 1), :] = zc1
        pad1[:, :, :, pl.ds(Wo + 1, 1), :] = zc1
        zr2 = jnp.zeros((B, 1, Wo + 2, Cp), MXU_DTYPE)
        pad2[:, pl.ds(0, 1), :, :] = zr2
        pad2[:, pl.ds(Ho + 1, 1), :, :] = zr2
        zc2 = jnp.zeros((B, Ho + 2, 1, Cp), MXU_DTYPE)
        pad2[:, :, pl.ds(0, 1), :] = zc2
        pad2[:, :, pl.ds(Wo + 1, 1), :] = zc2

        # ---- BN1 + ReLU prologue (f32 math), stored bf16 into pad1 interior ----
        a1 = jnp.maximum(x_ref[...] * s1_ref[...] + b1_ref[...], 0.0)
        pad1[:, :, pl.ds(1, Ho), pl.ds(1, Wo), :] = a1.astype(MXU_DTYPE)

        # ---- conv1 (stride s): im2col LHS (M, 9*Cin) in VMEM, ONE matmul with K = 9*Cin ----
        for kh in range(3):
            dh = (kh - 1) % s
            rh = 1 + (kh - 1 - dh) // s
            for kw in range(3):
                dw = (kw - 1) % s
                rw = 1 + (kw - 1 - dw) // s
                t = kh * 3 + kw
                win = pad1[dh * s + dw, :, pl.ds(rh, Ho), pl.ds(rw, Wo), :]   # (B, Ho, Wo, Cin)
                col1[:, pl.ds(t * Cin, Cin)] = win.reshape(M, Cin)
        h1 = jnp.dot(col1[...], w1_ref[...], preferred_element_type=jnp.float32)   # (M, Cp) f32

        # ---- BN2 + ReLU on the f32 conv1 result (intermediate never leaves VMEM) ----
        a2 = jnp.maximum(h1 * s2_ref[...] + b2_ref[...], 0.0).astype(MXU_DTYPE)
        pad2[:, pl.ds(1, Ho), pl.ds(1, Wo), :] = a2.reshape(B, Ho, Wo, Cp)

        # ---- conv2 (stride 1): 128-lane-aligned im2col copies, ONE matmul with K = 9*Cp ----
        for kh in range(3):
            for kw in range(3):
                t = kh * 3 + kw
                win = pad2[:, pl.ds(kh, Ho), pl.ds(kw, Wo), :]                # (B, Ho, Wo, Cp)
                col2[:, pl.ds(t * Cp, Cp)] = win.reshape(M, Cp)
        acc = jnp.dot(col2[...], w2_ref[...], preferred_element_type=jnp.float32)   # (M, Cp) f32

        # ---- fused residual: phase 0 of the space-to-depth input == x[:, ::s, ::s, :] ----
        r = x_ref[0, :, :, :, :].reshape(M, Cin)
        if has_downsample:
            acc = acc + jnp.dot(r.astype(MXU_DTYPE), wds_ref[...],
                                preferred_element_type=jnp.float32)
        else:
            if Cin < Cp:
                r = jnp.concatenate([r, jnp.zeros((M, Cp - Cin), r.dtype)], axis=-1)
            acc = acc + r      # identity shortcut: plain f32 VPU add, no MXU pass

        o_ref[...] = acc.reshape(B, Ho, Wo, Cp).astype(o_ref.dtype)

    return kernel


# ------------------------------ parameter prep ------------------------------ #

def _bn_fold(gamma, beta, mean, var):
    scale = gamma / jnp.sqrt(var + EPS)
    return scale, beta - mean * scale


# ------------------------------ block forward ------------------------------ #

def preact_basic_block_forward(x_nchw, params, stride, inplanes, planes):
    """PreActBasicBlock: bn1 -> relu -> conv1(stride) -> bn2 -> relu -> conv2, + downsample(x)."""
    assert inplanes <= LANES and planes <= LANES
    x = jnp.transpose(x_nchw, (0, 2, 3, 1)).astype(jnp.float32)      # NHWC
    N, H, W, C = x.shape
    assert C == inplanes and H % stride == 0 and W % stride == 0
    s = stride
    P = s * s
    Ho, Wo = H // s, W // s
    Cp = LANES
    has_downsample = inplanes != planes
    if not has_downsample:
        # nn.Identity shortcut only shape-checks in torch when stride == 1.
        assert s == 1, "identity shortcut requires stride == 1"

    # ---- batch block size: target ~512 matmul rows / step, divisor of N, VMEM-bounded ----
    # TODO(synk): for 32x32 stages (Ho*Wo = 1024) the single-shot conv2 matmul keeps a 512 KiB
    #             f32 accumulator live; chunking that dot over ho-bands would bound vreg pressure.
    hw = Ho * Wo
    B = 1 if hw > 512 else max(1, min(N, 512 // hw))
    while N % B:
        B -= 1

    def step_vmem_bytes(b):
        return (2 * P * b * hw * C * 4                          # x block (double-buffered)
                + 2 * b * hw * Cp * 4                           # out block (double-buffered)
                + P * b * (Ho + 2) * (Wo + 2) * C * 2           # pad1 scratch (bf16)
                + b * hw * 9 * C * 2                            # col1 scratch (bf16)
                + b * (Ho + 2) * (Wo + 2) * Cp * 2              # pad2 scratch (bf16)
                + b * hw * 9 * Cp * 2                           # col2 scratch (bf16)
                + 2 * (9 * C * Cp + 9 * Cp * Cp + C * Cp) * 2   # resident weights (bf16)
                + 2 * 2 * (C + Cp) * 4)                         # folded BN vectors (f32)

    VMEM_BUDGET = 40 * 2**20            # headroom for v7x's 64 MiB VMEM
    while B > 1 and step_vmem_bytes(B) > VMEM_BUDGET:
        B -= 1
        while N % B:
            B -= 1

    # ---- folded (inference-mode) BatchNorm parameters ----
    s1, b1 = _bn_fold(params["bn1_g"], params["bn1_b"], params["bn1_m"], params["bn1_v"])
    s2, b2 = _bn_fold(params["bn2_g"], params["bn2_b"], params["bn2_m"], params["bn2_v"])
    s2p = jnp.pad(s2, (0, Cp - planes))
    b2p = jnp.pad(b2, (0, Cp - planes))

    # conv1 weight -> (9*Cin, Cp); row index = (kh*3 + kw)*Cin + cin
    w1 = jnp.transpose(params["conv1_w"], (2, 3, 1, 0)).reshape(9 * inplanes, planes)
    w1 = jnp.pad(w1, ((0, 0), (0, Cp - planes))).astype(MXU_DTYPE)
    # conv2 weight -> (9*Cp, Cp); input channels zero-padded to Cp before flattening
    w2 = jnp.transpose(params["conv2_w"], (2, 3, 1, 0))               # (3, 3, planes, planes)
    w2 = jnp.pad(w2, ((0, 0), (0, 0), (0, Cp - planes), (0, Cp - planes)))
    w2 = w2.reshape(9 * Cp, Cp).astype(MXU_DTYPE)

    # space-to-depth phase split: xps[ph*s+pw, n, ho, wo, c] = x[n, ho*s+ph, wo*s+pw, c]
    # (free reshape for stride == 1; phase 0 doubles as the residual operand)
    # TODO(synk): for stride 2 this is one extra XLA pass over x; could be fused via
    #             allow_input_fusion if it ever shows up in profiles.
    xps = (x.reshape(N, Ho, s, Wo, s, C)
            .transpose(2, 4, 0, 1, 3, 5)
            .reshape(P, N, Ho, Wo, C))

    in_specs = [
        pl.BlockSpec((P, B, Ho, Wo, C), lambda n: (0, n, 0, 0, 0)),   # activations (B images)
        pl.BlockSpec((1, C), lambda n: (0, 0)),                       # bn1 scale   (resident)
        pl.BlockSpec((1, C), lambda n: (0, 0)),                       # bn1 bias    (resident)
        pl.BlockSpec((9 * C, Cp), lambda n: (0, 0)),                  # conv1 weight(resident)
        pl.BlockSpec((1, Cp), lambda n: (0, 0)),                      # bn2 scale   (resident)
        pl.BlockSpec((1, Cp), lambda n: (0, 0)),                      # bn2 bias    (resident)
        pl.BlockSpec((9 * Cp, Cp), lambda n: (0, 0)),                 # conv2 weight(resident)
    ]
    args = [xps, s1.reshape(1, C), b1.reshape(1, C), w1,
            s2p.reshape(1, Cp), b2p.reshape(1, Cp), w2]
    if has_downsample:
        wds = jnp.transpose(params["ds_w"][:, :, 0, 0], (1, 0))       # (Cin, planes)
        wds = jnp.pad(wds, ((0, 0), (0, Cp - planes))).astype(MXU_DTYPE)
        in_specs.append(pl.BlockSpec((C, Cp), lambda n: (0, 0)))      # 1x1 downsample weight
        args.append(wds)

    kernel = _make_block_kernel(s=s, B=B, Ho=Ho, Wo=Wo, Cin=C, Cp=Cp,
                                has_downsample=has_downsample)

    flops = 2 * N * hw * (9 * C * Cp + 9 * Cp * Cp)
    bytes_accessed = xps.size * 4 + N * hw * Cp * 4 + (w1.size + w2.size) * 2
    if has_downsample:
        flops += 2 * N * hw * C * Cp
        bytes_accessed += wds.size * 2

    out = pl.pallas_call(
        kernel,
        grid=(N // B,),
        in_specs=in_specs,
        out_specs=pl.BlockSpec((B, Ho, Wo, Cp), lambda n: (n, 0, 0, 0)),
        out_shape=jax.ShapeDtypeStruct((N, Ho, Wo, Cp), jnp.float32),
        scratch_shapes=[
            pltpu.VMEM((P, B, Ho + 2, Wo + 2, C), MXU_DTYPE),   # pad1: relu(bn1(x)), zero ring
            pltpu.VMEM((B * hw, 9 * C), MXU_DTYPE),             # col1: conv1 im2col LHS
            pltpu.VMEM((B, Ho + 2, Wo + 2, Cp), MXU_DTYPE),     # pad2: relu(bn2(out1)), zero ring
            pltpu.VMEM((B * hw, 9 * Cp), MXU_DTYPE),            # col2: conv2 im2col LHS
        ],
        compiler_params=pltpu.CompilerParams(
            dimension_semantics=("parallel",),
            vmem_limit_bytes=int(min(100 * 2**20, max(32 * 2**20, 2 * step_vmem_bytes(B)))),
        ),
        cost_estimate=pl.CostEstimate(flops=int(flops), transcendentals=0,
                                      bytes_accessed=int(bytes_accessed)),
    )(*args)

    out = out[..., :planes]                                           # drop lane padding
    return jnp.transpose(out, (0, 3, 1, 2))                           # back to NCHW


# ------------------------------ pure-JAX reference ------------------------------ #

def ref_forward(x, params, stride, inplanes, planes):
    dn = ("NCHW", "OIHW", "NCHW")

    def bn(t, g, b, m, v):
        g, b, m, v = (a[None, :, None, None] for a in (g, b, m, v))
        return (t - m) / jnp.sqrt(v + EPS) * g + b

    if inplanes != planes:
        residual = lax.conv_general_dilated(x, params["ds_w"], (stride, stride),
                                            "VALID", dimension_numbers=dn)
    else:
        residual = x
    out = jnp.maximum(bn(x, params["bn1_g"], params["bn1_b"],
                         params["bn1_m"], params["bn1_v"]), 0.0)
    out = lax.conv_general_dilated(out, params["conv1_w"], (stride, stride),
                                   ((1, 1), (1, 1)), dimension_numbers=dn)
    out = jnp.maximum(bn(out, params["bn2_g"], params["bn2_b"],
                         params["bn2_m"], params["bn2_v"]), 0.0)
    out = lax.conv_general_dilated(out, params["conv2_w"], (1, 1),
                                   ((1, 1), (1, 1)), dimension_numbers=dn)
    return out + residual


# ------------------------------------ main ------------------------------------ #

if __name__ == "__main__":
    inplanes, planes, stride = 4, 8, 2
    N, H, W = 2, 16, 16

    key = jax.random.PRNGKey(0)
    ks = jax.random.split(key, 13)
    params = {
        "conv1_w": 0.1 * jax.random.normal(ks[0], (planes, inplanes, 3, 3), jnp.float32),
        "conv2_w": 0.1 * jax.random.normal(ks[1], (planes, planes, 3, 3), jnp.float32),
        "ds_w":    0.1 * jax.random.normal(ks[2], (planes, inplanes, 1, 1), jnp.float32),
        "bn1_g": 1.0 + 0.1 * jax.random.normal(ks[3], (inplanes,), jnp.float32),
        "bn1_b": 0.1 * jax.random.normal(ks[4], (inplanes,), jnp.float32),
        "bn1_m": 0.1 * jax.random.normal(ks[5], (inplanes,), jnp.float32),
        "bn1_v": 0.5 + jax.random.uniform(ks[6], (inplanes,), jnp.float32),
        "bn2_g": 1.0 + 0.1 * jax.random.normal(ks[7], (planes,), jnp.float32),
        "bn2_b": 0.1 * jax.random.normal(ks[8], (planes,), jnp.float32),
        "bn2_m": 0.1 * jax.random.normal(ks[9], (planes,), jnp.float32),
        "bn2_v": 0.5 + jax.random.uniform(ks[10], (planes,), jnp.float32),
    }
    x = jax.random.normal(ks[11], (N, inplanes, H, W), jnp.float32)

    fwd = jax.jit(functools.partial(preact_basic_block_forward,
                                    stride=stride, inplanes=inplanes, planes=planes))
    out = jax.block_until_ready(fwd(x, params))

    ref = ref_forward(x, params, stride, inplanes, planes)
    assert out.shape == (N, planes, H // stride, W // stride), out.shape
    max_err = float(jnp.max(jnp.abs(out - ref)))
    # bf16 MXU operands (f32 accumulation) -> slightly looser tolerance than pure f32
    assert jnp.allclose(out, ref, atol=2e-2, rtol=2e-2), max_err

    print("KERNEL_OK")
</pallas_src>

<mosaic_0001>
module attributes {stable_mosaic.version = 11 : i64} {
  func.func @kernel(%arg0: i32, %arg1: memref<4x2x8x8x4xf32, #tpu.memory_space<vmem>>, %arg2: memref<1x4xf32, #tpu.memory_space<vmem>>, %arg3: memref<1x4xf32, #tpu.memory_space<vmem>>, %arg4: memref<36x128xbf16, #tpu.memory_space<vmem>>, %arg5: memref<1x128xf32, #tpu.memory_space<vmem>>, %arg6: memref<1x128xf32, #tpu.memory_space<vmem>>, %arg7: memref<1152x128xbf16, #tpu.memory_space<vmem>>, %arg8: memref<4x128xbf16, #tpu.memory_space<vmem>>, %arg9: memref<2x8x8x128xf32, #tpu.memory_space<vmem>>, %arg10: memref<4x2x10x10x4xbf16, #tpu.memory_space<vmem>>, %arg11: memref<128x36xbf16, #tpu.memory_space<vmem>>, %arg12: memref<2x10x10x128xbf16, #tpu.memory_space<vmem>>, %arg13: memref<128x1152xbf16, #tpu.memory_space<vmem>>) attributes {dimension_semantics = [#tpu.dimension_semantics<parallel>], iteration_bounds = array<i64: 1>, scalar_prefetch = 0 : i64, scratch_operands = 4 : i64, tpu.core_type = #tpu.core_type<tc>, window_params = [{transform_indices = @transform_0, window_bounds = array<i64: 4, 2, 8, 8, 4>}, {pipeline_mode = #tpu.pipeline_mode<synchronous>, transform_indices = @transform_1, window_bounds = array<i64: 1, 4>}, {pipeline_mode = #tpu.pipeline_mode<synchronous>, transform_indices = @transform_2, window_bounds = array<i64: 1, 4>}, {pipeline_mode = #tpu.pipeline_mode<synchronous>, transform_indices = @transform_3, window_bounds = array<i64: 36, 128>}, {pipeline_mode = #tpu.pipeline_mode<synchronous>, transform_indices = @transform_4, window_bounds = array<i64: 1, 128>}, {pipeline_mode = #tpu.pipeline_mode<synchronous>, transform_indices = @transform_5, window_bounds = array<i64: 1, 128>}, {pipeline_mode = #tpu.pipeline_mode<synchronous>, transform_indices = @transform_6, window_bounds = array<i64: 1152, 128>}, {pipeline_mode = #tpu.pipeline_mode<synchronous>, transform_indices = @transform_7, window_bounds = array<i64: 4, 128>}, {transform_indices = @transform_8, window_bounds = array<i64: 2, 8, 8, 128>}]} {
    %cst = arith.constant 0.000000e+00 : bf16
    %0 = vector.broadcast %cst : bf16 to vector<4x2x1x10x4xbf16>
    %c0 = arith.constant 0 : index
    %c0_0 = arith.constant 0 : index
    %c0_1 = arith.constant 0 : index
    %c0_2 = arith.constant 0 : index
    %c0_3 = arith.constant 0 : index
    %1 = vector.load %arg10[%c0, %c0_0, %c0_1, %c0_2, %c0_3] : memref<4x2x10x10x4xbf16, #tpu.memory_space<vmem>>, vector<4x2x1x10x4xbf16>
    tpu.vector_store %arg10[%c0, %c0_0, %c0_1, %c0_2, %c0_3], %0 {strides = array<i32>} : memref<4x2x10x10x4xbf16, #tpu.memory_space<vmem>>, vector<4x2x1x10x4xbf16>,
    %c0_4 = arith.constant 0 : index
    %c0_5 = arith.constant 0 : index
    %c9 = arith.constant 9 : index
    %c0_6 = arith.constant 0 : index
    %c0_7 = arith.constant 0 : index
    %2 = vector.load %arg10[%c0_4, %c0_5, %c9, %c0_6, %c0_7] : memref<4x2x10x10x4xbf16, #tpu.memory_space<vmem>>, vector<4x2x1x10x4xbf16>
    tpu.vector_store %arg10[%c0_4, %c0_5, %c9, %c0_6, %c0_7], %0 {strides = array<i32>} : memref<4x2x10x10x4xbf16, #tpu.memory_space<vmem>>, vector<4x2x1x10x4xbf16>,
    %cst_8 = arith.constant 0.000000e+00 : bf16
    %3 = vector.broadcast %cst_8 : bf16 to vector<4x2x10x1x4xbf16>
    %c0_9 = arith.constant 0 : index
    %c0_10 = arith.constant 0 : index
    %c0_11 = arith.constant 0 : index
    %c0_12 = arith.constant 0 : index
    %c0_13 = arith.constant 0 : index
    %4 = vector.load %arg10[%c0_9, %c0_10, %c0_11, %c0_12, %c0_13] : memref<4x2x10x10x4xbf16, #tpu.memory_space<vmem>>, vector<4x2x10x1x4xbf16>
    tpu.vector_store %arg10[%c0_9, %c0_10, %c0_11, %c0_12, %c0_13], %3 {strides = array<i32>} : memref<4x2x10x10x4xbf16, #tpu.memory_space<vmem>>, vector<4x2x10x1x4xbf16>,
    %c0_14 = arith.constant 0 : index
    %c0_15 = arith.constant 0 : index
    %c0_16 = arith.constant 0 : index
    %c9_17 = arith.constant 9 : index
    %c0_18 = arith.constant 0 : index
    %5 = vector.load %arg10[%c0_14, %c0_15, %c0_16, %c9_17, %c0_18] : memref<4x2x10x10x4xbf16, #tpu.memory_space<vmem>>, vector<4x2x10x1x4xbf16>
    tpu.vector_store %arg10[%c0_14, %c0_15, %c0_16, %c9_17, %c0_18], %3 {strides = array<i32>} : memref<4x2x10x10x4xbf16, #tpu.memory_space<vmem>>, vector<4x2x10x1x4xbf16>,
    %cst_19 = arith.constant 0.000000e+00 : bf16
    %6 = vector.broadcast %cst_19 : bf16 to vector<2x1x10x128xbf16>
    %c0_20 = arith.constant 0 : index
    %c0_21 = arith.constant 0 : index
    %c0_22 = arith.constant 0 : index
    %c0_23 = arith.constant 0 : index
    %7 = vector.load %arg12[%c0_20, %c0_21, %c0_22, %c0_23] : memref<2x10x10x128xbf16, #tpu.memory_space<vmem>>, vector<2x1x10x128xbf16>
    tpu.vector_store %arg12[%c0_20, %c0_21, %c0_22, %c0_23], %6 {strides = array<i32>} : memref<2x10x10x128xbf16, #tpu.memory_space<vmem>>, vector<2x1x10x128xbf16>,
    %c0_24 = arith.constant 0 : index
    %c9_25 = arith.constant 9 : index
    %c0_26 = arith.constant 0 : index
    %c0_27 = arith.constant 0 : index
    %8 = vector.load %arg12[%c0_24, %c9_25, %c0_26, %c0_27] : memref<2x10x10x128xbf16, #tpu.memory_space<vmem>>, vector<2x1x10x128xbf16>
    tpu.vector_store %arg12[%c0_24, %c9_25, %c0_26, %c0_27], %6 {strides = array<i32>} : memref<2x10x10x128xbf16, #tpu.memory_space<vmem>>, vector<2x1x10x128xbf16>,
    %cst_28 = arith.constant 0.000000e+00 : bf16
    %9 = vector.broadcast %cst_28 : bf16 to vector<2x10x1x128xbf16>
    %c0_29 = arith.constant 0 : index
    %c0_30 = arith.constant 0 : index
    %c0_31 = arith.constant 0 : index
    %c0_32 = arith.constant 0 : index
    %10 = vector.load %arg12[%c0_29, %c0_30, %c0_31, %c0_32] : memref<2x10x10x128xbf16, #tpu.memory_space<vmem>>, vector<2x10x1x128xbf16>
    tpu.vector_store %arg12[%c0_29, %c0_30, %c0_31, %c0_32], %9 {strides = array<i32>} : memref<2x10x10x128xbf16, #tpu.memory_space<vmem>>, vector<2x10x1x128xbf16>,
    %c0_33 = arith.constant 0 : index
    %c0_34 = arith.constant 0 : index
    %c9_35 = arith.constant 9 : index
    %c0_36 = arith.constant 0 : index
    %11 = vector.load %arg12[%c0_33, %c0_34, %c9_35, %c0_36] : memref<2x10x10x128xbf16, #tpu.memory_space<vmem>>, vector<2x10x1x128xbf16>
    tpu.vector_store %arg12[%c0_33, %c0_34, %c9_35, %c0_36], %9 {strides = array<i32>} : memref<2x10x10x128xbf16, #tpu.memory_space<vmem>>, vector<2x10x1x128xbf16>,
    %c0_37 = arith.constant 0 : index
    %c0_38 = arith.constant 0 : index
    %c0_39 = arith.constant 0 : index
    %c0_40 = arith.constant 0 : index
    %c0_41 = arith.constant 0 : index
    %12 = vector.load %arg1[%c0_37, %c0_38, %c0_39, %c0_40, %c0_41] : memref<4x2x8x8x4xf32, #tpu.memory_space<vmem>>, vector<4x2x8x8x4xf32>
    %c0_42 = arith.constant 0 : index
    %c0_43 = arith.constant 0 : index
    %13 = vector.load %arg2[%c0_42, %c0_43] : memref<1x4xf32, #tpu.memory_space<vmem>>, vector<1x4xf32>
    %14 = vector.shape_cast %13 : vector<1x4xf32> to vector<1x1x1x1x4xf32>
    %15 = vector.broadcast %14 : vector<1x1x1x1x4xf32> to vector<4x2x8x8x4xf32>
    %16 = arith.mulf %12, %15 : vector<4x2x8x8x4xf32>
    %c0_44 = arith.constant 0 : index
    %c0_45 = arith.constant 0 : index
    %17 = vector.load %arg3[%c0_44, %c0_45] : memref<1x4xf32, #tpu.memory_space<vmem>>, vector<1x4xf32>
    %18 = vector.shape_cast %17 : vector<1x4xf32> to vector<1x1x1x1x4xf32>
    %19 = vector.broadcast %18 : vector<1x1x1x1x4xf32> to vector<4x2x8x8x4xf32>
    %20 = arith.addf %16, %19 : vector<4x2x8x8x4xf32>
    %cst_46 = arith.constant 0.000000e+00 : f32
    %21 = vector.broadcast %cst_46 : f32 to vector<4x2x8x8x4xf32>
    %22 = arith.maximumf %20, %21 : vector<4x2x8x8x4xf32>
    %23 = arith.truncf %22 : vector<4x2x8x8x4xf32> to vector<4x2x8x8x4xbf16>
    %c0_47 = arith.constant 0 : index
    %c0_48 = arith.constant 0 : index
    %c1 = arith.constant 1 : index
    %c1_49 = arith.constant 1 : index
    %c0_50 = arith.constant 0 : index
    %24 = vector.load %arg10[%c0_47, %c0_48, %c1, %c1_49, %c0_50] : memref<4x2x10x10x4xbf16, #tpu.memory_space<vmem>>, vector<4x2x8x8x4xbf16>
    tpu.vector_store %arg10[%c0_47, %c0_48, %c1, %c1_49, %c0_50], %23 {strides = array<i32>} : memref<4x2x10x10x4xbf16, #tpu.memory_space<vmem>>, vector<4x2x8x8x4xbf16>,
    %c3 = arith.constant 3 : index
    %c0_51 = arith.constant 0 : index
    %c0_52 = arith.constant 0 : index
    %c0_53 = arith.constant 0 : index
    %c0_54 = arith.constant 0 : index
    %25 = vector.load %arg10[%c3, %c0_51, %c0_52, %c0_53, %c0_54] : memref<4x2x10x10x4xbf16, #tpu.memory_space<vmem>>, vector<1x2x8x8x4xbf16>
    %26 = vector.shape_cast %25 : vector<1x2x8x8x4xbf16> to vector<2x8x8x4xbf16>
    %27 = vector.shape_cast %26 : vector<2x8x8x4xbf16> to vector<128x4xbf16>
    %c0_55 = arith.constant 0 : index
    %c0_56 = arith.constant 0 : index
    %28 = vector.load %arg11[%c0_55, %c0_56] : memref<128x36xbf16, #tpu.memory_space<vmem>>, vector<128x4xbf16>
    tpu.vector_store %arg11[%c0_55, %c0_56], %27 {strides = array<i32>} : memref<128x36xbf16, #tpu.memory_space<vmem>>, vector<128x4xbf16>,
    %c2 = arith.constant 2 : index
    %c0_57 = arith.constant 0 : index
    %c0_58 = arith.constant 0 : index
    %c1_59 = arith.constant 1 : index
    %c0_60 = arith.constant 0 : index
    %29 = vector.load %arg10[%c2, %c0_57, %c0_58, %c1_59, %c0_60] : memref<4x2x10x10x4xbf16, #tpu.memory_space<vmem>>, vector<1x2x8x8x4xbf16>
    %30 = vector.shape_cast %29 : vector<1x2x8x8x4xbf16> to vector<2x8x8x4xbf16>
    %31 = vector.shape_cast %30 : vector<2x8x8x4xbf16> to vector<128x4xbf16>
    %c0_61 = arith.constant 0 : index
    %c4 = arith.constant 4 : index
    %32 = vector.load %arg11[%c0_61, %c4] : memref<128x36xbf16, #tpu.memory_space<vmem>>, vector<128x4xbf16>
    tpu.vector_store %arg11[%c0_61, %c4], %31 {strides = array<i32>} : memref<128x36xbf16, #tpu.memory_space<vmem>>, vector<128x4xbf16>,
    %c3_62 = arith.constant 3 : index
    %c0_63 = arith.constant 0 : index
    %c0_64 = arith.constant 0 : index
    %c1_65 = arith.constant 1 : index
    %c0_66 = arith.constant 0 : index
    %33 = vector.load %arg10[%c3_62, %c0_63, %c0_64, %c1_65, %c0_66] : memref<4x2x10x10x4xbf16, #tpu.memory_space<vmem>>, vector<1x2x8x8x4xbf16>
    %34 = vector.shape_cast %33 : vector<1x2x8x8x4xbf16> to vector<2x8x8x4xbf16>
    %35 = vector.shape_cast %34 : vector<2x8x8x4xbf16> to vector<128x4xbf16>
    %c0_67 = arith.constant 0 : index
    %c8 = arith.constant 8 : index
    %36 = vector.load %arg11[%c0_67, %c8] : memref<128x36xbf16, #tpu.memory_space<vmem>>, vector<128x4xbf16>
    tpu.vector_store %arg11[%c0_67, %c8], %35 {strides = array<i32>} : memref<128x36xbf16, #tpu.memory_space<vmem>>, vector<128x4xbf16>,
    %c1_68 = arith.constant 1 : index
    %c0_69 = arith.constant 0 : index
    %c1_70 = arith.constant 1 : index
    %c0_71 = arith.constant 0 : index
    %c0_72 = arith.constant 0 : index
    %37 = vector.load %arg10[%c1_68, %c0_69, %c1_70, %c0_71, %c0_72] : memref<4x2x10x10x4xbf16, #tpu.memory_space<vmem>>, vector<1x2x8x8x4xbf16>
    %38 = vector.shape_cast %37 : vector<1x2x8x8x4xbf16> to vector<2x8x8x4xbf16>
    %39 = vector.shape_cast %38 : vector<2x8x8x4xbf16> to vector<128x4xbf16>
    %c0_73 = arith.constant 0 : index
    %c12 = arith.constant 12 : index
    %40 = vector.load %arg11[%c0_73, %c12] : memref<128x36xbf16, #tpu.memory_space<vmem>>, vector<128x4xbf16>
    tpu.vector_store %arg11[%c0_73, %c12], %39 {strides = array<i32>} : memref<128x36xbf16, #tpu.memory_space<vmem>>, vector<128x4xbf16>,
    %c0_74 = arith.constant 0 : index
    %c0_75 = arith.constant 0 : index
    %c1_76 = arith.constant 1 : index
    %c1_77 = arith.constant 1 : index
    %c0_78 = arith.constant 0 : index
    %41 = vector.load %arg10[%c0_74, %c0_75, %c1_76, %c1_77, %c0_78] : memref<4x2x10x10x4xbf16, #tpu.memory_space<vmem>>, vector<1x2x8x8x4xbf16>
    %42 = vector.shape_cast %41 : vector<1x2x8x8x4xbf16> to vector<2x8x8x4xbf16>
    %43 = vector.shape_cast %42 : vector<2x8x8x4xbf16> to vector<128x4xbf16>
    %c0_79 = arith.constant 0 : index
    %c16 = arith.constant 16 : index
    %44 = vector.load %arg11[%c0_79, %c16] : memref<128x36xbf16, #tpu.memory_space<vmem>>, vector<128x4xbf16>
    tpu.vector_store %arg11[%c0_79, %c16], %43 {strides = array<i32>} : memref<128x36xbf16, #tpu.memory_space<vmem>>, vector<128x4xbf16>,
    %c1_80 = arith.constant 1 : index
    %c0_81 = arith.constant 0 : index
    %c1_82 = arith.constant 1 : index
    %c1_83 = arith.constant 1 : index
    %c0_84 = arith.constant 0 : index
    %45 = vector.load %arg10[%c1_80, %c0_81, %c1_82, %c1_83, %c0_84] : memref<4x2x10x10x4xbf16, #tpu.memory_space<vmem>>, vector<1x2x8x8x4xbf16>
    %46 = vector.shape_cast %45 : vector<1x2x8x8x4xbf16> to vector<2x8x8x4xbf16>
    %47 = vector.shape_cast %46 : vector<2x8x8x4xbf16> to vector<128x4xbf16>
    %c0_85 = arith.constant 0 : index
    %c20 = arith.constant 20 : index
    %48 = vector.load %arg11[%c0_85, %c20] : memref<128x36xbf16, #tpu.memory_space<vmem>>, vector<128x4xbf16>
    tpu.vector_store %arg11[%c0_85, %c20], %47 {strides = array<i32>} : memref<128x36xbf16, #tpu.memory_space<vmem>>, vector<128x4xbf16>,
    %c3_86 = arith.constant 3 : index
    %c0_87 = arith.constant 0 : index
    %c1_88 = arith.constant 1 : index
    %c0_89 = arith.constant 0 : index
    %c0_90 = arith.constant 0 : index
    %49 = vector.load %arg10[%c3_86, %c0_87, %c1_88, %c0_89, %c0_90] : memref<4x2x10x10x4xbf16, #tpu.memory_space<vmem>>, vector<1x2x8x8x4xbf16>
    %50 = vector.shape_cast %49 : vector<1x2x8x8x4xbf16> to vector<2x8x8x4xbf16>
    %51 = vector.shape_cast %50 : vector<2x8x8x4xbf16> to vector<128x4xbf16>
    %c0_91 = arith.constant 0 : index
    %c24 = arith.constant 24 : index
    %52 = vector.load %arg11[%c0_91, %c24] : memref<128x36xbf16, #tpu.memory_space<vmem>>, vector<128x4xbf16>
    tpu.vector_store %arg11[%c0_91, %c24], %51 {strides = array<i32>} : memref<128x36xbf16, #tpu.memory_space<vmem>>, vector<128x4xbf16>,
    %c2_92 = arith.constant 2 : index
    %c0_93 = arith.constant 0 : index
    %c1_94 = arith.constant 1 : index
    %c1_95 = arith.constant 1 : index
    %c0_96 = arith.constant 0 : index
    %53 = vector.load %arg10[%c2_92, %c0_93, %c1_94, %c1_95, %c0_96] : memref<4x2x10x10x4xbf16, #tpu.memory_space<vmem>>, vector<1x2x8x8x4xbf16>
    %54 = vector.shape_cast %53 : vector<1x2x8x8x4xbf16> to vector<2x8x8x4xbf16>
    %55 = vector.shape_cast %54 : vector<2x8x8x4xbf16> to vector<128x4xbf16>
    %c0_97 = arith.constant 0 : index
    %c28 = arith.constant 28 : index
    %56 = vector.load %arg11[%c0_97, %c28] : memref<128x36xbf16, #tpu.memory_space<vmem>>, vector<128x4xbf16>
    tpu.vector_store %arg11[%c0_97, %c28], %55 {strides = array<i32>} : memref<128x36xbf16, #tpu.memory_space<vmem>>, vector<128x4xbf16>,
    %c3_98 = arith.constant 3 : index
    %c0_99 = arith.constant 0 : index
    %c1_100 = arith.constant 1 : index
    %c1_101 = arith.constant 1 : index
    %c0_102 = arith.constant 0 : index
    %57 = vector.load %arg10[%c3_98, %c0_99, %c1_100, %c1_101, %c0_102] : memref<4x2x10x10x4xbf16, #tpu.memory_space<vmem>>, vector<1x2x8x8x4xbf16>
    %58 = vector.shape_cast %57 : vector<1x2x8x8x4xbf16> to vector<2x8x8x4xbf16>
    %59 = vector.shape_cast %58 : vector<2x8x8x4xbf16> to vector<128x4xbf16>
    %c0_103 = arith.constant 0 : index
    %c32 = arith.constant 32 : index
    %60 = vector.load %arg11[%c0_103, %c32] : memref<128x36xbf16, #tpu.memory_space<vmem>>, vector<128x4xbf16>
    tpu.vector_store %arg11[%c0_103, %c32], %59 {strides = array<i32>} : memref<128x36xbf16, #tpu.memory_space<vmem>>, vector<128x4xbf16>,
    %c0_104 = arith.constant 0 : index
    %c0_105 = arith.constant 0 : index
    %61 = vector.load %arg11[%c0_104, %c0_105] : memref<128x36xbf16, #tpu.memory_space<vmem>>, vector<128x36xbf16>
    %c0_106 = arith.constant 0 : index
    %c0_107 = arith.constant 0 : index
    %62 = vector.load %arg4[%c0_106, %c0_107] : memref<36x128xbf16, #tpu.memory_space<vmem>>, vector<36x128xbf16>
    %cst_108 = arith.constant dense<0.000000e+00> : vector<128x128xf32>
    %63 = tpu.matmul %61, %62, %cst_108 {dimension_numbers = #tpu.dot_dimension_numbers<[1], [0], [0], [1], [0, 0, 1, 1], [], []>} : vector<128x36xbf16>, vector<36x128xbf16>, vector<128x128xf32> -> vector<128x128xf32>
    %c0_109 = arith.constant 0 : index
    %c0_110 = arith.constant 0 : index
    %64 = vector.load %arg5[%c0_109, %c0_110] : memref<1x128xf32, #tpu.memory_space<vmem>>, vector<1x128xf32>
    %65 = vector.broadcast %64 : vector<1x128xf32> to vector<128x128xf32>
    %66 = arith.mulf %63, %65 : vector<128x128xf32>
    %c0_111 = arith.constant 0 : index
    %c0_112 = arith.constant 0 : index
    %67 = vector.load %arg6[%c0_111, %c0_112] : memref<1x128xf32, #tpu.memory_space<vmem>>, vector<1x128xf32>
    %68 = vector.broadcast %67 : vector<1x128xf32> to vector<128x128xf32>
    %69 = arith.addf %66, %68 : vector<128x128xf32>
    %cst_113 = arith.constant 0.000000e+00 : f32
    %70 = vector.broadcast %cst_113 : f32 to vector<128x128xf32>
    %71 = arith.maximumf %69, %70 : vector<128x128xf32>
    %72 = arith.truncf %71 : vector<128x128xf32> to vector<128x128xbf16>
    %73 = vector.shape_cast %72 : vector<128x128xbf16> to vector<2x8x8x128xbf16>
    %c0_114 = arith.constant 0 : index
    %c1_115 = arith.constant 1 : index
    %c1_116 = arith.constant 1 : index
    %c0_117 = arith.constant 0 : index
    %74 = vector.load %arg12[%c0_114, %c1_115, %c1_116, %c0_117] : memref<2x10x10x128xbf16, #tpu.memory_space<vmem>>, vector<2x8x8x128xbf16>
    tpu.vector_store %arg12[%c0_114, %c1_115, %c1_116, %c0_117], %73 {strides = array<i32>} : memref<2x10x10x128xbf16, #tpu.memory_space<vmem>>, vector<2x8x8x128xbf16>,
    %c0_118 = arith.constant 0 : index
    %c0_119 = arith.constant 0 : index
    %c0_120 = arith.constant 0 : index
    %c0_121 = arith.constant 0 : index
    %75 = vector.load %arg12[%c0_118, %c0_119, %c0_120, %c0_121] : memref<2x10x10x128xbf16, #tpu.memory_space<vmem>>, vector<2x8x8x128xbf16>
    %76 = vector.shape_cast %75 : vector<2x8x8x128xbf16> to vector<128x128xbf16>
    %c0_122 = arith.constant 0 : index
    %c0_123 = arith.constant 0 : index
    %77 = vector.load %arg13[%c0_122, %c0_123] : memref<128x1152xbf16, #tpu.memory_space<vmem>>, vector<128x128xbf16>
    tpu.vector_store %arg13[%c0_122, %c0_123], %76 {strides = array<i32>} : memref<128x1152xbf16, #tpu.memory_space<vmem>>, vector<128x128xbf16>,
    %c0_124 = arith.constant 0 : index
    %c0_125 = arith.constant 0 : index
    %c1_126 = arith.constant 1 : index
    %c0_127 = arith.constant 0 : index
    %78 = vector.load %arg12[%c0_124, %c0_125, %c1_126, %c0_127] : memref<2x10x10x128xbf16, #tpu.memory_space<vmem>>, vector<2x8x8x128xbf16>
    %79 = vector.shape_cast %78 : vector<2x8x8x128xbf16> to vector<128x128xbf16>
    %c0_128 = arith.constant 0 : index
    %c128 = arith.constant 128 : index
    %80 = vector.load %arg13[%c0_128, %c128] : memref<128x1152xbf16, #tpu.memory_space<vmem>>, vector<128x128xbf16>
    tpu.vector_store %arg13[%c0_128, %c128], %79 {strides = array<i32>} : memref<128x1152xbf16, #tpu.memory_space<vmem>>, vector<128x128xbf16>,
    %c0_129 = arith.constant 0 : index
    %c0_130 = arith.constant 0 : index
    %c2_131 = arith.constant 2 : index
    %c0_132 = arith.constant 0 : index
    %81 = vector.load %arg12[%c0_129, %c0_130, %c2_131, %c0_132] : memref<2x10x10x128xbf16, #tpu.memory_space<vmem>>, vector<2x8x8x128xbf16>
    %82 = vector.shape_cast %81 : vector<2x8x8x128xbf16> to vector<128x128xbf16>
    %c0_133 = arith.constant 0 : index
    %c256 = arith.constant 256 : index
    %83 = vector.load %arg13[%c0_133, %c256] : memref<128x1152xbf16, #tpu.memory_space<vmem>>, vector<128x128xbf16>
    tpu.vector_store %arg13[%c0_133, %c256], %82 {strides = array<i32>} : memref<128x1152xbf16, #tpu.memory_space<vmem>>, vector<128x128xbf16>,
    %c0_134 = arith.constant 0 : index
    %c1_135 = arith.constant 1 : index
    %c0_136 = arith.constant 0 : index
    %c0_137 = arith.constant 0 : index
    %84 = vector.load %arg12[%c0_134, %c1_135, %c0_136, %c0_137] : memref<2x10x10x128xbf16, #tpu.memory_space<vmem>>, vector<2x8x8x128xbf16>
    %85 = vector.shape_cast %84 : vector<2x8x8x128xbf16> to vector<128x128xbf16>
    %c0_138 = arith.constant 0 : index
    %c384 = arith.constant 384 : index
    %86 = vector.load %arg13[%c0_138, %c384] : memref<128x1152xbf16, #tpu.memory_space<vmem>>, vector<128x128xbf16>
    tpu.vector_store %arg13[%c0_138, %c384], %85 {strides = array<i32>} : memref<128x1152xbf16, #tpu.memory_space<vmem>>, vector<128x128xbf16>,
    %c0_139 = arith.constant 0 : index
    %c1_140 = arith.constant 1 : index
    %c1_141 = arith.constant 1 : index
    %c0_142 = arith.constant 0 : index
    %87 = vector.load %arg12[%c0_139, %c1_140, %c1_141, %c0_142] : memref<2x10x10x128xbf16, #tpu.memory_space<vmem>>, vector<2x8x8x128xbf16>
    %88 = vector.shape_cast %87 : vector<2x8x8x128xbf16> to vector<128x128xbf16>
    %c0_143 = arith.constant 0 : index
    %c512 = arith.constant 512 : index
    %89 = vector.load %arg13[%c0_143, %c512] : memref<128x1152xbf16, #tpu.memory_space<vmem>>, vector<128x128xbf16>
    tpu.vector_store %arg13[%c0_143, %c512], %88 {strides = array<i32>} : memref<128x1152xbf16, #tpu.memory_space<vmem>>, vector<128x128xbf16>,
    %c0_144 = arith.constant 0 : index
    %c1_145 = arith.constant 1 : index
    %c2_146 = arith.constant 2 : index
    %c0_147 = arith.constant 0 : index
    %90 = vector.load %arg12[%c0_144, %c1_145, %c2_146, %c0_147] : memref<2x10x10x128xbf16, #tpu.memory_space<vmem>>, vector<2x8x8x128xbf16>
    %91 = vector.shape_cast %90 : vector<2x8x8x128xbf16> to vector<128x128xbf16>
    %c0_148 = arith.constant 0 : index
    %c640 = arith.constant 640 : index
    %92 = vector.load %arg13[%c0_148, %c640] : memref<128x1152xbf16, #tpu.memory_space<vmem>>, vector<128x128xbf16>
    tpu.vector_store %arg13[%c0_148, %c640], %91 {strides = array<i32>} : memref<128x1152xbf16, #tpu.memory_space<vmem>>, vector<128x128xbf16>,
    %c0_149 = arith.constant 0 : index
    %c2_150 = arith.constant 2 : index
    %c0_151 = arith.constant 0 : index
    %c0_152 = arith.constant 0 : index
    %93 = vector.load %arg12[%c0_149, %c2_150, %c0_151, %c0_152] : memref<2x10x10x128xbf16, #tpu.memory_space<vmem>>, vector<2x8x8x128xbf16>
    %94 = vector.shape_cast %93 : vector<2x8x8x128xbf16> to vector<128x128xbf16>
    %c0_153 = arith.constant 0 : index
    %c768 = arith.constant 768 : index
    %95 = vector.load %arg13[%c0_153, %c768] : memref<128x1152xbf16, #tpu.memory_space<vmem>>, vector<128x128xbf16>
    tpu.vector_store %arg13[%c0_153, %c768], %94 {strides = array<i32>} : memref<128x1152xbf16, #tpu.memory_space<vmem>>, vector<128x128xbf16>,
    %c0_154 = arith.constant 0 : index
    %c2_155 = arith.constant 2 : index
    %c1_156 = arith.constant 1 : index
    %c0_157 = arith.constant 0 : index
    %96 = vector.load %arg12[%c0_154, %c2_155, %c1_156, %c0_157] : memref<2x10x10x128xbf16, #tpu.memory_space<vmem>>, vector<2x8x8x128xbf16>
    %97 = vector.shape_cast %96 : vector<2x8x8x128xbf16> to vector<128x128xbf16>
    %c0_158 = arith.constant 0 : index
    %c896 = arith.constant 896 : index
    %98 = vector.load %arg13[%c0_158, %c896] : memref<128x1152xbf16, #tpu.memory_space<vmem>>, vector<128x128xbf16>
    tpu.vector_store %arg13[%c0_158, %c896], %97 {strides = array<i32>} : memref<128x1152xbf16, #tpu.memory_space<vmem>>, vector<128x128xbf16>,
    %c0_159 = arith.constant 0 : index
    %c2_160 = arith.constant 2 : index
    %c2_161 = arith.constant 2 : index
    %c0_162 = arith.constant 0 : index
    %99 = vector.load %arg12[%c0_159, %c2_160, %c2_161, %c0_162] : memref<2x10x10x128xbf16, #tpu.memory_space<vmem>>, vector<2x8x8x128xbf16>
    %100 = vector.shape_cast %99 : vector<2x8x8x128xbf16> to vector<128x128xbf16>
    %c0_163 = arith.constant 0 : index
    %c1024 = arith.constant 1024 : index
    %101 = vector.load %arg13[%c0_163, %c1024] : memref<128x1152xbf16, #tpu.memory_space<vmem>>, vector<128x128xbf16>
    tpu.vector_store %arg13[%c0_163, %c1024], %100 {strides = array<i32>} : memref<128x1152xbf16, #tpu.memory_space<vmem>>, vector<128x128xbf16>,
    %c0_164 = arith.constant 0 : index
    %c0_165 = arith.constant 0 : index
    %102 = vector.load %arg13[%c0_164, %c0_165] : memref<128x1152xbf16, #tpu.memory_space<vmem>>, vector<128x1152xbf16>
    %c0_166 = arith.constant 0 : index
    %c0_167 = arith.constant 0 : index
    %103 = vector.load %arg7[%c0_166, %c0_167] : memref<1152x128xbf16, #tpu.memory_space<vmem>>, vector<1152x128xbf16>
    %cst_168 = arith.constant dense<0.000000e+00> : vector<128x128xf32>
    %104 = tpu.matmul %102, %103, %cst_168 {dimension_numbers = #tpu.dot_dimension_numbers<[1], [0], [0], [1], [0, 0, 1, 1], [], []>} : vector<128x1152xbf16>, vector<1152x128xbf16>, vector<128x128xf32> -> vector<128x128xf32>
    %c0_169 = arith.constant 0 : index
    %c0_170 = arith.constant 0 : index
    %c0_171 = arith.constant 0 : index
    %c0_172 = arith.constant 0 : index
    %c0_173 = arith.constant 0 : index
    %105 = vector.load %arg1[%c0_169, %c0_170, %c0_171, %c0_172, %c0_173] : memref<4x2x8x8x4xf32, #tpu.memory_space<vmem>>, vector<1x2x8x8x4xf32>
    %106 = vector.shape_cast %105 : vector<1x2x8x8x4xf32> to vector<2x8x8x4xf32>
    %107 = vector.shape_cast %106 : vector<2x8x8x4xf32> to vector<128x4xf32>
    %108 = arith.truncf %107 : vector<128x4xf32> to vector<128x4xbf16>
    %c0_174 = arith.constant 0 : index
    %c0_175 = arith.constant 0 : index
    %109 = vector.load %arg8[%c0_174, %c0_175] : memref<4x128xbf16, #tpu.memory_space<vmem>>, vector<4x128xbf16>
    %cst_176 = arith.constant dense<0.000000e+00> : vector<128x128xf32>
    %110 = tpu.matmul %108, %109, %cst_176 {dimension_numbers = #tpu.dot_dimension_numbers<[1], [0], [0], [1], [0, 0, 1, 1], [], []>} : vector<128x4xbf16>, vector<4x128xbf16>, vector<128x128xf32> -> vector<128x128xf32>
    %111 = arith.addf %104, %110 : vector<128x128xf32>
    %112 = vector.shape_cast %111 : vector<128x128xf32> to vector<2x8x8x128xf32>
    %c0_177 = arith.constant 0 : index
    %c0_178 = arith.constant 0 : index
    %c0_179 = arith.constant 0 : index
    %c0_180 = arith.constant 0 : index
    %113 = vector.load %arg9[%c0_177, %c0_178, %c0_179, %c0_180] : memref<2x8x8x128xf32, #tpu.memory_space<vmem>>, vector<2x8x8x128xf32>
    tpu.vector_store %arg9[%c0_177, %c0_178, %c0_179, %c0_180], %112 {strides = array<i32>} : memref<2x8x8x128xf32, #tpu.memory_space<vmem>>, vector<2x8x8x128xf32>,
    return
  }
  func.func @transform_0(%arg0: i32) -> (i32, i32, i32, i32, i32) {
    %c0_i32 = arith.constant 0 : i32
    %c0_i32_0 = arith.constant 0 : i32
    %c0_i32_1 = arith.constant 0 : i32
    %c0_i32_2 = arith.constant 0 : i32
    %c0_i32_3 = arith.constant 0 : i32
    return %c0_i32, %arg0, %c0_i32_0, %c0_i32_1, %c0_i32_2 : i32, i32, i32, i32, i32
  }
  func.func @transform_1(%arg0: i32) -> (i32, i32) {
    %c0_i32 = arith.constant 0 : i32
    %c0_i32_0 = arith.constant 0 : i32
    %c0_i32_1 = arith.constant 0 : i32
    return %c0_i32, %c0_i32_0 : i32, i32
  }
  func.func @transform_2(%arg0: i32) -> (i32, i32) {
    %c0_i32 = arith.constant 0 : i32
    %c0_i32_0 = arith.constant 0 : i32
    %c0_i32_1 = arith.constant 0 : i32
    return %c0_i32, %c0_i32_0 : i32, i32
  }
  func.func @transform_3(%arg0: i32) -> (i32, i32) {
    %c0_i32 = arith.constant 0 : i32
    %c0_i32_0 = arith.constant 0 : i32
    %c0_i32_1 = arith.constant 0 : i32
    return %c0_i32, %c0_i32_0 : i32, i32
  }
  func.func @transform_4(%arg0: i32) -> (i32, i32) {
    %c0_i32 = arith.constant 0 : i32
    %c0_i32_0 = arith.constant 0 : i32
    %c0_i32_1 = arith.constant 0 : i32
    return %c0_i32, %c0_i32_0 : i32, i32
  }
  func.func @transform_5(%arg0: i32) -> (i32, i32) {
    %c0_i32 = arith.constant 0 : i32
    %c0_i32_0 = arith.constant 0 : i32
    %c0_i32_1 = arith.constant 0 : i32
    return %c0_i32, %c0_i32_0 : i32, i32
  }
  func.func @transform_6(%arg0: i32) -> (i32, i32) {
    %c0_i32 = arith.constant 0 : i32
    %c0_i32_0 = arith.constant 0 : i32
    %c0_i32_1 = arith.constant 0 : i32
    return %c0_i32, %c0_i32_0 : i32, i32
  }
  func.func @transform_7(%arg0: i32) -> (i32, i32) {
    %c0_i32 = arith.constant 0 : i32
    %c0_i32_0 = arith.constant 0 : i32
    %c0_i32_1 = arith.constant 0 : i32
    return %c0_i32, %c0_i32_0 : i32, i32
  }
  func.func @transform_8(%arg0: i32) -> (i32, i32, i32, i32) {
    %c0_i32 = arith.constant 0 : i32
    %c0_i32_0 = arith.constant 0 : i32
    %c0_i32_1 = arith.constant 0 : i32
    %c0_i32_2 = arith.constant 0 : i32
    return %arg0, %c0_i32, %c0_i32_0, %c0_i32_1 : i32, i32, i32, i32
  }
}

</mosaic_0001>

<llo_original>
// kernel: preact_basic_block_forward.1
$region0: #{preact_basic_block_forward.1}
  #allocation0 [shape = 'u32[]', space=smem, size = 0x4, offset = 0x4, fixed_abs, tag = 'smem constant byte address 0x4 - core index']
  #allocation1 [shape = 'u32[72,128]{1,0:T(1,128)}', space=vmem, size = 0x9000, scoped, tag = 'internal scratch']
  #allocation2 [shape = 'bf16[4,2,10,10,4]{4,3,2,1,0:T(8,128)(2,1)}', space=vmem, size = 0x50000, scoped, tag = 'scratch operand']
  #allocation3 [shape = 'bf16[128,36]{1,0:T(8,128)(2,1)}', space=vmem, size = 0x8000, scoped, tag = 'scratch operand']
  #allocation4 [shape = 'bf16[2,10,10,128]{3,2,1,0:T(8,128)(2,1)}', space=vmem, size = 0x14000, scoped, tag = 'scratch operand']
  #allocation5 [shape = 'bf16[128,1152]{1,0:T(8,128)(2,1)}', space=vmem, size = 0x48000, scoped, tag = 'scratch operand']
  %s0 = inlined_call_operand.vmem [shape: f32[4,2,8,8,4], index: 0, kind: input, shape index: {}]
  %s1 = inlined_call_operand.vmem [shape: f32[1,4], index: 1, kind: input, shape index: {}]
  %s2 = inlined_call_operand.vmem [shape: f32[1,4], index: 2, kind: input, shape index: {}]
  %s3 = inlined_call_operand.vmem [shape: bf16[36,128], index: 3, kind: input, shape index: {}]
  %s4 = inlined_call_operand.vmem [shape: f32[1,128], index: 4, kind: input, shape index: {}]
  %s5 = inlined_call_operand.vmem [shape: f32[1,128], index: 5, kind: input, shape index: {}]
  %s6 = inlined_call_operand.vmem [shape: bf16[1152,128], index: 6, kind: input, shape index: {}]
  %s7 = inlined_call_operand.vmem [shape: bf16[4,128], index: 7, kind: input, shape index: {}]
  %s8 = inlined_call_operand.vmem [shape: f32[2,8,8,128], index: 8, kind: output, shape index: {}]
  %s9 = sld [smem:[#allocation0]]
  $region42: #{preact_basic_block_forward.1} parent=0
    _
  %s11 = ssub.s32 1, %s9
  %s12 = scalar_select 0, %s11, %s9
  // Predicated region
  $region2: #{preact_basic_block_forward.1} parent=0 // pred_check
    _
  $region3: #{preact_basic_block_forward.1} parent=0 // pred_check_branch
    %14 = sbr.rel (0) target = $region5
  $region4: #{preact_basic_block_forward.1} parent=0 // pred_region
    _
  $region5: #{preact_basic_block_forward.1} parent=0 // pred_fallthru
    _
  // Predicated region
  $region6: #{preact_basic_block_forward.1} parent=0 // pred_check
    _
  $region7: #{preact_basic_block_forward.1} parent=0 // pred_check_branch
    %16 = sbr.rel (0) target = $region9
  $region8: #{preact_basic_block_forward.1} parent=0 // pred_region
    _
  $region9: #{preact_basic_block_forward.1} parent=0 // pred_fallthru
    _
  // Predicated region
  $region10: #{preact_basic_block_forward.1} parent=0 // pred_check
    _
  $region11: #{preact_basic_block_forward.1} parent=0 // pred_check_branch
    %18 = sbr.rel (0) target = $region13
  $region12: #{preact_basic_block_forward.1} parent=0 // pred_region
    _
  $region13: #{preact_basic_block_forward.1} parent=0 // pred_fallthru
    _
  // Predicated region
  $region14: #{preact_basic_block_forward.1} parent=0 // pred_check
    _
  $region15: #{preact_basic_block_forward.1} parent=0 // pred_check_branch
    %20 = sbr.rel (0) target = $region17
  $region16: #{preact_basic_block_forward.1} parent=0 // pred_region
    _
  $region17: #{preact_basic_block_forward.1} parent=0 // pred_fallthru
    _
  // Predicated region
  $region18: #{preact_basic_block_forward.1} parent=0 // pred_check
    _
  $region19: #{preact_basic_block_forward.1} parent=0 // pred_check_branch
    %22 = sbr.rel (0) target = $region21
  $region20: #{preact_basic_block_forward.1} parent=0 // pred_region
    _
  $region21: #{preact_basic_block_forward.1} parent=0 // pred_fallthru
    _
  // Predicated region
  $region22: #{preact_basic_block_forward.1} parent=0 // pred_check
    _
  $region23: #{preact_basic_block_forward.1} parent=0 // pred_check_branch
    %24 = sbr.rel (0) target = $region25
  $region24: #{preact_basic_block_forward.1} parent=0 // pred_region
    _
  $region25: #{preact_basic_block_forward.1} parent=0 // pred_fallthru
    _
  // Predicated region
  $region26: #{preact_basic_block_forward.1} parent=0 // pred_check
    _
  $region27: #{preact_basic_block_forward.1} parent=0 // pred_check_branch
    %26 = sbr.rel (0) target = $region29
  $region28: #{preact_basic_block_forward.1} parent=0 // pred_region
    _
  $region29: #{preact_basic_block_forward.1} parent=0 // pred_fallthru
    _
  // Predicated region
  $region30: #{preact_basic_block_forward.1} parent=0 // pred_check
    _
  $region31: #{preact_basic_block_forward.1} parent=0 // pred_check_branch
    %28 = sbr.rel (0) target = $region33
  $region32: #{preact_basic_block_forward.1} parent=0 // pred_region
    _
  $region33: #{preact_basic_block_forward.1} parent=0 // pred_fallthru
    _
  %vm30 = vcmask 27648
  %31 = vst.msk [vmem:[#allocation2] sm:$0xf] %vm30, 0
  %vm32 = vcmask 24576
  %33 = vst.msk [vmem:[#allocation2 + $0x4] sm:$0x1] %vm32, 0
  %34 = vst.msk [vmem:[#allocation2 + $0x50] sm:$0xf] %vm30, 0
  %35 = vst.msk [vmem:[#allocation2 + $0x54] sm:$0x1] %vm32, 0
  %36 = vst.msk [vmem:[#allocation2 + $0xa0] sm:$0xf] %vm30, 0
  %37 = vst.msk [vmem:[#allocation2 + $0xa4] sm:$0x1] %vm32, 0
  %38 = vst.msk [vmem:[#allocation2 + $0xf0] sm:$0xf] %vm30, 0
  %39 = vst.msk [vmem:[#allocation2 + $0xf4] sm:$0x1] %vm32, 0
  %40 = vst.msk [vmem:[#allocation2 + $0x140] sm:$0xf] %vm30, 0
  %41 = vst.msk [vmem:[#allocation2 + $0x144] sm:$0x1] %vm32, 0
  %42 = vst.msk [vmem:[#allocation2 + $0x190] sm:$0xf] %vm30, 0
  %43 = vst.msk [vmem:[#allocation2 + $0x194] sm:$0x1] %vm32, 0
  %44 = vst.msk [vmem:[#allocation2 + $0x1e0] sm:$0xf] %vm30, 0
  %45 = vst.msk [vmem:[#allocation2 + $0x1e4] sm:$0x1] %vm32, 0
  %46 = vst.msk [vmem:[#allocation2 + $0x230] sm:$0xf] %vm30, 0
  %47 = vst.msk [vmem:[#allocation2 + $0x234] sm:$0x1] %vm32, 0
  %s48 = scalar_lea.vmem [#allocation2], 72
  %49 = vst.msk [vmem:[%s48] sm:$0xf] %vm30, 0
  %50 = vst.msk [vmem:[%s48 + $0x4] sm:$0x1] %vm32, 0
  %51 = vst.msk [vmem:[%s48 + $0x50] sm:$0xf] %vm30, 0
  %52 = vst.msk [vmem:[%s48 + $0x54] sm:$0x1] %vm32, 0
  %53 = vst.msk [vmem:[%s48 + $0xa0] sm:$0xf] %vm30, 0
  %54 = vst.msk [vmem:[%s48 + $0xa4] sm:$0x1] %vm32, 0
  %55 = vst.msk [vmem:[%s48 + $0xf0] sm:$0xf] %vm30, 0
  %56 = vst.msk [vmem:[%s48 + $0xf4] sm:$0x1] %vm32, 0
  %57 = vst.msk [vmem:[%s48 + $0x140] sm:$0xf] %vm30, 0
  %58 = vst.msk [vmem:[%s48 + $0x144] sm:$0x1] %vm32, 0
  %59 = vst.msk [vmem:[%s48 + $0x190] sm:$0xf] %vm30, 0
  %60 = vst.msk [vmem:[%s48 + $0x194] sm:$0x1] %vm32, 0
  %61 = vst.msk [vmem:[%s48 + $0x1e0] sm:$0xf] %vm30, 0
  %62 = vst.msk [vmem:[%s48 + $0x1e4] sm:$0x1] %vm32, 0
  %63 = vst.msk [vmem:[%s48 + $0x230] sm:$0xf] %vm30, 0
  %64 = vst.msk [vmem:[%s48 + $0x234] sm:$0x1] %vm32, 0
  %vm65 = vcmask 24576
  %vm66 = vsmask.f32 256
  %vm67 = vmand %vm65, %vm66
  %v68 = vld [vmem:[#allocation2] sm:$0x1]
  %v69 = vsel %vm67, 0, %v68
  %70 = vst [vmem:[#allocation2] sm:$0x1] %v69
  %v71 = vld [vmem:[#allocation2 + $0x8] sm:$0x1]
  %v72 = vsel %vm67, 0, %v71
  %73 = vst [vmem:[#allocation2 + $0x8] sm:$0x1] %v72
  %v74 = vld [vmem:[#allocation2 + $0x10] sm:$0x1]
  %v75 = vsel %vm67, 0, %v74
  %76 = vst [vmem:[#allocation2 + $0x10] sm:$0x1] %v75
  %v77 = vld [vmem:[#allocation2 + $0x18] sm:$0x1]
  %v78 = vsel %vm67, 0, %v77
  %79 = vst [vmem:[#allocation2 + $0x18] sm:$0x1] %v78
  %v80 = vld [vmem:[#allocation2 + $0x20] sm:$0x1]
  %v81 = vsel %vm67, 0, %v80
  %82 = vst [vmem:[#allocation2 + $0x20] sm:$0x1] %v81
  %v83 = vld [vmem:[#allocation2 + $0x28] sm:$0x1]
  %v84 = vsel %vm67, 0, %v83
  %85 = vst [vmem:[#allocation2 + $0x28] sm:$0x1] %v84
  %v86 = vld [vmem:[#allocation2 + $0x30] sm:$0x1]
  %v87 = vsel %vm67, 0, %v86
  %88 = vst [vmem:[#allocation2 + $0x30] sm:$0x1] %v87
  %v89 = vld [vmem:[#allocation2 + $0x38] sm:$0x1]
  %v90 = vsel %vm67, 0, %v89
  %91 = vst [vmem:[#allocation2 + $0x38] sm:$0x1] %v90
  %v92 = vld [vmem:[#allocation2 + $0x40] sm:$0x1]
  %v93 = vsel %vm67, 0, %v92
  %94 = vst [vmem:[#allocation2 + $0x40] sm:$0x1] %v93
  %v95 = vld [vmem:[#allocation2 + $0x48] sm:$0x1]
  %v96 = vsel %vm67, 0, %v95
  %97 = vst [vmem:[#allocation2 + $0x48] sm:$0x1] %v96
  %v98 = vld [vmem:[#allocation2 + $0x50] sm:$0x1]
  %v99 = vsel %vm67, 0, %v98
  %100 = vst [vmem:[#allocation2 + $0x50] sm:$0x1] %v99
  %v101 = vld [vmem:[#allocation2 + $0x58] sm:$0x1]
  %v102 = vsel %vm67, 0, %v101
  %103 = vst [vmem:[#allocation2 + $0x58] sm:$0x1] %v102
  %v104 = vld [vmem:[#allocation2 + $0x60] sm:$0x1]
  %v105 = vsel %vm67, 0, %v104
  %106 = vst [vmem:[#allocation2 + $0x60] sm:$0x1] %v105
  %v107 = vld [vmem:[#allocation2 + $0x68] sm:$0x1]
  %v108 = vsel %vm67, 0, %v107
  %109 = vst [vmem:[#allocation2 + $0x68] sm:$0x1] %v108
  %v110 = vld [vmem:[#allocation2 + $0x70] sm:$0x1]
  %v111 = vsel %vm67, 0, %v110
  %112 = vst [vmem:[#allocation2 + $0x70] sm:$0x1] %v111
  %v113 = vld [vmem:[#allocation2 + $0x78] sm:$0x1]
  %v114 = vsel %vm67, 0, %v113
  %115 = vst [vmem:[#allocation2 + $0x78] sm:$0x1] %v114
  %v116 = vld [vmem:[#allocation2 + $0x80] sm:$0x1]
  %v117 = vsel %vm67, 0, %v116
  %118 = vst [vmem:[#allocation2 + $0x80] sm:$0x1] %v117
  %v119 = vld [vmem:[#allocation2 + $0x88] sm:$0x1]
  %v120 = vsel %vm67, 0, %v119
  %121 = vst [vmem:[#allocation2 + $0x88] sm:$0x1] %v120
  %v122 = vld [vmem:[#allocation2 + $0x90] sm:$0x1]
  %v123 = vsel %vm67, 0, %v122
  %124 = vst [vmem:[#allocation2 + $0x90] sm:$0x1] %v123
  %v125 = vld [vmem:[#allocation2 + $0x98] sm:$0x1]
  %v126 = vsel %vm67, 0, %v125
  %127 = vst [vmem:[#allocation2 + $0x98] sm:$0x1] %v126
  %v128 = vld [vmem:[#allocation2 + $0xa0] sm:$0x1]
  %v129 = vsel %vm67, 0, %v128
  %130 = vst [vmem:[#allocation2 + $0xa0] sm:$0x1] %v129
  %v131 = vld [vmem:[#allocation2 + $0xa8] sm:$0x1]
  %v132 = vsel %vm67, 0, %v131
  %133 = vst [vmem:[#allocation2 + $0xa8] sm:$0x1] %v132
  %v134 = vld [vmem:[#allocation2 + $0xb0] sm:$0x1]
  %v135 = vsel %vm67, 0, %v134
  %136 = vst [vmem:[#allocation2 + $0xb0] sm:$0x1] %v135
  %v137 = vld [vmem:[#allocation2 + $0xb8] sm:$0x1]
  %v138 = vsel %vm67, 0, %v137
  %139 = vst [vmem:[#allocation2 + $0xb8] sm:$0x1] %v138
  %v140 = vld [vmem:[#allocation2 + $0xc0] sm:$0x1]
  %v141 = vsel %vm67, 0, %v140
  %142 = vst [vmem:[#allocation2 + $0xc0] sm:$0x1] %v141
  %v143 = vld [vmem:[#allocation2 + $0xc8] sm:$0x1]
  %v144 = vsel %vm67, 0, %v143
  %145 = vst [vmem:[#allocation2 + $0xc8] sm:$0x1] %v144
  %v146 = vld [vmem:[#allocation2 + $0xd0] sm:$0x1]
  %v147 = vsel %vm67, 0, %v146
  %148 = vst [vmem:[#allocation2 + $0xd0] sm:$0x1] %v147
  %v149 = vld [vmem:[#allocation2 + $0xd8] sm:$0x1]
  %v150 = vsel %vm67, 0, %v149
  %151 = vst [vmem:[#allocation2 + $0xd8] sm:$0x1] %v150
  %v152 = vld [vmem:[#allocation2 + $0xe0] sm:$0x1]
  %v153 = vsel %vm67, 0, %v152
  %154 = vst [vmem:[#allocation2 + $0xe0] sm:$0x1] %v153
  %v155 = vld [vmem:[#allocation2 + $0xe8] sm:$0x1]
  %v156 = vsel %vm67, 0, %v155
  %157 = vst [vmem:[#allocation2 + $0xe8] sm:$0x1] %v156
  %v158 = vld [vmem:[#allocation2 + $0xf0] sm:$0x1]
  %v159 = vsel %vm67, 0, %v158
  %160 = vst [vmem:[#allocation2 + $0xf0] sm:$0x1] %v159
  %v161 = vld [vmem:[#allocation2 + $0xf8] sm:$0x1]
  %v162 = vsel %vm67, 0, %v161
  %163 = vst [vmem:[#allocation2 + $0xf8] sm:$0x1] %v162
  %v164 = vld [vmem:[#allocation2 + $0x100] sm:$0x1]
  %v165 = vsel %vm67, 0, %v164
  %166 = vst [vmem:[#allocation2 + $0x100] sm:$0x1] %v165
  %v167 = vld [vmem:[#allocation2 + $0x108] sm:$0x1]
  %v168 = vsel %vm67, 0, %v167
  %169 = vst [vmem:[#allocation2 + $0x108] sm:$0x1] %v168
  %v170 = vld [vmem:[#allocation2 + $0x110] sm:$0x1]
  %v171 = vsel %vm67, 0, %v170
  %172 = vst [vmem:[#allocation2 + $0x110] sm:$0x1] %v171
  %v173 = vld [vmem:[#allocation2 + $0x118] sm:$0x1]
  %v174 = vsel %vm67, 0, %v173
  %175 = vst [vmem:[#allocation2 + $0x118] sm:$0x1] %v174
  %v176 = vld [vmem:[#allocation2 + $0x120] sm:$0x1]
  %v177 = vsel %vm67, 0, %v176
  %178 = vst [vmem:[#allocation2 + $0x120] sm:$0x1] %v177
  %v179 = vld [vmem:[#allocation2 + $0x128] sm:$0x1]
  %v180 = vsel %vm67, 0, %v179
  %181 = vst [vmem:[#allocation2 + $0x128] sm:$0x1] %v180
  %v182 = vld [vmem:[#allocation2 + $0x130] sm:$0x1]
  %v183 = vsel %vm67, 0, %v182
  %184 = vst [vmem:[#allocation2 + $0x130] sm:$0x1] %v183
  %v185 = vld [vmem:[#allocation2 + $0x138] sm:$0x1]
  %v186 = vsel %vm67, 0, %v185
  %187 = vst [vmem:[#allocation2 + $0x138] sm:$0x1] %v186
  %v188 = vld [vmem:[#allocation2 + $0x140] sm:$0x1]
  %v189 = vsel %vm67, 0, %v188
  %190 = vst [vmem:[#allocation2 + $0x140] sm:$0x1] %v189
  %v191 = vld [vmem:[#allocation2 + $0x148] sm:$0x1]
  %v192 = vsel %vm67, 0, %v191
  %193 = vst [vmem:[#allocation2 + $0x148] sm:$0x1] %v192
  %v194 = vld [vmem:[#allocation2 + $0x150] sm:$0x1]
  %v195 = vsel %vm67, 0, %v194
  %196 = vst [vmem:[#allocation2 + $0x150] sm:$0x1] %v195
  %v197 = vld [vmem:[#allocation2 + $0x158] sm:$0x1]
  %v198 = vsel %vm67, 0, %v197
  %199 = vst [vmem:[#allocation2 + $0x158] sm:$0x1] %v198
  %v200 = vld [vmem:[#allocation2 + $0x160] sm:$0x1]
  %v201 = vsel %vm67, 0, %v200
  %202 = vst [vmem:[#allocation2 + $0x160] sm:$0x1] %v201
  %v203 = vld [vmem:[#allocation2 + $0x168] sm:$0x1]
  %v204 = vsel %vm67, 0, %v203
  %205 = vst [vmem:[#allocation2 + $0x168] sm:$0x1] %v204
  %v206 = vld [vmem:[#allocation2 + $0x170] sm:$0x1]
  %v207 = vsel %vm67, 0, %v206
  %208 = vst [vmem:[#allocation2 + $0x170] sm:$0x1] %v207
  %v209 = vld [vmem:[#allocation2 + $0x178] sm:$0x1]
  %v210 = vsel %vm67, 0, %v209
  %211 = vst [vmem:[#allocation2 + $0x178] sm:$0x1] %v210
  %v212 = vld [vmem:[#allocation2 + $0x180] sm:$0x1]
  %v213 = vsel %vm67, 0, %v212
  %214 = vst [vmem:[#allocation2 + $0x180] sm:$0x1] %v213
  %v215 = vld [vmem:[#allocation2 + $0x188] sm:$0x1]
  %v216 = vsel %vm67, 0, %v215
  %217 = vst [vmem:[#allocation2 + $0x188] sm:$0x1] %v216
  %v218 = vld [vmem:[#allocation2 + $0x190] sm:$0x1]
  %v219 = vsel %vm67, 0, %v218
  %220 = vst [vmem:[#allocation2 + $0x190] sm:$0x1] %v219
  %v221 = vld [vmem:[#allocation2 + $0x198] sm:$0x1]
  %v222 = vsel %vm67, 0, %v221
  %223 = vst [vmem:[#allocation2 + $0x198] sm:$0x1] %v222
  %v224 = vld [vmem:[#allocation2 + $0x1a0] sm:$0x1]
  %v225 = vsel %vm67, 0, %v224
  %226 = vst [vmem:[#allocation2 + $0x1a0] sm:$0x1] %v225
  %v227 = vld [vmem:[#allocation2 + $0x1a8] sm:$0x1]
  %v228 = vsel %vm67, 0, %v227
  %229 = vst [vmem:[#allocation2 + $0x1a8] sm:$0x1] %v228
  %v230 = vld [vmem:[#allocation2 + $0x1b0] sm:$0x1]
  %v231 = vsel %vm67, 0, %v230
  %232 = vst [vmem:[#allocation2 + $0x1b0] sm:$0x1] %v231
  %v233 = vld [vmem:[#allocation2 + $0x1b8] sm:$0x1]
  %v234 = vsel %vm67, 0, %v233
  %235 = vst [vmem:[#allocation2 + $0x1b8] sm:$0x1] %v234
  %v236 = vld [vmem:[#allocation2 + $0x1c0] sm:$0x1]
  %v237 = vsel %vm67, 0, %v236
  %238 = vst [vmem:[#allocation2 + $0x1c0] sm:$0x1] %v237
  %v239 = vld [vmem:[#allocation2 + $0x1c8] sm:$0x1]
  %v240 = vsel %vm67, 0, %v239
  %241 = vst [vmem:[#allocation2 + $0x1c8] sm:$0x1] %v240
  %v242 = vld [vmem:[#allocation2 + $0x1d0] sm:$0x1]
  %v243 = vsel %vm67, 0, %v242
  %244 = vst [vmem:[#allocation2 + $0x1d0] sm:$0x1] %v243
  %v245 = vld [vmem:[#allocation2 + $0x1d8] sm:$0x1]
  %v246 = vsel %vm67, 0, %v245
  %247 = vst [vmem:[#allocation2 + $0x1d8] sm:$0x1] %v246
  %v248 = vld [vmem:[#allocation2 + $0x1e0] sm:$0x1]
  %v249 = vsel %vm67, 0, %v248
  %250 = vst [vmem:[#allocation2 + $0x1e0] sm:$0x1] %v249
  %v251 = vld [vmem:[#allocation2 + $0x1e8] sm:$0x1]
  %v252 = vsel %vm67, 0, %v251
  %253 = vst [vmem:[#allocation2 + $0x1e8] sm:$0x1] %v252
  %v254 = vld [vmem:[#allocation2 + $0x1f0] sm:$0x1]
  %v255 = vsel %vm67, 0, %v254
  %256 = vst [vmem:[#allocation2 + $0x1f0] sm:$0x1] %v255
  %v257 = vld [vmem:[#allocation2 + $0x1f8] sm:$0x1]
  %v258 = vsel %vm67, 0, %v257
  %259 = vst [vmem:[#allocation2 + $0x1f8] sm:$0x1] %v258
  %v260 = vld [vmem:[#allocation2 + $0x200] sm:$0x1]
  %v261 = vsel %vm67, 0, %v260
  %262 = vst [vmem:[#allocation2 + $0x200] sm:$0x1] %v261
  %v263 = vld [vmem:[#allocation2 + $0x208] sm:$0x1]
  %v264 = vsel %vm67, 0, %v263
  %265 = vst [vmem:[#allocation2 + $0x208] sm:$0x1] %v264
  %v266 = vld [vmem:[#allocation2 + $0x210] sm:$0x1]
  %v267 = vsel %vm67, 0, %v266
  %268 = vst [vmem:[#allocation2 + $0x210] sm:$0x1] %v267
  %v269 = vld [vmem:[#allocation2 + $0x218] sm:$0x1]
  %v270 = vsel %vm67, 0, %v269
  %271 = vst [vmem:[#allocation2 + $0x218] sm:$0x1] %v270
  %v272 = vld [vmem:[#allocation2 + $0x220] sm:$0x1]
  %v273 = vsel %vm67, 0, %v272
  %274 = vst [vmem:[#allocation2 + $0x220] sm:$0x1] %v273
  %v275 = vld [vmem:[#allocation2 + $0x228] sm:$0x1]
  %v276 = vsel %vm67, 0, %v275
  %277 = vst [vmem:[#allocation2 + $0x228] sm:$0x1] %v276
  %v278 = vld [vmem:[#allocation2 + $0x230] sm:$0x1]
  %v279 = vsel %vm67, 0, %v278
  %280 = vst [vmem:[#allocation2 + $0x230] sm:$0x1] %v279
  %v281 = vld [vmem:[#allocation2 + $0x238] sm:$0x1]
  %v282 = vsel %vm67, 0, %v281
  %283 = vst [vmem:[#allocation2 + $0x238] sm:$0x1] %v282
  %v284 = vld [vmem:[#allocation2 + $0x240] sm:$0x1]
  %v285 = vsel %vm67, 0, %v284
  %286 = vst [vmem:[#allocation2 + $0x240] sm:$0x1] %v285
  %v287 = vld [vmem:[#allocation2 + $0x248] sm:$0x1]
  %v288 = vsel %vm67, 0, %v287
  %289 = vst [vmem:[#allocation2 + $0x248] sm:$0x1] %v288
  %v290 = vld [vmem:[#allocation2 + $0x250] sm:$0x1]
  %v291 = vsel %vm67, 0, %v290
  %292 = vst [vmem:[#allocation2 + $0x250] sm:$0x1] %v291
  %v293 = vld [vmem:[#allocation2 + $0x258] sm:$0x1]
  %v294 = vsel %vm67, 0, %v293
  %295 = vst [vmem:[#allocation2 + $0x258] sm:$0x1] %v294
  %v296 = vld [vmem:[#allocation2 + $0x260] sm:$0x1]
  %v297 = vsel %vm67, 0, %v296
  %298 = vst [vmem:[#allocation2 + $0x260] sm:$0x1] %v297
  %v299 = vld [vmem:[#allocation2 + $0x268] sm:$0x1]
  %v300 = vsel %vm67, 0, %v299
  %301 = vst [vmem:[#allocation2 + $0x268] sm:$0x1] %v300
  %v302 = vld [vmem:[#allocation2 + $0x270] sm:$0x1]
  %v303 = vsel %vm67, 0, %v302
  %304 = vst [vmem:[#allocation2 + $0x270] sm:$0x1] %v303
  %v305 = vld [vmem:[#allocation2 + $0x278] sm:$0x1]
  %v306 = vsel %vm67, 0, %v305
  %307 = vst [vmem:[#allocation2 + $0x278] sm:$0x1] %v306
  %vm308 = vsmask.f32 7938
  %vm309 = vmand %vm65, %vm308
  %v310 = vld [vmem:[#allocation2 + $0x4] sm:$0x1]
  %v311 = vsel %vm309, 0, %v310
  %312 = vst [vmem:[#allocation2 + $0x4] sm:$0x1] %v311
  %v313 = vld [vmem:[#allocation2 + $0xc] sm:$0x1]
  %v314 = vsel %vm309, 0, %v313
  %315 = vst [vmem:[#allocation2 + $0xc] sm:$0x1] %v314
  %v316 = vld [vmem:[#allocation2 + $0x14] sm:$0x1]
  %v317 = vsel %vm309, 0, %v316
  %318 = vst [vmem:[#allocation2 + $0x14] sm:$0x1] %v317
  %v319 = vld [vmem:[#allocation2 + $0x1c] sm:$0x1]
  %v320 = vsel %vm309, 0, %v319
  %321 = vst [vmem:[#allocation2 + $0x1c] sm:$0x1] %v320
  %v322 = vld [vmem:[#allocation2 + $0x24] sm:$0x1]
  %v323 = vsel %vm309, 0, %v322
  %324 = vst [vmem:[#allocation2 + $0x24] sm:$0x1] %v323
  %v325 = vld [vmem:[#allocation2 + $0x2c] sm:$0x1]
  %v326 = vsel %vm309, 0, %v325
  %327 = vst [vmem:[#allocation2 + $0x2c] sm:$0x1] %v326
  %v328 = vld [vmem:[#allocation2 + $0x34] sm:$0x1]
  %v329 = vsel %vm309, 0, %v328
  %330 = vst [vmem:[#allocation2 + $0x34] sm:$0x1] %v329
  %v331 = vld [vmem:[#allocation2 + $0x3c] sm:$0x1]
  %v332 = vsel %vm309, 0, %v331
  %333 = vst [vmem:[#allocation2 + $0x3c] sm:$0x1] %v332
  %v334 = vld [vmem:[#allocation2 + $0x44] sm:$0x1]
  %v335 = vsel %vm309, 0, %v334
  %336 = vst [vmem:[#allocation2 + $0x44] sm:$0x1] %v335
  %v337 = vld [vmem:[#allocation2 + $0x4c] sm:$0x1]
  %v338 = vsel %vm309, 0, %v337
  %339 = vst [vmem:[#allocation2 + $0x4c] sm:$0x1] %v338
  %v340 = vld [vmem:[#allocation2 + $0x54] sm:$0x1]
  %v341 = vsel %vm309, 0, %v340
  %342 = vst [vmem:[#allocation2 + $0x54] sm:$0x1] %v341
  %v343 = vld [vmem:[#allocation2 + $0x5c] sm:$0x1]
  %v344 = vsel %vm309, 0, %v343
  %345 = vst [vmem:[#allocation2 + $0x5c] sm:$0x1] %v344
  %v346 = vld [vmem:[#allocation2 + $0x64] sm:$0x1]
  %v347 = vsel %vm309, 0, %v346
  %348 = vst [vmem:[#allocation2 + $0x64] sm:$0x1] %v347
  %v349 = vld [vmem:[#allocation2 + $0x6c] sm:$0x1]
  %v350 = vsel %vm309, 0, %v349
  %351 = vst [vmem:[#allocation2 + $0x6c] sm:$0x1] %v350
  %v352 = vld [vmem:[#allocation2 + $0x74] sm:$0x1]
  %v353 = vsel %vm309, 0, %v352
  %354 = vst [vmem:[#allocation2 + $0x74] sm:$0x1] %v353
  %v355 = vld [vmem:[#allocation2 + $0x7c] sm:$0x1]
  %v356 = vsel %vm309, 0, %v355
  %357 = vst [vmem:[#allocation2 + $0x7c] sm:$0x1] %v356
  %v358 = vld [vmem:[#allocation2 + $0x84] sm:$0x1]
  %v359 = vsel %vm309, 0, %v358
  %360 = vst [vmem:[#allocation2 + $0x84] sm:$0x1] %v359
  %v361 = vld [vmem:[#allocation2 + $0x8c] sm:$0x1]
  %v362 = vsel %vm309, 0, %v361
  %363 = vst [vmem:[#allocation2 + $0x8c] sm:$0x1] %v362
  %v364 = vld [vmem:[#allocation2 + $0x94] sm:$0x1]
  %v365 = vsel %vm309, 0, %v364
  %366 = vst [vmem:[#allocation2 + $0x94] sm:$0x1] %v365
  %v367 = vld [vmem:[#allocation2 + $0x9c] sm:$0x1]
  %v368 = vsel %vm309, 0, %v367
  %369 = vst [vmem:[#allocation2 + $0x9c] sm:$0x1] %v368
  %v370 = vld [vmem:[#allocation2 + $0xa4] sm:$0x1]
  %v371 = vsel %vm309, 0, %v370
  %372 = vst [vmem:[#allocation2 + $0xa4] sm:$0x1] %v371
  %v373 = vld [vmem:[#allocation2 + $0xac] sm:$0x1]
  %v374 = vsel %vm309, 0, %v373
  %375 = vst [vmem:[#allocation2 + $0xac] sm:$0x1] %v374
  %v376 = vld [vmem:[#allocation2 + $0xb4] sm:$0x1]
  %v377 = vsel %vm309, 0, %v376
  %378 = vst [vmem:[#allocation2 + $0xb4] sm:$0x1] %v377
  %v379 = vld [vmem:[#allocation2 + $0xbc] sm:$0x1]
  %v380 = vsel %vm309, 0, %v379
  %381 = vst [vmem:[#allocation2 + $0xbc] sm:$0x1] %v380
  %v382 = vld [vmem:[#allocation2 + $0xc4] sm:$0x1]
  %v383 = vsel %vm309, 0, %v382
  %384 = vst [vmem:[#allocation2 + $0xc4] sm:$0x1] %v383
  %v385 = vld [vmem:[#allocation2 + $0xcc] sm:$0x1]
  %v386 = vsel %vm309, 0, %v385
  %387 = vst [vmem:[#allocation2 + $0xcc] sm:$0x1] %v386
  %v388 = vld [vmem:[#allocation2 + $0xd4] sm:$0x1]
  %v389 = vsel %vm309, 0, %v388
  %390 = vst [vmem:[#allocation2 + $0xd4] sm:$0x1] %v389
  %v391 = vld [vmem:[#allocation2 + $0xdc] sm:$0x1]
  %v392 = vsel %vm309, 0, %v391
  %393 = vst [vmem:[#allocation2 + $0xdc] sm:$0x1] %v392
  %v394 = vld [vmem:[#allocation2 + $0xe4] sm:$0x1]
  %v395 = vsel %vm309, 0, %v394
  %396 = vst [vmem:[#allocation2 + $0xe4] sm:$0x1] %v395
  %v397 = vld [vmem:[#allocation2 + $0xec] sm:$0x1]
  %v398 = vsel %vm309, 0, %v397
  %399 = vst [vmem:[#allocation2 + $0xec] sm:$0x1] %v398
  %v400 = vld [vmem:[#allocation2 + $0xf4] sm:$0x1]
  %v401 = vsel %vm309, 0, %v400
  %402 = vst [vmem:[#allocation2 + $0xf4] sm:$0x1] %v401
  %v403 = vld [vmem:[#allocation2 + $0xfc] sm:$0x1]
  %v404 = vsel %vm309, 0, %v403
  %405 = vst [vmem:[#allocation2 + $0xfc] sm:$0x1] %v404
  %v406 = vld [vmem:[#allocation2 + $0x104] sm:$0x1]
  %v407 = vsel %vm309, 0, %v406
  %408 = vst [vmem:[#allocation2 + $0x104] sm:$0x1] %v407
  %v409 = vld [vmem:[#allocation2 + $0x10c] sm:$0x1]
  %v410 = vsel %vm309, 0, %v409
  %411 = vst [vmem:[#allocation2 + $0x10c] sm:$0x1] %v410
  %v412 = vld [vmem:[#allocation2 + $0x114] sm:$0x1]
  %v413 = vsel %vm309, 0, %v412
  %414 = vst [vmem:[#allocation2 + $0x114] sm:$0x1] %v413
  %v415 = vld [vmem:[#allocation2 + $0x11c] sm:$0x1]
  %v416 = vsel %vm309, 0, %v415
  %417 = vst [vmem:[#allocation2 + $0x11c] sm:$0x1] %v416
  %v418 = vld [vmem:[#allocation2 + $0x124] sm:$0x1]
  %v419 = vsel %vm309, 0, %v418
  %420 = vst [vmem:[#allocation2 + $0x124] sm:$0x1] %v419
  %v421 = vld [vmem:[#allocation2 + $0x12c] sm:$0x1]
  %v422 = vsel %vm309, 0, %v421
  %423 = vst [vmem:[#allocation2 + $0x12c] sm:$0x1] %v422
  %v424 = vld [vmem:[#allocation2 + $0x134] sm:$0x1]
  %v425 = vsel %vm309, 0, %v424
  %426 = vst [vmem:[#allocation2 + $0x134] sm:$0x1] %v425
  %v427 = vld [vmem:[#allocation2 + $0x13c] sm:$0x1]
  %v428 = vsel %vm309, 0, %v427
  %429 = vst [vmem:[#allocation2 + $0x13c] sm:$0x1] %v428
  %v430 = vld [vmem:[#allocation2 + $0x144] sm:$0x1]
  %v431 = vsel %vm309, 0, %v430
  %432 = vst [vmem:[#allocation2 + $0x144] sm:$0x1] %v431
  %v433 = vld [vmem:[#allocation2 + $0x14c] sm:$0x1]
  %v434 = vsel %vm309, 0, %v433
  %435 = vst [vmem:[#allocation2 + $0x14c] sm:$0x1] %v434
  %v436 = vld [vmem:[#allocation2 + $0x154] sm:$0x1]
  %v437 = vsel %vm309, 0, %v436
  %438 = vst [vmem:[#allocation2 + $0x154] sm:$0x1] %v437
  %v439 = vld [vmem:[#allocation2 + $0x15c] sm:$0x1]
  %v440 = vsel %vm309, 0, %v439
  %441 = vst [vmem:[#allocation2 + $0x15c] sm:$0x1] %v440
  %v442 = vld [vmem:[#allocation2 + $0x164] sm:$0x1]
  %v443 = vsel %vm309, 0, %v442
  %444 = vst [vmem:[#allocation2 + $0x164] sm:$0x1] %v443
  %v445 = vld [vmem:[#allocation2 + $0x16c] sm:$0x1]
  %v446 = vsel %vm309, 0, %v445
  %447 = vst [vmem:[#allocation2 + $0x16c] sm:$0x1] %v446
  %v448 = vld [vmem:[#allocation2 + $0x174] sm:$0x1]
  %v449 = vsel %vm309, 0, %v448
  %450 = vst [vmem:[#allocation2 + $0x174] sm:$0x1] %v449
  %v451 = vld [vmem:[#allocation2 + $0x17c] sm:$0x1]
  %v452 = vsel %vm309, 0, %v451
  %453 = vst [vmem:[#allocation2 + $0x17c] sm:$0x1] %v452
  %v454 = vld [vmem:[#allocation2 + $0x184] sm:$0x1]
  %v455 = vsel %vm309, 0, %v454
  %456 = vst [vmem:[#allocation2 + $0x184] sm:$0x1] %v455
  %v457 = vld [vmem:[#allocation2 + $0x18c] sm:$0x1]
  %v458 = vsel %vm309, 0, %v457
  %459 = vst [vmem:[#allocation2 + $0x18c] sm:$0x1] %v458
  %v460 = vld [vmem:[#allocation2 + $0x194] sm:$0x1]
  %v461 = vsel %vm309, 0, %v460
  %462 = vst [vmem:[#allocation2 + $0x194] sm:$0x1] %v461
  %v463 = vld [vmem:[#allocation2 + $0x19c] sm:$0x1]
  %v464 = vsel %vm309, 0, %v463
  %465 = vst [vmem:[#allocation2 + $0x19c] sm:$0x1] %v464
  %v466 = vld [vmem:[#allocation2 + $0x1a4] sm:$0x1]
  %v467 = vsel %vm309, 0, %v466
  %468 = vst [vmem:[#allocation2 + $0x1a4] sm:$0x1] %v467
  %v469 = vld [vmem:[#allocation2 + $0x1ac] sm:$0x1]
  %v470 = vsel %vm309, 0, %v469
  %471 = vst [vmem:[#allocation2 + $0x1ac] sm:$0x1] %v470
  %v472 = vld [vmem:[#allocation2 + $0x1b4] sm:$0x1]
  %v473 = vsel %vm309, 0, %v472
  %474 = vst [vmem:[#allocation2 + $0x1b4] sm:$0x1] %v473
  %v475 = vld [vmem:[#allocation2 + $0x1bc] sm:$0x1]
  %v476 = vsel %vm309, 0, %v475
  %477 = vst [vmem:[#allocation2 + $0x1bc] sm:$0x1] %v476
  %v478 = vld [vmem:[#allocation2 + $0x1c4] sm:$0x1]
  %v479 = vsel %vm309, 0, %v478
  %480 = vst [vmem:[#allocation2 + $0x1c4] sm:$0x1] %v479
  %v481 = vld [vmem:[#allocation2 + $0x1cc] sm:$0x1]
  %v482 = vsel %vm309, 0, %v481
  %483 = vst [vmem:[#allocation2 + $0x1cc] sm:$0x1] %v482
  %v484 = vld [vmem:[#allocation2 + $0x1d4] sm:$0x1]
  %v485 = vsel %vm309, 0, %v484
  %486 = vst [vmem:[#allocation2 + $0x1d4] sm:$0x1] %v485
  %v487 = vld [vmem:[#allocation2 + $0x1dc] sm:$0x1]
  %v488 = vsel %vm309, 0, %v487
  %489 = vst [vmem:[#allocation2 + $0x1dc] sm:$0x1] %v488
  %v490 = vld [vmem:[#allocation2 + $0x1e4] sm:$0x1]
  %v491 = vsel %vm309, 0, %v490
  %492 = vst [vmem:[#allocation2 + $0x1e4] sm:$0x1] %v491
  %v493 = vld [vmem:[#allocation2 + $0x1ec] sm:$0x1]
  %v494 = vsel %vm309, 0, %v493
  %495 = vst [vmem:[#allocation2 + $0x1ec] sm:$0x1] %v494
  %v496 = vld [vmem:[#allocation2 + $0x1f4] sm:$0x1]
  %v497 = vsel %vm309, 0, %v496
  %498 = vst [vmem:[#allocation2 + $0x1f4] sm:$0x1] %v497
  %v499 = vld [vmem:[#allocation2 + $0x1fc] sm:$0x1]
  %v500 = vsel %vm309, 0, %v499
  %501 = vst [vmem:[#allocation2 + $0x1fc] sm:$0x1] %v500
  %v502 = vld [vmem:[#allocation2 + $0x204] sm:$0x1]
  %v503 = vsel %vm309, 0, %v502
  %504 = vst [vmem:[#allocation2 + $0x204] sm:$0x1] %v503
  %v505 = vld [vmem:[#allocation2 + $0x20c] sm:$0x1]
  %v506 = vsel %vm309, 0, %v505
  %507 = vst [vmem:[#allocation2 + $0x20c] sm:$0x1] %v506
  %v508 = vld [vmem:[#allocation2 + $0x214] sm:$0x1]
  %v509 = vsel %vm309, 0, %v508
  %510 = vst [vmem:[#allocation2 + $0x214] sm:$0x1] %v509
  %v511 = vld [vmem:[#allocation2 + $0x21c] sm:$0x1]
  %v512 = vsel %vm309, 0, %v511
  %513 = vst [vmem:[#allocation2 + $0x21c] sm:$0x1] %v512
  %v514 = vld [vmem:[#allocation2 + $0x224] sm:$0x1]
  %v515 = vsel %vm309, 0, %v514
  %516 = vst [vmem:[#allocation2 + $0x224] sm:$0x1] %v515
  %v517 = vld [vmem:[#allocation2 + $0x22c] sm:$0x1]
  %v518 = vsel %vm309, 0, %v517
  %519 = vst [vmem:[#allocation2 + $0x22c] sm:$0x1] %v518
  %v520 = vld [vmem:[#allocation2 + $0x234] sm:$0x1]
  %v521 = vsel %vm309, 0, %v520
  %522 = vst [vmem:[#allocation2 + $0x234] sm:$0x1] %v521
  %v523 = vld [vmem:[#allocation2 + $0x23c] sm:$0x1]
  %v524 = vsel %vm309, 0, %v523
  %525 = vst [vmem:[#allocation2 + $0x23c] sm:$0x1] %v524
  %v526 = vld [vmem:[#allocation2 + $0x244] sm:$0x1]
  %v527 = vsel %vm309, 0, %v526
  %528 = vst [vmem:[#allocation2 + $0x244] sm:$0x1] %v527
  %v529 = vld [vmem:[#allocation2 + $0x24c] sm:$0x1]
  %v530 = vsel %vm309, 0, %v529
  %531 = vst [vmem:[#allocation2 + $0x24c] sm:$0x1] %v530
  %v532 = vld [vmem:[#allocation2 + $0x254] sm:$0x1]
  %v533 = vsel %vm309, 0, %v532
  %534 = vst [vmem:[#allocation2 + $0x254] sm:$0x1] %v533
  %v535 = vld [vmem:[#allocation2 + $0x25c] sm:$0x1]
  %v536 = vsel %vm309, 0, %v535
  %537 = vst [vmem:[#allocation2 + $0x25c] sm:$0x1] %v536
  %v538 = vld [vmem:[#allocation2 + $0x264] sm:$0x1]
  %v539 = vsel %vm309, 0, %v538
  %540 = vst [vmem:[#allocation2 + $0x264] sm:$0x1] %v539
  %v541 = vld [vmem:[#allocation2 + $0x26c] sm:$0x1]
  %v542 = vsel %vm309, 0, %v541
  %543 = vst [vmem:[#allocation2 + $0x26c] sm:$0x1] %v542
  %v544 = vld [vmem:[#allocation2 + $0x274] sm:$0x1]
  %v545 = vsel %vm309, 0, %v544
  %546 = vst [vmem:[#allocation2 + $0x274] sm:$0x1] %v545
  %v547 = vld [vmem:[#allocation2 + $0x27c] sm:$0x1]
  %v548 = vsel %vm309, 0, %v547
  %549 = vst [vmem:[#allocation2 + $0x27c] sm:$0x1] %v548
  %550 = vst [vmem:[#allocation4] sm:$0xf] 0
  %551 = vst [vmem:[#allocation4 + $0x4] sm:$0x1] 0
  %552 = vst [vmem:[#allocation4 + $0x50] sm:$0xf] 0
  %553 = vst [vmem:[#allocation4 + $0x54] sm:$0x1] 0
  %s554 = scalar_lea.vmem [#allocation4], 72
  %555 = vst [vmem:[%s554] sm:$0xf] 0
  %556 = vst [vmem:[%s554 + $0x4] sm:$0x1] 0
  %557 = vst [vmem:[%s554 + $0x50] sm:$0xf] 0
  %558 = vst [vmem:[%s554 + $0x54] sm:$0x1] 0
  %vm559 = vcmask 1040384
  %vm560 = vmand %vm559, %vm66
  %v561 = vld [vmem:[#allocation4] sm:$0x1]
  %v562 = vsel %vm560, 0, %v561
  %563 = vst [vmem:[#allocation4] sm:$0x1] %v562
  %v564 = vld [vmem:[#allocation4 + $0x8] sm:$0x1]
  %v565 = vsel %vm560, 0, %v564
  %566 = vst [vmem:[#allocation4 + $0x8] sm:$0x1] %v565
  %v567 = vld [vmem:[#allocation4 + $0x10] sm:$0x1]
  %v568 = vsel %vm560, 0, %v567
  %569 = vst [vmem:[#allocation4 + $0x10] sm:$0x1] %v568
  %v570 = vld [vmem:[#allocation4 + $0x18] sm:$0x1]
  %v571 = vsel %vm560, 0, %v570
  %572 = vst [vmem:[#allocation4 + $0x18] sm:$0x1] %v571
  %v573 = vld [vmem:[#allocation4 + $0x20] sm:$0x1]
  %v574 = vsel %vm560, 0, %v573
  %575 = vst [vmem:[#allocation4 + $0x20] sm:$0x1] %v574
  %v576 = vld [vmem:[#allocation4 + $0x28] sm:$0x1]
  %v577 = vsel %vm560, 0, %v576
  %578 = vst [vmem:[#allocation4 + $0x28] sm:$0x1] %v577
  %v579 = vld [vmem:[#allocation4 + $0x30] sm:$0x1]
  %v580 = vsel %vm560, 0, %v579
  %581 = vst [vmem:[#allocation4 + $0x30] sm:$0x1] %v580
  %v582 = vld [vmem:[#allocation4 + $0x38] sm:$0x1]
  %v583 = vsel %vm560, 0, %v582
  %584 = vst [vmem:[#allocation4 + $0x38] sm:$0x1] %v583
  %v585 = vld [vmem:[#allocation4 + $0x40] sm:$0x1]
  %v586 = vsel %vm560, 0, %v585
  %587 = vst [vmem:[#allocation4 + $0x40] sm:$0x1] %v586
  %v588 = vld [vmem:[#allocation4 + $0x48] sm:$0x1]
  %v589 = vsel %vm560, 0, %v588
  %590 = vst [vmem:[#allocation4 + $0x48] sm:$0x1] %v589
  %v591 = vld [vmem:[#allocation4 + $0x50] sm:$0x1]
  %v592 = vsel %vm560, 0, %v591
  %593 = vst [vmem:[#allocation4 + $0x50] sm:$0x1] %v592
  %v594 = vld [vmem:[#allocation4 + $0x58] sm:$0x1]
  %v595 = vsel %vm560, 0, %v594
  %596 = vst [vmem:[#allocation4 + $0x58] sm:$0x1] %v595
  %v597 = vld [vmem:[#allocation4 + $0x60] sm:$0x1]
  %v598 = vsel %vm560, 0, %v597
  %599 = vst [vmem:[#allocation4 + $0x60] sm:$0x1] %v598
  %v600 = vld [vmem:[#allocation4 + $0x68] sm:$0x1]
  %v601 = vsel %vm560, 0, %v600
  %602 = vst [vmem:[#allocation4 + $0x68] sm:$0x1] %v601
  %v603 = vld [vmem:[#allocation4 + $0x70] sm:$0x1]
  %v604 = vsel %vm560, 0, %v603
  %605 = vst [vmem:[#allocation4 + $0x70] sm:$0x1] %v604
  %v606 = vld [vmem:[#allocation4 + $0x78] sm:$0x1]
  %v607 = vsel %vm560, 0, %v606
  %608 = vst [vmem:[#allocation4 + $0x78] sm:$0x1] %v607
  %v609 = vld [vmem:[#allocation4 + $0x80] sm:$0x1]
  %v610 = vsel %vm560, 0, %v609
  %611 = vst [vmem:[#allocation4 + $0x80] sm:$0x1] %v610
  %v612 = vld [vmem:[#allocation4 + $0x88] sm:$0x1]
  %v613 = vsel %vm560, 0, %v612
  %614 = vst [vmem:[#allocation4 + $0x88] sm:$0x1] %v613
  %v615 = vld [vmem:[#allocation4 + $0x90] sm:$0x1]
  %v616 = vsel %vm560, 0, %v615
  %617 = vst [vmem:[#allocation4 + $0x90] sm:$0x1] %v616
  %v618 = vld [vmem:[#allocation4 + $0x98] sm:$0x1]
  %v619 = vsel %vm560, 0, %v618
  %620 = vst [vmem:[#allocation4 + $0x98] sm:$0x1] %v619
  %vm621 = vmand %vm559, %vm308
  %v622 = vld [vmem:[#allocation4 + $0x4] sm:$0x1]
  %v623 = vsel %vm621, 0, %v622
  %624 = vst [vmem:[#allocation4 + $0x4] sm:$0x1] %v623
  %v625 = vld [vmem:[#allocation4 + $0xc] sm:$0x1]
  %v626 = vsel %vm621, 0, %v625
  %627 = vst [vmem:[#allocation4 + $0xc] sm:$0x1] %v626
  %v628 = vld [vmem:[#allocation4 + $0x14] sm:$0x1]
  %v629 = vsel %vm621, 0, %v628
  %630 = vst [vmem:[#allocation4 + $0x14] sm:$0x1] %v629
  %v631 = vld [vmem:[#allocation4 + $0x1c] sm:$0x1]
  %v632 = vsel %vm621, 0, %v631
  %633 = vst [vmem:[#allocation4 + $0x1c] sm:$0x1] %v632
  %v634 = vld [vmem:[#allocation4 + $0x24] sm:$0x1]
  %v635 = vsel %vm621, 0, %v634
  %636 = vst [vmem:[#allocation4 + $0x24] sm:$0x1] %v635
  %v637 = vld [vmem:[#allocation4 + $0x2c] sm:$0x1]
  %v638 = vsel %vm621, 0, %v637
  %639 = vst [vmem:[#allocation4 + $0x2c] sm:$0x1] %v638
  %v640 = vld [vmem:[#allocation4 + $0x34] sm:$0x1]
  %v641 = vsel %vm621, 0, %v640
  %642 = vst [vmem:[#allocation4 + $0x34] sm:$0x1] %v641
  %v643 = vld [vmem:[#allocation4 + $0x3c] sm:$0x1]
  %v644 = vsel %vm621, 0, %v643
  %645 = vst [vmem:[#allocation4 + $0x3c] sm:$0x1] %v644
  %v646 = vld [vmem:[#allocation4 + $0x44] sm:$0x1]
  %v647 = vsel %vm621, 0, %v646
  %648 = vst [vmem:[#allocation4 + $0x44] sm:$0x1] %v647
  %v649 = vld [vmem:[#allocation4 + $0x4c] sm:$0x1]
  %v650 = vsel %vm621, 0, %v649
  %651 = vst [vmem:[#allocation4 + $0x4c] sm:$0x1] %v650
  %v652 = vld [vmem:[#allocation4 + $0x54] sm:$0x1]
  %v653 = vsel %vm621, 0, %v652
  %654 = vst [vmem:[#allocation4 + $0x54] sm:$0x1] %v653
  %v655 = vld [vmem:[#allocation4 + $0x5c] sm:$0x1]
  %v656 = vsel %vm621, 0, %v655
  %657 = vst [vmem:[#allocation4 + $0x5c] sm:$0x1] %v656
  %v658 = vld [vmem:[#allocation4 + $0x64] sm:$0x1]
  %v659 = vsel %vm621, 0, %v658
  %660 = vst [vmem:[#allocation4 + $0x64] sm:$0x1] %v659
  %v661 = vld [vmem:[#allocation4 + $0x6c] sm:$0x1]
  %v662 = vsel %vm621, 0, %v661
  %663 = vst [vmem:[#allocation4 + $0x6c] sm:$0x1] %v662
  %v664 = vld [vmem:[#allocation4 + $0x74] sm:$0x1]
  %v665 = vsel %vm621, 0, %v664
  %666 = vst [vmem:[#allocation4 + $0x74] sm:$0x1] %v665
  %v667 = vld [vmem:[#allocation4 + $0x7c] sm:$0x1]
  %v668 = vsel %vm621, 0, %v667
  %669 = vst [vmem:[#allocation4 + $0x7c] sm:$0x1] %v668
  %v670 = vld [vmem:[#allocation4 + $0x84] sm:$0x1]
  %v671 = vsel %vm621, 0, %v670
  %672 = vst [vmem:[#allocation4 + $0x84] sm:$0x1] %v671
  %v673 = vld [vmem:[#allocation4 + $0x8c] sm:$0x1]
  %v674 = vsel %vm621, 0, %v673
  %675 = vst [vmem:[#allocation4 + $0x8c] sm:$0x1] %v674
  %v676 = vld [vmem:[#allocation4 + $0x94] sm:$0x1]
  %v677 = vsel %vm621, 0, %v676
  %678 = vst [vmem:[#allocation4 + $0x94] sm:$0x1] %v677
  %v679 = vld [vmem:[#allocation4 + $0x9c] sm:$0x1]
  %v680 = vsel %vm621, 0, %v679
  %681 = vst [vmem:[#allocation4 + $0x9c] sm:$0x1] %v680
  %v682 = vld [vmem:[%s0] sm:$0xff]
  %v683 = vld [vmem:[%s0 + $0x8] sm:$0xff]
  %v684 = vld [vmem:[%s0 + $0x10] sm:$0xff]
  %v685 = vld [vmem:[%s0 + $0x18] sm:$0xff]
  %v686 = vld [vmem:[%s0 + $0x20] sm:$0xff]
  %v687 = vld [vmem:[%s0 + $0x28] sm:$0xff]
  %v688 = vld [vmem:[%s0 + $0x30] sm:$0xff]
  %v689 = vld [vmem:[%s0 + $0x38] sm:$0xff]
  %v690 = vld [vmem:[%s0 + $0x40] sm:$0xff]
  %v691 = vld [vmem:[%s0 + $0x48] sm:$0xff]
  %v692 = vld [vmem:[%s0 + $0x50] sm:$0xff]
  %v693 = vld [vmem:[%s0 + $0x58] sm:$0xff]
  %v694 = vld [vmem:[%s0 + $0x60] sm:$0xff]
  %v695 = vld [vmem:[%s0 + $0x68] sm:$0xff]
  %v696 = vld [vmem:[%s0 + $0x70] sm:$0xff]
  %v697 = vld [vmem:[%s0 + $0x78] sm:$0xff]
  %v698 = vld [vmem:[%s0 + $0x80] sm:$0xff]
  %v699 = vld [vmem:[%s0 + $0x88] sm:$0xff]
  %v700 = vld [vmem:[%s0 + $0x90] sm:$0xff]
  %v701 = vld [vmem:[%s0 + $0x98] sm:$0xff]
  %v702 = vld [vmem:[%s0 + $0xa0] sm:$0xff]
  %v703 = vld [vmem:[%s0 + $0xa8] sm:$0xff]
  %v704 = vld [vmem:[%s0 + $0xb0] sm:$0xff]
  %v705 = vld [vmem:[%s0 + $0xb8] sm:$0xff]
  %v706 = vld [vmem:[%s0 + $0xc0] sm:$0xff]
  %v707 = vld [vmem:[%s0 + $0xc8] sm:$0xff]
  %v708 = vld [vmem:[%s0 + $0xd0] sm:$0xff]
  %v709 = vld [vmem:[%s0 + $0xd8] sm:$0xff]
  %v710 = vld [vmem:[%s0 + $0xe0] sm:$0xff]
  %v711 = vld [vmem:[%s0 + $0xe8] sm:$0xff]
  %v712 = vld [vmem:[%s0 + $0xf0] sm:$0xff]
  %v713 = vld [vmem:[%s0 + $0xf8] sm:$0xff]
  %v714 = vld [vmem:[%s0 + $0x100] sm:$0xff]
  %v715 = vld [vmem:[%s0 + $0x108] sm:$0xff]
  %v716 = vld [vmem:[%s0 + $0x110] sm:$0xff]
  %v717 = vld [vmem:[%s0 + $0x118] sm:$0xff]
  %v718 = vld [vmem:[%s0 + $0x120] sm:$0xff]
  %v719 = vld [vmem:[%s0 + $0x128] sm:$0xff]
  %v720 = vld [vmem:[%s0 + $0x130] sm:$0xff]
  %v721 = vld [vmem:[%s0 + $0x138] sm:$0xff]
  %v722 = vld [vmem:[%s0 + $0x140] sm:$0xff]
  %v723 = vld [vmem:[%s0 + $0x148] sm:$0xff]
  %v724 = vld [vmem:[%s0 + $0x150] sm:$0xff]
  %v725 = vld [vmem:[%s0 + $0x158] sm:$0xff]
  %v726 = vld [vmem:[%s0 + $0x160] sm:$0xff]
  %v727 = vld [vmem:[%s0 + $0x168] sm:$0xff]
  %v728 = vld [vmem:[%s0 + $0x170] sm:$0xff]
  %v729 = vld [vmem:[%s0 + $0x178] sm:$0xff]
  %v730 = vld [vmem:[%s0 + $0x180] sm:$0xff]
  %v731 = vld [vmem:[%s0 + $0x188] sm:$0xff]
  %v732 = vld [vmem:[%s0 + $0x190] sm:$0xff]
  %v733 = vld [vmem:[%s0 + $0x198] sm:$0xff]
  %v734 = vld [vmem:[%s0 + $0x1a0] sm:$0xff]
  %v735 = vld [vmem:[%s0 + $0x1a8] sm:$0xff]
  %v736 = vld [vmem:[%s0 + $0x1b0] sm:$0xff]
  %v737 = vld [vmem:[%s0 + $0x1b8] sm:$0xff]
  %v738 = vld [vmem:[%s0 + $0x1c0] sm:$0xff]
  %v739 = vld [vmem:[%s0 + $0x1c8] sm:$0xff]
  %v740 = vld [vmem:[%s0 + $0x1d0] sm:$0xff]
  %v741 = vld [vmem:[%s0 + $0x1d8] sm:$0xff]
  %v742 = vld [vmem:[%s0 + $0x1e0] sm:$0xff]
  %v743 = vld [vmem:[%s0 + $0x1e8] sm:$0xff]
  %v744 = vld [vmem:[%s0 + $0x1f0] sm:$0xff]
  %v745 = vld [vmem:[%s0 + $0x1f8] sm:$0xff]
  %v746 = vld [vmem:[%s1] sm:$0x1]
  %v748 = vperm.slane %v746, 0
  %v750 = vmul.f32 %v682, %v748
  %v751 = vmul.f32 %v683, %v748
  %v752 = vmul.f32 %v684, %v748
  %v753 = vmul.f32 %v685, %v748
  %v754 = vmul.f32 %v686, %v748
  %v755 = vmul.f32 %v687, %v748
  %v756 = vmul.f32 %v688, %v748
  %v757 = vmul.f32 %v689, %v748
  %v758 = vmul.f32 %v690, %v748
  %v759 = vmul.f32 %v691, %v748
  %v760 = vmul.f32 %v692, %v748
  %v761 = vmul.f32 %v693, %v748
  %v762 = vmul.f32 %v694, %v748
  %v763 = vmul.f32 %v695, %v748
  %v764 = vmul.f32 %v696, %v748
  %v765 = vmul.f32 %v697, %v748
  %v766 = vmul.f32 %v698, %v748
  %v767 = vmul.f32 %v699, %v748
  %v768 = vmul.f32 %v700, %v748
  %v769 = vmul.f32 %v701, %v748
  %v770 = vmul.f32 %v702, %v748
  %v771 = vmul.f32 %v703, %v748
  %v772 = vmul.f32 %v704, %v748
  %v773 = vmul.f32 %v705, %v748
  %v774 = vmul.f32 %v706, %v748
  %v775 = vmul.f32 %v707, %v748
  %v776 = vmul.f32 %v708, %v748
  %v777 = vmul.f32 %v709, %v748
  %v778 = vmul.f32 %v710, %v748
  %v779 = vmul.f32 %v711, %v748
  %v780 = vmul.f32 %v712, %v748
  %v781 = vmul.f32 %v713, %v748
  %v782 = vmul.f32 %v714, %v748
  %v783 = vmul.f32 %v715, %v748
  %v784 = vmul.f32 %v716, %v748
  %v785 = vmul.f32 %v717, %v748
  %v786 = vmul.f32 %v718, %v748
  %v787 = vmul.f32 %v719, %v748
  %v788 = vmul.f32 %v720, %v748
  %v789 = vmul.f32 %v721, %v748
  %v790 = vmul.f32 %v722, %v748
  %v791 = vmul.f32 %v723, %v748
  %v792 = vmul.f32 %v724, %v748
  %v793 = vmul.f32 %v725, %v748
  %v794 = vmul.f32 %v726, %v748
  %v795 = vmul.f32 %v727, %v748
  %v796 = vmul.f32 %v728, %v748
  %v797 = vmul.f32 %v729, %v748
  %v798 = vmul.f32 %v730, %v748
  %v799 = vmul.f32 %v731, %v748
  %v800 = vmul.f32 %v732, %v748
  %v801 = vmul.f32 %v733, %v748
  %v802 = vmul.f32 %v734, %v748
  %v803 = vmul.f32 %v735, %v748
  %v804 = vmul.f32 %v736, %v748
  %v805 = vmul.f32 %v737, %v748
  %v806 = vmul.f32 %v738, %v748
  %v807 = vmul.f32 %v739, %v748
  %v808 = vmul.f32 %v740, %v748
  %v809 = vmul.f32 %v741, %v748
  %v810 = vmul.f32 %v742, %v748
  %v811 = vmul.f32 %v743, %v748
  %v812 = vmul.f32 %v744, %v748
  %v813 = vmul.f32 %v745, %v748
  %v814 = vld [vmem:[%s2] sm:$0x1]
  %v816 = vperm.slane %v814, 0
  %v818 = vadd.f32 %v750, %v816
  %v819 = vadd.f32 %v751, %v816
  %v820 = vadd.f32 %v752, %v816
  %v821 = vadd.f32 %v753, %v816
  %v822 = vadd.f32 %v754, %v816
  %v823 = vadd.f32 %v755, %v816
  %v824 = vadd.f32 %v756, %v816
  %v825 = vadd.f32 %v757, %v816
  %v826 = vadd.f32 %v758, %v816
  %v827 = vadd.f32 %v759, %v816
  %v828 = vadd.f32 %v760, %v816
  %v829 = vadd.f32 %v761, %v816
  %v830 = vadd.f32 %v762, %v816
  %v831 = vadd.f32 %v763, %v816
  %v832 = vadd.f32 %v764, %v816
  %v833 = vadd.f32 %v765, %v816
  %v834 = vadd.f32 %v766, %v816
  %v835 = vadd.f32 %v767, %v816
  %v836 = vadd.f32 %v768, %v816
  %v837 = vadd.f32 %v769, %v816
  %v838 = vadd.f32 %v770, %v816
  %v839 = vadd.f32 %v771, %v816
  %v840 = vadd.f32 %v772, %v816
  %v841 = vadd.f32 %v773, %v816
  %v842 = vadd.f32 %v774, %v816
  %v843 = vadd.f32 %v775, %v816
  %v844 = vadd.f32 %v776, %v816
  %v845 = vadd.f32 %v777, %v816
  %v846 = vadd.f32 %v778, %v816
  %v847 = vadd.f32 %v779, %v816
  %v848 = vadd.f32 %v780, %v816
  %v849 = vadd.f32 %v781, %v816
  %v850 = vadd.f32 %v782, %v816
  %v851 = vadd.f32 %v783, %v816
  %v852 = vadd.f32 %v784, %v816
  %v853 = vadd.f32 %v785, %v816
  %v854 = vadd.f32 %v786, %v816
  %v855 = vadd.f32 %v787, %v816
  %v856 = vadd.f32 %v788, %v816
  %v857 = vadd.f32 %v789, %v816
  %v858 = vadd.f32 %v790, %v816
  %v859 = vadd.f32 %v791, %v816
  %v860 = vadd.f32 %v792, %v816
  %v861 = vadd.f32 %v793, %v816
  %v862 = vadd.f32 %v794, %v816
  %v863 = vadd.f32 %v795, %v816
  %v864 = vadd.f32 %v796, %v816
  %v865 = vadd.f32 %v797, %v816
  %v866 = vadd.f32 %v798, %v816
  %v867 = vadd.f32 %v799, %v816
  %v868 = vadd.f32 %v800, %v816
  %v869 = vadd.f32 %v801, %v816
  %v870 = vadd.f32 %v802, %v816
  %v871 = vadd.f32 %v803, %v816
  %v872 = vadd.f32 %v804, %v816
  %v873 = vadd.f32 %v805, %v816
  %v874 = vadd.f32 %v806, %v816
  %v875 = vadd.f32 %v807, %v816
  %v876 = vadd.f32 %v808, %v816
  %v877 = vadd.f32 %v809, %v816
  %v878 = vadd.f32 %v810, %v816
  %v879 = vadd.f32 %v811, %v816
  %v880 = vadd.f32 %v812, %v816
  %v881 = vadd.f32 %v813, %v816
  %v882 = vmax.f32 %v818, 0.0
  %v883 = vmax.f32 %v819, 0.0
  %v884 = vmax.f32 %v820, 0.0
  %v885 = vmax.f32 %v821, 0.0
  %v886 = vmax.f32 %v822, 0.0
  %v887 = vmax.f32 %v823, 0.0
  %v888 = vmax.f32 %v824, 0.0
  %v889 = vmax.f32 %v825, 0.0
  %v890 = vmax.f32 %v826, 0.0
  %v891 = vmax.f32 %v827, 0.0
  %v892 = vmax.f32 %v828, 0.0
  %v893 = vmax.f32 %v829, 0.0
  %v894 = vmax.f32 %v830, 0.0
  %v895 = vmax.f32 %v831, 0.0
  %v896 = vmax.f32 %v832, 0.0
  %v897 = vmax.f32 %v833, 0.0
  %v898 = vmax.f32 %v834, 0.0
  %v899 = vmax.f32 %v835, 0.0
  %v900 = vmax.f32 %v836, 0.0
  %v901 = vmax.f32 %v837, 0.0
  %v902 = vmax.f32 %v838, 0.0
  %v903 = vmax.f32 %v839, 0.0
  %v904 = vmax.f32 %v840, 0.0
  %v905 = vmax.f32 %v841, 0.0
  %v906 = vmax.f32 %v842, 0.0
  %v907 = vmax.f32 %v843, 0.0
  %v908 = vmax.f32 %v844, 0.0
  %v909 = vmax.f32 %v845, 0.0
  %v910 = vmax.f32 %v846, 0.0
  %v911 = vmax.f32 %v847, 0.0
  %v912 = vmax.f32 %v848, 0.0
  %v913 = vmax.f32 %v849, 0.0
  %v914 = vmax.f32 %v850, 0.0
  %v915 = vmax.f32 %v851, 0.0
  %v916 = vmax.f32 %v852, 0.0
  %v917 = vmax.f32 %v853, 0.0
  %v918 = vmax.f32 %v854, 0.0
  %v919 = vmax.f32 %v855, 0.0
  %v920 = vmax.f32 %v856, 0.0
  %v921 = vmax.f32 %v857, 0.0
  %v922 = vmax.f32 %v858, 0.0
  %v923 = vmax.f32 %v859, 0.0
  %v924 = vmax.f32 %v860, 0.0
  %v925 = vmax.f32 %v861, 0.0
  %v926 = vmax.f32 %v862, 0.0
  %v927 = vmax.f32 %v863, 0.0
  %v928 = vmax.f32 %v864, 0.0
  %v929 = vmax.f32 %v865, 0.0
  %v930 = vmax.f32 %v866, 0.0
  %v931 = vmax.f32 %v867, 0.0
  %v932 = vmax.f32 %v868, 0.0
  %v933 = vmax.f32 %v869, 0.0
  %v934 = vmax.f32 %v870, 0.0
  %v935 = vmax.f32 %v871, 0.0
  %v936 = vmax.f32 %v872, 0.0
  %v937 = vmax.f32 %v873, 0.0
  %v938 = vmax.f32 %v874, 0.0
  %v939 = vmax.f32 %v875, 0.0
  %v940 = vmax.f32 %v876, 0.0
  %v941 = vmax.f32 %v877, 0.0
  %v942 = vmax.f32 %v878, 0.0
  %v943 = vmax.f32 %v879, 0.0
  %v944 = vmax.f32 %v880, 0.0
  %v945 = vmax.f32 %v881, 0.0
  %v946 = vpack.c.bf16 %v882, %v882
  %v947 = vpack.c.bf16 %v883, %v883
  %v948 = vpack.c.bf16 %v884, %v884
  %v949 = vpack.c.bf16 %v885, %v885
  %v950 = vpack.c.bf16 %v886, %v886
  %v951 = vpack.c.bf16 %v887, %v887
  %v952 = vpack.c.bf16 %v888, %v888
  %v953 = vpack.c.bf16 %v889, %v889
  %v954 = vpack.c.bf16 %v890, %v890
  %v955 = vpack.c.bf16 %v891, %v891
  %v956 = vpack.c.bf16 %v892, %v892
  %v957 = vpack.c.bf16 %v893, %v893
  %v958 = vpack.c.bf16 %v894, %v894
  %v959 = vpack.c.bf16 %v895, %v895
  %v960 = vpack.c.bf16 %v896, %v896
  %v961 = vpack.c.bf16 %v897, %v897
  %v962 = vpack.c.bf16 %v898, %v898
  %v963 = vpack.c.bf16 %v899, %v899
  %v964 = vpack.c.bf16 %v900, %v900
  %v965 = vpack.c.bf16 %v901, %v901
  %v966 = vpack.c.bf16 %v902, %v902
  %v967 = vpack.c.bf16 %v903, %v903
  %v968 = vpack.c.bf16 %v904, %v904
  %v969 = vpack.c.bf16 %v905, %v905
  %v970 = vpack.c.bf16 %v906, %v906
  %v971 = vpack.c.bf16 %v907, %v907
  %v972 = vpack.c.bf16 %v908, %v908
  %v973 = vpack.c.bf16 %v909, %v909
  %v974 = vpack.c.bf16 %v910, %v910
  %v975 = vpack.c.bf16 %v911, %v911
  %v976 = vpack.c.bf16 %v912, %v912
  %v977 = vpack.c.bf16 %v913, %v913
  %v978 = vpack.c.bf16 %v914, %v914
  %v979 = vpack.c.bf16 %v915, %v915
  %v980 = vpack.c.bf16 %v916, %v916
  %v981 = vpack.c.bf16 %v917, %v917
  %v982 = vpack.c.bf16 %v918, %v918
  %v983 = vpack.c.bf16 %v919, %v919
  %v984 = vpack.c.bf16 %v920, %v920
  %v985 = vpack.c.bf16 %v921, %v921
  %v986 = vpack.c.bf16 %v922, %v922
  %v987 = vpack.c.bf16 %v923, %v923
  %v988 = vpack.c.bf16 %v924, %v924
  %v989 = vpack.c.bf16 %v925, %v925
  %v990 = vpack.c.bf16 %v926, %v926
  %v991 = vpack.c.bf16 %v927, %v927
  %v992 = vpack.c.bf16 %v928, %v928
  %v993 = vpack.c.bf16 %v929, %v929
  %v994 = vpack.c.bf16 %v930, %v930
  %v995 = vpack.c.bf16 %v931, %v931
  %v996 = vpack.c.bf16 %v932, %v932
  %v997 = vpack.c.bf16 %v933, %v933
  %v998 = vpack.c.bf16 %v934, %v934
  %v999 = vpack.c.bf16 %v935, %v935
  %v1000 = vpack.c.bf16 %v936, %v936
  %v1001 = vpack.c.bf16 %v937, %v937
  %v1002 = vpack.c.bf16 %v938, %v938
  %v1003 = vpack.c.bf16 %v939, %v939
  %v1004 = vpack.c.bf16 %v940, %v940
  %v1005 = vpack.c.bf16 %v941, %v941
  %v1006 = vpack.c.bf16 %v942, %v942
  %v1007 = vpack.c.bf16 %v943, %v943
  %v1008 = vpack.c.bf16 %v944, %v944
  %v1009 = vpack.c.bf16 %v945, %v945
  %v1011 = vshrl.u32 %v946, 16
  %v1013 = vrot.slane %v1011, 7
  %v1014 = vshll.u32 %v946, 16
  %v1016 = vor.u32 %v1013, %v1014
  %v1017 = vrot.slane %v1013, 4
  %v1019 = vshrl.u32 %v947, 16
  %v1021 = vrot.slane %v1019, 7
  %v1022 = vshll.u32 %v947, 16
  %v1024 = vor.u32 %v1021, %v1022
  %v1025 = vrot.slane %v1021, 4
  %v1027 = vshrl.u32 %v948, 16
  %v1029 = vrot.slane %v1027, 7
  %v1030 = vshll.u32 %v948, 16
  %v1032 = vor.u32 %v1029, %v1030
  %v1033 = vrot.slane %v1029, 4
  %v1035 = vshrl.u32 %v949, 16
  %v1037 = vrot.slane %v1035, 7
  %v1038 = vshll.u32 %v949, 16
  %v1040 = vor.u32 %v1037, %v1038
  %v1041 = vrot.slane %v1037, 4
  %v1043 = vshrl.u32 %v950, 16
  %v1045 = vrot.slane %v1043, 7
  %v1046 = vshll.u32 %v950, 16
  %v1048 = vor.u32 %v1045, %v1046
  %v1049 = vrot.slane %v1045, 4
  %v1051 = vshrl.u32 %v951, 16
  %v1053 = vrot.slane %v1051, 7
  %v1054 = vshll.u32 %v951, 16
  %v1056 = vor.u32 %v1053, %v1054
  %v1057 = vrot.slane %v1053, 4
  %v1059 = vshrl.u32 %v952, 16
  %v1061 = vrot.slane %v1059, 7
  %v1062 = vshll.u32 %v952, 16
  %v1064 = vor.u32 %v1061, %v1062
  %v1065 = vrot.slane %v1061, 4
  %v1067 = vshrl.u32 %v953, 16
  %v1069 = vrot.slane %v1067, 7
  %v1070 = vshll.u32 %v953, 16
  %v1072 = vor.u32 %v1069, %v1070
  %v1073 = vrot.slane %v1069, 4
  %v1075 = vshrl.u32 %v954, 16
  %v1077 = vrot.slane %v1075, 7
  %v1078 = vshll.u32 %v954, 16
  %v1080 = vor.u32 %v1077, %v1078
  %v1081 = vrot.slane %v1077, 4
  %v1083 = vshrl.u32 %v955, 16
  %v1085 = vrot.slane %v1083, 7
  %v1086 = vshll.u32 %v955, 16
  %v1088 = vor.u32 %v1085, %v1086
  %v1089 = vrot.slane %v1085, 4
  %v1091 = vshrl.u32 %v956, 16
  %v1093 = vrot.slane %v1091, 7
  %v1094 = vshll.u32 %v956, 16
  %v1096 = vor.u32 %v1093, %v1094
  %v1097 = vrot.slane %v1093, 4
  %v1099 = vshrl.u32 %v957, 16
  %v1101 = vrot.slane %v1099, 7
  %v1102 = vshll.u32 %v957, 16
  %v1104 = vor.u32 %v1101, %v1102
  %v1105 = vrot.slane %v1101, 4
  %v1107 = vshrl.u32 %v958, 16
  %v1109 = vrot.slane %v1107, 7
  %v1110 = vshll.u32 %v958, 16
  %v1112 = vor.u32 %v1109, %v1110
  %v1113 = vrot.slane %v1109, 4
  %v1115 = vshrl.u32 %v959, 16
  %v1117 = vrot.slane %v1115, 7
  %v1118 = vshll.u32 %v959, 16
  %v1120 = vor.u32 %v1117, %v1118
  %v1121 = vrot.slane %v1117, 4
  %v1123 = vshrl.u32 %v960, 16
  %v1125 = vrot.slane %v1123, 7
  %v1126 = vshll.u32 %v960, 16
  %v1128 = vor.u32 %v1125, %v1126
  %v1129 = vrot.slane %v1125, 4
  %v1131 = vshrl.u32 %v961, 16
  %v1133 = vrot.slane %v1131, 7
  %v1134 = vshll.u32 %v961, 16
  %v1136 = vor.u32 %v1133, %v1134
  %v1137 = vrot.slane %v1133, 4
  %v1139 = vshrl.u32 %v962, 16
  %v1141 = vrot.slane %v1139, 7
  %v1142 = vshll.u32 %v962, 16
  %v1144 = vor.u32 %v1141, %v1142
  %v1145 = vrot.slane %v1141, 4
  %v1147 = vshrl.u32 %v963, 16
  %v1149 = vrot.slane %v1147, 7
  %v1150 = vshll.u32 %v963, 16
  %v1152 = vor.u32 %v1149, %v1150
  %v1153 = vrot.slane %v1149, 4
  %v1155 = vshrl.u32 %v964, 16
  %v1157 = vrot.slane %v1155, 7
  %v1158 = vshll.u32 %v964, 16
  %v1160 = vor.u32 %v1157, %v1158
  %v1161 = vrot.slane %v1157, 4
  %v1163 = vshrl.u32 %v965, 16
  %v1165 = vrot.slane %v1163, 7
  %v1166 = vshll.u32 %v965, 16
  %v1168 = vor.u32 %v1165, %v1166
  %v1169 = vrot.slane %v1165, 4
  %v1171 = vshrl.u32 %v966, 16
  %v1173 = vrot.slane %v1171, 7
  %v1174 = vshll.u32 %v966, 16
  %v1176 = vor.u32 %v1173, %v1174
  %v1177 = vrot.slane %v1173, 4
  %v1179 = vshrl.u32 %v967, 16
  %v1181 = vrot.slane %v1179, 7
  %v1182 = vshll.u32 %v967, 16
  %v1184 = vor.u32 %v1181, %v1182
  %v1185 = vrot.slane %v1181, 4
  %v1187 = vshrl.u32 %v968, 16
  %v1189 = vrot.slane %v1187, 7
  %v1190 = vshll.u32 %v968, 16
  %v1192 = vor.u32 %v1189, %v1190
  %v1193 = vrot.slane %v1189, 4
  %v1195 = vshrl.u32 %v969, 16
  %v1197 = vrot.slane %v1195, 7
  %v1198 = vshll.u32 %v969, 16
  %v1200 = vor.u32 %v1197, %v1198
  %v1201 = vrot.slane %v1197, 4
  %v1203 = vshrl.u32 %v970, 16
  %v1205 = vrot.slane %v1203, 7
  %v1206 = vshll.u32 %v970, 16
  %v1208 = vor.u32 %v1205, %v1206
  %v1209 = vrot.slane %v1205, 4
  %v1211 = vshrl.u32 %v971, 16
  %v1213 = vrot.slane %v1211, 7
  %v1214 = vshll.u32 %v971, 16
  %v1216 = vor.u32 %v1213, %v1214
  %v1217 = vrot.slane %v1213, 4
  %v1219 = vshrl.u32 %v972, 16
  %v1221 = vrot.slane %v1219, 7
  %v1222 = vshll.u32 %v972, 16
  %v1224 = vor.u32 %v1221, %v1222
  %v1225 = vrot.slane %v1221, 4
  %v1227 = vshrl.u32 %v973, 16
  %v1229 = vrot.slane %v1227, 7
  %v1230 = vshll.u32 %v973, 16
  %v1232 = vor.u32 %v1229, %v1230
  %v1233 = vrot.slane %v1229, 4
  %v1235 = vshrl.u32 %v974, 16
  %v1237 = vrot.slane %v1235, 7
  %v1238 = vshll.u32 %v974, 16
  %v1240 = vor.u32 %v1237, %v1238
  %v1241 = vrot.slane %v1237, 4
  %v1243 = vshrl.u32 %v975, 16
  %v1245 = vrot.slane %v1243, 7
  %v1246 = vshll.u32 %v975, 16
  %v1248 = vor.u32 %v1245, %v1246
  %v1249 = vrot.slane %v1245, 4
  %v1251 = vshrl.u32 %v976, 16
  %v1253 = vrot.slane %v1251, 7
  %v1254 = vshll.u32 %v976, 16
  %v1256 = vor.u32 %v1253, %v1254
  %v1257 = vrot.slane %v1253, 4
  %v1259 = vshrl.u32 %v977, 16
  %v1261 = vrot.slane %v1259, 7
  %v1262 = vshll.u32 %v977, 16
  %v1264 = vor.u32 %v1261, %v1262
  %v1265 = vrot.slane %v1261, 4
  %v1267 = vshrl.u32 %v978, 16
  %v1269 = vrot.slane %v1267, 7
  %v1270 = vshll.u32 %v978, 16
  %v1272 = vor.u32 %v1269, %v1270
  %v1273 = vrot.slane %v1269, 4
  %v1275 = vshrl.u32 %v979, 16
  %v1277 = vrot.slane %v1275, 7
  %v1278 = vshll.u32 %v979, 16
  %v1280 = vor.u32 %v1277, %v1278
  %v1281 = vrot.slane %v1277, 4
  %v1283 = vshrl.u32 %v980, 16
  %v1285 = vrot.slane %v1283, 7
  %v1286 = vshll.u32 %v980, 16
  %v1288 = vor.u32 %v1285, %v1286
  %v1289 = vrot.slane %v1285, 4
  %v1291 = vshrl.u32 %v981, 16
  %v1293 = vrot.slane %v1291, 7
  %v1294 = vshll.u32 %v981, 16
  %v1296 = vor.u32 %v1293, %v1294
  %v1297 = vrot.slane %v1293, 4
  %v1299 = vshrl.u32 %v982, 16
  %v1301 = vrot.slane %v1299, 7
  %v1302 = vshll.u32 %v982, 16
  %v1304 = vor.u32 %v1301, %v1302
  %v1305 = vrot.slane %v1301, 4
  %v1307 = vshrl.u32 %v983, 16
  %v1309 = vrot.slane %v1307, 7
  %v1310 = vshll.u32 %v983, 16
  %v1312 = vor.u32 %v1309, %v1310
  %v1313 = vrot.slane %v1309, 4
  %v1315 = vshrl.u32 %v984, 16
  %v1317 = vrot.slane %v1315, 7
  %v1318 = vshll.u32 %v984, 16
  %v1320 = vor.u32 %v1317, %v1318
  %v1321 = vrot.slane %v1317, 4
  %v1323 = vshrl.u32 %v985, 16
  %v1325 = vrot.slane %v1323, 7
  %v1326 = vshll.u32 %v985, 16
  %v1328 = vor.u32 %v1325, %v1326
  %v1329 = vrot.slane %v1325, 4
  %v1331 = vshrl.u32 %v986, 16
  %v1333 = vrot.slane %v1331, 7
  %v1334 = vshll.u32 %v986, 16
  %v1336 = vor.u32 %v1333, %v1334
  %v1337 = vrot.slane %v1333, 4
  %v1339 = vshrl.u32 %v987, 16
  %v1341 = vrot.slane %v1339, 7
  %v1342 = vshll.u32 %v987, 16
  %v1344 = vor.u32 %v1341, %v1342
  %v1345 = vrot.slane %v1341, 4
  %v1347 = vshrl.u32 %v988, 16
  %v1349 = vrot.slane %v1347, 7
  %v1350 = vshll.u32 %v988, 16
  %v1352 = vor.u32 %v1349, %v1350
  %v1353 = vrot.slane %v1349, 4
  %v1355 = vshrl.u32 %v989, 16
  %v1357 = vrot.slane %v1355, 7
  %v1358 = vshll.u32 %v989, 16
  %v1360 = vor.u32 %v1357, %v1358
  %v1361 = vrot.slane %v1357, 4
  %v1363 = vshrl.u32 %v990, 16
  %v1365 = vrot.slane %v1363, 7
  %v1366 = vshll.u32 %v990, 16
  %v1368 = vor.u32 %v1365, %v1366
  %v1369 = vrot.slane %v1365, 4
  %v1371 = vshrl.u32 %v991, 16
  %v1373 = vrot.slane %v1371, 7
  %v1374 = vshll.u32 %v991, 16
  %v1376 = vor.u32 %v1373, %v1374
  %v1377 = vrot.slane %v1373, 4
  %v1379 = vshrl.u32 %v992, 16
  %v1381 = vrot.slane %v1379, 7
  %v1382 = vshll.u32 %v992, 16
  %v1384 = vor.u32 %v1381, %v1382
  %v1385 = vrot.slane %v1381, 4
  %v1387 = vshrl.u32 %v993, 16
  %v1389 = vrot.slane %v1387, 7
  %v1390 = vshll.u32 %v993, 16
  %v1392 = vor.u32 %v1389, %v1390
  %v1393 = vrot.slane %v1389, 4
  %v1395 = vshrl.u32 %v994, 16
  %v1397 = vrot.slane %v1395, 7
  %v1398 = vshll.u32 %v994, 16
  %v1400 = vor.u32 %v1397, %v1398
  %v1401 = vrot.slane %v1397, 4
  %v1403 = vshrl.u32 %v995, 16
  %v1405 = vrot.slane %v1403, 7
  %v1406 = vshll.u32 %v995, 16
  %v1408 = vor.u32 %v1405, %v1406
  %v1409 = vrot.slane %v1405, 4
  %v1411 = vshrl.u32 %v996, 16
  %v1413 = vrot.slane %v1411, 7
  %v1414 = vshll.u32 %v996, 16
  %v1416 = vor.u32 %v1413, %v1414
  %v1417 = vrot.slane %v1413, 4
  %v1419 = vshrl.u32 %v997, 16
  %v1421 = vrot.slane %v1419, 7
  %v1422 = vshll.u32 %v997, 16
  %v1424 = vor.u32 %v1421, %v1422
  %v1425 = vrot.slane %v1421, 4
  %v1427 = vshrl.u32 %v998, 16
  %v1429 = vrot.slane %v1427, 7
  %v1430 = vshll.u32 %v998, 16
  %v1432 = vor.u32 %v1429, %v1430
  %v1433 = vrot.slane %v1429, 4
  %v1435 = vshrl.u32 %v999, 16
  %v1437 = vrot.slane %v1435, 7
  %v1438 = vshll.u32 %v999, 16
  %v1440 = vor.u32 %v1437, %v1438
  %v1441 = vrot.slane %v1437, 4
  %v1443 = vshrl.u32 %v1000, 16
  %v1445 = vrot.slane %v1443, 7
  %v1446 = vshll.u32 %v1000, 16
  %v1448 = vor.u32 %v1445, %v1446
  %v1449 = vrot.slane %v1445, 4
  %v1451 = vshrl.u32 %v1001, 16
  %v1453 = vrot.slane %v1451, 7
  %v1454 = vshll.u32 %v1001, 16
  %v1456 = vor.u32 %v1453, %v1454
  %v1457 = vrot.slane %v1453, 4
  %v1459 = vshrl.u32 %v1002, 16
  %v1461 = vrot.slane %v1459, 7
  %v1462 = vshll.u32 %v1002, 16
  %v1464 = vor.u32 %v1461, %v1462
  %v1465 = vrot.slane %v1461, 4
  %v1467 = vshrl.u32 %v1003, 16
  %v1469 = vrot.slane %v1467, 7
  %v1470 = vshll.u32 %v1003, 16
  %v1472 = vor.u32 %v1469, %v1470
  %v1473 = vrot.slane %v1469, 4
  %v1475 = vshrl.u32 %v1004, 16
  %v1477 = vrot.slane %v1475, 7
  %v1478 = vshll.u32 %v1004, 16
  %v1480 = vor.u32 %v1477, %v1478
  %v1481 = vrot.slane %v1477, 4
  %v1483 = vshrl.u32 %v1005, 16
  %v1485 = vrot.slane %v1483, 7
  %v1486 = vshll.u32 %v1005, 16
  %v1488 = vor.u32 %v1485, %v1486
  %v1489 = vrot.slane %v1485, 4
  %v1491 = vshrl.u32 %v1006, 16
  %v1493 = vrot.slane %v1491, 7
  %v1494 = vshll.u32 %v1006, 16
  %v1496 = vor.u32 %v1493, %v1494
  %v1497 = vrot.slane %v1493, 4
  %v1499 = vshrl.u32 %v1007, 16
  %v1501 = vrot.slane %v1499, 7
  %v1502 = vshll.u32 %v1007, 16
  %v1504 = vor.u32 %v1501, %v1502
  %v1505 = vrot.slane %v1501, 4
  %v1507 = vshrl.u32 %v1008, 16
  %v1509 = vrot.slane %v1507, 7
  %v1510 = vshll.u32 %v1008, 16
  %v1512 = vor.u32 %v1509, %v1510
  %v1513 = vrot.slane %v1509, 4
  %v1515 = vshrl.u32 %v1009, 16
  %v1517 = vrot.slane %v1515, 7
  %v1518 = vshll.u32 %v1009, 16
  %v1520 = vor.u32 %v1517, %v1518
  %v1521 = vrot.slane %v1517, 4
  %s1650 = scalar_lea.vmem [#allocation2], 8
  %vm1651 = vcmask 27648
  %vm1652 = vmand %vm1651, %vm308
  %v1653 = vld [vmem:[%s1650] sm:$0xf]
  %v1654 = vsel %vm1652, %v1016, %v1653
  %1655 = vst [vmem:[%s1650] sm:$0xf] %v1654
  %v1656 = vld [vmem:[%s1650 + $0x4] sm:$0x1]
  %v1657 = vsel %vm67, %v1017, %v1656
  %1658 = vst [vmem:[%s1650 + $0x4] sm:$0x1] %v1657
  %v1659 = vld [vmem:[%s1650 + $0x8] sm:$0xf]
  %v1660 = vsel %vm1652, %v1024, %v1659
  %1661 = vst [vmem:[%s1650 + $0x8] sm:$0xf] %v1660
  %v1662 = vld [vmem:[%s1650 + $0xc] sm:$0x1]
  %v1663 = vsel %vm67, %v1025, %v1662
  %1664 = vst [vmem:[%s1650 + $0xc] sm:$0x1] %v1663
  %v1665 = vld [vmem:[%s1650 + $0x10] sm:$0xf]
  %v1666 = vsel %vm1652, %v1032, %v1665
  %1667 = vst [vmem:[%s1650 + $0x10] sm:$0xf] %v1666
  %v1668 = vld [vmem:[%s1650 + $0x14] sm:$0x1]
  %v1669 = vsel %vm67, %v1033, %v1668
  %1670 = vst [vmem:[%s1650 + $0x14] sm:$0x1] %v1669
  %v1671 = vld [vmem:[%s1650 + $0x18] sm:$0xf]
  %v1672 = vsel %vm1652, %v1040, %v1671
  %1673 = vst [vmem:[%s1650 + $0x18] sm:$0xf] %v1672
  %v1674 = vld [vmem:[%s1650 + $0x1c] sm:$0x1]
  %v1675 = vsel %vm67, %v1041, %v1674
  %1676 = vst [vmem:[%s1650 + $0x1c] sm:$0x1] %v1675
  %v1677 = vld [vmem:[%s1650 + $0x20] sm:$0xf]
  %v1678 = vsel %vm1652, %v1048, %v1677
  %1679 = vst [vmem:[%s1650 + $0x20] sm:$0xf] %v1678
  %v1680 = vld [vmem:[%s1650 + $0x24] sm:$0x1]
  %v1681 = vsel %vm67, %v1049, %v1680
  %1682 = vst [vmem:[%s1650 + $0x24] sm:$0x1] %v1681
  %v1683 = vld [vmem:[%s1650 + $0x28] sm:$0xf]
  %v1684 = vsel %vm1652, %v1056, %v1683
  %1685 = vst [vmem:[%s1650 + $0x28] sm:$0xf] %v1684
  %v1686 = vld [vmem:[%s1650 + $0x2c] sm:$0x1]
  %v1687 = vsel %vm67, %v1057, %v1686
  %1688 = vst [vmem:[%s1650 + $0x2c] sm:$0x1] %v1687
  %v1689 = vld [vmem:[%s1650 + $0x30] sm:$0xf]
  %v1690 = vsel %vm1652, %v1064, %v1689
  %1691 = vst [vmem:[%s1650 + $0x30] sm:$0xf] %v1690
  %v1692 = vld [vmem:[%s1650 + $0x34] sm:$0x1]
  %v1693 = vsel %vm67, %v1065, %v1692
  %1694 = vst [vmem:[%s1650 + $0x34] sm:$0x1] %v1693
  %v1695 = vld [vmem:[%s1650 + $0x38] sm:$0xf]
  %v1696 = vsel %vm1652, %v1072, %v1695
  %1697 = vst [vmem:[%s1650 + $0x38] sm:$0xf] %v1696
  %v1698 = vld [vmem:[%s1650 + $0x3c] sm:$0x1]
  %v1699 = vsel %vm67, %v1073, %v1698
  %1700 = vst [vmem:[%s1650 + $0x3c] sm:$0x1] %v1699
  %v1701 = vld [vmem:[%s1650 + $0x50] sm:$0xf]
  %v1702 = vsel %vm1652, %v1080, %v1701
  %1703 = vst [vmem:[%s1650 + $0x50] sm:$0xf] %v1702
  %v1704 = vld [vmem:[%s1650 + $0x54] sm:$0x1]
  %v1705 = vsel %vm67, %v1081, %v1704
  %1706 = vst [vmem:[%s1650 + $0x54] sm:$0x1] %v1705
  %v1707 = vld [vmem:[%s1650 + $0x58] sm:$0xf]
  %v1708 = vsel %vm1652, %v1088, %v1707
  %1709 = vst [vmem:[%s1650 + $0x58] sm:$0xf] %v1708
  %v1710 = vld [vmem:[%s1650 + $0x5c] sm:$0x1]
  %v1711 = vsel %vm67, %v1089, %v1710
  %1712 = vst [vmem:[%s1650 + $0x5c] sm:$0x1] %v1711
  %v1713 = vld [vmem:[%s1650 + $0x60] sm:$0xf]
  %v1714 = vsel %vm1652, %v1096, %v1713
  %1715 = vst [vmem:[%s1650 + $0x60] sm:$0xf] %v1714
  %v1716 = vld [vmem:[%s1650 + $0x64] sm:$0x1]
  %v1717 = vsel %vm67, %v1097, %v1716
  %1718 = vst [vmem:[%s1650 + $0x64] sm:$0x1] %v1717
  %v1719 = vld [vmem:[%s1650 + $0x68] sm:$0xf]
  %v1720 = vsel %vm1652, %v1104, %v1719
  %1721 = vst [vmem:[%s1650 + $0x68] sm:$0xf] %v1720
  %v1722 = vld [vmem:[%s1650 + $0x6c] sm:$0x1]
  %v1723 = vsel %vm67, %v1105, %v1722
  %1724 = vst [vmem:[%s1650 + $0x6c] sm:$0x1] %v1723
  %v1725 = vld [vmem:[%s1650 + $0x70] sm:$0xf]
  %v1726 = vsel %vm1652, %v1112, %v1725
  %1727 = vst [vmem:[%s1650 + $0x70] sm:$0xf] %v1726
  %v1728 = vld [vmem:[%s1650 + $0x74] sm:$0x1]
  %v1729 = vsel %vm67, %v1113, %v1728
  %1730 = vst [vmem:[%s1650 + $0x74] sm:$0x1] %v1729
  %v1731 = vld [vmem:[%s1650 + $0x78] sm:$0xf]
  %v1732 = vsel %vm1652, %v1120, %v1731
  %1733 = vst [vmem:[%s1650 + $0x78] sm:$0xf] %v1732
  %v1734 = vld [vmem:[%s1650 + $0x7c] sm:$0x1]
  %v1735 = vsel %vm67, %v1121, %v1734
  %1736 = vst [vmem:[%s1650 + $0x7c] sm:$0x1] %v1735
  %v1737 = vld [vmem:[%s1650 + $0x80] sm:$0xf]
  %v1738 = vsel %vm1652, %v1128, %v1737
  %1739 = vst [vmem:[%s1650 + $0x80] sm:$0xf] %v1738
  %v1740 = vld [vmem:[%s1650 + $0x84] sm:$0x1]
  %v1741 = vsel %vm67, %v1129, %v1740
  %1742 = vst [vmem:[%s1650 + $0x84] sm:$0x1] %v1741
  %v1743 = vld [vmem:[%s1650 + $0x88] sm:$0xf]
  %v1744 = vsel %vm1652, %v1136, %v1743
  %1745 = vst [vmem:[%s1650 + $0x88] sm:$0xf] %v1744
  %v1746 = vld [vmem:[%s1650 + $0x8c] sm:$0x1]
  %v1747 = vsel %vm67, %v1137, %v1746
  %1748 = vst [vmem:[%s1650 + $0x8c] sm:$0x1] %v1747
  %v1749 = vld [vmem:[%s1650 + $0xa0] sm:$0xf]
  %v1750 = vsel %vm1652, %v1144, %v1749
  %1751 = vst [vmem:[%s1650 + $0xa0] sm:$0xf] %v1750
  %v1752 = vld [vmem:[%s1650 + $0xa4] sm:$0x1]
  %v1753 = vsel %vm67, %v1145, %v1752
  %1754 = vst [vmem:[%s1650 + $0xa4] sm:$0x1] %v1753
  %v1755 = vld [vmem:[%s1650 + $0xa8] sm:$0xf]
  %v1756 = vsel %vm1652, %v1152, %v1755
  %1757 = vst [vmem:[%s1650 + $0xa8] sm:$0xf] %v1756
  %v1758 = vld [vmem:[%s1650 + $0xac] sm:$0x1]
  %v1759 = vsel %vm67, %v1153, %v1758
  %1760 = vst [vmem:[%s1650 + $0xac] sm:$0x1] %v1759
  %v1761 = vld [vmem:[%s1650 + $0xb0] sm:$0xf]
  %v1762 = vsel %vm1652, %v1160, %v1761
  %1763 = vst [vmem:[%s1650 + $0xb0] sm:$0xf] %v1762
  %v1764 = vld [vmem:[%s1650 + $0xb4] sm:$0x1]
  %v1765 = vsel %vm67, %v1161, %v1764
  %1766 = vst [vmem:[%s1650 + $0xb4] sm:$0x1] %v1765
  %v1767 = vld [vmem:[%s1650 + $0xb8] sm:$0xf]
  %v1768 = vsel %vm1652, %v1168, %v1767
  %1769 = vst [vmem:[%s1650 + $0xb8] sm:$0xf] %v1768
  %v1770 = vld [vmem:[%s1650 + $0xbc] sm:$0x1]
  %v1771 = vsel %vm67, %v1169, %v1770
  %1772 = vst [vmem:[%s1650 + $0xbc] sm:$0x1] %v1771
  %v1773 = vld [vmem:[%s1650 + $0xc0] sm:$0xf]
  %v1774 = vsel %vm1652, %v1176, %v1773
  %1775 = vst [vmem:[%s1650 + $0xc0] sm:$0xf] %v1774
  %v1776 = vld [vmem:[%s1650 + $0xc4] sm:$0x1]
  %v1777 = vsel %vm67, %v1177, %v1776
  %1778 = vst [vmem:[%s1650 + $0xc4] sm:$0x1] %v1777
  %v1779 = vld [vmem:[%s1650 + $0xc8] sm:$0xf]
  %v1780 = vsel %vm1652, %v1184, %v1779
  %1781 = vst [vmem:[%s1650 + $0xc8] sm:$0xf] %v1780
  %v1782 = vld [vmem:[%s1650 + $0xcc] sm:$0x1]
  %v1783 = vsel %vm67, %v1185, %v1782
  %1784 = vst [vmem:[%s1650 + $0xcc] sm:$0x1] %v1783
  %v1785 = vld [vmem:[%s1650 + $0xd0] sm:$0xf]
  %v1786 = vsel %vm1652, %v1192, %v1785
  %1787 = vst [vmem:[%s1650 + $0xd0] sm:$0xf] %v1786
  %v1788 = vld [vmem:[%s1650 + $0xd4] sm:$0x1]
  %v1789 = vsel %vm67, %v1193, %v1788
  %1790 = vst [vmem:[%s1650 + $0xd4] sm:$0x1] %v1789
  %v1791 = vld [vmem:[%s1650 + $0xd8] sm:$0xf]
  %v1792 = vsel %vm1652, %v1200, %v1791
  %1793 = vst [vmem:[%s1650 + $0xd8] sm:$0xf] %v1792
  %v1794 = vld [vmem:[%s1650 + $0xdc] sm:$0x1]
  %v1795 = vsel %vm67, %v1201, %v1794
  %1796 = vst [vmem:[%s1650 + $0xdc] sm:$0x1] %v1795
  %v1797 = vld [vmem:[%s1650 + $0xf0] sm:$0xf]
  %v1798 = vsel %vm1652, %v1208, %v1797
  %1799 = vst [vmem:[%s1650 + $0xf0] sm:$0xf] %v1798
  %v1800 = vld [vmem:[%s1650 + $0xf4] sm:$0x1]
  %v1801 = vsel %vm67, %v1209, %v1800
  %1802 = vst [vmem:[%s1650 + $0xf4] sm:$0x1] %v1801
  %v1803 = vld [vmem:[%s1650 + $0xf8] sm:$0xf]
  %v1804 = vsel %vm1652, %v1216, %v1803
  %1805 = vst [vmem:[%s1650 + $0xf8] sm:$0xf] %v1804
  %v1806 = vld [vmem:[%s1650 + $0xfc] sm:$0x1]
  %v1807 = vsel %vm67, %v1217, %v1806
  %1808 = vst [vmem:[%s1650 + $0xfc] sm:$0x1] %v1807
  %v1809 = vld [vmem:[%s1650 + $0x100] sm:$0xf]
  %v1810 = vsel %vm1652, %v1224, %v1809
  %1811 = vst [vmem:[%s1650 + $0x100] sm:$0xf] %v1810
  %v1812 = vld [vmem:[%s1650 + $0x104] sm:$0x1]
  %v1813 = vsel %vm67, %v1225, %v1812
  %1814 = vst [vmem:[%s1650 + $0x104] sm:$0x1] %v1813
  %v1815 = vld [vmem:[%s1650 + $0x108] sm:$0xf]
  %v1816 = vsel %vm1652, %v1232, %v1815
  %1817 = vst [vmem:[%s1650 + $0x108] sm:$0xf] %v1816
  %v1818 = vld [vmem:[%s1650 + $0x10c] sm:$0x1]
  %v1819 = vsel %vm67, %v1233, %v1818
  %1820 = vst [vmem:[%s1650 + $0x10c] sm:$0x1] %v1819
  %v1821 = vld [vmem:[%s1650 + $0x110] sm:$0xf]
  %v1822 = vsel %vm1652, %v1240, %v1821
  %1823 = vst [vmem:[%s1650 + $0x110] sm:$0xf] %v1822
  %v1824 = vld [vmem:[%s1650 + $0x114] sm:$0x1]
  %v1825 = vsel %vm67, %v1241, %v1824
  %1826 = vst [vmem:[%s1650 + $0x114] sm:$0x1] %v1825
  %v1827 = vld [vmem:[%s1650 + $0x118] sm:$0xf]
  %v1828 = vsel %vm1652, %v1248, %v1827
  %1829 = vst [vmem:[%s1650 + $0x118] sm:$0xf] %v1828
  %v1830 = vld [vmem:[%s1650 + $0x11c] sm:$0x1]
  %v1831 = vsel %vm67, %v1249, %v1830
  %1832 = vst [vmem:[%s1650 + $0x11c] sm:$0x1] %v1831
  %v1833 = vld [vmem:[%s1650 + $0x120] sm:$0xf]
  %v1834 = vsel %vm1652, %v1256, %v1833
  %1835 = vst [vmem:[%s1650 + $0x120] sm:$0xf] %v1834
  %v1836 = vld [vmem:[%s1650 + $0x124] sm:$0x1]
  %v1837 = vsel %vm67, %v1257, %v1836
  %1838 = vst [vmem:[%s1650 + $0x124] sm:$0x1] %v1837
  %v1839 = vld [vmem:[%s1650 + $0x128] sm:$0xf]
  %v1840 = vsel %vm1652, %v1264, %v1839
  %1841 = vst [vmem:[%s1650 + $0x128] sm:$0xf] %v1840
  %v1842 = vld [vmem:[%s1650 + $0x12c] sm:$0x1]
  %v1843 = vsel %vm67, %v1265, %v1842
  %1844 = vst [vmem:[%s1650 + $0x12c] sm:$0x1] %v1843
  %v1845 = vld [vmem:[%s1650 + $0x140] sm:$0xf]
  %v1846 = vsel %vm1652, %v1272, %v1845
  %1847 = vst [vmem:[%s1650 + $0x140] sm:$0xf] %v1846
  %v1848 = vld [vmem:[%s1650 + $0x144] sm:$0x1]
  %v1849 = vsel %vm67, %v1273, %v1848
  %1850 = vst [vmem:[%s1650 + $0x144] sm:$0x1] %v1849
  %v1851 = vld [vmem:[%s1650 + $0x148] sm:$0xf]
  %v1852 = vsel %vm1652, %v1280, %v1851
  %1853 = vst [vmem:[%s1650 + $0x148] sm:$0xf] %v1852
  %v1854 = vld [vmem:[%s1650 + $0x14c] sm:$0x1]
  %v1855 = vsel %vm67, %v1281, %v1854
  %1856 = vst [vmem:[%s1650 + $0x14c] sm:$0x1] %v1855
  %v1857 = vld [vmem:[%s1650 + $0x150] sm:$0xf]
  %v1858 = vsel %vm1652, %v1288, %v1857
  %1859 = vst [vmem:[%s1650 + $0x150] sm:$0xf] %v1858
  %v1860 = vld [vmem:[%s1650 + $0x154] sm:$0x1]
  %v1861 = vsel %vm67, %v1289, %v1860
  %1862 = vst [vmem:[%s1650 + $0x154] sm:$0x1] %v1861
  %v1863 = vld [vmem:[%s1650 + $0x158] sm:$0xf]
  %v1864 = vsel %vm1652, %v1296, %v1863
  %1865 = vst [vmem:[%s1650 + $0x158] sm:$0xf] %v1864
  %v1866 = vld [vmem:[%s1650 + $0x15c] sm:$0x1]
  %v1867 = vsel %vm67, %v1297, %v1866
  %1868 = vst [vmem:[%s1650 + $0x15c] sm:$0x1] %v1867
  %v1869 = vld [vmem:[%s1650 + $0x160] sm:$0xf]
  %v1870 = vsel %vm1652, %v1304, %v1869
  %1871 = vst [vmem:[%s1650 + $0x160] sm:$0xf] %v1870
  %v1872 = vld [vmem:[%s1650 + $0x164] sm:$0x1]
  %v1873 = vsel %vm67, %v1305, %v1872
  %1874 = vst [vmem:[%s1650 + $0x164] sm:$0x1] %v1873
  %v1875 = vld [vmem:[%s1650 + $0x168] sm:$0xf]
  %v1876 = vsel %vm1652, %v1312, %v1875
  %1877 = vst [vmem:[%s1650 + $0x168] sm:$0xf] %v1876
  %v1878 = vld [vmem:[%s1650 + $0x16c] sm:$0x1]
  %v1879 = vsel %vm67, %v1313, %v1878
  %1880 = vst [vmem:[%s1650 + $0x16c] sm:$0x1] %v1879
  %v1881 = vld [vmem:[%s1650 + $0x170] sm:$0xf]
  %v1882 = vsel %vm1652, %v1320, %v1881
  %1883 = vst [vmem:[%s1650 + $0x170] sm:$0xf] %v1882
  %v1884 = vld [vmem:[%s1650 + $0x174] sm:$0x1]
  %v1885 = vsel %vm67, %v1321, %v1884
  %1886 = vst [vmem:[%s1650 + $0x174] sm:$0x1] %v1885
  %v1887 = vld [vmem:[%s1650 + $0x178] sm:$0xf]
  %v1888 = vsel %vm1652, %v1328, %v1887
  %1889 = vst [vmem:[%s1650 + $0x178] sm:$0xf] %v1888
  %v1890 = vld [vmem:[%s1650 + $0x17c] sm:$0x1]
  %v1891 = vsel %vm67, %v1329, %v1890
  %1892 = vst [vmem:[%s1650 + $0x17c] sm:$0x1] %v1891
  %v1893 = vld [vmem:[%s1650 + $0x190] sm:$0xf]
  %v1894 = vsel %vm1652, %v1336, %v1893
  %1895 = vst [vmem:[%s1650 + $0x190] sm:$0xf] %v1894
  %v1896 = vld [vmem:[%s1650 + $0x194] sm:$0x1]
  %v1897 = vsel %vm67, %v1337, %v1896
  %1898 = vst [vmem:[%s1650 + $0x194] sm:$0x1] %v1897
  %v1899 = vld [vmem:[%s1650 + $0x198] sm:$0xf]
  %v1900 = vsel %vm1652, %v1344, %v1899
  %1901 = vst [vmem:[%s1650 + $0x198] sm:$0xf] %v1900
  %v1902 = vld [vmem:[%s1650 + $0x19c] sm:$0x1]
  %v1903 = vsel %vm67, %v1345, %v1902
  %1904 = vst [vmem:[%s1650 + $0x19c] sm:$0x1] %v1903
  %v1905 = vld [vmem:[%s1650 + $0x1a0] sm:$0xf]
  %v1906 = vsel %vm1652, %v1352, %v1905
  %1907 = vst [vmem:[%s1650 + $0x1a0] sm:$0xf] %v1906
  %v1908 = vld [vmem:[%s1650 + $0x1a4] sm:$0x1]
  %v1909 = vsel %vm67, %v1353, %v1908
  %1910 = vst [vmem:[%s1650 + $0x1a4] sm:$0x1] %v1909
  %v1911 = vld [vmem:[%s1650 + $0x1a8] sm:$0xf]
  %v1912 = vsel %vm1652, %v1360, %v1911
  %1913 = vst [vmem:[%s1650 + $0x1a8] sm:$0xf] %v1912
  %v1914 = vld [vmem:[%s1650 + $0x1ac] sm:$0x1]
  %v1915 = vsel %vm67, %v1361, %v1914
  %1916 = vst [vmem:[%s1650 + $0x1ac] sm:$0x1] %v1915
  %v1917 = vld [vmem:[%s1650 + $0x1b0] sm:$0xf]
  %v1918 = vsel %vm1652, %v1368, %v1917
  %1919 = vst [vmem:[%s1650 + $0x1b0] sm:$0xf] %v1918
  %v1920 = vld [vmem:[%s1650 + $0x1b4] sm:$0x1]
  %v1921 = vsel %vm67, %v1369, %v1920
  %1922 = vst [vmem:[%s1650 + $0x1b4] sm:$0x1] %v1921
  %v1923 = vld [vmem:[%s1650 + $0x1b8] sm:$0xf]
  %v1924 = vsel %vm1652, %v1376, %v1923
  %1925 = vst [vmem:[%s1650 + $0x1b8] sm:$0xf] %v1924
  %v1926 = vld [vmem:[%s1650 + $0x1bc] sm:$0x1]
  %v1927 = vsel %vm67, %v1377, %v1926
  %1928 = vst [vmem:[%s1650 + $0x1bc] sm:$0x1] %v1927
  %v1929 = vld [vmem:[%s1650 + $0x1c0] sm:$0xf]
  %v1930 = vsel %vm1652, %v1384, %v1929
  %1931 = vst [vmem:[%s1650 + $0x1c0] sm:$0xf] %v1930
  %v1932 = vld [vmem:[%s1650 + $0x1c4] sm:$0x1]
  %v1933 = vsel %vm67, %v1385, %v1932
  %1934 = vst [vmem:[%s1650 + $0x1c4] sm:$0x1] %v1933
  %v1935 = vld [vmem:[%s1650 + $0x1c8] sm:$0xf]
  %v1936 = vsel %vm1652, %v1392, %v1935
  %1937 = vst [vmem:[%s1650 + $0x1c8] sm:$0xf] %v1936
  %v1938 = vld [vmem:[%s1650 + $0x1cc] sm:$0x1]
  %v1939 = vsel %vm67, %v1393, %v1938
  %1940 = vst [vmem:[%s1650 + $0x1cc] sm:$0x1] %v1939
  %v1941 = vld [vmem:[%s1650 + $0x1e0] sm:$0xf]
  %v1942 = vsel %vm1652, %v1400, %v1941
  %1943 = vst [vmem:[%s1650 + $0x1e0] sm:$0xf] %v1942
  %v1944 = vld [vmem:[%s1650 + $0x1e4] sm:$0x1]
  %v1945 = vsel %vm67, %v1401, %v1944
  %1946 = vst [vmem:[%s1650 + $0x1e4] sm:$0x1] %v1945
  %v1947 = vld [vmem:[%s1650 + $0x1e8] sm:$0xf]
  %v1948 = vsel %vm1652, %v1408, %v1947
  %1949 = vst [vmem:[%s1650 + $0x1e8] sm:$0xf] %v1948
  %v1950 = vld [vmem:[%s1650 + $0x1ec] sm:$0x1]
  %v1951 = vsel %vm67, %v1409, %v1950
  %1952 = vst [vmem:[%s1650 + $0x1ec] sm:$0x1] %v1951
  %v1953 = vld [vmem:[%s1650 + $0x1f0] sm:$0xf]
  %v1954 = vsel %vm1652, %v1416, %v1953
  %1955 = vst [vmem:[%s1650 + $0x1f0] sm:$0xf] %v1954
  %v1956 = vld [vmem:[%s1650 + $0x1f4] sm:$0x1]
  %v1957 = vsel %vm67, %v1417, %v1956
  %1958 = vst [vmem:[%s1650 + $0x1f4] sm:$0x1] %v1957
  %v1959 = vld [vmem:[%s1650 + $0x1f8] sm:$0xf]
  %v1960 = vsel %vm1652, %v1424, %v1959
  %1961 = vst [vmem:[%s1650 + $0x1f8] sm:$0xf] %v1960
  %v1962 = vld [vmem:[%s1650 + $0x1fc] sm:$0x1]
  %v1963 = vsel %vm67, %v1425, %v1962
  %1964 = vst [vmem:[%s1650 + $0x1fc] sm:$0x1] %v1963
  %v1965 = vld [vmem:[%s1650 + $0x200] sm:$0xf]
  %v1966 = vsel %vm1652, %v1432, %v1965
  %1967 = vst [vmem:[%s1650 + $0x200] sm:$0xf] %v1966
  %v1968 = vld [vmem:[%s1650 + $0x204] sm:$0x1]
  %v1969 = vsel %vm67, %v1433, %v1968
  %1970 = vst [vmem:[%s1650 + $0x204] sm:$0x1] %v1969
  %v1971 = vld [vmem:[%s1650 + $0x208] sm:$0xf]
  %v1972 = vsel %vm1652, %v1440, %v1971
  %1973 = vst [vmem:[%s1650 + $0x208] sm:$0xf] %v1972
  %v1974 = vld [vmem:[%s1650 + $0x20c] sm:$0x1]
  %v1975 = vsel %vm67, %v1441, %v1974
  %1976 = vst [vmem:[%s1650 + $0x20c] sm:$0x1] %v1975
  %v1977 = vld [vmem:[%s1650 + $0x210] sm:$0xf]
  %v1978 = vsel %vm1652, %v1448, %v1977
  %1979 = vst [vmem:[%s1650 + $0x210] sm:$0xf] %v1978
  %v1980 = vld [vmem:[%s1650 + $0x214] sm:$0x1]
  %v1981 = vsel %vm67, %v1449, %v1980
  %1982 = vst [vmem:[%s1650 + $0x214] sm:$0x1] %v1981
  %v1983 = vld [vmem:[%s1650 + $0x218] sm:$0xf]
  %v1984 = vsel %vm1652, %v1456, %v1983
  %1985 = vst [vmem:[%s1650 + $0x218] sm:$0xf] %v1984
  %v1986 = vld [vmem:[%s1650 + $0x21c] sm:$0x1]
  %v1987 = vsel %vm67, %v1457, %v1986
  %1988 = vst [vmem:[%s1650 + $0x21c] sm:$0x1] %v1987
  %v1989 = vld [vmem:[%s1650 + $0x230] sm:$0xf]
  %v1990 = vsel %vm1652, %v1464, %v1989
  %1991 = vst [vmem:[%s1650 + $0x230] sm:$0xf] %v1990
  %v1992 = vld [vmem:[%s1650 + $0x234] sm:$0x1]
  %v1993 = vsel %vm67, %v1465, %v1992
  %1994 = vst [vmem:[%s1650 + $0x234] sm:$0x1] %v1993
  %v1995 = vld [vmem:[%s1650 + $0x238] sm:$0xf]
  %v1996 = vsel %vm1652, %v1472, %v1995
  %1997 = vst [vmem:[%s1650 + $0x238] sm:$0xf] %v1996
  %v1998 = vld [vmem:[%s1650 + $0x23c] sm:$0x1]
  %v1999 = vsel %vm67, %v1473, %v1998
  %2000 = vst [vmem:[%s1650 + $0x23c] sm:$0x1] %v1999
  %v2001 = vld [vmem:[%s1650 + $0x240] sm:$0xf]
  %v2002 = vsel %vm1652, %v1480, %v2001
  %2003 = vst [vmem:[%s1650 + $0x240] sm:$0xf] %v2002
  %v2004 = vld [vmem:[%s1650 + $0x244] sm:$0x1]
  %v2005 = vsel %vm67, %v1481, %v2004
  %2006 = vst [vmem:[%s1650 + $0x244] sm:$0x1] %v2005
  %v2007 = vld [vmem:[%s1650 + $0x248] sm:$0xf]
  %v2008 = vsel %vm1652, %v1488, %v2007
  %2009 = vst [vmem:[%s1650 + $0x248] sm:$0xf] %v2008
  %v2010 = vld [vmem:[%s1650 + $0x24c] sm:$0x1]
  %v2011 = vsel %vm67, %v1489, %v2010
  %2012 = vst [vmem:[%s1650 + $0x24c] sm:$0x1] %v2011
  %v2013 = vld [vmem:[%s1650 + $0x250] sm:$0xf]
  %v2014 = vsel %vm1652, %v1496, %v2013
  %2015 = vst [vmem:[%s1650 + $0x250] sm:$0xf] %v2014
  %v2016 = vld [vmem:[%s1650 + $0x254] sm:$0x1]
  %v2017 = vsel %vm67, %v1497, %v2016
  %2018 = vst [vmem:[%s1650 + $0x254] sm:$0x1] %v2017
  %v2019 = vld [vmem:[%s1650 + $0x258] sm:$0xf]
  %v2020 = vsel %vm1652, %v1504, %v2019
  %2021 = vst [vmem:[%s1650 + $0x258] sm:$0xf] %v2020
  %v2022 = vld [vmem:[%s1650 + $0x25c] sm:$0x1]
  %v2023 = vsel %vm67, %v1505, %v2022
  %2024 = vst [vmem:[%s1650 + $0x25c] sm:$0x1] %v2023
  %v2025 = vld [vmem:[%s1650 + $0x260] sm:$0xf]
  %v2026 = vsel %vm1652, %v1512, %v2025
  %2027 = vst [vmem:[%s1650 + $0x260] sm:$0xf] %v2026
  %v2028 = vld [vmem:[%s1650 + $0x264] sm:$0x1]
  %v2029 = vsel %vm67, %v1513, %v2028
  %2030 = vst [vmem:[%s1650 + $0x264] sm:$0x1] %v2029
  %v2031 = vld [vmem:[%s1650 + $0x268] sm:$0xf]
  %v2032 = vsel %vm1652, %v1520, %v2031
  %2033 = vst [vmem:[%s1650 + $0x268] sm:$0xf] %v2032
  %v2034 = vld [vmem:[%s1650 + $0x26c] sm:$0x1]
  %v2035 = vsel %vm67, %v1521, %v2034
  %2036 = vst [vmem:[%s1650 + $0x26c] sm:$0x1] %v2035
  %s2037 = scalar_lea.vmem [#allocation2], 480
  %v2038 = vld [vmem:[%s2037] sm:$0xf]
  %v2039 = vld [vmem:[%s2037 + $0x8] sm:$0xf]
  %v2040 = vld [vmem:[%s2037 + $0x10] sm:$0xf]
  %v2041 = vld [vmem:[%s2037 + $0x18] sm:$0xf]
  %v2042 = vld [vmem:[%s2037 + $0x20] sm:$0xf]
  %v2043 = vld [vmem:[%s2037 + $0x28] sm:$0xf]
  %v2044 = vld [vmem:[%s2037 + $0x30] sm:$0xf]
  %v2045 = vld [vmem:[%s2037 + $0x38] sm:$0xf]
  %v2046 = vld [vmem:[%s2037 + $0x50] sm:$0xf]
  %v2047 = vld [vmem:[%s2037 + $0x58] sm:$0xf]
  %v2048 = vld [vmem:[%s2037 + $0x60] sm:$0xf]
  %v2049 = vld [vmem:[%s2037 + $0x68] sm:$0xf]
  %v2050 = vld [vmem:[%s2037 + $0x70] sm:$0xf]
  %v2051 = vld [vmem:[%s2037 + $0x78] sm:$0xf]
  %v2052 = vld [vmem:[%s2037 + $0x80] sm:$0xf]
  %v2053 = vld [vmem:[%s2037 + $0x88] sm:$0xf]
  %2054 = vst.msk [vmem:[#allocation3] sm:$0xf] %vm30, %v2038
  %2055 = vst.msk [vmem:[#allocation3 + $0x4] sm:$0xf] %vm30, %v2039
  %2056 = vst.msk [vmem:[#allocation3 + $0x8] sm:$0xf] %vm30, %v2040
  %2057 = vst.msk [vmem:[#allocation3 + $0xc] sm:$0xf] %vm30, %v2041
  %2058 = vst.msk [vmem:[#allocation3 + $0x10] sm:$0xf] %vm30, %v2042
  %2059 = vst.msk [vmem:[#allocation3 + $0x14] sm:$0xf] %vm30, %v2043
  %2060 = vst.msk [vmem:[#allocation3 + $0x18] sm:$0xf] %vm30, %v2044
  %2061 = vst.msk [vmem:[#allocation3 + $0x1c] sm:$0xf] %vm30, %v2045
  %2062 = vst.msk [vmem:[#allocation3 + $0x20] sm:$0xf] %vm30, %v2046
  %2063 = vst.msk [vmem:[#allocation3 + $0x24] sm:$0xf] %vm30, %v2047
  %2064 = vst.msk [vmem:[#allocation3 + $0x28] sm:$0xf] %vm30, %v2048
  %2065 = vst.msk [vmem:[#allocation3 + $0x2c] sm:$0xf] %vm30, %v2049
  %2066 = vst.msk [vmem:[#allocation3 + $0x30] sm:$0xf] %vm30, %v2050
  %2067 = vst.msk [vmem:[#allocation3 + $0x34] sm:$0xf] %vm30, %v2051
  %2068 = vst.msk [vmem:[#allocation3 + $0x38] sm:$0xf] %vm30, %v2052
  %2069 = vst.msk [vmem:[#allocation3 + $0x3c] sm:$0xf] %vm30, %v2053
  %s2070 = scalar_lea.vmem [#allocation2], 320
  %v2071 = vld [vmem:[%s2070] sm:$0xf]
  %v2072 = vld [vmem:[%s2070 + $0x4] sm:$0x1]
  %v2073 = vld [vmem:[%s2070 + $0x8] sm:$0xf]
  %v2074 = vld [vmem:[%s2070 + $0xc] sm:$0x1]
  %v2075 = vld [vmem:[%s2070 + $0x10] sm:$0xf]
  %v2076 = vld [vmem:[%s2070 + $0x14] sm:$0x1]
  %v2077 = vld [vmem:[%s2070 + $0x18] sm:$0xf]
  %v2078 = vld [vmem:[%s2070 + $0x1c] sm:$0x1]
  %v2079 = vld [vmem:[%s2070 + $0x20] sm:$0xf]
  %v2080 = vld [vmem:[%s2070 + $0x24] sm:$0x1]
  %v2081 = vld [vmem:[%s2070 + $0x28] sm:$0xf]
  %v2082 = vld [vmem:[%s2070 + $0x2c] sm:$0x1]
  %v2083 = vld [vmem:[%s2070 + $0x30] sm:$0xf]
  %v2084 = vld [vmem:[%s2070 + $0x34] sm:$0x1]
  %v2085 = vld [vmem:[%s2070 + $0x38] sm:$0xf]
  %v2086 = vld [vmem:[%s2070 + $0x3c] sm:$0x1]
  %v2087 = vld [vmem:[%s2070 + $0x50] sm:$0xf]
  %v2088 = vld [vmem:[%s2070 + $0x54] sm:$0x1]
  %v2089 = vld [vmem:[%s2070 + $0x58] sm:$0xf]
  %v2090 = vld [vmem:[%s2070 + $0x5c] sm:$0x1]
  %v2091 = vld [vmem:[%s2070 + $0x60] sm:$0xf]
  %v2092 = vld [vmem:[%s2070 + $0x64] sm:$0x1]
  %v2093 = vld [vmem:[%s2070 + $0x68] sm:$0xf]
  %v2094 = vld [vmem:[%s2070 + $0x6c] sm:$0x1]
  %v2095 = vld [vmem:[%s2070 + $0x70] sm:$0xf]
  %v2096 = vld [vmem:[%s2070 + $0x74] sm:$0x1]
  %v2097 = vld [vmem:[%s2070 + $0x78] sm:$0xf]
  %v2098 = vld [vmem:[%s2070 + $0x7c] sm:$0x1]
  %v2099 = vld [vmem:[%s2070 + $0x80] sm:$0xf]
  %v2100 = vld [vmem:[%s2070 + $0x84] sm:$0x1]
  %v2101 = vld [vmem:[%s2070 + $0x88] sm:$0xf]
  %v2102 = vld [vmem:[%s2070 + $0x8c] sm:$0x1]
  %vm2103 = vsmask.f32 3328
  %vm2104 = vsmask.f32 7440
  %vm2105 = vmor %vm2103, %vm2104
  %v2107 = vshrl.u32 %v2071, 16
  %v2109 = vrot.slane %v2107, 4
  %v2110 = vshll.u32 %v2071, 16
  %v2112 = vrot.slane %v2110, 5
  %v2113 = vor.u32 %v2109, %v2112
  %v2114 = vrot.slane %v2113, 4
  %v2116 = vshll.u32 %v2072, 16
  %v2118 = vrot.slane %v2116, 5
  %v2119 = vsel %vm2105, %v2114, %v2118
  %v2121 = vshrl.u32 %v2073, 16
  %v2123 = vrot.slane %v2121, 4
  %v2124 = vshll.u32 %v2073, 16
  %v2126 = vrot.slane %v2124, 5
  %v2127 = vor.u32 %v2123, %v2126
  %v2128 = vrot.slane %v2127, 4
  %v2130 = vshll.u32 %v2074, 16
  %v2132 = vrot.slane %v2130, 5
  %v2133 = vsel %vm2105, %v2128, %v2132
  %v2135 = vshrl.u32 %v2075, 16
  %v2137 = vrot.slane %v2135, 4
  %v2138 = vshll.u32 %v2075, 16
  %v2140 = vrot.slane %v2138, 5
  %v2141 = vor.u32 %v2137, %v2140
  %v2142 = vrot.slane %v2141, 4
  %v2144 = vshll.u32 %v2076, 16
  %v2146 = vrot.slane %v2144, 5
  %v2147 = vsel %vm2105, %v2142, %v2146
  %v2149 = vshrl.u32 %v2077, 16
  %v2151 = vrot.slane %v2149, 4
  %v2152 = vshll.u32 %v2077, 16
  %v2154 = vrot.slane %v2152, 5
  %v2155 = vor.u32 %v2151, %v2154
  %v2156 = vrot.slane %v2155, 4
  %v2158 = vshll.u32 %v2078, 16
  %v2160 = vrot.slane %v2158, 5
  %v2161 = vsel %vm2105, %v2156, %v2160
  %v2163 = vshrl.u32 %v2079, 16
  %v2165 = vrot.slane %v2163, 4
  %v2166 = vshll.u32 %v2079, 16
  %v2168 = vrot.slane %v2166, 5
  %v2169 = vor.u32 %v2165, %v2168
  %v2170 = vrot.slane %v2169, 4
  %v2172 = vshll.u32 %v2080, 16
  %v2174 = vrot.slane %v2172, 5
  %v2175 = vsel %vm2105, %v2170, %v2174
  %v2177 = vshrl.u32 %v2081, 16
  %v2179 = vrot.slane %v2177, 4
  %v2180 = vshll.u32 %v2081, 16
  %v2182 = vrot.slane %v2180, 5
  %v2183 = vor.u32 %v2179, %v2182
  %v2184 = vrot.slane %v2183, 4
  %v2186 = vshll.u32 %v2082, 16
  %v2188 = vrot.slane %v2186, 5
  %v2189 = vsel %vm2105, %v2184, %v2188
  %v2191 = vshrl.u32 %v2083, 16
  %v2193 = vrot.slane %v2191, 4
  %v2194 = vshll.u32 %v2083, 16
  %v2196 = vrot.slane %v2194, 5
  %v2197 = vor.u32 %v2193, %v2196
  %v2198 = vrot.slane %v2197, 4
  %v2200 = vshll.u32 %v2084, 16
  %v2202 = vrot.slane %v2200, 5
  %v2203 = vsel %vm2105, %v2198, %v2202
  %v2205 = vshrl.u32 %v2085, 16
  %v2207 = vrot.slane %v2205, 4
  %v2208 = vshll.u32 %v2085, 16
  %v2210 = vrot.slane %v2208, 5
  %v2211 = vor.u32 %v2207, %v2210
  %v2212 = vrot.slane %v2211, 4
  %v2214 = vshll.u32 %v2086, 16
  %v2216 = vrot.slane %v2214, 5
  %v2217 = vsel %vm2105, %v2212, %v2216
  %v2219 = vshrl.u32 %v2087, 16
  %v2221 = vrot.slane %v2219, 4
  %v2222 = vshll.u32 %v2087, 16
  %v2224 = vrot.slane %v2222, 5
  %v2225 = vor.u32 %v2221, %v2224
  %v2226 = vrot.slane %v2225, 4
  %v2228 = vshll.u32 %v2088, 16
  %v2230 = vrot.slane %v2228, 5
  %v2231 = vsel %vm2105, %v2226, %v2230
  %v2233 = vshrl.u32 %v2089, 16
  %v2235 = vrot.slane %v2233, 4
  %v2236 = vshll.u32 %v2089, 16
  %v2238 = vrot.slane %v2236, 5
  %v2239 = vor.u32 %v2235, %v2238
  %v2240 = vrot.slane %v2239, 4
  %v2242 = vshll.u32 %v2090, 16
  %v2244 = vrot.slane %v2242, 5
  %v2245 = vsel %vm2105, %v2240, %v2244
  %v2247 = vshrl.u32 %v2091, 16
  %v2249 = vrot.slane %v2247, 4
  %v2250 = vshll.u32 %v2091, 16
  %v2252 = vrot.slane %v2250, 5
  %v2253 = vor.u32 %v2249, %v2252
  %v2254 = vrot.slane %v2253, 4
  %v2256 = vshll.u32 %v2092, 16
  %v2258 = vrot.slane %v2256, 5
  %v2259 = vsel %vm2105, %v2254, %v2258
  %v2261 = vshrl.u32 %v2093, 16
  %v2263 = vrot.slane %v2261, 4
  %v2264 = vshll.u32 %v2093, 16
  %v2266 = vrot.slane %v2264, 5
  %v2267 = vor.u32 %v2263, %v2266
  %v2268 = vrot.slane %v2267, 4
  %v2270 = vshll.u32 %v2094, 16
  %v2272 = vrot.slane %v2270, 5
  %v2273 = vsel %vm2105, %v2268, %v2272
  %v2275 = vshrl.u32 %v2095, 16
  %v2277 = vrot.slane %v2275, 4
  %v2278 = vshll.u32 %v2095, 16
  %v2280 = vrot.slane %v2278, 5
  %v2281 = vor.u32 %v2277, %v2280
  %v2282 = vrot.slane %v2281, 4
  %v2284 = vshll.u32 %v2096, 16
  %v2286 = vrot.slane %v2284, 5
  %v2287 = vsel %vm2105, %v2282, %v2286
  %v2289 = vshrl.u32 %v2097, 16
  %v2291 = vrot.slane %v2289, 4
  %v2292 = vshll.u32 %v2097, 16
  %v2294 = vrot.slane %v2292, 5
  %v2295 = vor.u32 %v2291, %v2294
  %v2296 = vrot.slane %v2295, 4
  %v2298 = vshll.u32 %v2098, 16
  %v2300 = vrot.slane %v2298, 5
  %v2301 = vsel %vm2105, %v2296, %v2300
  %v2303 = vshrl.u32 %v2099, 16
  %v2305 = vrot.slane %v2303, 4
  %v2306 = vshll.u32 %v2099, 16
  %v2308 = vrot.slane %v2306, 5
  %v2309 = vor.u32 %v2305, %v2308
  %v2310 = vrot.slane %v2309, 4
  %v2312 = vshll.u32 %v2100, 16
  %v2314 = vrot.slane %v2312, 5
  %v2315 = vsel %vm2105, %v2310, %v2314
  %v2317 = vshrl.u32 %v2101, 16
  %v2319 = vrot.slane %v2317, 4
  %v2320 = vshll.u32 %v2101, 16
  %v2322 = vrot.slane %v2320, 5
  %v2323 = vor.u32 %v2319, %v2322
  %v2324 = vrot.slane %v2323, 4
  %v2326 = vshll.u32 %v2102, 16
  %v2328 = vrot.slane %v2326, 5
  %v2329 = vsel %vm2105, %v2324, %v2328
  %2330 = vrot.lane.b32.xlu0 %v2119, 4
  %v2331 = vpop.permute.xlu0 %2330
  %2332 = vrot.lane.b32.xlu0 %v2133, 4
  %v2333 = vpop.permute.xlu0 %2332
  %2334 = vrot.lane.b32.xlu0 %v2147, 4
  %v2335 = vpop.permute.xlu0 %2334
  %2336 = vrot.lane.b32.xlu0 %v2161, 4
  %v2337 = vpop.permute.xlu0 %2336
  %2338 = vrot.lane.b32.xlu0 %v2175, 4
  %v2339 = vpop.permute.xlu0 %2338
  %2340 = vrot.lane.b32.xlu0 %v2189, 4
  %v2341 = vpop.permute.xlu0 %2340
  %2342 = vrot.lane.b32.xlu0 %v2203, 4
  %v2343 = vpop.permute.xlu0 %2342
  %2344 = vrot.lane.b32.xlu0 %v2217, 4
  %v2345 = vpop.permute.xlu0 %2344
  %2346 = vrot.lane.b32.xlu0 %v2231, 4
  %v2347 = vpop.permute.xlu0 %2346
  %2348 = vrot.lane.b32.xlu0 %v2245, 4
  %v2349 = vpop.permute.xlu0 %2348
  %2350 = vrot.lane.b32.xlu0 %v2259, 4
  %v2351 = vpop.permute.xlu0 %2350
  %2352 = vrot.lane.b32.xlu0 %v2273, 4
  %v2353 = vpop.permute.xlu0 %2352
  %2354 = vrot.lane.b32.xlu0 %v2287, 4
  %v2355 = vpop.permute.xlu0 %2354
  %2356 = vrot.lane.b32.xlu0 %v2301, 4
  %v2357 = vpop.permute.xlu0 %2356
  %2358 = vrot.lane.b32.xlu0 %v2315, 4
  %v2359 = vpop.permute.xlu0 %2358
  %2360 = vrot.lane.b32.xlu0 %v2329, 4
  %v2361 = vpop.permute.xlu0 %2360
  %vm2378 = vcmask 60448
  %2379 = vst.msk [vmem:[#allocation3] sm:$0xf] %vm2378, %v2331
  %2380 = vst.msk [vmem:[#allocation3 + $0x4] sm:$0xf] %vm2378, %v2333
  %2381 = vst.msk [vmem:[#allocation3 + $0x8] sm:$0xf] %vm2378, %v2335
  %2382 = vst.msk [vmem:[#allocation3 + $0xc] sm:$0xf] %vm2378, %v2337
  %2383 = vst.msk [vmem:[#allocation3 + $0x10] sm:$0xf] %vm2378, %v2339
  %2384 = vst.msk [vmem:[#allocation3 + $0x14] sm:$0xf] %vm2378, %v2341
  %2385 = vst.msk [vmem:[#allocation3 + $0x18] sm:$0xf] %vm2378, %v2343
  %2386 = vst.msk [vmem:[#allocation3 + $0x1c] sm:$0xf] %vm2378, %v2345
  %2387 = vst.msk [vmem:[#allocation3 + $0x20] sm:$0xf] %vm2378, %v2347
  %2388 = vst.msk [vmem:[#allocation3 + $0x24] sm:$0xf] %vm2378, %v2349
  %2389 = vst.msk [vmem:[#allocation3 + $0x28] sm:$0xf] %vm2378, %v2351
  %2390 = vst.msk [vmem:[#allocation3 + $0x2c] sm:$0xf] %vm2378, %v2353
  %2391 = vst.msk [vmem:[#allocation3 + $0x30] sm:$0xf] %vm2378, %v2355
  %2392 = vst.msk [vmem:[#allocation3 + $0x34] sm:$0xf] %vm2378, %v2357
  %2393 = vst.msk [vmem:[#allocation3 + $0x38] sm:$0xf] %vm2378, %v2359
  %2394 = vst.msk [vmem:[#allocation3 + $0x3c] sm:$0xf] %vm2378, %v2361
  %v2395 = vld [vmem:[%s2037] sm:$0xf]
  %v2396 = vld [vmem:[%s2037 + $0x4] sm:$0x1]
  %v2397 = vld [vmem:[%s2037 + $0x8] sm:$0xf]
  %v2398 = vld [vmem:[%s2037 + $0xc] sm:$0x1]
  %v2399 = vld [vmem:[%s2037 + $0x10] sm:$0xf]
  %v2400 = vld [vmem:[%s2037 + $0x14] sm:$0x1]
  %v2401 = vld [vmem:[%s2037 + $0x18] sm:$0xf]
  %v2402 = vld [vmem:[%s2037 + $0x1c] sm:$0x1]
  %v2403 = vld [vmem:[%s2037 + $0x20] sm:$0xf]
  %v2404 = vld [vmem:[%s2037 + $0x24] sm:$0x1]
  %v2405 = vld [vmem:[%s2037 + $0x28] sm:$0xf]
  %v2406 = vld [vmem:[%s2037 + $0x2c] sm:$0x1]
  %v2407 = vld [vmem:[%s2037 + $0x30] sm:$0xf]
  %v2408 = vld [vmem:[%s2037 + $0x34] sm:$0x1]
  %v2409 = vld [vmem:[%s2037 + $0x38] sm:$0xf]
  %v2410 = vld [vmem:[%s2037 + $0x3c] sm:$0x1]
  %v2411 = vld [vmem:[%s2037 + $0x50] sm:$0xf]
  %v2412 = vld [vmem:[%s2037 + $0x54] sm:$0x1]
  %v2413 = vld [vmem:[%s2037 + $0x58] sm:$0xf]
  %v2414 = vld [vmem:[%s2037 + $0x5c] sm:$0x1]
  %v2415 = vld [vmem:[%s2037 + $0x60] sm:$0xf]
  %v2416 = vld [vmem:[%s2037 + $0x64] sm:$0x1]
  %v2417 = vld [vmem:[%s2037 + $0x68] sm:$0xf]
  %v2418 = vld [vmem:[%s2037 + $0x6c] sm:$0x1]
  %v2419 = vld [vmem:[%s2037 + $0x70] sm:$0xf]
  %v2420 = vld [vmem:[%s2037 + $0x74] sm:$0x1]
  %v2421 = vld [vmem:[%s2037 + $0x78] sm:$0xf]
  %v2422 = vld [vmem:[%s2037 + $0x7c] sm:$0x1]
  %v2423 = vld [vmem:[%s2037 + $0x80] sm:$0xf]
  %v2424 = vld [vmem:[%s2037 + $0x84] sm:$0x1]
  %v2425 = vld [vmem:[%s2037 + $0x88] sm:$0xf]
  %v2426 = vld [vmem:[%s2037 + $0x8c] sm:$0x1]
  %v2428 = vshrl.u32 %v2395, 16
  %v2430 = vrot.slane %v2428, 4
  %v2431 = vshll.u32 %v2395, 16
  %v2433 = vrot.slane %v2431, 5
  %v2434 = vor.u32 %v2430, %v2433
  %v2435 = vrot.slane %v2434, 4
  %v2437 = vshll.u32 %v2396, 16
  %v2439 = vrot.slane %v2437, 5
  %v2440 = vsel %vm2105, %v2435, %v2439
  %v2442 = vshrl.u32 %v2397, 16
  %v2444 = vrot.slane %v2442, 4
  %v2445 = vshll.u32 %v2397, 16
  %v2447 = vrot.slane %v2445, 5
  %v2448 = vor.u32 %v2444, %v2447
  %v2449 = vrot.slane %v2448, 4
  %v2451 = vshll.u32 %v2398, 16
  %v2453 = vrot.slane %v2451, 5
  %v2454 = vsel %vm2105, %v2449, %v2453
  %v2456 = vshrl.u32 %v2399, 16
  %v2458 = vrot.slane %v2456, 4
  %v2459 = vshll.u32 %v2399, 16
  %v2461 = vrot.slane %v2459, 5
  %v2462 = vor.u32 %v2458, %v2461
  %v2463 = vrot.slane %v2462, 4
  %v2465 = vshll.u32 %v2400, 16
  %v2467 = vrot.slane %v2465, 5
  %v2468 = vsel %vm2105, %v2463, %v2467
  %v2470 = vshrl.u32 %v2401, 16
  %v2472 = vrot.slane %v2470, 4
  %v2473 = vshll.u32 %v2401, 16
  %v2475 = vrot.slane %v2473, 5
  %v2476 = vor.u32 %v2472, %v2475
  %v2477 = vrot.slane %v2476, 4
  %v2479 = vshll.u32 %v2402, 16
  %v2481 = vrot.slane %v2479, 5
  %v2482 = vsel %vm2105, %v2477, %v2481
  %v2484 = vshrl.u32 %v2403, 16
  %v2486 = vrot.slane %v2484, 4
  %v2487 = vshll.u32 %v2403, 16
  %v2489 = vrot.slane %v2487, 5
  %v2490 = vor.u32 %v2486, %v2489
  %v2491 = vrot.slane %v2490, 4
  %v2493 = vshll.u32 %v2404, 16
  %v2495 = vrot.slane %v2493, 5
  %v2496 = vsel %vm2105, %v2491, %v2495
  %v2498 = vshrl.u32 %v2405, 16
  %v2500 = vrot.slane %v2498, 4
  %v2501 = vshll.u32 %v2405, 16
  %v2503 = vrot.slane %v2501, 5
  %v2504 = vor.u32 %v2500, %v2503
  %v2505 = vrot.slane %v2504, 4
  %v2507 = vshll.u32 %v2406, 16
  %v2509 = vrot.slane %v2507, 5
  %v2510 = vsel %vm2105, %v2505, %v2509
  %v2512 = vshrl.u32 %v2407, 16
  %v2514 = vrot.slane %v2512, 4
  %v2515 = vshll.u32 %v2407, 16
  %v2517 = vrot.slane %v2515, 5
  %v2518 = vor.u32 %v2514, %v2517
  %v2519 = vrot.slane %v2518, 4
  %v2521 = vshll.u32 %v2408, 16
  %v2523 = vrot.slane %v2521, 5
  %v2524 = vsel %vm2105, %v2519, %v2523
  %v2526 = vshrl.u32 %v2409, 16
  %v2528 = vrot.slane %v2526, 4
  %v2529 = vshll.u32 %v2409, 16
  %v2531 = vrot.slane %v2529, 5
  %v2532 = vor.u32 %v2528, %v2531
  %v2533 = vrot.slane %v2532, 4
  %v2535 = vshll.u32 %v2410, 16
  %v2537 = vrot.slane %v2535, 5
  %v2538 = vsel %vm2105, %v2533, %v2537
  %v2540 = vshrl.u32 %v2411, 16
  %v2542 = vrot.slane %v2540, 4
  %v2543 = vshll.u32 %v2411, 16
  %v2545 = vrot.slane %v2543, 5
  %v2546 = vor.u32 %v2542, %v2545
  %v2547 = vrot.slane %v2546, 4
  %v2549 = vshll.u32 %v2412, 16
  %v2551 = vrot.slane %v2549, 5
  %v2552 = vsel %vm2105, %v2547, %v2551
  %v2554 = vshrl.u32 %v2413, 16
  %v2556 = vrot.slane %v2554, 4
  %v2557 = vshll.u32 %v2413, 16
  %v2559 = vrot.slane %v2557, 5
  %v2560 = vor.u32 %v2556, %v2559
  %v2561 = vrot.slane %v2560, 4
  %v2563 = vshll.u32 %v2414, 16
  %v2565 = vrot.slane %v2563, 5
  %v2566 = vsel %vm2105, %v2561, %v2565
  %v2568 = vshrl.u32 %v2415, 16
  %v2570 = vrot.slane %v2568, 4
  %v2571 = vshll.u32 %v2415, 16
  %v2573 = vrot.slane %v2571, 5
  %v2574 = vor.u32 %v2570, %v2573
  %v2575 = vrot.slane %v2574, 4
  %v2577 = vshll.u32 %v2416, 16
  %v2579 = vrot.slane %v2577, 5
  %v2580 = vsel %vm2105, %v2575, %v2579
  %v2582 = vshrl.u32 %v2417, 16
  %v2584 = vrot.slane %v2582, 4
  %v2585 = vshll.u32 %v2417, 16
  %v2587 = vrot.slane %v2585, 5
  %v2588 = vor.u32 %v2584, %v2587
  %v2589 = vrot.slane %v2588, 4
  %v2591 = vshll.u32 %v2418, 16
  %v2593 = vrot.slane %v2591, 5
  %v2594 = vsel %vm2105, %v2589, %v2593
  %v2596 = vshrl.u32 %v2419, 16
  %v2598 = vrot.slane %v2596, 4
  %v2599 = vshll.u32 %v2419, 16
  %v2601 = vrot.slane %v2599, 5
  %v2602 = vor.u32 %v2598, %v2601
  %v2603 = vrot.slane %v2602, 4
  %v2605 = vshll.u32 %v2420, 16
  %v2607 = vrot.slane %v2605, 5
  %v2608 = vsel %vm2105, %v2603, %v2607
  %v2610 = vshrl.u32 %v2421, 16
  %v2612 = vrot.slane %v2610, 4
  %v2613 = vshll.u32 %v2421, 16
  %v2615 = vrot.slane %v2613, 5
  %v2616 = vor.u32 %v2612, %v2615
  %v2617 = vrot.slane %v2616, 4
  %v2619 = vshll.u32 %v2422, 16
  %v2621 = vrot.slane %v2619, 5
  %v2622 = vsel %vm2105, %v2617, %v2621
  %v2624 = vshrl.u32 %v2423, 16
  %v2626 = vrot.slane %v2624, 4
  %v2627 = vshll.u32 %v2423, 16
  %v2629 = vrot.slane %v2627, 5
  %v2630 = vor.u32 %v2626, %v2629
  %v2631 = vrot.slane %v2630, 4
  %v2633 = vshll.u32 %v2424, 16
  %v2635 = vrot.slane %v2633, 5
  %v2636 = vsel %vm2105, %v2631, %v2635
  %v2638 = vshrl.u32 %v2425, 16
  %v2640 = vrot.slane %v2638, 4
  %v2641 = vshll.u32 %v2425, 16
  %v2643 = vrot.slane %v2641, 5
  %v2644 = vor.u32 %v2640, %v2643
  %v2645 = vrot.slane %v2644, 4
  %v2647 = vshll.u32 %v2426, 16
  %v2649 = vrot.slane %v2647, 5
  %v2650 = vsel %vm2105, %v2645, %v2649
  %2651 = vrot.lane.b32.xlu0 %v2440, 8
  %v2652 = vpop.permute.xlu0 %2651
  %2653 = vrot.lane.b32.xlu0 %v2454, 8
  %v2654 = vpop.permute.xlu0 %2653
  %2655 = vrot.lane.b32.xlu0 %v2468, 8
  %v2656 = vpop.permute.xlu0 %2655
  %2657 = vrot.lane.b32.xlu0 %v2482, 8
  %v2658 = vpop.permute.xlu0 %2657
  %2659 = vrot.lane.b32.xlu0 %v2496, 8
  %v2660 = vpop.permute.xlu0 %2659
  %2661 = vrot.lane.b32.xlu0 %v2510, 8
  %v2662 = vpop.permute.xlu0 %2661
  %2663 = vrot.lane.b32.xlu0 %v2524, 8
  %v2664 = vpop.permute.xlu0 %2663
  %2665 = vrot.lane.b32.xlu0 %v2538, 8
  %v2666 = vpop.permute.xlu0 %2665
  %2667 = vrot.lane.b32.xlu0 %v2552, 8
  %v2668 = vpop.permute.xlu0 %2667
  %2669 = vrot.lane.b32.xlu0 %v2566, 8
  %v2670 = vpop.permute.xlu0 %2669
  %2671 = vrot.lane.b32.xlu0 %v2580, 8
  %v2672 = vpop.permute.xlu0 %2671
  %2673 = vrot.lane.b32.xlu0 %v2594, 8
  %v2674 = vpop.permute.xlu0 %2673
  %2675 = vrot.lane.b32.xlu0 %v2608, 8
  %v2676 = vpop.permute.xlu0 %2675
  %2677 = vrot.lane.b32.xlu0 %v2622, 8
  %v2678 = vpop.permute.xlu0 %2677
  %2679 = vrot.lane.b32.xlu0 %v2636, 8
  %v2680 = vpop.permute.xlu0 %2679
  %2681 = vrot.lane.b32.xlu0 %v2650, 8
  %v2682 = vpop.permute.xlu0 %2681
  %vm2699 = vcmask 93248
  %2700 = vst.msk [vmem:[#allocation3] sm:$0xf] %vm2699, %v2652
  %2701 = vst.msk [vmem:[#allocation3 + $0x4] sm:$0xf] %vm2699, %v2654
  %2702 = vst.msk [vmem:[#allocation3 + $0x8] sm:$0xf] %vm2699, %v2656
  %2703 = vst.msk [vmem:[#allocation3 + $0xc] sm:$0xf] %vm2699, %v2658
  %2704 = vst.msk [vmem:[#allocation3 + $0x10] sm:$0xf] %vm2699, %v2660
  %2705 = vst.msk [vmem:[#allocation3 + $0x14] sm:$0xf] %vm2699, %v2662
  %2706 = vst.msk [vmem:[#allocation3 + $0x18] sm:$0xf] %vm2699, %v2664
  %2707 = vst.msk [vmem:[#allocation3 + $0x1c] sm:$0xf] %vm2699, %v2666
  %2708 = vst.msk [vmem:[#allocation3 + $0x20] sm:$0xf] %vm2699, %v2668
  %2709 = vst.msk [vmem:[#allocation3 + $0x24] sm:$0xf] %vm2699, %v2670
  %2710 = vst.msk [vmem:[#allocation3 + $0x28] sm:$0xf] %vm2699, %v2672
  %2711 = vst.msk [vmem:[#allocation3 + $0x2c] sm:$0xf] %vm2699, %v2674
  %2712 = vst.msk [vmem:[#allocation3 + $0x30] sm:$0xf] %vm2699, %v2676
  %2713 = vst.msk [vmem:[#allocation3 + $0x34] sm:$0xf] %vm2699, %v2678
  %2714 = vst.msk [vmem:[#allocation3 + $0x38] sm:$0xf] %vm2699, %v2680
  %2715 = vst.msk [vmem:[#allocation3 + $0x3c] sm:$0xf] %vm2699, %v2682
  %s2716 = scalar_lea.vmem [#allocation2], 168
  %v2717 = vld [vmem:[%s2716] sm:$0xf]
  %v2718 = vld [vmem:[%s2716 + $0x8] sm:$0xf]
  %v2719 = vld [vmem:[%s2716 + $0x10] sm:$0xf]
  %v2720 = vld [vmem:[%s2716 + $0x18] sm:$0xf]
  %v2721 = vld [vmem:[%s2716 + $0x20] sm:$0xf]
  %v2722 = vld [vmem:[%s2716 + $0x28] sm:$0xf]
  %v2723 = vld [vmem:[%s2716 + $0x30] sm:$0xf]
  %v2724 = vld [vmem:[%s2716 + $0x38] sm:$0xf]
  %v2725 = vld [vmem:[%s2716 + $0x50] sm:$0xf]
  %v2726 = vld [vmem:[%s2716 + $0x58] sm:$0xf]
  %v2727 = vld [vmem:[%s2716 + $0x60] sm:$0xf]
  %v2728 = vld [vmem:[%s2716 + $0x68] sm:$0xf]
  %v2729 = vld [vmem:[%s2716 + $0x70] sm:$0xf]
  %v2730 = vld [vmem:[%s2716 + $0x78] sm:$0xf]
  %v2731 = vld [vmem:[%s2716 + $0x80] sm:$0xf]
  %v2732 = vld [vmem:[%s2716 + $0x88] sm:$0xf]
  %2749 = vrot.lane.b32.xlu0 %v2717, 12
  %v2750 = vpop.permute.xlu0 %2749
  %2751 = vrot.lane.b32.xlu0 %v2718, 12
  %v2752 = vpop.permute.xlu0 %2751
  %2753 = vrot.lane.b32.xlu0 %v2719, 12
  %v2754 = vpop.permute.xlu0 %2753
  %2755 = vrot.lane.b32.xlu0 %v2720, 12
  %v2756 = vpop.permute.xlu0 %2755
  %2757 = vrot.lane.b32.xlu0 %v2721, 12
  %v2758 = vpop.permute.xlu0 %2757
  %2759 = vrot.lane.b32.xlu0 %v2722, 12
  %v2760 = vpop.permute.xlu0 %2759
  %2761 = vrot.lane.b32.xlu0 %v2723, 12
  %v2762 = vpop.permute.xlu0 %2761
  %2763 = vrot.lane.b32.xlu0 %v2724, 12
  %v2764 = vpop.permute.xlu0 %2763
  %2765 = vrot.lane.b32.xlu0 %v2725, 12
  %v2766 = vpop.permute.xlu0 %2765
  %2767 = vrot.lane.b32.xlu0 %v2726, 12
  %v2768 = vpop.permute.xlu0 %2767
  %2769 = vrot.lane.b32.xlu0 %v2727, 12
  %v2770 = vpop.permute.xlu0 %2769
  %2771 = vrot.lane.b32.xlu0 %v2728, 12
  %v2772 = vpop.permute.xlu0 %2771
  %2773 = vrot.lane.b32.xlu0 %v2729, 12
  %v2774 = vpop.permute.xlu0 %2773
  %2775 = vrot.lane.b32.xlu0 %v2730, 12
  %v2776 = vpop.permute.xlu0 %2775
  %2777 = vrot.lane.b32.xlu0 %v2731, 12
  %v2778 = vpop.permute.xlu0 %2777
  %2779 = vrot.lane.b32.xlu0 %v2732, 12
  %v2780 = vpop.permute.xlu0 %2779
  %vm2797 = vcmask 126048
  %2798 = vst.msk [vmem:[#allocation3] sm:$0xf] %vm2797, %v2750
  %2799 = vst.msk [vmem:[#allocation3 + $0x4] sm:$0xf] %vm2797, %v2752
  %2800 = vst.msk [vmem:[#allocation3 + $0x8] sm:$0xf] %vm2797, %v2754
  %2801 = vst.msk [vmem:[#allocation3 + $0xc] sm:$0xf] %vm2797, %v2756
  %2802 = vst.msk [vmem:[#allocation3 + $0x10] sm:$0xf] %vm2797, %v2758
  %2803 = vst.msk [vmem:[#allocation3 + $0x14] sm:$0xf] %vm2797, %v2760
  %2804 = vst.msk [vmem:[#allocation3 + $0x18] sm:$0xf] %vm2797, %v2762
  %2805 = vst.msk [vmem:[#allocation3 + $0x1c] sm:$0xf] %vm2797, %v2764
  %2806 = vst.msk [vmem:[#allocation3 + $0x20] sm:$0xf] %vm2797, %v2766
  %2807 = vst.msk [vmem:[#allocation3 + $0x24] sm:$0xf] %vm2797, %v2768
  %2808 = vst.msk [vmem:[#allocation3 + $0x28] sm:$0xf] %vm2797, %v2770
  %2809 = vst.msk [vmem:[#allocation3 + $0x2c] sm:$0xf] %vm2797, %v2772
  %2810 = vst.msk [vmem:[#allocation3 + $0x30] sm:$0xf] %vm2797, %v2774
  %2811 = vst.msk [vmem:[#allocation3 + $0x34] sm:$0xf] %vm2797, %v2776
  %2812 = vst.msk [vmem:[#allocation3 + $0x38] sm:$0xf] %vm2797, %v2778
  %2813 = vst.msk [vmem:[#allocation3 + $0x3c] sm:$0xf] %vm2797, %v2780
  %v2814 = vld [vmem:[%s1650] sm:$0xf]
  %v2815 = vld [vmem:[%s1650 + $0x4] sm:$0x1]
  %v2816 = vld [vmem:[%s1650 + $0x8] sm:$0xf]
  %v2817 = vld [vmem:[%s1650 + $0xc] sm:$0x1]
  %v2818 = vld [vmem:[%s1650 + $0x10] sm:$0xf]
  %v2819 = vld [vmem:[%s1650 + $0x14] sm:$0x1]
  %v2820 = vld [vmem:[%s1650 + $0x18] sm:$0xf]
  %v2821 = vld [vmem:[%s1650 + $0x1c] sm:$0x1]
  %v2822 = vld [vmem:[%s1650 + $0x20] sm:$0xf]
  %v2823 = vld [vmem:[%s1650 + $0x24] sm:$0x1]
  %v2824 = vld [vmem:[%s1650 + $0x28] sm:$0xf]
  %v2825 = vld [vmem:[%s1650 + $0x2c] sm:$0x1]
  %v2826 = vld [vmem:[%s1650 + $0x30] sm:$0xf]
  %v2827 = vld [vmem:[%s1650 + $0x34] sm:$0x1]
  %v2828 = vld [vmem:[%s1650 + $0x38] sm:$0xf]
  %v2829 = vld [vmem:[%s1650 + $0x3c] sm:$0x1]
  %v2830 = vld [vmem:[%s1650 + $0x50] sm:$0xf]
  %v2831 = vld [vmem:[%s1650 + $0x54] sm:$0x1]
  %v2832 = vld [vmem:[%s1650 + $0x58] sm:$0xf]
  %v2833 = vld [vmem:[%s1650 + $0x5c] sm:$0x1]
  %v2834 = vld [vmem:[%s1650 + $0x60] sm:$0xf]
  %v2835 = vld [vmem:[%s1650 + $0x64] sm:$0x1]
  %v2836 = vld [vmem:[%s1650 + $0x68] sm:$0xf]
  %v2837 = vld [vmem:[%s1650 + $0x6c] sm:$0x1]
  %v2838 = vld [vmem:[%s1650 + $0x70] sm:$0xf]
  %v2839 = vld [vmem:[%s1650 + $0x74] sm:$0x1]
  %v2840 = vld [vmem:[%s1650 + $0x78] sm:$0xf]
  %v2841 = vld [vmem:[%s1650 + $0x7c] sm:$0x1]
  %v2842 = vld [vmem:[%s1650 + $0x80] sm:$0xf]
  %v2843 = vld [vmem:[%s1650 + $0x84] sm:$0x1]
  %v2844 = vld [vmem:[%s1650 + $0x88] sm:$0xf]
  %v2845 = vld [vmem:[%s1650 + $0x8c] sm:$0x1]
  %v2847 = vshrl.u32 %v2814, 16
  %v2849 = vrot.slane %v2847, 4
  %v2850 = vshll.u32 %v2814, 16
  %v2852 = vrot.slane %v2850, 5
  %v2853 = vor.u32 %v2849, %v2852
  %v2854 = vrot.slane %v2853, 4
  %v2856 = vshll.u32 %v2815, 16
  %v2858 = vrot.slane %v2856, 5
  %v2859 = vsel %vm2105, %v2854, %v2858
  %v2861 = vshrl.u32 %v2816, 16
  %v2863 = vrot.slane %v2861, 4
  %v2864 = vshll.u32 %v2816, 16
  %v2866 = vrot.slane %v2864, 5
  %v2867 = vor.u32 %v2863, %v2866
  %v2868 = vrot.slane %v2867, 4
  %v2870 = vshll.u32 %v2817, 16
  %v2872 = vrot.slane %v2870, 5
  %v2873 = vsel %vm2105, %v2868, %v2872
  %v2875 = vshrl.u32 %v2818, 16
  %v2877 = vrot.slane %v2875, 4
  %v2878 = vshll.u32 %v2818, 16
  %v2880 = vrot.slane %v2878, 5
  %v2881 = vor.u32 %v2877, %v2880
  %v2882 = vrot.slane %v2881, 4
  %v2884 = vshll.u32 %v2819, 16
  %v2886 = vrot.slane %v2884, 5
  %v2887 = vsel %vm2105, %v2882, %v2886
  %v2889 = vshrl.u32 %v2820, 16
  %v2891 = vrot.slane %v2889, 4
  %v2892 = vshll.u32 %v2820, 16
  %v2894 = vrot.slane %v2892, 5
  %v2895 = vor.u32 %v2891, %v2894
  %v2896 = vrot.slane %v2895, 4
  %v2898 = vshll.u32 %v2821, 16
  %v2900 = vrot.slane %v2898, 5
  %v2901 = vsel %vm2105, %v2896, %v2900
  %v2903 = vshrl.u32 %v2822, 16
  %v2905 = vrot.slane %v2903, 4
  %v2906 = vshll.u32 %v2822, 16
  %v2908 = vrot.slane %v2906, 5
  %v2909 = vor.u32 %v2905, %v2908
  %v2910 = vrot.slane %v2909, 4
  %v2912 = vshll.u32 %v2823, 16
  %v2914 = vrot.slane %v2912, 5
  %v2915 = vsel %vm2105, %v2910, %v2914
  %v2917 = vshrl.u32 %v2824, 16
  %v2919 = vrot.slane %v2917, 4
  %v2920 = vshll.u32 %v2824, 16
  %v2922 = vrot.slane %v2920, 5
  %v2923 = vor.u32 %v2919, %v2922
  %v2924 = vrot.slane %v2923, 4
  %v2926 = vshll.u32 %v2825, 16
  %v2928 = vrot.slane %v2926, 5
  %v2929 = vsel %vm2105, %v2924, %v2928
  %v2931 = vshrl.u32 %v2826, 16
  %v2933 = vrot.slane %v2931, 4
  %v2934 = vshll.u32 %v2826, 16
  %v2936 = vrot.slane %v2934, 5
  %v2937 = vor.u32 %v2933, %v2936
  %v2938 = vrot.slane %v2937, 4
  %v2940 = vshll.u32 %v2827, 16
  %v2942 = vrot.slane %v2940, 5
  %v2943 = vsel %vm2105, %v2938, %v2942
  %v2945 = vshrl.u32 %v2828, 16
  %v2947 = vrot.slane %v2945, 4
  %v2948 = vshll.u32 %v2828, 16
  %v2950 = vrot.slane %v2948, 5
  %v2951 = vor.u32 %v2947, %v2950
  %v2952 = vrot.slane %v2951, 4
  %v2954 = vshll.u32 %v2829, 16
  %v2956 = vrot.slane %v2954, 5
  %v2957 = vsel %vm2105, %v2952, %v2956
  %v2959 = vshrl.u32 %v2830, 16
  %v2961 = vrot.slane %v2959, 4
  %v2962 = vshll.u32 %v2830, 16
  %v2964 = vrot.slane %v2962, 5
  %v2965 = vor.u32 %v2961, %v2964
  %v2966 = vrot.slane %v2965, 4
  %v2968 = vshll.u32 %v2831, 16
  %v2970 = vrot.slane %v2968, 5
  %v2971 = vsel %vm2105, %v2966, %v2970
  %v2973 = vshrl.u32 %v2832, 16
  %v2975 = vrot.slane %v2973, 4
  %v2976 = vshll.u32 %v2832, 16
  %v2978 = vrot.slane %v2976, 5
  %v2979 = vor.u32 %v2975, %v2978
  %v2980 = vrot.slane %v2979, 4
  %v2982 = vshll.u32 %v2833, 16
  %v2984 = vrot.slane %v2982, 5
  %v2985 = vsel %vm2105, %v2980, %v2984
  %v2987 = vshrl.u32 %v2834, 16
  %v2989 = vrot.slane %v2987, 4
  %v2990 = vshll.u32 %v2834, 16
  %v2992 = vrot.slane %v2990, 5
  %v2993 = vor.u32 %v2989, %v2992
  %v2994 = vrot.slane %v2993, 4
  %v2996 = vshll.u32 %v2835, 16
  %v2998 = vrot.slane %v2996, 5
  %v2999 = vsel %vm2105, %v2994, %v2998
  %v3001 = vshrl.u32 %v2836, 16
  %v3003 = vrot.slane %v3001, 4
  %v3004 = vshll.u32 %v2836, 16
  %v3006 = vrot.slane %v3004, 5
  %v3007 = vor.u32 %v3003, %v3006
  %v3008 = vrot.slane %v3007, 4
  %v3010 = vshll.u32 %v2837, 16
  %v3012 = vrot.slane %v3010, 5
  %v3013 = vsel %vm2105, %v3008, %v3012
  %v3015 = vshrl.u32 %v2838, 16
  %v3017 = vrot.slane %v3015, 4
  %v3018 = vshll.u32 %v2838, 16
  %v3020 = vrot.slane %v3018, 5
  %v3021 = vor.u32 %v3017, %v3020
  %v3022 = vrot.slane %v3021, 4
  %v3024 = vshll.u32 %v2839, 16
  %v3026 = vrot.slane %v3024, 5
  %v3027 = vsel %vm2105, %v3022, %v3026
  %v3029 = vshrl.u32 %v2840, 16
  %v3031 = vrot.slane %v3029, 4
  %v3032 = vshll.u32 %v2840, 16
  %v3034 = vrot.slane %v3032, 5
  %v3035 = vor.u32 %v3031, %v3034
  %v3036 = vrot.slane %v3035, 4
  %v3038 = vshll.u32 %v2841, 16
  %v3040 = vrot.slane %v3038, 5
  %v3041 = vsel %vm2105, %v3036, %v3040
  %v3043 = vshrl.u32 %v2842, 16
  %v3045 = vrot.slane %v3043, 4
  %v3046 = vshll.u32 %v2842, 16
  %v3048 = vrot.slane %v3046, 5
  %v3049 = vor.u32 %v3045, %v3048
  %v3050 = vrot.slane %v3049, 4
  %v3052 = vshll.u32 %v2843, 16
  %v3054 = vrot.slane %v3052, 5
  %v3055 = vsel %vm2105, %v3050, %v3054
  %v3057 = vshrl.u32 %v2844, 16
  %v3059 = vrot.slane %v3057, 4
  %v3060 = vshll.u32 %v2844, 16
  %v3062 = vrot.slane %v3060, 5
  %v3063 = vor.u32 %v3059, %v3062
  %v3064 = vrot.slane %v3063, 4
  %v3066 = vshll.u32 %v2845, 16
  %v3068 = vrot.slane %v3066, 5
  %v3069 = vsel %vm2105, %v3064, %v3068
  %3070 = vrot.lane.b32.xlu0 %v2859, 16
  %v3071 = vpop.permute.xlu0 %3070
  %3072 = vrot.lane.b32.xlu0 %v2873, 16
  %v3073 = vpop.permute.xlu0 %3072
  %3074 = vrot.lane.b32.xlu0 %v2887, 16
  %v3075 = vpop.permute.xlu0 %3074
  %3076 = vrot.lane.b32.xlu0 %v2901, 16
  %v3077 = vpop.permute.xlu0 %3076
  %3078 = vrot.lane.b32.xlu0 %v2915, 16
  %v3079 = vpop.permute.xlu0 %3078
  %3080 = vrot.lane.b32.xlu0 %v2929, 16
  %v3081 = vpop.permute.xlu0 %3080
  %3082 = vrot.lane.b32.xlu0 %v2943, 16
  %v3083 = vpop.permute.xlu0 %3082
  %3084 = vrot.lane.b32.xlu0 %v2957, 16
  %v3085 = vpop.permute.xlu0 %3084
  %3086 = vrot.lane.b32.xlu0 %v2971, 16
  %v3087 = vpop.permute.xlu0 %3086
  %3088 = vrot.lane.b32.xlu0 %v2985, 16
  %v3089 = vpop.permute.xlu0 %3088
  %3090 = vrot.lane.b32.xlu0 %v2999, 16
  %v3091 = vpop.permute.xlu0 %3090
  %3092 = vrot.lane.b32.xlu0 %v3013, 16
  %v3093 = vpop.permute.xlu0 %3092
  %3094 = vrot.lane.b32.xlu0 %v3027, 16
  %v3095 = vpop.permute.xlu0 %3094
  %3096 = vrot.lane.b32.xlu0 %v3041, 16
  %v3097 = vpop.permute.xlu0 %3096
  %3098 = vrot.lane.b32.xlu0 %v3055, 16
  %v3099 = vpop.permute.xlu0 %3098
  %3100 = vrot.lane.b32.xlu0 %v3069, 16
  %v3101 = vpop.permute.xlu0 %3100
  %vm3118 = vcmask 158848
  %3119 = vst.msk [vmem:[#allocation3] sm:$0xf] %vm3118, %v3071
  %3120 = vst.msk [vmem:[#allocation3 + $0x4] sm:$0xf] %vm3118, %v3073
  %3121 = vst.msk [vmem:[#allocation3 + $0x8] sm:$0xf] %vm3118, %v3075
  %3122 = vst.msk [vmem:[#allocation3 + $0xc] sm:$0xf] %vm3118, %v3077
  %3123 = vst.msk [vmem:[#allocation3 + $0x10] sm:$0xf] %vm3118, %v3079
  %3124 = vst.msk [vmem:[#allocation3 + $0x14] sm:$0xf] %vm3118, %v3081
  %3125 = vst.msk [vmem:[#allocation3 + $0x18] sm:$0xf] %vm3118, %v3083
  %3126 = vst.msk [vmem:[#allocation3 + $0x1c] sm:$0xf] %vm3118, %v3085
  %3127 = vst.msk [vmem:[#allocation3 + $0x20] sm:$0xf] %vm3118, %v3087
  %3128 = vst.msk [vmem:[#allocation3 + $0x24] sm:$0xf] %vm3118, %v3089
  %3129 = vst.msk [vmem:[#allocation3 + $0x28] sm:$0xf] %vm3118, %v3091
  %3130 = vst.msk [vmem:[#allocation3 + $0x2c] sm:$0xf] %vm3118, %v3093
  %3131 = vst.msk [vmem:[#allocation3 + $0x30] sm:$0xf] %vm3118, %v3095
  %3132 = vst.msk [vmem:[#allocation3 + $0x34] sm:$0xf] %vm3118, %v3097
  %3133 = vst.msk [vmem:[#allocation3 + $0x38] sm:$0xf] %vm3118, %v3099
  %3134 = vst.msk [vmem:[#allocation3 + $0x3c] sm:$0xf] %vm3118, %v3101
  %v3135 = vld [vmem:[%s2716] sm:$0xf]
  %v3136 = vld [vmem:[%s2716 + $0x4] sm:$0x1]
  %v3137 = vld [vmem:[%s2716 + $0x8] sm:$0xf]
  %v3138 = vld [vmem:[%s2716 + $0xc] sm:$0x1]
  %v3139 = vld [vmem:[%s2716 + $0x10] sm:$0xf]
  %v3140 = vld [vmem:[%s2716 + $0x14] sm:$0x1]
  %v3141 = vld [vmem:[%s2716 + $0x18] sm:$0xf]
  %v3142 = vld [vmem:[%s2716 + $0x1c] sm:$0x1]
  %v3143 = vld [vmem:[%s2716 + $0x20] sm:$0xf]
  %v3144 = vld [vmem:[%s2716 + $0x24] sm:$0x1]
  %v3145 = vld [vmem:[%s2716 + $0x28] sm:$0xf]
  %v3146 = vld [vmem:[%s2716 + $0x2c] sm:$0x1]
  %v3147 = vld [vmem:[%s2716 + $0x30] sm:$0xf]
  %v3148 = vld [vmem:[%s2716 + $0x34] sm:$0x1]
  %v3149 = vld [vmem:[%s2716 + $0x38] sm:$0xf]
  %v3150 = vld [vmem:[%s2716 + $0x3c] sm:$0x1]
  %v3151 = vld [vmem:[%s2716 + $0x50] sm:$0xf]
  %v3152 = vld [vmem:[%s2716 + $0x54] sm:$0x1]
  %v3153 = vld [vmem:[%s2716 + $0x58] sm:$0xf]
  %v3154 = vld [vmem:[%s2716 + $0x5c] sm:$0x1]
  %v3155 = vld [vmem:[%s2716 + $0x60] sm:$0xf]
  %v3156 = vld [vmem:[%s2716 + $0x64] sm:$0x1]
  %v3157 = vld [vmem:[%s2716 + $0x68] sm:$0xf]
  %v3158 = vld [vmem:[%s2716 + $0x6c] sm:$0x1]
  %v3159 = vld [vmem:[%s2716 + $0x70] sm:$0xf]
  %v3160 = vld [vmem:[%s2716 + $0x74] sm:$0x1]
  %v3161 = vld [vmem:[%s2716 + $0x78] sm:$0xf]
  %v3162 = vld [vmem:[%s2716 + $0x7c] sm:$0x1]
  %v3163 = vld [vmem:[%s2716 + $0x80] sm:$0xf]
  %v3164 = vld [vmem:[%s2716 + $0x84] sm:$0x1]
  %v3165 = vld [vmem:[%s2716 + $0x88] sm:$0xf]
  %v3166 = vld [vmem:[%s2716 + $0x8c] sm:$0x1]
  %v3168 = vshrl.u32 %v3135, 16
  %v3170 = vrot.slane %v3168, 4
  %v3171 = vshll.u32 %v3135, 16
  %v3173 = vrot.slane %v3171, 5
  %v3174 = vor.u32 %v3170, %v3173
  %v3175 = vrot.slane %v3174, 4
  %v3177 = vshll.u32 %v3136, 16
  %v3179 = vrot.slane %v3177, 5
  %v3180 = vsel %vm2105, %v3175, %v3179
  %v3182 = vshrl.u32 %v3137, 16
  %v3184 = vrot.slane %v3182, 4
  %v3185 = vshll.u32 %v3137, 16
  %v3187 = vrot.slane %v3185, 5
  %v3188 = vor.u32 %v3184, %v3187
  %v3189 = vrot.slane %v3188, 4
  %v3191 = vshll.u32 %v3138, 16
  %v3193 = vrot.slane %v3191, 5
  %v3194 = vsel %vm2105, %v3189, %v3193
  %v3196 = vshrl.u32 %v3139, 16
  %v3198 = vrot.slane %v3196, 4
  %v3199 = vshll.u32 %v3139, 16
  %v3201 = vrot.slane %v3199, 5
  %v3202 = vor.u32 %v3198, %v3201
  %v3203 = vrot.slane %v3202, 4
  %v3205 = vshll.u32 %v3140, 16
  %v3207 = vrot.slane %v3205, 5
  %v3208 = vsel %vm2105, %v3203, %v3207
  %v3210 = vshrl.u32 %v3141, 16
  %v3212 = vrot.slane %v3210, 4
  %v3213 = vshll.u32 %v3141, 16
  %v3215 = vrot.slane %v3213, 5
  %v3216 = vor.u32 %v3212, %v3215
  %v3217 = vrot.slane %v3216, 4
  %v3219 = vshll.u32 %v3142, 16
  %v3221 = vrot.slane %v3219, 5
  %v3222 = vsel %vm2105, %v3217, %v3221
  %v3224 = vshrl.u32 %v3143, 16
  %v3226 = vrot.slane %v3224, 4
  %v3227 = vshll.u32 %v3143, 16
  %v3229 = vrot.slane %v3227, 5
  %v3230 = vor.u32 %v3226, %v3229
  %v3231 = vrot.slane %v3230, 4
  %v3233 = vshll.u32 %v3144, 16
  %v3235 = vrot.slane %v3233, 5
  %v3236 = vsel %vm2105, %v3231, %v3235
  %v3238 = vshrl.u32 %v3145, 16
  %v3240 = vrot.slane %v3238, 4
  %v3241 = vshll.u32 %v3145, 16
  %v3243 = vrot.slane %v3241, 5
  %v3244 = vor.u32 %v3240, %v3243
  %v3245 = vrot.slane %v3244, 4
  %v3247 = vshll.u32 %v3146, 16
  %v3249 = vrot.slane %v3247, 5
  %v3250 = vsel %vm2105, %v3245, %v3249
  %v3252 = vshrl.u32 %v3147, 16
  %v3254 = vrot.slane %v3252, 4
  %v3255 = vshll.u32 %v3147, 16
  %v3257 = vrot.slane %v3255, 5
  %v3258 = vor.u32 %v3254, %v3257
  %v3259 = vrot.slane %v3258, 4
  %v3261 = vshll.u32 %v3148, 16
  %v3263 = vrot.slane %v3261, 5
  %v3264 = vsel %vm2105, %v3259, %v3263
  %v3266 = vshrl.u32 %v3149, 16
  %v3268 = vrot.slane %v3266, 4
  %v3269 = vshll.u32 %v3149, 16
  %v3271 = vrot.slane %v3269, 5
  %v3272 = vor.u32 %v3268, %v3271
  %v3273 = vrot.slane %v3272, 4
  %v3275 = vshll.u32 %v3150, 16
  %v3277 = vrot.slane %v3275, 5
  %v3278 = vsel %vm2105, %v3273, %v3277
  %v3280 = vshrl.u32 %v3151, 16
  %v3282 = vrot.slane %v3280, 4
  %v3283 = vshll.u32 %v3151, 16
  %v3285 = vrot.slane %v3283, 5
  %v3286 = vor.u32 %v3282, %v3285
  %v3287 = vrot.slane %v3286, 4
  %v3289 = vshll.u32 %v3152, 16
  %v3291 = vrot.slane %v3289, 5
  %v3292 = vsel %vm2105, %v3287, %v3291
  %v3294 = vshrl.u32 %v3153, 16
  %v3296 = vrot.slane %v3294, 4
  %v3297 = vshll.u32 %v3153, 16
  %v3299 = vrot.slane %v3297, 5
  %v3300 = vor.u32 %v3296, %v3299
  %v3301 = vrot.slane %v3300, 4
  %v3303 = vshll.u32 %v3154, 16
  %v3305 = vrot.slane %v3303, 5
  %v3306 = vsel %vm2105, %v3301, %v3305
  %v3308 = vshrl.u32 %v3155, 16
  %v3310 = vrot.slane %v3308, 4
  %v3311 = vshll.u32 %v3155, 16
  %v3313 = vrot.slane %v3311, 5
  %v3314 = vor.u32 %v3310, %v3313
  %v3315 = vrot.slane %v3314, 4
  %v3317 = vshll.u32 %v3156, 16
  %v3319 = vrot.slane %v3317, 5
  %v3320 = vsel %vm2105, %v3315, %v3319
  %v3322 = vshrl.u32 %v3157, 16
  %v3324 = vrot.slane %v3322, 4
  %v3325 = vshll.u32 %v3157, 16
  %v3327 = vrot.slane %v3325, 5
  %v3328 = vor.u32 %v3324, %v3327
  %v3329 = vrot.slane %v3328, 4
  %v3331 = vshll.u32 %v3158, 16
  %v3333 = vrot.slane %v3331, 5
  %v3334 = vsel %vm2105, %v3329, %v3333
  %v3336 = vshrl.u32 %v3159, 16
  %v3338 = vrot.slane %v3336, 4
  %v3339 = vshll.u32 %v3159, 16
  %v3341 = vrot.slane %v3339, 5
  %v3342 = vor.u32 %v3338, %v3341
  %v3343 = vrot.slane %v3342, 4
  %v3345 = vshll.u32 %v3160, 16
  %v3347 = vrot.slane %v3345, 5
  %v3348 = vsel %vm2105, %v3343, %v3347
  %v3350 = vshrl.u32 %v3161, 16
  %v3352 = vrot.slane %v3350, 4
  %v3353 = vshll.u32 %v3161, 16
  %v3355 = vrot.slane %v3353, 5
  %v3356 = vor.u32 %v3352, %v3355
  %v3357 = vrot.slane %v3356, 4
  %v3359 = vshll.u32 %v3162, 16
  %v3361 = vrot.slane %v3359, 5
  %v3362 = vsel %vm2105, %v3357, %v3361
  %v3364 = vshrl.u32 %v3163, 16
  %v3366 = vrot.slane %v3364, 4
  %v3367 = vshll.u32 %v3163, 16
  %v3369 = vrot.slane %v3367, 5
  %v3370 = vor.u32 %v3366, %v3369
  %v3371 = vrot.slane %v3370, 4
  %v3373 = vshll.u32 %v3164, 16
  %v3375 = vrot.slane %v3373, 5
  %v3376 = vsel %vm2105, %v3371, %v3375
  %v3378 = vshrl.u32 %v3165, 16
  %v3380 = vrot.slane %v3378, 4
  %v3381 = vshll.u32 %v3165, 16
  %v3383 = vrot.slane %v3381, 5
  %v3384 = vor.u32 %v3380, %v3383
  %v3385 = vrot.slane %v3384, 4
  %v3387 = vshll.u32 %v3166, 16
  %v3389 = vrot.slane %v3387, 5
  %v3390 = vsel %vm2105, %v3385, %v3389
  %3391 = vrot.lane.b32.xlu0 %v3180, 20
  %v3392 = vpop.permute.xlu0 %3391
  %3393 = vrot.lane.b32.xlu0 %v3194, 20
  %v3394 = vpop.permute.xlu0 %3393
  %3395 = vrot.lane.b32.xlu0 %v3208, 20
  %v3396 = vpop.permute.xlu0 %3395
  %3397 = vrot.lane.b32.xlu0 %v3222, 20
  %v3398 = vpop.permute.xlu0 %3397
  %3399 = vrot.lane.b32.xlu0 %v3236, 20
  %v3400 = vpop.permute.xlu0 %3399
  %3401 = vrot.lane.b32.xlu0 %v3250, 20
  %v3402 = vpop.permute.xlu0 %3401
  %3403 = vrot.lane.b32.xlu0 %v3264, 20
  %v3404 = vpop.permute.xlu0 %3403
  %3405 = vrot.lane.b32.xlu0 %v3278, 20
  %v3406 = vpop.permute.xlu0 %3405
  %3407 = vrot.lane.b32.xlu0 %v3292, 20
  %v3408 = vpop.permute.xlu0 %3407
  %3409 = vrot.lane.b32.xlu0 %v3306, 20
  %v3410 = vpop.permute.xlu0 %3409
  %3411 = vrot.lane.b32.xlu0 %v3320, 20
  %v3412 = vpop.permute.xlu0 %3411
  %3413 = vrot.lane.b32.xlu0 %v3334, 20
  %v3414 = vpop.permute.xlu0 %3413
  %3415 = vrot.lane.b32.xlu0 %v3348, 20
  %v3416 = vpop.permute.xlu0 %3415
  %3417 = vrot.lane.b32.xlu0 %v3362, 20
  %v3418 = vpop.permute.xlu0 %3417
  %3419 = vrot.lane.b32.xlu0 %v3376, 20
  %v3420 = vpop.permute.xlu0 %3419
  %3421 = vrot.lane.b32.xlu0 %v3390, 20
  %v3422 = vpop.permute.xlu0 %3421
  %vm3439 = vcmask 191648
  %3440 = vst.msk [vmem:[#allocation3] sm:$0xf] %vm3439, %v3392
  %3441 = vst.msk [vmem:[#allocation3 + $0x4] sm:$0xf] %vm3439, %v3394
  %3442 = vst.msk [vmem:[#allocation3 + $0x8] sm:$0xf] %vm3439, %v3396
  %3443 = vst.msk [vmem:[#allocation3 + $0xc] sm:$0xf] %vm3439, %v3398
  %3444 = vst.msk [vmem:[#allocation3 + $0x10] sm:$0xf] %vm3439, %v3400
  %3445 = vst.msk [vmem:[#allocation3 + $0x14] sm:$0xf] %vm3439, %v3402
  %3446 = vst.msk [vmem:[#allocation3 + $0x18] sm:$0xf] %vm3439, %v3404
  %3447 = vst.msk [vmem:[#allocation3 + $0x1c] sm:$0xf] %vm3439, %v3406
  %3448 = vst.msk [vmem:[#allocation3 + $0x20] sm:$0xf] %vm3439, %v3408
  %3449 = vst.msk [vmem:[#allocation3 + $0x24] sm:$0xf] %vm3439, %v3410
  %3450 = vst.msk [vmem:[#allocation3 + $0x28] sm:$0xf] %vm3439, %v3412
  %3451 = vst.msk [vmem:[#allocation3 + $0x2c] sm:$0xf] %vm3439, %v3414
  %3452 = vst.msk [vmem:[#allocation3 + $0x30] sm:$0xf] %vm3439, %v3416
  %3453 = vst.msk [vmem:[#allocation3 + $0x34] sm:$0xf] %vm3439, %v3418
  %3454 = vst.msk [vmem:[#allocation3 + $0x38] sm:$0xf] %vm3439, %v3420
  %3455 = vst.msk [vmem:[#allocation3 + $0x3c] sm:$0xf] %vm3439, %v3422
  %s3456 = scalar_lea.vmem [#allocation2], 488
  %v3457 = vld [vmem:[%s3456] sm:$0xf]
  %v3458 = vld [vmem:[%s3456 + $0x8] sm:$0xf]
  %v3459 = vld [vmem:[%s3456 + $0x10] sm:$0xf]
  %v3460 = vld [vmem:[%s3456 + $0x18] sm:$0xf]
  %v3461 = vld [vmem:[%s3456 + $0x20] sm:$0xf]
  %v3462 = vld [vmem:[%s3456 + $0x28] sm:$0xf]
  %v3463 = vld [vmem:[%s3456 + $0x30] sm:$0xf]
  %v3464 = vld [vmem:[%s3456 + $0x38] sm:$0xf]
  %v3465 = vld [vmem:[%s3456 + $0x50] sm:$0xf]
  %v3466 = vld [vmem:[%s3456 + $0x58] sm:$0xf]
  %v3467 = vld [vmem:[%s3456 + $0x60] sm:$0xf]
  %v3468 = vld [vmem:[%s3456 + $0x68] sm:$0xf]
  %v3469 = vld [vmem:[%s3456 + $0x70] sm:$0xf]
  %v3470 = vld [vmem:[%s3456 + $0x78] sm:$0xf]
  %v3471 = vld [vmem:[%s3456 + $0x80] sm:$0xf]
  %v3472 = vld [vmem:[%s3456 + $0x88] sm:$0xf]
  %3489 = vrot.lane.b32.xlu0 %v3457, 24
  %v3490 = vpop.permute.xlu0 %3489
  %3491 = vrot.lane.b32.xlu0 %v3458, 24
  %v3492 = vpop.permute.xlu0 %3491
  %3493 = vrot.lane.b32.xlu0 %v3459, 24
  %v3494 = vpop.permute.xlu0 %3493
  %3495 = vrot.lane.b32.xlu0 %v3460, 24
  %v3496 = vpop.permute.xlu0 %3495
  %3497 = vrot.lane.b32.xlu0 %v3461, 24
  %v3498 = vpop.permute.xlu0 %3497
  %3499 = vrot.lane.b32.xlu0 %v3462, 24
  %v3500 = vpop.permute.xlu0 %3499
  %3501 = vrot.lane.b32.xlu0 %v3463, 24
  %v3502 = vpop.permute.xlu0 %3501
  %3503 = vrot.lane.b32.xlu0 %v3464, 24
  %v3504 = vpop.permute.xlu0 %3503
  %3505 = vrot.lane.b32.xlu0 %v3465, 24
  %v3506 = vpop.permute.xlu0 %3505
  %3507 = vrot.lane.b32.xlu0 %v3466, 24
  %v3508 = vpop.permute.xlu0 %3507
  %3509 = vrot.lane.b32.xlu0 %v3467, 24
  %v3510 = vpop.permute.xlu0 %3509
  %3511 = vrot.lane.b32.xlu0 %v3468, 24
  %v3512 = vpop.permute.xlu0 %3511
  %3513 = vrot.lane.b32.xlu0 %v3469, 24
  %v3514 = vpop.permute.xlu0 %3513
  %3515 = vrot.lane.b32.xlu0 %v3470, 24
  %v3516 = vpop.permute.xlu0 %3515
  %3517 = vrot.lane.b32.xlu0 %v3471, 24
  %v3518 = vpop.permute.xlu0 %3517
  %3519 = vrot.lane.b32.xlu0 %v3472, 24
  %v3520 = vpop.permute.xlu0 %3519
  %vm3537 = vcmask 224448
  %3538 = vst.msk [vmem:[#allocation3] sm:$0xf] %vm3537, %v3490
  %3539 = vst.msk [vmem:[#allocation3 + $0x4] sm:$0xf] %vm3537, %v3492
  %3540 = vst.msk [vmem:[#allocation3 + $0x8] sm:$0xf] %vm3537, %v3494
  %3541 = vst.msk [vmem:[#allocation3 + $0xc] sm:$0xf] %vm3537, %v3496
  %3542 = vst.msk [vmem:[#allocation3 + $0x10] sm:$0xf] %vm3537, %v3498
  %3543 = vst.msk [vmem:[#allocation3 + $0x14] sm:$0xf] %vm3537, %v3500
  %3544 = vst.msk [vmem:[#allocation3 + $0x18] sm:$0xf] %vm3537, %v3502
  %3545 = vst.msk [vmem:[#allocation3 + $0x1c] sm:$0xf] %vm3537, %v3504
  %3546 = vst.msk [vmem:[#allocation3 + $0x20] sm:$0xf] %vm3537, %v3506
  %3547 = vst.msk [vmem:[#allocation3 + $0x24] sm:$0xf] %vm3537, %v3508
  %3548 = vst.msk [vmem:[#allocation3 + $0x28] sm:$0xf] %vm3537, %v3510
  %3549 = vst.msk [vmem:[#allocation3 + $0x2c] sm:$0xf] %vm3537, %v3512
  %3550 = vst.msk [vmem:[#allocation3 + $0x30] sm:$0xf] %vm3537, %v3514
  %3551 = vst.msk [vmem:[#allocation3 + $0x34] sm:$0xf] %vm3537, %v3516
  %3552 = vst.msk [vmem:[#allocation3 + $0x38] sm:$0xf] %vm3537, %v3518
  %3553 = vst.msk [vmem:[#allocation3 + $0x3c] sm:$0xf] %vm3537, %v3520
  %s3554 = scalar_lea.vmem [#allocation2], 328
  %v3555 = vld [vmem:[%s3554] sm:$0xf]
  %v3556 = vld [vmem:[%s3554 + $0x4] sm:$0x1]
  %v3557 = vld [vmem:[%s3554 + $0x8] sm:$0xf]
  %v3558 = vld [vmem:[%s3554 + $0xc] sm:$0x1]
  %v3559 = vld [vmem:[%s3554 + $0x10] sm:$0xf]
  %v3560 = vld [vmem:[%s3554 + $0x14] sm:$0x1]
  %v3561 = vld [vmem:[%s3554 + $0x18] sm:$0xf]
  %v3562 = vld [vmem:[%s3554 + $0x1c] sm:$0x1]
  %v3563 = vld [vmem:[%s3554 + $0x20] sm:$0xf]
  %v3564 = vld [vmem:[%s3554 + $0x24] sm:$0x1]
  %v3565 = vld [vmem:[%s3554 + $0x28] sm:$0xf]
  %v3566 = vld [vmem:[%s3554 + $0x2c] sm:$0x1]
  %v3567 = vld [vmem:[%s3554 + $0x30] sm:$0xf]
  %v3568 = vld [vmem:[%s3554 + $0x34] sm:$0x1]
  %v3569 = vld [vmem:[%s3554 + $0x38] sm:$0xf]
  %v3570 = vld [vmem:[%s3554 + $0x3c] sm:$0x1]
  %v3571 = vld [vmem:[%s3554 + $0x50] sm:$0xf]
  %v3572 = vld [vmem:[%s3554 + $0x54] sm:$0x1]
  %v3573 = vld [vmem:[%s3554 + $0x58] sm:$0xf]
  %v3574 = vld [vmem:[%s3554 + $0x5c] sm:$0x1]
  %v3575 = vld [vmem:[%s3554 + $0x60] sm:$0xf]
  %v3576 = vld [vmem:[%s3554 + $0x64] sm:$0x1]
  %v3577 = vld [vmem:[%s3554 + $0x68] sm:$0xf]
  %v3578 = vld [vmem:[%s3554 + $0x6c] sm:$0x1]
  %v3579 = vld [vmem:[%s3554 + $0x70] sm:$0xf]
  %v3580 = vld [vmem:[%s3554 + $0x74] sm:$0x1]
  %v3581 = vld [vmem:[%s3554 + $0x78] sm:$0xf]
  %v3582 = vld [vmem:[%s3554 + $0x7c] sm:$0x1]
  %v3583 = vld [vmem:[%s3554 + $0x80] sm:$0xf]
  %v3584 = vld [vmem:[%s3554 + $0x84] sm:$0x1]
  %v3585 = vld [vmem:[%s3554 + $0x88] sm:$0xf]
  %v3586 = vld [vmem:[%s3554 + $0x8c] sm:$0x1]
  %v3588 = vshrl.u32 %v3555, 16
  %v3590 = vrot.slane %v3588, 4
  %v3591 = vshll.u32 %v3555, 16
  %v3593 = vrot.slane %v3591, 5
  %v3594 = vor.u32 %v3590, %v3593
  %v3595 = vrot.slane %v3594, 4
  %v3597 = vshll.u32 %v3556, 16
  %v3599 = vrot.slane %v3597, 5
  %v3600 = vsel %vm2105, %v3595, %v3599
  %v3602 = vshrl.u32 %v3557, 16
  %v3604 = vrot.slane %v3602, 4
  %v3605 = vshll.u32 %v3557, 16
  %v3607 = vrot.slane %v3605, 5
  %v3608 = vor.u32 %v3604, %v3607
  %v3609 = vrot.slane %v3608, 4
  %v3611 = vshll.u32 %v3558, 16
  %v3613 = vrot.slane %v3611, 5
  %v3614 = vsel %vm2105, %v3609, %v3613
  %v3616 = vshrl.u32 %v3559, 16
  %v3618 = vrot.slane %v3616, 4
  %v3619 = vshll.u32 %v3559, 16
  %v3621 = vrot.slane %v3619, 5
  %v3622 = vor.u32 %v3618, %v3621
  %v3623 = vrot.slane %v3622, 4
  %v3625 = vshll.u32 %v3560, 16
  %v3627 = vrot.slane %v3625, 5
  %v3628 = vsel %vm2105, %v3623, %v3627
  %v3630 = vshrl.u32 %v3561, 16
  %v3632 = vrot.slane %v3630, 4
  %v3633 = vshll.u32 %v3561, 16
  %v3635 = vrot.slane %v3633, 5
  %v3636 = vor.u32 %v3632, %v3635
  %v3637 = vrot.slane %v3636, 4
  %v3639 = vshll.u32 %v3562, 16
  %v3641 = vrot.slane %v3639, 5
  %v3642 = vsel %vm2105, %v3637, %v3641
  %v3644 = vshrl.u32 %v3563, 16
  %v3646 = vrot.slane %v3644, 4
  %v3647 = vshll.u32 %v3563, 16
  %v3649 = vrot.slane %v3647, 5
  %v3650 = vor.u32 %v3646, %v3649
  %v3651 = vrot.slane %v3650, 4
  %v3653 = vshll.u32 %v3564, 16
  %v3655 = vrot.slane %v3653, 5
  %v3656 = vsel %vm2105, %v3651, %v3655
  %v3658 = vshrl.u32 %v3565, 16
  %v3660 = vrot.slane %v3658, 4
  %v3661 = vshll.u32 %v3565, 16
  %v3663 = vrot.slane %v3661, 5
  %v3664 = vor.u32 %v3660, %v3663
  %v3665 = vrot.slane %v3664, 4
  %v3667 = vshll.u32 %v3566, 16
  %v3669 = vrot.slane %v3667, 5
  %v3670 = vsel %vm2105, %v3665, %v3669
  %v3672 = vshrl.u32 %v3567, 16
  %v3674 = vrot.slane %v3672, 4
  %v3675 = vshll.u32 %v3567, 16
  %v3677 = vrot.slane %v3675, 5
  %v3678 = vor.u32 %v3674, %v3677
  %v3679 = vrot.slane %v3678, 4
  %v3681 = vshll.u32 %v3568, 16
  %v3683 = vrot.slane %v3681, 5
  %v3684 = vsel %vm2105, %v3679, %v3683
  %v3686 = vshrl.u32 %v3569, 16
  %v3688 = vrot.slane %v3686, 4
  %v3689 = vshll.u32 %v3569, 16
  %v3691 = vrot.slane %v3689, 5
  %v3692 = vor.u32 %v3688, %v3691
  %v3693 = vrot.slane %v3692, 4
  %v3695 = vshll.u32 %v3570, 16
  %v3697 = vrot.slane %v3695, 5
  %v3698 = vsel %vm2105, %v3693, %v3697
  %v3700 = vshrl.u32 %v3571, 16
  %v3702 = vrot.slane %v3700, 4
  %v3703 = vshll.u32 %v3571, 16
  %v3705 = vrot.slane %v3703, 5
  %v3706 = vor.u32 %v3702, %v3705
  %v3707 = vrot.slane %v3706, 4
  %v3709 = vshll.u32 %v3572, 16
  %v3711 = vrot.slane %v3709, 5
  %v3712 = vsel %vm2105, %v3707, %v3711
  %v3714 = vshrl.u32 %v3573, 16
  %v3716 = vrot.slane %v3714, 4
  %v3717 = vshll.u32 %v3573, 16
  %v3719 = vrot.slane %v3717, 5
  %v3720 = vor.u32 %v3716, %v3719
  %v3721 = vrot.slane %v3720, 4
  %v3723 = vshll.u32 %v3574, 16
  %v3725 = vrot.slane %v3723, 5
  %v3726 = vsel %vm2105, %v3721, %v3725
  %v3728 = vshrl.u32 %v3575, 16
  %v3730 = vrot.slane %v3728, 4
  %v3731 = vshll.u32 %v3575, 16
  %v3733 = vrot.slane %v3731, 5
  %v3734 = vor.u32 %v3730, %v3733
  %v3735 = vrot.slane %v3734, 4
  %v3737 = vshll.u32 %v3576, 16
  %v3739 = vrot.slane %v3737, 5
  %v3740 = vsel %vm2105, %v3735, %v3739
  %v3742 = vshrl.u32 %v3577, 16
  %v3744 = vrot.slane %v3742, 4
  %v3745 = vshll.u32 %v3577, 16
  %v3747 = vrot.slane %v3745, 5
  %v3748 = vor.u32 %v3744, %v3747
  %v3749 = vrot.slane %v3748, 4
  %v3751 = vshll.u32 %v3578, 16
  %v3753 = vrot.slane %v3751, 5
  %v3754 = vsel %vm2105, %v3749, %v3753
  %v3756 = vshrl.u32 %v3579, 16
  %v3758 = vrot.slane %v3756, 4
  %v3759 = vshll.u32 %v3579, 16
  %v3761 = vrot.slane %v3759, 5
  %v3762 = vor.u32 %v3758, %v3761
  %v3763 = vrot.slane %v3762, 4
  %v3765 = vshll.u32 %v3580, 16
  %v3767 = vrot.slane %v3765, 5
  %v3768 = vsel %vm2105, %v3763, %v3767
  %v3770 = vshrl.u32 %v3581, 16
  %v3772 = vrot.slane %v3770, 4
  %v3773 = vshll.u32 %v3581, 16
  %v3775 = vrot.slane %v3773, 5
  %v3776 = vor.u32 %v3772, %v3775
  %v3777 = vrot.slane %v3776, 4
  %v3779 = vshll.u32 %v3582, 16
  %v3781 = vrot.slane %v3779, 5
  %v3782 = vsel %vm2105, %v3777, %v3781
  %v3784 = vshrl.u32 %v3583, 16
  %v3786 = vrot.slane %v3784, 4
  %v3787 = vshll.u32 %v3583, 16
  %v3789 = vrot.slane %v3787, 5
  %v3790 = vor.u32 %v3786, %v3789
  %v3791 = vrot.slane %v3790, 4
  %v3793 = vshll.u32 %v3584, 16
  %v3795 = vrot.slane %v3793, 5
  %v3796 = vsel %vm2105, %v3791, %v3795
  %v3798 = vshrl.u32 %v3585, 16
  %v3800 = vrot.slane %v3798, 4
  %v3801 = vshll.u32 %v3585, 16
  %v3803 = vrot.slane %v3801, 5
  %v3804 = vor.u32 %v3800, %v3803
  %v3805 = vrot.slane %v3804, 4
  %v3807 = vshll.u32 %v3586, 16
  %v3809 = vrot.slane %v3807, 5
  %v3810 = vsel %vm2105, %v3805, %v3809
  %3811 = vrot.lane.b32.xlu0 %v3600, 28
  %v3812 = vpop.permute.xlu0 %3811
  %3813 = vrot.lane.b32.xlu0 %v3614, 28
  %v3814 = vpop.permute.xlu0 %3813
  %3815 = vrot.lane.b32.xlu0 %v3628, 28
  %v3816 = vpop.permute.xlu0 %3815
  %3817 = vrot.lane.b32.xlu0 %v3642, 28
  %v3818 = vpop.permute.xlu0 %3817
  %3819 = vrot.lane.b32.xlu0 %v3656, 28
  %v3820 = vpop.permute.xlu0 %3819
  %3821 = vrot.lane.b32.xlu0 %v3670, 28
  %v3822 = vpop.permute.xlu0 %3821
  %3823 = vrot.lane.b32.xlu0 %v3684, 28
  %v3824 = vpop.permute.xlu0 %3823
  %3825 = vrot.lane.b32.xlu0 %v3698, 28
  %v3826 = vpop.permute.xlu0 %3825
  %3827 = vrot.lane.b32.xlu0 %v3712, 28
  %v3828 = vpop.permute.xlu0 %3827
  %3829 = vrot.lane.b32.xlu0 %v3726, 28
  %v3830 = vpop.permute.xlu0 %3829
  %3831 = vrot.lane.b32.xlu0 %v3740, 28
  %v3832 = vpop.permute.xlu0 %3831
  %3833 = vrot.lane.b32.xlu0 %v3754, 28
  %v3834 = vpop.permute.xlu0 %3833
  %3835 = vrot.lane.b32.xlu0 %v3768, 28
  %v3836 = vpop.permute.xlu0 %3835
  %3837 = vrot.lane.b32.xlu0 %v3782, 28
  %v3838 = vpop.permute.xlu0 %3837
  %3839 = vrot.lane.b32.xlu0 %v3796, 28
  %v3840 = vpop.permute.xlu0 %3839
  %3841 = vrot.lane.b32.xlu0 %v3810, 28
  %v3842 = vpop.permute.xlu0 %3841
  %vm3859 = vcmask 257248
  %3860 = vst.msk [vmem:[#allocation3] sm:$0xf] %vm3859, %v3812
  %3861 = vst.msk [vmem:[#allocation3 + $0x4] sm:$0xf] %vm3859, %v3814
  %3862 = vst.msk [vmem:[#allocation3 + $0x8] sm:$0xf] %vm3859, %v3816
  %3863 = vst.msk [vmem:[#allocation3 + $0xc] sm:$0xf] %vm3859, %v3818
  %3864 = vst.msk [vmem:[#allocation3 + $0x10] sm:$0xf] %vm3859, %v3820
  %3865 = vst.msk [vmem:[#allocation3 + $0x14] sm:$0xf] %vm3859, %v3822
  %3866 = vst.msk [vmem:[#allocation3 + $0x18] sm:$0xf] %vm3859, %v3824
  %3867 = vst.msk [vmem:[#allocation3 + $0x1c] sm:$0xf] %vm3859, %v3826
  %3868 = vst.msk [vmem:[#allocation3 + $0x20] sm:$0xf] %vm3859, %v3828
  %3869 = vst.msk [vmem:[#allocation3 + $0x24] sm:$0xf] %vm3859, %v3830
  %3870 = vst.msk [vmem:[#allocation3 + $0x28] sm:$0xf] %vm3859, %v3832
  %3871 = vst.msk [vmem:[#allocation3 + $0x2c] sm:$0xf] %vm3859, %v3834
  %3872 = vst.msk [vmem:[#allocation3 + $0x30] sm:$0xf] %vm3859, %v3836
  %3873 = vst.msk [vmem:[#allocation3 + $0x34] sm:$0xf] %vm3859, %v3838
  %3874 = vst.msk [vmem:[#allocation3 + $0x38] sm:$0xf] %vm3859, %v3840
  %3875 = vst.msk [vmem:[#allocation3 + $0x3c] sm:$0xf] %vm3859, %v3842
  %v3876 = vld [vmem:[%s3456] sm:$0xf]
  %v3877 = vld [vmem:[%s3456 + $0x4] sm:$0x1]
  %v3878 = vld [vmem:[%s3456 + $0x8] sm:$0xf]
  %v3879 = vld [vmem:[%s3456 + $0xc] sm:$0x1]
  %v3880 = vld [vmem:[%s3456 + $0x10] sm:$0xf]
  %v3881 = vld [vmem:[%s3456 + $0x14] sm:$0x1]
  %v3882 = vld [vmem:[%s3456 + $0x18] sm:$0xf]
  %v3883 = vld [vmem:[%s3456 + $0x1c] sm:$0x1]
  %v3884 = vld [vmem:[%s3456 + $0x20] sm:$0xf]
  %v3885 = vld [vmem:[%s3456 + $0x24] sm:$0x1]
  %v3886 = vld [vmem:[%s3456 + $0x28] sm:$0xf]
  %v3887 = vld [vmem:[%s3456 + $0x2c] sm:$0x1]
  %v3888 = vld [vmem:[%s3456 + $0x30] sm:$0xf]
  %v3889 = vld [vmem:[%s3456 + $0x34] sm:$0x1]
  %v3890 = vld [vmem:[%s3456 + $0x38] sm:$0xf]
  %v3891 = vld [vmem:[%s3456 + $0x3c] sm:$0x1]
  %v3892 = vld [vmem:[%s3456 + $0x50] sm:$0xf]
  %v3893 = vld [vmem:[%s3456 + $0x54] sm:$0x1]
  %v3894 = vld [vmem:[%s3456 + $0x58] sm:$0xf]
  %v3895 = vld [vmem:[%s3456 + $0x5c] sm:$0x1]
  %v3896 = vld [vmem:[%s3456 + $0x60] sm:$0xf]
  %v3897 = vld [vmem:[%s3456 + $0x64] sm:$0x1]
  %v3898 = vld [vmem:[%s3456 + $0x68] sm:$0xf]
  %v3899 = vld [vmem:[%s3456 + $0x6c] sm:$0x1]
  %v3900 = vld [vmem:[%s3456 + $0x70] sm:$0xf]
  %v3901 = vld [vmem:[%s3456 + $0x74] sm:$0x1]
  %v3902 = vld [vmem:[%s3456 + $0x78] sm:$0xf]
  %v3903 = vld [vmem:[%s3456 + $0x7c] sm:$0x1]
  %v3904 = vld [vmem:[%s3456 + $0x80] sm:$0xf]
  %v3905 = vld [vmem:[%s3456 + $0x84] sm:$0x1]
  %v3906 = vld [vmem:[%s3456 + $0x88] sm:$0xf]
  %v3907 = vld [vmem:[%s3456 + $0x8c] sm:$0x1]
  %v3909 = vshrl.u32 %v3876, 16
  %v3911 = vrot.slane %v3909, 4
  %v3912 = vshll.u32 %v3876, 16
  %v3914 = vrot.slane %v3912, 5
  %v3915 = vor.u32 %v3911, %v3914
  %v3916 = vrot.slane %v3915, 4
  %v3918 = vshll.u32 %v3877, 16
  %v3920 = vrot.slane %v3918, 5
  %v3921 = vsel %vm2105, %v3916, %v3920
  %v3923 = vshrl.u32 %v3878, 16
  %v3925 = vrot.slane %v3923, 4
  %v3926 = vshll.u32 %v3878, 16
  %v3928 = vrot.slane %v3926, 5
  %v3929 = vor.u32 %v3925, %v3928
  %v3930 = vrot.slane %v3929, 4
  %v3932 = vshll.u32 %v3879, 16
  %v3934 = vrot.slane %v3932, 5
  %v3935 = vsel %vm2105, %v3930, %v3934
  %v3937 = vshrl.u32 %v3880, 16
  %v3939 = vrot.slane %v3937, 4
  %v3940 = vshll.u32 %v3880, 16
  %v3942 = vrot.slane %v3940, 5
  %v3943 = vor.u32 %v3939, %v3942
  %v3944 = vrot.slane %v3943, 4
  %v3946 = vshll.u32 %v3881, 16
  %v3948 = vrot.slane %v3946, 5
  %v3949 = vsel %vm2105, %v3944, %v3948
  %v3951 = vshrl.u32 %v3882, 16
  %v3953 = vrot.slane %v3951, 4
  %v3954 = vshll.u32 %v3882, 16
  %v3956 = vrot.slane %v3954, 5
  %v3957 = vor.u32 %v3953, %v3956
  %v3958 = vrot.slane %v3957, 4
  %v3960 = vshll.u32 %v3883, 16
  %v3962 = vrot.slane %v3960, 5
  %v3963 = vsel %vm2105, %v3958, %v3962
  %v3965 = vshrl.u32 %v3884, 16
  %v3967 = vrot.slane %v3965, 4
  %v3968 = vshll.u32 %v3884, 16
  %v3970 = vrot.slane %v3968, 5
  %v3971 = vor.u32 %v3967, %v3970
  %v3972 = vrot.slane %v3971, 4
  %v3974 = vshll.u32 %v3885, 16
  %v3976 = vrot.slane %v3974, 5
  %v3977 = vsel %vm2105, %v3972, %v3976
  %v3979 = vshrl.u32 %v3886, 16
  %v3981 = vrot.slane %v3979, 4
  %v3982 = vshll.u32 %v3886, 16
  %v3984 = vrot.slane %v3982, 5
  %v3985 = vor.u32 %v3981, %v3984
  %v3986 = vrot.slane %v3985, 4
  %v3988 = vshll.u32 %v3887, 16
  %v3990 = vrot.slane %v3988, 5
  %v3991 = vsel %vm2105, %v3986, %v3990
  %v3993 = vshrl.u32 %v3888, 16
  %v3995 = vrot.slane %v3993, 4
  %v3996 = vshll.u32 %v3888, 16
  %v3998 = vrot.slane %v3996, 5
  %v3999 = vor.u32 %v3995, %v3998
  %v4000 = vrot.slane %v3999, 4
  %v4002 = vshll.u32 %v3889, 16
  %v4004 = vrot.slane %v4002, 5
  %v4005 = vsel %vm2105, %v4000, %v4004
  %v4007 = vshrl.u32 %v3890, 16
  %v4009 = vrot.slane %v4007, 4
  %v4010 = vshll.u32 %v3890, 16
  %v4012 = vrot.slane %v4010, 5
  %v4013 = vor.u32 %v4009, %v4012
  %v4014 = vrot.slane %v4013, 4
  %v4016 = vshll.u32 %v3891, 16
  %v4018 = vrot.slane %v4016, 5
  %v4019 = vsel %vm2105, %v4014, %v4018
  %v4021 = vshrl.u32 %v3892, 16
  %v4023 = vrot.slane %v4021, 4
  %v4024 = vshll.u32 %v3892, 16
  %v4026 = vrot.slane %v4024, 5
  %v4027 = vor.u32 %v4023, %v4026
  %v4028 = vrot.slane %v4027, 4
  %v4030 = vshll.u32 %v3893, 16
  %v4032 = vrot.slane %v4030, 5
  %v4033 = vsel %vm2105, %v4028, %v4032
  %v4035 = vshrl.u32 %v3894, 16
  %v4037 = vrot.slane %v4035, 4
  %v4038 = vshll.u32 %v3894, 16
  %v4040 = vrot.slane %v4038, 5
  %v4041 = vor.u32 %v4037, %v4040
  %v4042 = vrot.slane %v4041, 4
  %v4044 = vshll.u32 %v3895, 16
  %v4046 = vrot.slane %v4044, 5
  %v4047 = vsel %vm2105, %v4042, %v4046
  %v4049 = vshrl.u32 %v3896, 16
  %v4051 = vrot.slane %v4049, 4
  %v4052 = vshll.u32 %v3896, 16
  %v4054 = vrot.slane %v4052, 5
  %v4055 = vor.u32 %v4051, %v4054
  %v4056 = vrot.slane %v4055, 4
  %v4058 = vshll.u32 %v3897, 16
  %v4060 = vrot.slane %v4058, 5
  %v4061 = vsel %vm2105, %v4056, %v4060
  %v4063 = vshrl.u32 %v3898, 16
  %v4065 = vrot.slane %v4063, 4
  %v4066 = vshll.u32 %v3898, 16
  %v4068 = vrot.slane %v4066, 5
  %v4069 = vor.u32 %v4065, %v4068
  %v4070 = vrot.slane %v4069, 4
  %v4072 = vshll.u32 %v3899, 16
  %v4074 = vrot.slane %v4072, 5
  %v4075 = vsel %vm2105, %v4070, %v4074
  %v4077 = vshrl.u32 %v3900, 16
  %v4079 = vrot.slane %v4077, 4
  %v4080 = vshll.u32 %v3900, 16
  %v4082 = vrot.slane %v4080, 5
  %v4083 = vor.u32 %v4079, %v4082
  %v4084 = vrot.slane %v4083, 4
  %v4086 = vshll.u32 %v3901, 16
  %v4088 = vrot.slane %v4086, 5
  %v4089 = vsel %vm2105, %v4084, %v4088
  %v4091 = vshrl.u32 %v3902, 16
  %v4093 = vrot.slane %v4091, 4
  %v4094 = vshll.u32 %v3902, 16
  %v4096 = vrot.slane %v4094, 5
  %v4097 = vor.u32 %v4093, %v4096
  %v4098 = vrot.slane %v4097, 4
  %v4100 = vshll.u32 %v3903, 16
  %v4102 = vrot.slane %v4100, 5
  %v4103 = vsel %vm2105, %v4098, %v4102
  %v4105 = vshrl.u32 %v3904, 16
  %v4107 = vrot.slane %v4105, 4
  %v4108 = vshll.u32 %v3904, 16
  %v4110 = vrot.slane %v4108, 5
  %v4111 = vor.u32 %v4107, %v4110
  %v4112 = vrot.slane %v4111, 4
  %v4114 = vshll.u32 %v3905, 16
  %v4116 = vrot.slane %v4114, 5
  %v4117 = vsel %vm2105, %v4112, %v4116
  %v4119 = vshrl.u32 %v3906, 16
  %v4121 = vrot.slane %v4119, 4
  %v4122 = vshll.u32 %v3906, 16
  %v4124 = vrot.slane %v4122, 5
  %v4125 = vor.u32 %v4121, %v4124
  %v4126 = vrot.slane %v4125, 4
  %v4128 = vshll.u32 %v3907, 16
  %v4130 = vrot.slane %v4128, 5
  %v4131 = vsel %vm2105, %v4126, %v4130
  %4132 = vrot.lane.b32.xlu0 %v3921, 32
  %v4133 = vpop.permute.xlu0 %4132
  %4134 = vrot.lane.b32.xlu0 %v3935, 32
  %v4135 = vpop.permute.xlu0 %4134
  %4136 = vrot.lane.b32.xlu0 %v3949, 32
  %v4137 = vpop.permute.xlu0 %4136
  %4138 = vrot.lane.b32.xlu0 %v3963, 32
  %v4139 = vpop.permute.xlu0 %4138
  %4140 = vrot.lane.b32.xlu0 %v3977, 32
  %v4141 = vpop.permute.xlu0 %4140
  %4142 = vrot.lane.b32.xlu0 %v3991, 32
  %v4143 = vpop.permute.xlu0 %4142
  %4144 = vrot.lane.b32.xlu0 %v4005, 32
  %v4145 = vpop.permute.xlu0 %4144
  %4146 = vrot.lane.b32.xlu0 %v4019, 32
  %v4147 = vpop.permute.xlu0 %4146
  %4148 = vrot.lane.b32.xlu0 %v4033, 32
  %v4149 = vpop.permute.xlu0 %4148
  %4150 = vrot.lane.b32.xlu0 %v4047, 32
  %v4151 = vpop.permute.xlu0 %4150
  %4152 = vrot.lane.b32.xlu0 %v4061, 32
  %v4153 = vpop.permute.xlu0 %4152
  %4154 = vrot.lane.b32.xlu0 %v4075, 32
  %v4155 = vpop.permute.xlu0 %4154
  %4156 = vrot.lane.b32.xlu0 %v4089, 32
  %v4157 = vpop.permute.xlu0 %4156
  %4158 = vrot.lane.b32.xlu0 %v4103, 32
  %v4159 = vpop.permute.xlu0 %4158
  %4160 = vrot.lane.b32.xlu0 %v4117, 32
  %v4161 = vpop.permute.xlu0 %4160
  %4162 = vrot.lane.b32.xlu0 %v4131, 32
  %v4163 = vpop.permute.xlu0 %4162
  %vm4180 = vcmask 290048
  %4181 = vst.msk [vmem:[#allocation3] sm:$0xf] %vm4180, %v4133
  %4182 = vst.msk [vmem:[#allocation3 + $0x4] sm:$0xf] %vm4180, %v4135
  %4183 = vst.msk [vmem:[#allocation3 + $0x8] sm:$0xf] %vm4180, %v4137
  %4184 = vst.msk [vmem:[#allocation3 + $0xc] sm:$0xf] %vm4180, %v4139
  %4185 = vst.msk [vmem:[#allocation3 + $0x10] sm:$0xf] %vm4180, %v4141
  %4186 = vst.msk [vmem:[#allocation3 + $0x14] sm:$0xf] %vm4180, %v4143
  %4187 = vst.msk [vmem:[#allocation3 + $0x18] sm:$0xf] %vm4180, %v4145
  %4188 = vst.msk [vmem:[#allocation3 + $0x1c] sm:$0xf] %vm4180, %v4147
  %4189 = vst.msk [vmem:[#allocation3 + $0x20] sm:$0xf] %vm4180, %v4149
  %4190 = vst.msk [vmem:[#allocation3 + $0x24] sm:$0xf] %vm4180, %v4151
  %4191 = vst.msk [vmem:[#allocation3 + $0x28] sm:$0xf] %vm4180, %v4153
  %4192 = vst.msk [vmem:[#allocation3 + $0x2c] sm:$0xf] %vm4180, %v4155
  %4193 = vst.msk [vmem:[#allocation3 + $0x30] sm:$0xf] %vm4180, %v4157
  %4194 = vst.msk [vmem:[#allocation3 + $0x34] sm:$0xf] %vm4180, %v4159
  %4195 = vst.msk [vmem:[#allocation3 + $0x38] sm:$0xf] %vm4180, %v4161
  %4196 = vst.msk [vmem:[#allocation3 + $0x3c] sm:$0xf] %vm4180, %v4163
  %v4197 = vld [vmem:[#allocation3] sm:$0xf]
  %v4198 = vld [vmem:[#allocation3 + $0x4] sm:$0xf]
  %v4199 = vld [vmem:[#allocation3 + $0x8] sm:$0xf]
  %v4200 = vld [vmem:[#allocation3 + $0xc] sm:$0xf]
  %v4201 = vld [vmem:[#allocation3 + $0x10] sm:$0xf]
  %v4202 = vld [vmem:[#allocation3 + $0x14] sm:$0xf]
  %v4203 = vld [vmem:[#allocation3 + $0x18] sm:$0xf]
  %v4204 = vld [vmem:[#allocation3 + $0x1c] sm:$0xf]
  %v4205 = vld [vmem:[#allocation3 + $0x20] sm:$0xf]
  %v4206 = vld [vmem:[#allocation3 + $0x24] sm:$0xf]
  %v4207 = vld [vmem:[#allocation3 + $0x28] sm:$0xf]
  %v4208 = vld [vmem:[#allocation3 + $0x2c] sm:$0xf]
  %v4209 = vld [vmem:[#allocation3 + $0x30] sm:$0xf]
  %v4210 = vld [vmem:[#allocation3 + $0x34] sm:$0xf]
  %v4211 = vld [vmem:[#allocation3 + $0x38] sm:$0xf]
  %v4212 = vld [vmem:[#allocation3 + $0x3c] sm:$0xf]
  %v4213 = vld [vmem:[%s3] sm:$0xf]
  %v4214 = vld [vmem:[%s3 + $0x4] sm:$0xf]
  %v4215 = vld [vmem:[%s3 + $0x8] sm:$0xf]
  %v4216 = vld [vmem:[%s3 + $0xc] sm:$0xf]
  %v4217 = vld [vmem:[%s3 + $0x10] sm:$0x3]
  %v4234 = vunpack.c.l.b16 %v4197
  %v4235 = vunpack.c.l.b16 %v4198
  %v4236 = vunpack.c.l.b16 %v4199
  %v4237 = vunpack.c.l.b16 %v4200
  %v4238 = vunpack.c.l.b16 %v4201
  %v4239 = vunpack.c.l.b16 %v4202
  %v4240 = vunpack.c.l.b16 %v4203
  %v4241 = vunpack.c.l.b16 %v4204
  %v4242 = vunpack.c.l.b16 %v4205
  %v4243 = vunpack.c.l.b16 %v4206
  %v4244 = vunpack.c.l.b16 %v4207
  %v4245 = vunpack.c.l.b16 %v4208
  %v4246 = vunpack.c.l.b16 %v4209
  %v4247 = vunpack.c.l.b16 %v4210
  %v4248 = vunpack.c.l.b16 %v4211
  %v4249 = vunpack.c.l.b16 %v4212
  %v4250 = vpack.c.b16 %v4235, %v4234
  %v4251 = vpack.c.b16 %v4237, %v4236
  %v4252 = vpack.c.b16 %v4239, %v4238
  %v4253 = vpack.c.b16 %v4241, %v4240
  %v4254 = vpack.c.b16 %v4243, %v4242
  %v4255 = vpack.c.b16 %v4245, %v4244
  %v4256 = vpack.c.b16 %v4247, %v4246
  %v4257 = vpack.c.b16 %v4249, %v4248
  %v4263 = vunpack.c.l.b16 %v4213
  %v4264 = vunpack.c.l.b16 %v4214
  %v4265 = vunpack.c.l.b16 %v4215
  %v4266 = vunpack.c.l.b16 %v4216
  %v4267 = vunpack.c.l.b16 %v4217
  %v4268 = vpack.c.b16 %v4264, %v4263
  %v4269 = vpack.c.b16 %v4266, %v4265
  %v4270 = vpack.c.b16 %v4267, %v4267
  %vm4273 = vcmask 293888
  %v4275 = vsel %vm4273, %v4250, 0
  %v4278 = vsel %vm4273, %v4251, 0
  %v4281 = vsel %vm4273, %v4252, 0
  %v4284 = vsel %vm4273, %v4253, 0
  %v4287 = vsel %vm4273, %v4254, 0
  %v4290 = vsel %vm4273, %v4255, 0
  %v4293 = vsel %vm4273, %v4256, 0
  %v4296 = vsel %vm4273, %v4257, 0
  %vm4298 = vcmask 1041408
  %v4300 = vsel %vm4298, %v4270, 0
  %4302 = vmatpush.bf16.msra.mxu0 0
  %4303 = vmatpush.bf16.msra.mxu0 0
  %4304 = vmatpush.bf16.msra.mxu0 0
  %4305 = vmatpush.bf16.msra.mxu0 0
  %4306 = vmatpush.bf16.msra.mxu0 0
  %4307 = vmatpush.bf16.msra.mxu0 %v4300
  %4308 = vmatpush.bf16.msra.mxu0 %v4269
  %4309 = vmatpush.bf16.msra.mxu0 %v4268
  %4310 = vmatmul.bf16.gmra.mxu0 %v4275
  %v4311 = vpop.f32.mrf.mxu0
  %v4312 = vadd.f32 0.0, %v4311
  %v4313 = vpop.f32.mrf.mxu0
  %v4314 = vadd.f32 0.0, %v4313
  %4315 = vmatmul.bf16.gmra.mxu0 %v4278
  %v4316 = vpop.f32.mrf.mxu0
  %v4317 = vadd.f32 0.0, %v4316
  %v4318 = vpop.f32.mrf.mxu0
  %v4319 = vadd.f32 0.0, %v4318
  %4320 = vmatmul.bf16.gmra.mxu0 %v4281
  %v4321 = vpop.f32.mrf.mxu0
  %v4322 = vadd.f32 0.0, %v4321
  %v4323 = vpop.f32.mrf.mxu0
  %v4324 = vadd.f32 0.0, %v4323
  %4325 = vmatmul.bf16.gmra.mxu0 %v4284
  %v4326 = vpop.f32.mrf.mxu0
  %v4327 = vadd.f32 0.0, %v4326
  %v4328 = vpop.f32.mrf.mxu0
  %v4329 = vadd.f32 0.0, %v4328
  %4330 = vmatmul.bf16.gmra.mxu0 %v4287
  %v4331 = vpop.f32.mrf.mxu0
  %v4332 = vadd.f32 0.0, %v4331
  %v4333 = vpop.f32.mrf.mxu0
  %v4334 = vadd.f32 0.0, %v4333
  %4335 = vmatmul.bf16.gmra.mxu0 %v4290
  %v4336 = vpop.f32.mrf.mxu0
  %v4337 = vadd.f32 0.0, %v4336
  %v4338 = vpop.f32.mrf.mxu0
  %v4339 = vadd.f32 0.0, %v4338
  %4340 = vmatmul.bf16.gmra.mxu0 %v4293
  %v4341 = vpop.f32.mrf.mxu0
  %v4342 = vadd.f32 0.0, %v4341
  %v4343 = vpop.f32.mrf.mxu0
  %v4344 = vadd.f32 0.0, %v4343
  %4345 = vmatmul.bf16.gmra.mxu0 %v4296
  %v4346 = vpop.f32.mrf.mxu0
  %v4347 = vadd.f32 0.0, %v4346
  %v4348 = vpop.f32.mrf.mxu0
  %v4349 = vadd.f32 0.0, %v4348
  %4350 = vdwg.mxu0
  %v4351 = vld [vmem:[%s4] sm:$0x1]
  %v4353 = vperm.slane %v4351, 0
  %v4355 = vmul.f32 %v4312, %v4353
  %v4356 = vmul.f32 %v4314, %v4353
  %v4357 = vmul.f32 %v4317, %v4353
  %v4358 = vmul.f32 %v4319, %v4353
  %v4359 = vmul.f32 %v4322, %v4353
  %v4360 = vmul.f32 %v4324, %v4353
  %v4361 = vmul.f32 %v4327, %v4353
  %v4362 = vmul.f32 %v4329, %v4353
  %v4363 = vmul.f32 %v4332, %v4353
  %v4364 = vmul.f32 %v4334, %v4353
  %v4365 = vmul.f32 %v4337, %v4353
  %v4366 = vmul.f32 %v4339, %v4353
  %v4367 = vmul.f32 %v4342, %v4353
  %v4368 = vmul.f32 %v4344, %v4353
  %v4369 = vmul.f32 %v4347, %v4353
  %v4370 = vmul.f32 %v4349, %v4353
  %v4371 = vld [vmem:[%s5] sm:$0x1]
  %v4373 = vperm.slane %v4371, 0
  %v4375 = vadd.f32 %v4355, %v4373
  %v4376 = vadd.f32 %v4356, %v4373
  %v4377 = vadd.f32 %v4357, %v4373
  %v4378 = vadd.f32 %v4358, %v4373
  %v4379 = vadd.f32 %v4359, %v4373
  %v4380 = vadd.f32 %v4360, %v4373
  %v4381 = vadd.f32 %v4361, %v4373
  %v4382 = vadd.f32 %v4362, %v4373
  %v4383 = vadd.f32 %v4363, %v4373
  %v4384 = vadd.f32 %v4364, %v4373
  %v4385 = vadd.f32 %v4365, %v4373
  %v4386 = vadd.f32 %v4366, %v4373
  %v4387 = vadd.f32 %v4367, %v4373
  %v4388 = vadd.f32 %v4368, %v4373
  %v4389 = vadd.f32 %v4369, %v4373
  %v4390 = vadd.f32 %v4370, %v4373
  %v4391 = vmax.f32 %v4375, 0.0
  %v4392 = vmax.f32 %v4376, 0.0
  %v4393 = vmax.f32 %v4377, 0.0
  %v4394 = vmax.f32 %v4378, 0.0
  %v4395 = vmax.f32 %v4379, 0.0
  %v4396 = vmax.f32 %v4380, 0.0
  %v4397 = vmax.f32 %v4381, 0.0
  %v4398 = vmax.f32 %v4382, 0.0
  %v4399 = vmax.f32 %v4383, 0.0
  %v4400 = vmax.f32 %v4384, 0.0
  %v4401 = vmax.f32 %v4385, 0.0
  %v4402 = vmax.f32 %v4386, 0.0
  %v4403 = vmax.f32 %v4387, 0.0
  %v4404 = vmax.f32 %v4388, 0.0
  %v4405 = vmax.f32 %v4389, 0.0
  %v4406 = vmax.f32 %v4390, 0.0
  %v4407 = vpack.c.bf16 %v4391, %v4391
  %v4408 = vpack.c.bf16 %v4392, %v4392
  %v4409 = vpack.c.bf16 %v4393, %v4393
  %v4410 = vpack.c.bf16 %v4394, %v4394
  %v4411 = vpack.c.bf16 %v4395, %v4395
  %v4412 = vpack.c.bf16 %v4396, %v4396
  %v4413 = vpack.c.bf16 %v4397, %v4397
  %v4414 = vpack.c.bf16 %v4398, %v4398
  %v4415 = vpack.c.bf16 %v4399, %v4399
  %v4416 = vpack.c.bf16 %v4400, %v4400
  %v4417 = vpack.c.bf16 %v4401, %v4401
  %v4418 = vpack.c.bf16 %v4402, %v4402
  %v4419 = vpack.c.bf16 %v4403, %v4403
  %v4420 = vpack.c.bf16 %v4404, %v4404
  %v4421 = vpack.c.bf16 %v4405, %v4405
  %v4422 = vpack.c.bf16 %v4406, %v4406
  %v4424 = vshrl.u32 %v4407, 16
  %v4426 = vrot.slane %v4424, 7
  %v4427 = vshll.u32 %v4407, 16
  %v4429 = vor.u32 %v4426, %v4427
  %v4430 = vrot.slane %v4426, 4
  %v4432 = vshrl.u32 %v4408, 16
  %v4434 = vrot.slane %v4432, 7
  %v4435 = vshll.u32 %v4408, 16
  %v4437 = vor.u32 %v4434, %v4435
  %v4438 = vrot.slane %v4434, 4
  %v4440 = vshrl.u32 %v4409, 16
  %v4442 = vrot.slane %v4440, 7
  %v4443 = vshll.u32 %v4409, 16
  %v4445 = vor.u32 %v4442, %v4443
  %v4446 = vrot.slane %v4442, 4
  %v4448 = vshrl.u32 %v4410, 16
  %v4450 = vrot.slane %v4448, 7
  %v4451 = vshll.u32 %v4410, 16
  %v4453 = vor.u32 %v4450, %v4451
  %v4454 = vrot.slane %v4450, 4
  %v4456 = vshrl.u32 %v4411, 16
  %v4458 = vrot.slane %v4456, 7
  %v4459 = vshll.u32 %v4411, 16
  %v4461 = vor.u32 %v4458, %v4459
  %v4462 = vrot.slane %v4458, 4
  %v4464 = vshrl.u32 %v4412, 16
  %v4466 = vrot.slane %v4464, 7
  %v4467 = vshll.u32 %v4412, 16
  %v4469 = vor.u32 %v4466, %v4467
  %v4470 = vrot.slane %v4466, 4
  %v4472 = vshrl.u32 %v4413, 16
  %v4474 = vrot.slane %v4472, 7
  %v4475 = vshll.u32 %v4413, 16
  %v4477 = vor.u32 %v4474, %v4475
  %v4478 = vrot.slane %v4474, 4
  %v4480 = vshrl.u32 %v4414, 16
  %v4482 = vrot.slane %v4480, 7
  %v4483 = vshll.u32 %v4414, 16
  %v4485 = vor.u32 %v4482, %v4483
  %v4486 = vrot.slane %v4482, 4
  %v4488 = vshrl.u32 %v4415, 16
  %v4490 = vrot.slane %v4488, 7
  %v4491 = vshll.u32 %v4415, 16
  %v4493 = vor.u32 %v4490, %v4491
  %v4494 = vrot.slane %v4490, 4
  %v4496 = vshrl.u32 %v4416, 16
  %v4498 = vrot.slane %v4496, 7
  %v4499 = vshll.u32 %v4416, 16
  %v4501 = vor.u32 %v4498, %v4499
  %v4502 = vrot.slane %v4498, 4
  %v4504 = vshrl.u32 %v4417, 16
  %v4506 = vrot.slane %v4504, 7
  %v4507 = vshll.u32 %v4417, 16
  %v4509 = vor.u32 %v4506, %v4507
  %v4510 = vrot.slane %v4506, 4
  %v4512 = vshrl.u32 %v4418, 16
  %v4514 = vrot.slane %v4512, 7
  %v4515 = vshll.u32 %v4418, 16
  %v4517 = vor.u32 %v4514, %v4515
  %v4518 = vrot.slane %v4514, 4
  %v4520 = vshrl.u32 %v4419, 16
  %v4522 = vrot.slane %v4520, 7
  %v4523 = vshll.u32 %v4419, 16
  %v4525 = vor.u32 %v4522, %v4523
  %v4526 = vrot.slane %v4522, 4
  %v4528 = vshrl.u32 %v4420, 16
  %v4530 = vrot.slane %v4528, 7
  %v4531 = vshll.u32 %v4420, 16
  %v4533 = vor.u32 %v4530, %v4531
  %v4534 = vrot.slane %v4530, 4
  %v4536 = vshrl.u32 %v4421, 16
  %v4538 = vrot.slane %v4536, 7
  %v4539 = vshll.u32 %v4421, 16
  %v4541 = vor.u32 %v4538, %v4539
  %v4542 = vrot.slane %v4538, 4
  %v4544 = vshrl.u32 %v4422, 16
  %v4546 = vrot.slane %v4544, 7
  %v4547 = vshll.u32 %v4422, 16
  %v4549 = vor.u32 %v4546, %v4547
  %v4550 = vrot.slane %v4546, 4
  %s4583 = scalar_lea.vmem [#allocation4], 8
  %vm4584 = vcmask 1043456
  %vm4585 = vmand %vm4584, %vm308
  %v4586 = vld [vmem:[%s4583] sm:$0xf]
  %v4587 = vsel %vm4585, %v4429, %v4586
  %4588 = vst [vmem:[%s4583] sm:$0xf] %v4587
  %v4589 = vld [vmem:[%s4583 + $0x4] sm:$0x1]
  %v4590 = vsel %vm560, %v4430, %v4589
  %4591 = vst [vmem:[%s4583 + $0x4] sm:$0x1] %v4590
  %v4592 = vld [vmem:[%s4583 + $0x8] sm:$0xf]
  %v4593 = vsel %vm4585, %v4437, %v4592
  %4594 = vst [vmem:[%s4583 + $0x8] sm:$0xf] %v4593
  %v4595 = vld [vmem:[%s4583 + $0xc] sm:$0x1]
  %v4596 = vsel %vm560, %v4438, %v4595
  %4597 = vst [vmem:[%s4583 + $0xc] sm:$0x1] %v4596
  %v4598 = vld [vmem:[%s4583 + $0x10] sm:$0xf]
  %v4599 = vsel %vm4585, %v4445, %v4598
  %4600 = vst [vmem:[%s4583 + $0x10] sm:$0xf] %v4599
  %v4601 = vld [vmem:[%s4583 + $0x14] sm:$0x1]
  %v4602 = vsel %vm560, %v4446, %v4601
  %4603 = vst [vmem:[%s4583 + $0x14] sm:$0x1] %v4602
  %v4604 = vld [vmem:[%s4583 + $0x18] sm:$0xf]
  %v4605 = vsel %vm4585, %v4453, %v4604
  %4606 = vst [vmem:[%s4583 + $0x18] sm:$0xf] %v4605
  %v4607 = vld [vmem:[%s4583 + $0x1c] sm:$0x1]
  %v4608 = vsel %vm560, %v4454, %v4607
  %4609 = vst [vmem:[%s4583 + $0x1c] sm:$0x1] %v4608
  %v4610 = vld [vmem:[%s4583 + $0x20] sm:$0xf]
  %v4611 = vsel %vm4585, %v4461, %v4610
  %4612 = vst [vmem:[%s4583 + $0x20] sm:$0xf] %v4611
  %v4613 = vld [vmem:[%s4583 + $0x24] sm:$0x1]
  %v4614 = vsel %vm560, %v4462, %v4613
  %4615 = vst [vmem:[%s4583 + $0x24] sm:$0x1] %v4614
  %v4616 = vld [vmem:[%s4583 + $0x28] sm:$0xf]
  %v4617 = vsel %vm4585, %v4469, %v4616
  %4618 = vst [vmem:[%s4583 + $0x28] sm:$0xf] %v4617
  %v4619 = vld [vmem:[%s4583 + $0x2c] sm:$0x1]
  %v4620 = vsel %vm560, %v4470, %v4619
  %4621 = vst [vmem:[%s4583 + $0x2c] sm:$0x1] %v4620
  %v4622 = vld [vmem:[%s4583 + $0x30] sm:$0xf]
  %v4623 = vsel %vm4585, %v4477, %v4622
  %4624 = vst [vmem:[%s4583 + $0x30] sm:$0xf] %v4623
  %v4625 = vld [vmem:[%s4583 + $0x34] sm:$0x1]
  %v4626 = vsel %vm560, %v4478, %v4625
  %4627 = vst [vmem:[%s4583 + $0x34] sm:$0x1] %v4626
  %v4628 = vld [vmem:[%s4583 + $0x38] sm:$0xf]
  %v4629 = vsel %vm4585, %v4485, %v4628
  %4630 = vst [vmem:[%s4583 + $0x38] sm:$0xf] %v4629
  %v4631 = vld [vmem:[%s4583 + $0x3c] sm:$0x1]
  %v4632 = vsel %vm560, %v4486, %v4631
  %4633 = vst [vmem:[%s4583 + $0x3c] sm:$0x1] %v4632
  %v4634 = vld [vmem:[%s4583 + $0x50] sm:$0xf]
  %v4635 = vsel %vm4585, %v4493, %v4634
  %4636 = vst [vmem:[%s4583 + $0x50] sm:$0xf] %v4635
  %v4637 = vld [vmem:[%s4583 + $0x54] sm:$0x1]
  %v4638 = vsel %vm560, %v4494, %v4637
  %4639 = vst [vmem:[%s4583 + $0x54] sm:$0x1] %v4638
  %v4640 = vld [vmem:[%s4583 + $0x58] sm:$0xf]
  %v4641 = vsel %vm4585, %v4501, %v4640
  %4642 = vst [vmem:[%s4583 + $0x58] sm:$0xf] %v4641
  %v4643 = vld [vmem:[%s4583 + $0x5c] sm:$0x1]
  %v4644 = vsel %vm560, %v4502, %v4643
  %4645 = vst [vmem:[%s4583 + $0x5c] sm:$0x1] %v4644
  %v4646 = vld [vmem:[%s4583 + $0x60] sm:$0xf]
  %v4647 = vsel %vm4585, %v4509, %v4646
  %4648 = vst [vmem:[%s4583 + $0x60] sm:$0xf] %v4647
  %v4649 = vld [vmem:[%s4583 + $0x64] sm:$0x1]
  %v4650 = vsel %vm560, %v4510, %v4649
  %4651 = vst [vmem:[%s4583 + $0x64] sm:$0x1] %v4650
  %v4652 = vld [vmem:[%s4583 + $0x68] sm:$0xf]
  %v4653 = vsel %vm4585, %v4517, %v4652
  %4654 = vst [vmem:[%s4583 + $0x68] sm:$0xf] %v4653
  %v4655 = vld [vmem:[%s4583 + $0x6c] sm:$0x1]
  %v4656 = vsel %vm560, %v4518, %v4655
  %4657 = vst [vmem:[%s4583 + $0x6c] sm:$0x1] %v4656
  %v4658 = vld [vmem:[%s4583 + $0x70] sm:$0xf]
  %v4659 = vsel %vm4585, %v4525, %v4658
  %4660 = vst [vmem:[%s4583 + $0x70] sm:$0xf] %v4659
  %v4661 = vld [vmem:[%s4583 + $0x74] sm:$0x1]
  %v4662 = vsel %vm560, %v4526, %v4661
  %4663 = vst [vmem:[%s4583 + $0x74] sm:$0x1] %v4662
  %v4664 = vld [vmem:[%s4583 + $0x78] sm:$0xf]
  %v4665 = vsel %vm4585, %v4533, %v4664
  %4666 = vst [vmem:[%s4583 + $0x78] sm:$0xf] %v4665
  %v4667 = vld [vmem:[%s4583 + $0x7c] sm:$0x1]
  %v4668 = vsel %vm560, %v4534, %v4667
  %4669 = vst [vmem:[%s4583 + $0x7c] sm:$0x1] %v4668
  %v4670 = vld [vmem:[%s4583 + $0x80] sm:$0xf]
  %v4671 = vsel %vm4585, %v4541, %v4670
  %4672 = vst [vmem:[%s4583 + $0x80] sm:$0xf] %v4671
  %v4673 = vld [vmem:[%s4583 + $0x84] sm:$0x1]
  %v4674 = vsel %vm560, %v4542, %v4673
  %4675 = vst [vmem:[%s4583 + $0x84] sm:$0x1] %v4674
  %v4676 = vld [vmem:[%s4583 + $0x88] sm:$0xf]
  %v4677 = vsel %vm4585, %v4549, %v4676
  %4678 = vst [vmem:[%s4583 + $0x88] sm:$0xf] %v4677
  %v4679 = vld [vmem:[%s4583 + $0x8c] sm:$0x1]
  %v4680 = vsel %vm560, %v4550, %v4679
  %4681 = vst [vmem:[%s4583 + $0x8c] sm:$0x1] %v4680
  %v4682 = vld [vmem:[#allocation4] sm:$0xf]
  %v4683 = vld [vmem:[#allocation4 + $0x8] sm:$0xf]
  %v4684 = vld [vmem:[#allocation4 + $0x10] sm:$0xf]
  %v4685 = vld [vmem:[#allocation4 + $0x18] sm:$0xf]
  %v4686 = vld [vmem:[#allocation4 + $0x20] sm:$0xf]
  %v4687 = vld [vmem:[#allocation4 + $0x28] sm:$0xf]
  %v4688 = vld [vmem:[#allocation4 + $0x30] sm:$0xf]
  %v4689 = vld [vmem:[#allocation4 + $0x38] sm:$0xf]
  %v4690 = vld [vmem:[#allocation4 + $0x50] sm:$0xf]
  %v4691 = vld [vmem:[#allocation4 + $0x58] sm:$0xf]
  %v4692 = vld [vmem:[#allocation4 + $0x60] sm:$0xf]
  %v4693 = vld [vmem:[#allocation4 + $0x68] sm:$0xf]
  %v4694 = vld [vmem:[#allocation4 + $0x70] sm:$0xf]
  %v4695 = vld [vmem:[#allocation4 + $0x78] sm:$0xf]
  %v4696 = vld [vmem:[#allocation4 + $0x80] sm:$0xf]
  %v4697 = vld [vmem:[#allocation4 + $0x88] sm:$0xf]
  %4698 = vst [vmem:[#allocation5] sm:$0xf] %v4682
  %4699 = vst [vmem:[#allocation5 + $0x24] sm:$0xf] %v4683
  %4700 = vst [vmem:[#allocation5 + $0x48] sm:$0xf] %v4684
  %4701 = vst [vmem:[#allocation5 + $0x6c] sm:$0xf] %v4685
  %4702 = vst [vmem:[#allocation5 + $0x90] sm:$0xf] %v4686
  %4703 = vst [vmem:[#allocation5 + $0xb4] sm:$0xf] %v4687
  %4704 = vst [vmem:[#allocation5 + $0xd8] sm:$0xf] %v4688
  %4705 = vst [vmem:[#allocation5 + $0xfc] sm:$0xf] %v4689
  %4706 = vst [vmem:[#allocation5 + $0x120] sm:$0xf] %v4690
  %4707 = vst [vmem:[#allocation5 + $0x144] sm:$0xf] %v4691
  %4708 = vst [vmem:[#allocation5 + $0x168] sm:$0xf] %v4692
  %4709 = vst [vmem:[#allocation5 + $0x18c] sm:$0xf] %v4693
  %4710 = vst [vmem:[#allocation5 + $0x1b0] sm:$0xf] %v4694
  %4711 = vst [vmem:[#allocation5 + $0x1d4] sm:$0xf] %v4695
  %4712 = vst [vmem:[#allocation5 + $0x1f8] sm:$0xf] %v4696
  %4713 = vst [vmem:[#allocation5 + $0x21c] sm:$0xf] %v4697
  %v4714 = vld [vmem:[#allocation4] sm:$0xf]
  %v4715 = vld [vmem:[#allocation4 + $0x4] sm:$0x1]
  %v4716 = vld [vmem:[#allocation4 + $0x8] sm:$0xf]
  %v4717 = vld [vmem:[#allocation4 + $0xc] sm:$0x1]
  %v4718 = vld [vmem:[#allocation4 + $0x10] sm:$0xf]
  %v4719 = vld [vmem:[#allocation4 + $0x14] sm:$0x1]
  %v4720 = vld [vmem:[#allocation4 + $0x18] sm:$0xf]
  %v4721 = vld [vmem:[#allocation4 + $0x1c] sm:$0x1]
  %v4722 = vld [vmem:[#allocation4 + $0x20] sm:$0xf]
  %v4723 = vld [vmem:[#allocation4 + $0x24] sm:$0x1]
  %v4724 = vld [vmem:[#allocation4 + $0x28] sm:$0xf]
  %v4725 = vld [vmem:[#allocation4 + $0x2c] sm:$0x1]
  %v4726 = vld [vmem:[#allocation4 + $0x30] sm:$0xf]
  %v4727 = vld [vmem:[#allocation4 + $0x34] sm:$0x1]
  %v4728 = vld [vmem:[#allocation4 + $0x38] sm:$0xf]
  %v4729 = vld [vmem:[#allocation4 + $0x3c] sm:$0x1]
  %v4730 = vld [vmem:[#allocation4 + $0x50] sm:$0xf]
  %v4731 = vld [vmem:[#allocation4 + $0x54] sm:$0x1]
  %v4732 = vld [vmem:[#allocation4 + $0x58] sm:$0xf]
  %v4733 = vld [vmem:[#allocation4 + $0x5c] sm:$0x1]
  %v4734 = vld [vmem:[#allocation4 + $0x60] sm:$0xf]
  %v4735 = vld [vmem:[#allocation4 + $0x64] sm:$0x1]
  %v4736 = vld [vmem:[#allocation4 + $0x68] sm:$0xf]
  %v4737 = vld [vmem:[#allocation4 + $0x6c] sm:$0x1]
  %v4738 = vld [vmem:[#allocation4 + $0x70] sm:$0xf]
  %v4739 = vld [vmem:[#allocation4 + $0x74] sm:$0x1]
  %v4740 = vld [vmem:[#allocation4 + $0x78] sm:$0xf]
  %v4741 = vld [vmem:[#allocation4 + $0x7c] sm:$0x1]
  %v4742 = vld [vmem:[#allocation4 + $0x80] sm:$0xf]
  %v4743 = vld [vmem:[#allocation4 + $0x84] sm:$0x1]
  %v4744 = vld [vmem:[#allocation4 + $0x88] sm:$0xf]
  %v4745 = vld [vmem:[#allocation4 + $0x8c] sm:$0x1]
  %v4747 = vshrl.u32 %v4714, 16
  %v4749 = vrot.slane %v4747, 4
  %v4750 = vshll.u32 %v4714, 16
  %v4752 = vrot.slane %v4750, 5
  %v4753 = vor.u32 %v4749, %v4752
  %v4754 = vrot.slane %v4753, 4
  %v4756 = vshll.u32 %v4715, 16
  %v4758 = vrot.slane %v4756, 5
  %v4759 = vsel %vm2105, %v4754, %v4758
  %v4761 = vshrl.u32 %v4716, 16
  %v4763 = vrot.slane %v4761, 4
  %v4764 = vshll.u32 %v4716, 16
  %v4766 = vrot.slane %v4764, 5
  %v4767 = vor.u32 %v4763, %v4766
  %v4768 = vrot.slane %v4767, 4
  %v4770 = vshll.u32 %v4717, 16
  %v4772 = vrot.slane %v4770, 5
  %v4773 = vsel %vm2105, %v4768, %v4772
  %v4775 = vshrl.u32 %v4718, 16
  %v4777 = vrot.slane %v4775, 4
  %v4778 = vshll.u32 %v4718, 16
  %v4780 = vrot.slane %v4778, 5
  %v4781 = vor.u32 %v4777, %v4780
  %v4782 = vrot.slane %v4781, 4
  %v4784 = vshll.u32 %v4719, 16
  %v4786 = vrot.slane %v4784, 5
  %v4787 = vsel %vm2105, %v4782, %v4786
  %v4789 = vshrl.u32 %v4720, 16
  %v4791 = vrot.slane %v4789, 4
  %v4792 = vshll.u32 %v4720, 16
  %v4794 = vrot.slane %v4792, 5
  %v4795 = vor.u32 %v4791, %v4794
  %v4796 = vrot.slane %v4795, 4
  %v4798 = vshll.u32 %v4721, 16
  %v4800 = vrot.slane %v4798, 5
  %v4801 = vsel %vm2105, %v4796, %v4800
  %v4803 = vshrl.u32 %v4722, 16
  %v4805 = vrot.slane %v4803, 4
  %v4806 = vshll.u32 %v4722, 16
  %v4808 = vrot.slane %v4806, 5
  %v4809 = vor.u32 %v4805, %v4808
  %v4810 = vrot.slane %v4809, 4
  %v4812 = vshll.u32 %v4723, 16
  %v4814 = vrot.slane %v4812, 5
  %v4815 = vsel %vm2105, %v4810, %v4814
  %v4817 = vshrl.u32 %v4724, 16
  %v4819 = vrot.slane %v4817, 4
  %v4820 = vshll.u32 %v4724, 16
  %v4822 = vrot.slane %v4820, 5
  %v4823 = vor.u32 %v4819, %v4822
  %v4824 = vrot.slane %v4823, 4
  %v4826 = vshll.u32 %v4725, 16
  %v4828 = vrot.slane %v4826, 5
  %v4829 = vsel %vm2105, %v4824, %v4828
  %v4831 = vshrl.u32 %v4726, 16
  %v4833 = vrot.slane %v4831, 4
  %v4834 = vshll.u32 %v4726, 16
  %v4836 = vrot.slane %v4834, 5
  %v4837 = vor.u32 %v4833, %v4836
  %v4838 = vrot.slane %v4837, 4
  %v4840 = vshll.u32 %v4727, 16
  %v4842 = vrot.slane %v4840, 5
  %v4843 = vsel %vm2105, %v4838, %v4842
  %v4845 = vshrl.u32 %v4728, 16
  %v4847 = vrot.slane %v4845, 4
  %v4848 = vshll.u32 %v4728, 16
  %v4850 = vrot.slane %v4848, 5
  %v4851 = vor.u32 %v4847, %v4850
  %v4852 = vrot.slane %v4851, 4
  %v4854 = vshll.u32 %v4729, 16
  %v4856 = vrot.slane %v4854, 5
  %v4857 = vsel %vm2105, %v4852, %v4856
  %v4859 = vshrl.u32 %v4730, 16
  %v4861 = vrot.slane %v4859, 4
  %v4862 = vshll.u32 %v4730, 16
  %v4864 = vrot.slane %v4862, 5
  %v4865 = vor.u32 %v4861, %v4864
  %v4866 = vrot.slane %v4865, 4
  %v4868 = vshll.u32 %v4731, 16
  %v4870 = vrot.slane %v4868, 5
  %v4871 = vsel %vm2105, %v4866, %v4870
  %v4873 = vshrl.u32 %v4732, 16
  %v4875 = vrot.slane %v4873, 4
  %v4876 = vshll.u32 %v4732, 16
  %v4878 = vrot.slane %v4876, 5
  %v4879 = vor.u32 %v4875, %v4878
  %v4880 = vrot.slane %v4879, 4
  %v4882 = vshll.u32 %v4733, 16
  %v4884 = vrot.slane %v4882, 5
  %v4885 = vsel %vm2105, %v4880, %v4884
  %v4887 = vshrl.u32 %v4734, 16
  %v4889 = vrot.slane %v4887, 4
  %v4890 = vshll.u32 %v4734, 16
  %v4892 = vrot.slane %v4890, 5
  %v4893 = vor.u32 %v4889, %v4892
  %v4894 = vrot.slane %v4893, 4
  %v4896 = vshll.u32 %v4735, 16
  %v4898 = vrot.slane %v4896, 5
  %v4899 = vsel %vm2105, %v4894, %v4898
  %v4901 = vshrl.u32 %v4736, 16
  %v4903 = vrot.slane %v4901, 4
  %v4904 = vshll.u32 %v4736, 16
  %v4906 = vrot.slane %v4904, 5
  %v4907 = vor.u32 %v4903, %v4906
  %v4908 = vrot.slane %v4907, 4
  %v4910 = vshll.u32 %v4737, 16
  %v4912 = vrot.slane %v4910, 5
  %v4913 = vsel %vm2105, %v4908, %v4912
  %v4915 = vshrl.u32 %v4738, 16
  %v4917 = vrot.slane %v4915, 4
  %v4918 = vshll.u32 %v4738, 16
  %v4920 = vrot.slane %v4918, 5
  %v4921 = vor.u32 %v4917, %v4920
  %v4922 = vrot.slane %v4921, 4
  %v4924 = vshll.u32 %v4739, 16
  %v4926 = vrot.slane %v4924, 5
  %v4927 = vsel %vm2105, %v4922, %v4926
  %v4929 = vshrl.u32 %v4740, 16
  %v4931 = vrot.slane %v4929, 4
  %v4932 = vshll.u32 %v4740, 16
  %v4934 = vrot.slane %v4932, 5
  %v4935 = vor.u32 %v4931, %v4934
  %v4936 = vrot.slane %v4935, 4
  %v4938 = vshll.u32 %v4741, 16
  %v4940 = vrot.slane %v4938, 5
  %v4941 = vsel %vm2105, %v4936, %v4940
  %v4943 = vshrl.u32 %v4742, 16
  %v4945 = vrot.slane %v4943, 4
  %v4946 = vshll.u32 %v4742, 16
  %v4948 = vrot.slane %v4946, 5
  %v4949 = vor.u32 %v4945, %v4948
  %v4950 = vrot.slane %v4949, 4
  %v4952 = vshll.u32 %v4743, 16
  %v4954 = vrot.slane %v4952, 5
  %v4955 = vsel %vm2105, %v4950, %v4954
  %v4957 = vshrl.u32 %v4744, 16
  %v4959 = vrot.slane %v4957, 4
  %v4960 = vshll.u32 %v4744, 16
  %v4962 = vrot.slane %v4960, 5
  %v4963 = vor.u32 %v4959, %v4962
  %v4964 = vrot.slane %v4963, 4
  %v4966 = vshll.u32 %v4745, 16
  %v4968 = vrot.slane %v4966, 5
  %v4969 = vsel %vm2105, %v4964, %v4968
  %4986 = vst [vmem:[#allocation5 + $0x4] sm:$0xf] %v4759
  %4987 = vst [vmem:[#allocation5 + $0x28] sm:$0xf] %v4773
  %4988 = vst [vmem:[#allocation5 + $0x4c] sm:$0xf] %v4787
  %4989 = vst [vmem:[#allocation5 + $0x70] sm:$0xf] %v4801
  %4990 = vst [vmem:[#allocation5 + $0x94] sm:$0xf] %v4815
  %4991 = vst [vmem:[#allocation5 + $0xb8] sm:$0xf] %v4829
  %4992 = vst [vmem:[#allocation5 + $0xdc] sm:$0xf] %v4843
  %4993 = vst [vmem:[#allocation5 + $0x100] sm:$0xf] %v4857
  %4994 = vst [vmem:[#allocation5 + $0x124] sm:$0xf] %v4871
  %4995 = vst [vmem:[#allocation5 + $0x148] sm:$0xf] %v4885
  %4996 = vst [vmem:[#allocation5 + $0x16c] sm:$0xf] %v4899
  %4997 = vst [vmem:[#allocation5 + $0x190] sm:$0xf] %v4913
  %4998 = vst [vmem:[#allocation5 + $0x1b4] sm:$0xf] %v4927
  %4999 = vst [vmem:[#allocation5 + $0x1d8] sm:$0xf] %v4941
  %5000 = vst [vmem:[#allocation5 + $0x1fc] sm:$0xf] %v4955
  %5001 = vst [vmem:[#allocation5 + $0x220] sm:$0xf] %v4969
  %v5002 = vld [vmem:[#allocation4] sm:$0xe]
  %v5003 = vld [vmem:[#allocation4 + $0x4] sm:$0x1]
  %v5004 = vld [vmem:[#allocation4 + $0x8] sm:$0xe]
  %v5005 = vld [vmem:[#allocation4 + $0xc] sm:$0x1]
  %v5006 = vld [vmem:[#allocation4 + $0x10] sm:$0xe]
  %v5007 = vld [vmem:[#allocation4 + $0x14] sm:$0x1]
  %v5008 = vld [vmem:[#allocation4 + $0x18] sm:$0xe]
  %v5009 = vld [vmem:[#allocation4 + $0x1c] sm:$0x1]
  %v5010 = vld [vmem:[#allocation4 + $0x20] sm:$0xe]
  %v5011 = vld [vmem:[#allocation4 + $0x24] sm:$0x1]
  %v5012 = vld [vmem:[#allocation4 + $0x28] sm:$0xe]
  %v5013 = vld [vmem:[#allocation4 + $0x2c] sm:$0x1]
  %v5014 = vld [vmem:[#allocation4 + $0x30] sm:$0xe]
  %v5015 = vld [vmem:[#allocation4 + $0x34] sm:$0x1]
  %v5016 = vld [vmem:[#allocation4 + $0x38] sm:$0xe]
  %v5017 = vld [vmem:[#allocation4 + $0x3c] sm:$0x1]
  %v5018 = vld [vmem:[#allocation4 + $0x50] sm:$0xe]
  %v5019 = vld [vmem:[#allocation4 + $0x54] sm:$0x1]
  %v5020 = vld [vmem:[#allocation4 + $0x58] sm:$0xe]
  %v5021 = vld [vmem:[#allocation4 + $0x5c] sm:$0x1]
  %v5022 = vld [vmem:[#allocation4 + $0x60] sm:$0xe]
  %v5023 = vld [vmem:[#allocation4 + $0x64] sm:$0x1]
  %v5024 = vld [vmem:[#allocation4 + $0x68] sm:$0xe]
  %v5025 = vld [vmem:[#allocation4 + $0x6c] sm:$0x1]
  %v5026 = vld [vmem:[#allocation4 + $0x70] sm:$0xe]
  %v5027 = vld [vmem:[#allocation4 + $0x74] sm:$0x1]
  %v5028 = vld [vmem:[#allocation4 + $0x78] sm:$0xe]
  %v5029 = vld [vmem:[#allocation4 + $0x7c] sm:$0x1]
  %v5030 = vld [vmem:[#allocation4 + $0x80] sm:$0xe]
  %v5031 = vld [vmem:[#allocation4 + $0x84] sm:$0x1]
  %v5032 = vld [vmem:[#allocation4 + $0x88] sm:$0xe]
  %v5033 = vld [vmem:[#allocation4 + $0x8c] sm:$0x1]
  %vm5066 = vcmask 1042432
  %vm5067 = vcmask 1046532
  %vm5068 = vmor %vm5066, %vm5067
  %v5069 = vrot.slane %v5002, 5
  %v5070 = vrot.slane %v5069, 4
  %v5071 = vrot.slane %v5003, 5
  %v5072 = vsel %vm5068, %v5070, %v5071
  %v5073 = vrot.slane %v5004, 5
  %v5074 = vrot.slane %v5073, 4
  %v5075 = vrot.slane %v5005, 5
  %v5076 = vsel %vm5068, %v5074, %v5075
  %v5077 = vrot.slane %v5006, 5
  %v5078 = vrot.slane %v5077, 4
  %v5079 = vrot.slane %v5007, 5
  %v5080 = vsel %vm5068, %v5078, %v5079
  %v5081 = vrot.slane %v5008, 5
  %v5082 = vrot.slane %v5081, 4
  %v5083 = vrot.slane %v5009, 5
  %v5084 = vsel %vm5068, %v5082, %v5083
  %v5085 = vrot.slane %v5010, 5
  %v5086 = vrot.slane %v5085, 4
  %v5087 = vrot.slane %v5011, 5
  %v5088 = vsel %vm5068, %v5086, %v5087
  %v5089 = vrot.slane %v5012, 5
  %v5090 = vrot.slane %v5089, 4
  %v5091 = vrot.slane %v5013, 5
  %v5092 = vsel %vm5068, %v5090, %v5091
  %v5093 = vrot.slane %v5014, 5
  %v5094 = vrot.slane %v5093, 4
  %v5095 = vrot.slane %v5015, 5
  %v5096 = vsel %vm5068, %v5094, %v5095
  %v5097 = vrot.slane %v5016, 5
  %v5098 = vrot.slane %v5097, 4
  %v5099 = vrot.slane %v5017, 5
  %v5100 = vsel %vm5068, %v5098, %v5099
  %v5101 = vrot.slane %v5018, 5
  %v5102 = vrot.slane %v5101, 4
  %v5103 = vrot.slane %v5019, 5
  %v5104 = vsel %vm5068, %v5102, %v5103
  %v5105 = vrot.slane %v5020, 5
  %v5106 = vrot.slane %v5105, 4
  %v5107 = vrot.slane %v5021, 5
  %v5108 = vsel %vm5068, %v5106, %v5107
  %v5109 = vrot.slane %v5022, 5
  %v5110 = vrot.slane %v5109, 4
  %v5111 = vrot.slane %v5023, 5
  %v5112 = vsel %vm5068, %v5110, %v5111
  %v5113 = vrot.slane %v5024, 5
  %v5114 = vrot.slane %v5113, 4
  %v5115 = vrot.slane %v5025, 5
  %v5116 = vsel %vm5068, %v5114, %v5115
  %v5117 = vrot.slane %v5026, 5
  %v5118 = vrot.slane %v5117, 4
  %v5119 = vrot.slane %v5027, 5
  %v5120 = vsel %vm5068, %v5118, %v5119
  %v5121 = vrot.slane %v5028, 5
  %v5122 = vrot.slane %v5121, 4
  %v5123 = vrot.slane %v5029, 5
  %v5124 = vsel %vm5068, %v5122, %v5123
  %v5125 = vrot.slane %v5030, 5
  %v5126 = vrot.slane %v5125, 4
  %v5127 = vrot.slane %v5031, 5
  %v5128 = vsel %vm5068, %v5126, %v5127
  %v5129 = vrot.slane %v5032, 5
  %v5130 = vrot.slane %v5129, 4
  %v5131 = vrot.slane %v5033, 5
  %v5132 = vsel %vm5068, %v5130, %v5131
  %5149 = vst [vmem:[#allocation5 + $0x8] sm:$0xf] %v5072
  %5150 = vst [vmem:[#allocation5 + $0x2c] sm:$0xf] %v5076
  %5151 = vst [vmem:[#allocation5 + $0x50] sm:$0xf] %v5080
  %5152 = vst [vmem:[#allocation5 + $0x74] sm:$0xf] %v5084
  %5153 = vst [vmem:[#allocation5 + $0x98] sm:$0xf] %v5088
  %5154 = vst [vmem:[#allocation5 + $0xbc] sm:$0xf] %v5092
  %5155 = vst [vmem:[#allocation5 + $0xe0] sm:$0xf] %v5096
  %5156 = vst [vmem:[#allocation5 + $0x104] sm:$0xf] %v5100
  %5157 = vst [vmem:[#allocation5 + $0x128] sm:$0xf] %v5104
  %5158 = vst [vmem:[#allocation5 + $0x14c] sm:$0xf] %v5108
  %5159 = vst [vmem:[#allocation5 + $0x170] sm:$0xf] %v5112
  %5160 = vst [vmem:[#allocation5 + $0x194] sm:$0xf] %v5116
  %5161 = vst [vmem:[#allocation5 + $0x1b8] sm:$0xf] %v5120
  %5162 = vst [vmem:[#allocation5 + $0x1dc] sm:$0xf] %v5124
  %5163 = vst [vmem:[#allocation5 + $0x200] sm:$0xf] %v5128
  %5164 = vst [vmem:[#allocation5 + $0x224] sm:$0xf] %v5132
  %v5165 = vld [vmem:[%s4583] sm:$0xf]
  %v5166 = vld [vmem:[%s4583 + $0x8] sm:$0xf]
  %v5167 = vld [vmem:[%s4583 + $0x10] sm:$0xf]
  %v5168 = vld [vmem:[%s4583 + $0x18] sm:$0xf]
  %v5169 = vld [vmem:[%s4583 + $0x20] sm:$0xf]
  %v5170 = vld [vmem:[%s4583 + $0x28] sm:$0xf]
  %v5171 = vld [vmem:[%s4583 + $0x30] sm:$0xf]
  %v5172 = vld [vmem:[%s4583 + $0x38] sm:$0xf]
  %v5173 = vld [vmem:[%s4583 + $0x50] sm:$0xf]
  %v5174 = vld [vmem:[%s4583 + $0x58] sm:$0xf]
  %v5175 = vld [vmem:[%s4583 + $0x60] sm:$0xf]
  %v5176 = vld [vmem:[%s4583 + $0x68] sm:$0xf]
  %v5177 = vld [vmem:[%s4583 + $0x70] sm:$0xf]
  %v5178 = vld [vmem:[%s4583 + $0x78] sm:$0xf]
  %v5179 = vld [vmem:[%s4583 + $0x80] sm:$0xf]
  %v5180 = vld [vmem:[%s4583 + $0x88] sm:$0xf]
  %5181 = vst [vmem:[#allocation5 + $0xc] sm:$0xf] %v5165
  %5182 = vst [vmem:[#allocation5 + $0x30] sm:$0xf] %v5166
  %5183 = vst [vmem:[#allocation5 + $0x54] sm:$0xf] %v5167
  %5184 = vst [vmem:[#allocation5 + $0x78] sm:$0xf] %v5168
  %5185 = vst [vmem:[#allocation5 + $0x9c] sm:$0xf] %v5169
  %5186 = vst [vmem:[#allocation5 + $0xc0] sm:$0xf] %v5170
  %5187 = vst [vmem:[#allocation5 + $0xe4] sm:$0xf] %v5171
  %5188 = vst [vmem:[#allocation5 + $0x108] sm:$0xf] %v5172
  %5189 = vst [vmem:[#allocation5 + $0x12c] sm:$0xf] %v5173
  %5190 = vst [vmem:[#allocation5 + $0x150] sm:$0xf] %v5174
  %5191 = vst [vmem:[#allocation5 + $0x174] sm:$0xf] %v5175
  %5192 = vst [vmem:[#allocation5 + $0x198] sm:$0xf] %v5176
  %5193 = vst [vmem:[#allocation5 + $0x1bc] sm:$0xf] %v5177
  %5194 = vst [vmem:[#allocation5 + $0x1e0] sm:$0xf] %v5178
  %5195 = vst [vmem:[#allocation5 + $0x204] sm:$0xf] %v5179
  %5196 = vst [vmem:[#allocation5 + $0x228] sm:$0xf] %v5180
  %v5197 = vld [vmem:[%s4583] sm:$0xf]
  %v5198 = vld [vmem:[%s4583 + $0x4] sm:$0x1]
  %v5199 = vld [vmem:[%s4583 + $0x8] sm:$0xf]
  %v5200 = vld [vmem:[%s4583 + $0xc] sm:$0x1]
  %v5201 = vld [vmem:[%s4583 + $0x10] sm:$0xf]
  %v5202 = vld [vmem:[%s4583 + $0x14] sm:$0x1]
  %v5203 = vld [vmem:[%s4583 + $0x18] sm:$0xf]
  %v5204 = vld [vmem:[%s4583 + $0x1c] sm:$0x1]
  %v5205 = vld [vmem:[%s4583 + $0x20] sm:$0xf]
  %v5206 = vld [vmem:[%s4583 + $0x24] sm:$0x1]
  %v5207 = vld [vmem:[%s4583 + $0x28] sm:$0xf]
  %v5208 = vld [vmem:[%s4583 + $0x2c] sm:$0x1]
  %v5209 = vld [vmem:[%s4583 + $0x30] sm:$0xf]
  %v5210 = vld [vmem:[%s4583 + $0x34] sm:$0x1]
  %v5211 = vld [vmem:[%s4583 + $0x38] sm:$0xf]
  %v5212 = vld [vmem:[%s4583 + $0x3c] sm:$0x1]
  %v5213 = vld [vmem:[%s4583 + $0x50] sm:$0xf]
  %v5214 = vld [vmem:[%s4583 + $0x54] sm:$0x1]
  %v5215 = vld [vmem:[%s4583 + $0x58] sm:$0xf]
  %v5216 = vld [vmem:[%s4583 + $0x5c] sm:$0x1]
  %v5217 = vld [vmem:[%s4583 + $0x60] sm:$0xf]
  %v5218 = vld [vmem:[%s4583 + $0x64] sm:$0x1]
  %v5219 = vld [vmem:[%s4583 + $0x68] sm:$0xf]
  %v5220 = vld [vmem:[%s4583 + $0x6c] sm:$0x1]
  %v5221 = vld [vmem:[%s4583 + $0x70] sm:$0xf]
  %v5222 = vld [vmem:[%s4583 + $0x74] sm:$0x1]
  %v5223 = vld [vmem:[%s4583 + $0x78] sm:$0xf]
  %v5224 = vld [vmem:[%s4583 + $0x7c] sm:$0x1]
  %v5225 = vld [vmem:[%s4583 + $0x80] sm:$0xf]
  %v5226 = vld [vmem:[%s4583 + $0x84] sm:$0x1]
  %v5227 = vld [vmem:[%s4583 + $0x88] sm:$0xf]
  %v5228 = vld [vmem:[%s4583 + $0x8c] sm:$0x1]
  %v5230 = vshrl.u32 %v5197, 16
  %v5232 = vrot.slane %v5230, 4
  %v5233 = vshll.u32 %v5197, 16
  %v5235 = vrot.slane %v5233, 5
  %v5236 = vor.u32 %v5232, %v5235
  %v5237 = vrot.slane %v5236, 4
  %v5239 = vshll.u32 %v5198, 16
  %v5241 = vrot.slane %v5239, 5
  %v5242 = vsel %vm2105, %v5237, %v5241
  %v5244 = vshrl.u32 %v5199, 16
  %v5246 = vrot.slane %v5244, 4
  %v5247 = vshll.u32 %v5199, 16
  %v5249 = vrot.slane %v5247, 5
  %v5250 = vor.u32 %v5246, %v5249
  %v5251 = vrot.slane %v5250, 4
  %v5253 = vshll.u32 %v5200, 16
  %v5255 = vrot.slane %v5253, 5
  %v5256 = vsel %vm2105, %v5251, %v5255
  %v5258 = vshrl.u32 %v5201, 16
  %v5260 = vrot.slane %v5258, 4
  %v5261 = vshll.u32 %v5201, 16
  %v5263 = vrot.slane %v5261, 5
  %v5264 = vor.u32 %v5260, %v5263
  %v5265 = vrot.slane %v5264, 4
  %v5267 = vshll.u32 %v5202, 16
  %v5269 = vrot.slane %v5267, 5
  %v5270 = vsel %vm2105, %v5265, %v5269
  %v5272 = vshrl.u32 %v5203, 16
  %v5274 = vrot.slane %v5272, 4
  %v5275 = vshll.u32 %v5203, 16
  %v5277 = vrot.slane %v5275, 5
  %v5278 = vor.u32 %v5274, %v5277
  %v5279 = vrot.slane %v5278, 4
  %v5281 = vshll.u32 %v5204, 16
  %v5283 = vrot.slane %v5281, 5
  %v5284 = vsel %vm2105, %v5279, %v5283
  %v5286 = vshrl.u32 %v5205, 16
  %v5288 = vrot.slane %v5286, 4
  %v5289 = vshll.u32 %v5205, 16
  %v5291 = vrot.slane %v5289, 5
  %v5292 = vor.u32 %v5288, %v5291
  %v5293 = vrot.slane %v5292, 4
  %v5295 = vshll.u32 %v5206, 16
  %v5297 = vrot.slane %v5295, 5
  %v5298 = vsel %vm2105, %v5293, %v5297
  %v5300 = vshrl.u32 %v5207, 16
  %v5302 = vrot.slane %v5300, 4
  %v5303 = vshll.u32 %v5207, 16
  %v5305 = vrot.slane %v5303, 5
  %v5306 = vor.u32 %v5302, %v5305
  %v5307 = vrot.slane %v5306, 4
  %v5309 = vshll.u32 %v5208, 16
  %v5311 = vrot.slane %v5309, 5
  %v5312 = vsel %vm2105, %v5307, %v5311
  %v5314 = vshrl.u32 %v5209, 16
  %v5316 = vrot.slane %v5314, 4
  %v5317 = vshll.u32 %v5209, 16
  %v5319 = vrot.slane %v5317, 5
  %v5320 = vor.u32 %v5316, %v5319
  %v5321 = vrot.slane %v5320, 4
  %v5323 = vshll.u32 %v5210, 16
  %v5325 = vrot.slane %v5323, 5
  %v5326 = vsel %vm2105, %v5321, %v5325
  %v5328 = vshrl.u32 %v5211, 16
  %v5330 = vrot.slane %v5328, 4
  %v5331 = vshll.u32 %v5211, 16
  %v5333 = vrot.slane %v5331, 5
  %v5334 = vor.u32 %v5330, %v5333
  %v5335 = vrot.slane %v5334, 4
  %v5337 = vshll.u32 %v5212, 16
  %v5339 = vrot.slane %v5337, 5
  %v5340 = vsel %vm2105, %v5335, %v5339
  %v5342 = vshrl.u32 %v5213, 16
  %v5344 = vrot.slane %v5342, 4
  %v5345 = vshll.u32 %v5213, 16
  %v5347 = vrot.slane %v5345, 5
  %v5348 = vor.u32 %v5344, %v5347
  %v5349 = vrot.slane %v5348, 4
  %v5351 = vshll.u32 %v5214, 16
  %v5353 = vrot.slane %v5351, 5
  %v5354 = vsel %vm2105, %v5349, %v5353
  %v5356 = vshrl.u32 %v5215, 16
  %v5358 = vrot.slane %v5356, 4
  %v5359 = vshll.u32 %v5215, 16
  %v5361 = vrot.slane %v5359, 5
  %v5362 = vor.u32 %v5358, %v5361
  %v5363 = vrot.slane %v5362, 4
  %v5365 = vshll.u32 %v5216, 16
  %v5367 = vrot.slane %v5365, 5
  %v5368 = vsel %vm2105, %v5363, %v5367
  %v5370 = vshrl.u32 %v5217, 16
  %v5372 = vrot.slane %v5370, 4
  %v5373 = vshll.u32 %v5217, 16
  %v5375 = vrot.slane %v5373, 5
  %v5376 = vor.u32 %v5372, %v5375
  %v5377 = vrot.slane %v5376, 4
  %v5379 = vshll.u32 %v5218, 16
  %v5381 = vrot.slane %v5379, 5
  %v5382 = vsel %vm2105, %v5377, %v5381
  %v5384 = vshrl.u32 %v5219, 16
  %v5386 = vrot.slane %v5384, 4
  %v5387 = vshll.u32 %v5219, 16
  %v5389 = vrot.slane %v5387, 5
  %v5390 = vor.u32 %v5386, %v5389
  %v5391 = vrot.slane %v5390, 4
  %v5393 = vshll.u32 %v5220, 16
  %v5395 = vrot.slane %v5393, 5
  %v5396 = vsel %vm2105, %v5391, %v5395
  %v5398 = vshrl.u32 %v5221, 16
  %v5400 = vrot.slane %v5398, 4
  %v5401 = vshll.u32 %v5221, 16
  %v5403 = vrot.slane %v5401, 5
  %v5404 = vor.u32 %v5400, %v5403
  %v5405 = vrot.slane %v5404, 4
  %v5407 = vshll.u32 %v5222, 16
  %v5409 = vrot.slane %v5407, 5
  %v5410 = vsel %vm2105, %v5405, %v5409
  %v5412 = vshrl.u32 %v5223, 16
  %v5414 = vrot.slane %v5412, 4
  %v5415 = vshll.u32 %v5223, 16
  %v5417 = vrot.slane %v5415, 5
  %v5418 = vor.u32 %v5414, %v5417
  %v5419 = vrot.slane %v5418, 4
  %v5421 = vshll.u32 %v5224, 16
  %v5423 = vrot.slane %v5421, 5
  %v5424 = vsel %vm2105, %v5419, %v5423
  %v5426 = vshrl.u32 %v5225, 16
  %v5428 = vrot.slane %v5426, 4
  %v5429 = vshll.u32 %v5225, 16
  %v5431 = vrot.slane %v5429, 5
  %v5432 = vor.u32 %v5428, %v5431
  %v5433 = vrot.slane %v5432, 4
  %v5435 = vshll.u32 %v5226, 16
  %v5437 = vrot.slane %v5435, 5
  %v5438 = vsel %vm2105, %v5433, %v5437
  %v5440 = vshrl.u32 %v5227, 16
  %v5442 = vrot.slane %v5440, 4
  %v5443 = vshll.u32 %v5227, 16
  %v5445 = vrot.slane %v5443, 5
  %v5446 = vor.u32 %v5442, %v5445
  %v5447 = vrot.slane %v5446, 4
  %v5449 = vshll.u32 %v5228, 16
  %v5451 = vrot.slane %v5449, 5
  %v5452 = vsel %vm2105, %v5447, %v5451
  %5469 = vst [vmem:[#allocation5 + $0x10] sm:$0xf] %v5242
  %5470 = vst [vmem:[#allocation5 + $0x34] sm:$0xf] %v5256
  %5471 = vst [vmem:[#allocation5 + $0x58] sm:$0xf] %v5270
  %5472 = vst [vmem:[#allocation5 + $0x7c] sm:$0xf] %v5284
  %5473 = vst [vmem:[#allocation5 + $0xa0] sm:$0xf] %v5298
  %5474 = vst [vmem:[#allocation5 + $0xc4] sm:$0xf] %v5312
  %5475 = vst [vmem:[#allocation5 + $0xe8] sm:$0xf] %v5326
  %5476 = vst [vmem:[#allocation5 + $0x10c] sm:$0xf] %v5340
  %5477 = vst [vmem:[#allocation5 + $0x130] sm:$0xf] %v5354
  %5478 = vst [vmem:[#allocation5 + $0x154] sm:$0xf] %v5368
  %5479 = vst [vmem:[#allocation5 + $0x178] sm:$0xf] %v5382
  %5480 = vst [vmem:[#allocation5 + $0x19c] sm:$0xf] %v5396
  %5481 = vst [vmem:[#allocation5 + $0x1c0] sm:$0xf] %v5410
  %5482 = vst [vmem:[#allocation5 + $0x1e4] sm:$0xf] %v5424
  %5483 = vst [vmem:[#allocation5 + $0x208] sm:$0xf] %v5438
  %5484 = vst [vmem:[#allocation5 + $0x22c] sm:$0xf] %v5452
  %v5485 = vld [vmem:[%s4583] sm:$0xe]
  %v5486 = vld [vmem:[%s4583 + $0x4] sm:$0x1]
  %v5487 = vld [vmem:[%s4583 + $0x8] sm:$0xe]
  %v5488 = vld [vmem:[%s4583 + $0xc] sm:$0x1]
  %v5489 = vld [vmem:[%s4583 + $0x10] sm:$0xe]
  %v5490 = vld [vmem:[%s4583 + $0x14] sm:$0x1]
  %v5491 = vld [vmem:[%s4583 + $0x18] sm:$0xe]
  %v5492 = vld [vmem:[%s4583 + $0x1c] sm:$0x1]
  %v5493 = vld [vmem:[%s4583 + $0x20] sm:$0xe]
  %v5494 = vld [vmem:[%s4583 + $0x24] sm:$0x1]
  %v5495 = vld [vmem:[%s4583 + $0x28] sm:$0xe]
  %v5496 = vld [vmem:[%s4583 + $0x2c] sm:$0x1]
  %v5497 = vld [vmem:[%s4583 + $0x30] sm:$0xe]
  %v5498 = vld [vmem:[%s4583 + $0x34] sm:$0x1]
  %v5499 = vld [vmem:[%s4583 + $0x38] sm:$0xe]
  %v5500 = vld [vmem:[%s4583 + $0x3c] sm:$0x1]
  %v5501 = vld [vmem:[%s4583 + $0x50] sm:$0xe]
  %v5502 = vld [vmem:[%s4583 + $0x54] sm:$0x1]
  %v5503 = vld [vmem:[%s4583 + $0x58] sm:$0xe]
  %v5504 = vld [vmem:[%s4583 + $0x5c] sm:$0x1]
  %v5505 = vld [vmem:[%s4583 + $0x60] sm:$0xe]
  %v5506 = vld [vmem:[%s4583 + $0x64] sm:$0x1]
  %v5507 = vld [vmem:[%s4583 + $0x68] sm:$0xe]
  %v5508 = vld [vmem:[%s4583 + $0x6c] sm:$0x1]
  %v5509 = vld [vmem:[%s4583 + $0x70] sm:$0xe]
  %v5510 = vld [vmem:[%s4583 + $0x74] sm:$0x1]
  %v5511 = vld [vmem:[%s4583 + $0x78] sm:$0xe]
  %v5512 = vld [vmem:[%s4583 + $0x7c] sm:$0x1]
  %v5513 = vld [vmem:[%s4583 + $0x80] sm:$0xe]
  %v5514 = vld [vmem:[%s4583 + $0x84] sm:$0x1]
  %v5515 = vld [vmem:[%s4583 + $0x88] sm:$0xe]
  %v5516 = vld [vmem:[%s4583 + $0x8c] sm:$0x1]
  %v5549 = vrot.slane %v5485, 5
  %v5550 = vrot.slane %v5549, 4
  %v5551 = vrot.slane %v5486, 5
  %v5552 = vsel %vm5068, %v5550, %v5551
  %v5553 = vrot.slane %v5487, 5
  %v5554 = vrot.slane %v5553, 4
  %v5555 = vrot.slane %v5488, 5
  %v5556 = vsel %vm5068, %v5554, %v5555
  %v5557 = vrot.slane %v5489, 5
  %v5558 = vrot.slane %v5557, 4
  %v5559 = vrot.slane %v5490, 5
  %v5560 = vsel %vm5068, %v5558, %v5559
  %v5561 = vrot.slane %v5491, 5
  %v5562 = vrot.slane %v5561, 4
  %v5563 = vrot.slane %v5492, 5
  %v5564 = vsel %vm5068, %v5562, %v5563
  %v5565 = vrot.slane %v5493, 5
  %v5566 = vrot.slane %v5565, 4
  %v5567 = vrot.slane %v5494, 5
  %v5568 = vsel %vm5068, %v5566, %v5567
  %v5569 = vrot.slane %v5495, 5
  %v5570 = vrot.slane %v5569, 4
  %v5571 = vrot.slane %v5496, 5
  %v5572 = vsel %vm5068, %v5570, %v5571
  %v5573 = vrot.slane %v5497, 5
  %v5574 = vrot.slane %v5573, 4
  %v5575 = vrot.slane %v5498, 5
  %v5576 = vsel %vm5068, %v5574, %v5575
  %v5577 = vrot.slane %v5499, 5
  %v5578 = vrot.slane %v5577, 4
  %v5579 = vrot.slane %v5500, 5
  %v5580 = vsel %vm5068, %v5578, %v5579
  %v5581 = vrot.slane %v5501, 5
  %v5582 = vrot.slane %v5581, 4
  %v5583 = vrot.slane %v5502, 5
  %v5584 = vsel %vm5068, %v5582, %v5583
  %v5585 = vrot.slane %v5503, 5
  %v5586 = vrot.slane %v5585, 4
  %v5587 = vrot.slane %v5504, 5
  %v5588 = vsel %vm5068, %v5586, %v5587
  %v5589 = vrot.slane %v5505, 5
  %v5590 = vrot.slane %v5589, 4
  %v5591 = vrot.slane %v5506, 5
  %v5592 = vsel %vm5068, %v5590, %v5591
  %v5593 = vrot.slane %v5507, 5
  %v5594 = vrot.slane %v5593, 4
  %v5595 = vrot.slane %v5508, 5
  %v5596 = vsel %vm5068, %v5594, %v5595
  %v5597 = vrot.slane %v5509, 5
  %v5598 = vrot.slane %v5597, 4
  %v5599 = vrot.slane %v5510, 5
  %v5600 = vsel %vm5068, %v5598, %v5599
  %v5601 = vrot.slane %v5511, 5
  %v5602 = vrot.slane %v5601, 4
  %v5603 = vrot.slane %v5512, 5
  %v5604 = vsel %vm5068, %v5602, %v5603
  %v5605 = vrot.slane %v5513, 5
  %v5606 = vrot.slane %v5605, 4
  %v5607 = vrot.slane %v5514, 5
  %v5608 = vsel %vm5068, %v5606, %v5607
  %v5609 = vrot.slane %v5515, 5
  %v5610 = vrot.slane %v5609, 4
  %v5611 = vrot.slane %v5516, 5
  %v5612 = vsel %vm5068, %v5610, %v5611
  %5629 = vst [vmem:[#allocation5 + $0x14] sm:$0xf] %v5552
  %5630 = vst [vmem:[#allocation5 + $0x38] sm:$0xf] %v5556
  %5631 = vst [vmem:[#allocation5 + $0x5c] sm:$0xf] %v5560
  %5632 = vst [vmem:[#allocation5 + $0x80] sm:$0xf] %v5564
  %5633 = vst [vmem:[#allocation5 + $0xa4] sm:$0xf] %v5568
  %5634 = vst [vmem:[#allocation5 + $0xc8] sm:$0xf] %v5572
  %5635 = vst [vmem:[#allocation5 + $0xec] sm:$0xf] %v5576
  %5636 = vst [vmem:[#allocation5 + $0x110] sm:$0xf] %v5580
  %5637 = vst [vmem:[#allocation5 + $0x134] sm:$0xf] %v5584
  %5638 = vst [vmem:[#allocation5 + $0x158] sm:$0xf] %v5588
  %5639 = vst [vmem:[#allocation5 + $0x17c] sm:$0xf] %v5592
  %5640 = vst [vmem:[#allocation5 + $0x1a0] sm:$0xf] %v5596
  %5641 = vst [vmem:[#allocation5 + $0x1c4] sm:$0xf] %v5600
  %5642 = vst [vmem:[#allocation5 + $0x1e8] sm:$0xf] %v5604
  %5643 = vst [vmem:[#allocation5 + $0x20c] sm:$0xf] %v5608
  %5644 = vst [vmem:[#allocation5 + $0x230] sm:$0xf] %v5612
  %s5645 = scalar_lea.vmem [#allocation4], 16
  %v5646 = vld [vmem:[%s5645] sm:$0xf]
  %v5647 = vld [vmem:[%s5645 + $0x8] sm:$0xf]
  %v5648 = vld [vmem:[%s5645 + $0x10] sm:$0xf]
  %v5649 = vld [vmem:[%s5645 + $0x18] sm:$0xf]
  %v5650 = vld [vmem:[%s5645 + $0x20] sm:$0xf]
  %v5651 = vld [vmem:[%s5645 + $0x28] sm:$0xf]
  %v5652 = vld [vmem:[%s5645 + $0x30] sm:$0xf]
  %v5653 = vld [vmem:[%s5645 + $0x38] sm:$0xf]
  %v5654 = vld [vmem:[%s5645 + $0x50] sm:$0xf]
  %v5655 = vld [vmem:[%s5645 + $0x58] sm:$0xf]
  %v5656 = vld [vmem:[%s5645 + $0x60] sm:$0xf]
  %v5657 = vld [vmem:[%s5645 + $0x68] sm:$0xf]
  %v5658 = vld [vmem:[%s5645 + $0x70] sm:$0xf]
  %v5659 = vld [vmem:[%s5645 + $0x78] sm:$0xf]
  %v5660 = vld [vmem:[%s5645 + $0x80] sm:$0xf]
  %v5661 = vld [vmem:[%s5645 + $0x88] sm:$0xf]
  %5662 = vst [vmem:[#allocation5 + $0x18] sm:$0xf] %v5646
  %5663 = vst [vmem:[#allocation5 + $0x3c] sm:$0xf] %v5647
  %5664 = vst [vmem:[#allocation5 + $0x60] sm:$0xf] %v5648
  %5665 = vst [vmem:[#allocation5 + $0x84] sm:$0xf] %v5649
  %5666 = vst [vmem:[#allocation5 + $0xa8] sm:$0xf] %v5650
  %5667 = vst [vmem:[#allocation5 + $0xcc] sm:$0xf] %v5651
  %5668 = vst [vmem:[#allocation5 + $0xf0] sm:$0xf] %v5652
  %5669 = vst [vmem:[#allocation5 + $0x114] sm:$0xf] %v5653
  %5670 = vst [vmem:[#allocation5 + $0x138] sm:$0xf] %v5654
  %5671 = vst [vmem:[#allocation5 + $0x15c] sm:$0xf] %v5655
  %5672 = vst [vmem:[#allocation5 + $0x180] sm:$0xf] %v5656
  %5673 = vst [vmem:[#allocation5 + $0x1a4] sm:$0xf] %v5657
  %5674 = vst [vmem:[#allocation5 + $0x1c8] sm:$0xf] %v5658
  %5675 = vst [vmem:[#allocation5 + $0x1ec] sm:$0xf] %v5659
  %5676 = vst [vmem:[#allocation5 + $0x210] sm:$0xf] %v5660
  %5677 = vst [vmem:[#allocation5 + $0x234] sm:$0xf] %v5661
  %v5678 = vld [vmem:[%s5645] sm:$0xf]
  %v5679 = vld [vmem:[%s5645 + $0x4] sm:$0x1]
  %v5680 = vld [vmem:[%s5645 + $0x8] sm:$0xf]
  %v5681 = vld [vmem:[%s5645 + $0xc] sm:$0x1]
  %v5682 = vld [vmem:[%s5645 + $0x10] sm:$0xf]
  %v5683 = vld [vmem:[%s5645 + $0x14] sm:$0x1]
  %v5684 = vld [vmem:[%s5645 + $0x18] sm:$0xf]
  %v5685 = vld [vmem:[%s5645 + $0x1c] sm:$0x1]
  %v5686 = vld [vmem:[%s5645 + $0x20] sm:$0xf]
  %v5687 = vld [vmem:[%s5645 + $0x24] sm:$0x1]
  %v5688 = vld [vmem:[%s5645 + $0x28] sm:$0xf]
  %v5689 = vld [vmem:[%s5645 + $0x2c] sm:$0x1]
  %v5690 = vld [vmem:[%s5645 + $0x30] sm:$0xf]
  %v5691 = vld [vmem:[%s5645 + $0x34] sm:$0x1]
  %v5692 = vld [vmem:[%s5645 + $0x38] sm:$0xf]
  %v5693 = vld [vmem:[%s5645 + $0x3c] sm:$0x1]
  %v5694 = vld [vmem:[%s5645 + $0x50] sm:$0xf]
  %v5695 = vld [vmem:[%s5645 + $0x54] sm:$0x1]
  %v5696 = vld [vmem:[%s5645 + $0x58] sm:$0xf]
  %v5697 = vld [vmem:[%s5645 + $0x5c] sm:$0x1]
  %v5698 = vld [vmem:[%s5645 + $0x60] sm:$0xf]
  %v5699 = vld [vmem:[%s5645 + $0x64] sm:$0x1]
  %v5700 = vld [vmem:[%s5645 + $0x68] sm:$0xf]
  %v5701 = vld [vmem:[%s5645 + $0x6c] sm:$0x1]
  %v5702 = vld [vmem:[%s5645 + $0x70] sm:$0xf]
  %v5703 = vld [vmem:[%s5645 + $0x74] sm:$0x1]
  %v5704 = vld [vmem:[%s5645 + $0x78] sm:$0xf]
  %v5705 = vld [vmem:[%s5645 + $0x7c] sm:$0x1]
  %v5706 = vld [vmem:[%s5645 + $0x80] sm:$0xf]
  %v5707 = vld [vmem:[%s5645 + $0x84] sm:$0x1]
  %v5708 = vld [vmem:[%s5645 + $0x88] sm:$0xf]
  %v5709 = vld [vmem:[%s5645 + $0x8c] sm:$0x1]
  %v5711 = vshrl.u32 %v5678, 16
  %v5713 = vrot.slane %v5711, 4
  %v5714 = vshll.u32 %v5678, 16
  %v5716 = vrot.slane %v5714, 5
  %v5717 = vor.u32 %v5713, %v5716
  %v5718 = vrot.slane %v5717, 4
  %v5720 = vshll.u32 %v5679, 16
  %v5722 = vrot.slane %v5720, 5
  %v5723 = vsel %vm2105, %v5718, %v5722
  %v5725 = vshrl.u32 %v5680, 16
  %v5727 = vrot.slane %v5725, 4
  %v5728 = vshll.u32 %v5680, 16
  %v5730 = vrot.slane %v5728, 5
  %v5731 = vor.u32 %v5727, %v5730
  %v5732 = vrot.slane %v5731, 4
  %v5734 = vshll.u32 %v5681, 16
  %v5736 = vrot.slane %v5734, 5
  %v5737 = vsel %vm2105, %v5732, %v5736
  %v5739 = vshrl.u32 %v5682, 16
  %v5741 = vrot.slane %v5739, 4
  %v5742 = vshll.u32 %v5682, 16
  %v5744 = vrot.slane %v5742, 5
  %v5745 = vor.u32 %v5741, %v5744
  %v5746 = vrot.slane %v5745, 4
  %v5748 = vshll.u32 %v5683, 16
  %v5750 = vrot.slane %v5748, 5
  %v5751 = vsel %vm2105, %v5746, %v5750
  %v5753 = vshrl.u32 %v5684, 16
  %v5755 = vrot.slane %v5753, 4
  %v5756 = vshll.u32 %v5684, 16
  %v5758 = vrot.slane %v5756, 5
  %v5759 = vor.u32 %v5755, %v5758
  %v5760 = vrot.slane %v5759, 4
  %v5762 = vshll.u32 %v5685, 16
  %v5764 = vrot.slane %v5762, 5
  %v5765 = vsel %vm2105, %v5760, %v5764
  %v5767 = vshrl.u32 %v5686, 16
  %v5769 = vrot.slane %v5767, 4
  %v5770 = vshll.u32 %v5686, 16
  %v5772 = vrot.slane %v5770, 5
  %v5773 = vor.u32 %v5769, %v5772
  %v5774 = vrot.slane %v5773, 4
  %v5776 = vshll.u32 %v5687, 16
  %v5778 = vrot.slane %v5776, 5
  %v5779 = vsel %vm2105, %v5774, %v5778
  %v5781 = vshrl.u32 %v5688, 16
  %v5783 = vrot.slane %v5781, 4
  %v5784 = vshll.u32 %v5688, 16
  %v5786 = vrot.slane %v5784, 5
  %v5787 = vor.u32 %v5783, %v5786
  %v5788 = vrot.slane %v5787, 4
  %v5790 = vshll.u32 %v5689, 16
  %v5792 = vrot.slane %v5790, 5
  %v5793 = vsel %vm2105, %v5788, %v5792
  %v5795 = vshrl.u32 %v5690, 16
  %v5797 = vrot.slane %v5795, 4
  %v5798 = vshll.u32 %v5690, 16
  %v5800 = vrot.slane %v5798, 5
  %v5801 = vor.u32 %v5797, %v5800
  %v5802 = vrot.slane %v5801, 4
  %v5804 = vshll.u32 %v5691, 16
  %v5806 = vrot.slane %v5804, 5
  %v5807 = vsel %vm2105, %v5802, %v5806
  %v5809 = vshrl.u32 %v5692, 16
  %v5811 = vrot.slane %v5809, 4
  %v5812 = vshll.u32 %v5692, 16
  %v5814 = vrot.slane %v5812, 5
  %v5815 = vor.u32 %v5811, %v5814
  %v5816 = vrot.slane %v5815, 4
  %v5818 = vshll.u32 %v5693, 16
  %v5820 = vrot.slane %v5818, 5
  %v5821 = vsel %vm2105, %v5816, %v5820
  %v5823 = vshrl.u32 %v5694, 16
  %v5825 = vrot.slane %v5823, 4
  %v5826 = vshll.u32 %v5694, 16
  %v5828 = vrot.slane %v5826, 5
  %v5829 = vor.u32 %v5825, %v5828
  %v5830 = vrot.slane %v5829, 4
  %v5832 = vshll.u32 %v5695, 16
  %v5834 = vrot.slane %v5832, 5
  %v5835 = vsel %vm2105, %v5830, %v5834
  %v5837 = vshrl.u32 %v5696, 16
  %v5839 = vrot.slane %v5837, 4
  %v5840 = vshll.u32 %v5696, 16
  %v5842 = vrot.slane %v5840, 5
  %v5843 = vor.u32 %v5839, %v5842
  %v5844 = vrot.slane %v5843, 4
  %v5846 = vshll.u32 %v5697, 16
  %v5848 = vrot.slane %v5846, 5
  %v5849 = vsel %vm2105, %v5844, %v5848
  %v5851 = vshrl.u32 %v5698, 16
  %v5853 = vrot.slane %v5851, 4
  %v5854 = vshll.u32 %v5698, 16
  %v5856 = vrot.slane %v5854, 5
  %v5857 = vor.u32 %v5853, %v5856
  %v5858 = vrot.slane %v5857, 4
  %v5860 = vshll.u32 %v5699, 16
  %v5862 = vrot.slane %v5860, 5
  %v5863 = vsel %vm2105, %v5858, %v5862
  %v5865 = vshrl.u32 %v5700, 16
  %v5867 = vrot.slane %v5865, 4
  %v5868 = vshll.u32 %v5700, 16
  %v5870 = vrot.slane %v5868, 5
  %v5871 = vor.u32 %v5867, %v5870
  %v5872 = vrot.slane %v5871, 4
  %v5874 = vshll.u32 %v5701, 16
  %v5876 = vrot.slane %v5874, 5
  %v5877 = vsel %vm2105, %v5872, %v5876
  %v5879 = vshrl.u32 %v5702, 16
  %v5881 = vrot.slane %v5879, 4
  %v5882 = vshll.u32 %v5702, 16
  %v5884 = vrot.slane %v5882, 5
  %v5885 = vor.u32 %v5881, %v5884
  %v5886 = vrot.slane %v5885, 4
  %v5888 = vshll.u32 %v5703, 16
  %v5890 = vrot.slane %v5888, 5
  %v5891 = vsel %vm2105, %v5886, %v5890
  %v5893 = vshrl.u32 %v5704, 16
  %v5895 = vrot.slane %v5893, 4
  %v5896 = vshll.u32 %v5704, 16
  %v5898 = vrot.slane %v5896, 5
  %v5899 = vor.u32 %v5895, %v5898
  %v5900 = vrot.slane %v5899, 4
  %v5902 = vshll.u32 %v5705, 16
  %v5904 = vrot.slane %v5902, 5
  %v5905 = vsel %vm2105, %v5900, %v5904
  %v5907 = vshrl.u32 %v5706, 16
  %v5909 = vrot.slane %v5907, 4
  %v5910 = vshll.u32 %v5706, 16
  %v5912 = vrot.slane %v5910, 5
  %v5913 = vor.u32 %v5909, %v5912
  %v5914 = vrot.slane %v5913, 4
  %v5916 = vshll.u32 %v5707, 16
  %v5918 = vrot.slane %v5916, 5
  %v5919 = vsel %vm2105, %v5914, %v5918
  %v5921 = vshrl.u32 %v5708, 16
  %v5923 = vrot.slane %v5921, 4
  %v5924 = vshll.u32 %v5708, 16
  %v5926 = vrot.slane %v5924, 5
  %v5927 = vor.u32 %v5923, %v5926
  %v5928 = vrot.slane %v5927, 4
  %v5930 = vshll.u32 %v5709, 16
  %v5932 = vrot.slane %v5930, 5
  %v5933 = vsel %vm2105, %v5928, %v5932
  %5950 = vst [vmem:[#allocation5 + $0x1c] sm:$0xf] %v5723
  %5951 = vst [vmem:[#allocation5 + $0x40] sm:$0xf] %v5737
  %5952 = vst [vmem:[#allocation5 + $0x64] sm:$0xf] %v5751
  %5953 = vst [vmem:[#allocation5 + $0x88] sm:$0xf] %v5765
  %5954 = vst [vmem:[#allocation5 + $0xac] sm:$0xf] %v5779
  %5955 = vst [vmem:[#allocation5 + $0xd0] sm:$0xf] %v5793
  %5956 = vst [vmem:[#allocation5 + $0xf4] sm:$0xf] %v5807
  %5957 = vst [vmem:[#allocation5 + $0x118] sm:$0xf] %v5821
  %5958 = vst [vmem:[#allocation5 + $0x13c] sm:$0xf] %v5835
  %5959 = vst [vmem:[#allocation5 + $0x160] sm:$0xf] %v5849
  %5960 = vst [vmem:[#allocation5 + $0x184] sm:$0xf] %v5863
  %5961 = vst [vmem:[#allocation5 + $0x1a8] sm:$0xf] %v5877
  %5962 = vst [vmem:[#allocation5 + $0x1cc] sm:$0xf] %v5891
  %5963 = vst [vmem:[#allocation5 + $0x1f0] sm:$0xf] %v5905
  %5964 = vst [vmem:[#allocation5 + $0x214] sm:$0xf] %v5919
  %5965 = vst [vmem:[#allocation5 + $0x238] sm:$0xf] %v5933
  %v5966 = vld [vmem:[%s5645] sm:$0xe]
  %v5967 = vld [vmem:[%s5645 + $0x4] sm:$0x1]
  %v5968 = vld [vmem:[%s5645 + $0x8] sm:$0xe]
  %v5969 = vld [vmem:[%s5645 + $0xc] sm:$0x1]
  %v5970 = vld [vmem:[%s5645 + $0x10] sm:$0xe]
  %v5971 = vld [vmem:[%s5645 + $0x14] sm:$0x1]
  %v5972 = vld [vmem:[%s5645 + $0x18] sm:$0xe]
  %v5973 = vld [vmem:[%s5645 + $0x1c] sm:$0x1]
  %v5974 = vld [vmem:[%s5645 + $0x20] sm:$0xe]
  %v5975 = vld [vmem:[%s5645 + $0x24] sm:$0x1]
  %v5976 = vld [vmem:[%s5645 + $0x28] sm:$0xe]
  %v5977 = vld [vmem:[%s5645 + $0x2c] sm:$0x1]
  %v5978 = vld [vmem:[%s5645 + $0x30] sm:$0xe]
  %v5979 = vld [vmem:[%s5645 + $0x34] sm:$0x1]
  %v5980 = vld [vmem:[%s5645 + $0x38] sm:$0xe]
  %v5981 = vld [vmem:[%s5645 + $0x3c] sm:$0x1]
  %v5982 = vld [vmem:[%s5645 + $0x50] sm:$0xe]
  %v5983 = vld [vmem:[%s5645 + $0x54] sm:$0x1]
  %v5984 = vld [vmem:[%s5645 + $0x58] sm:$0xe]
  %v5985 = vld [vmem:[%s5645 + $0x5c] sm:$0x1]
  %v5986 = vld [vmem:[%s5645 + $0x60] sm:$0xe]
  %v5987 = vld [vmem:[%s5645 + $0x64] sm:$0x1]
  %v5988 = vld [vmem:[%s5645 + $0x68] sm:$0xe]
  %v5989 = vld [vmem:[%s5645 + $0x6c] sm:$0x1]
  %v5990 = vld [vmem:[%s5645 + $0x70] sm:$0xe]
  %v5991 = vld [vmem:[%s5645 + $0x74] sm:$0x1]
  %v5992 = vld [vmem:[%s5645 + $0x78] sm:$0xe]
  %v5993 = vld [vmem:[%s5645 + $0x7c] sm:$0x1]
  %v5994 = vld [vmem:[%s5645 + $0x80] sm:$0xe]
  %v5995 = vld [vmem:[%s5645 + $0x84] sm:$0x1]
  %v5996 = vld [vmem:[%s5645 + $0x88] sm:$0xe]
  %v5997 = vld [vmem:[%s5645 + $0x8c] sm:$0x1]
  %v6030 = vrot.slane %v5966, 5
  %v6031 = vrot.slane %v6030, 4
  %v6032 = vrot.slane %v5967, 5
  %v6033 = vsel %vm5068, %v6031, %v6032
  %v6034 = vrot.slane %v5968, 5
  %v6035 = vrot.slane %v6034, 4
  %v6036 = vrot.slane %v5969, 5
  %v6037 = vsel %vm5068, %v6035, %v6036
  %v6038 = vrot.slane %v5970, 5
  %v6039 = vrot.slane %v6038, 4
  %v6040 = vrot.slane %v5971, 5
  %v6041 = vsel %vm5068, %v6039, %v6040
  %v6042 = vrot.slane %v5972, 5
  %v6043 = vrot.slane %v6042, 4
  %v6044 = vrot.slane %v5973, 5
  %v6045 = vsel %vm5068, %v6043, %v6044
  %v6046 = vrot.slane %v5974, 5
  %v6047 = vrot.slane %v6046, 4
  %v6048 = vrot.slane %v5975, 5
  %v6049 = vsel %vm5068, %v6047, %v6048
  %v6050 = vrot.slane %v5976, 5
  %v6051 = vrot.slane %v6050, 4
  %v6052 = vrot.slane %v5977, 5
  %v6053 = vsel %vm5068, %v6051, %v6052
  %v6054 = vrot.slane %v5978, 5
  %v6055 = vrot.slane %v6054, 4
  %v6056 = vrot.slane %v5979, 5
  %v6057 = vsel %vm5068, %v6055, %v6056
  %v6058 = vrot.slane %v5980, 5
  %v6059 = vrot.slane %v6058, 4
  %v6060 = vrot.slane %v5981, 5
  %v6061 = vsel %vm5068, %v6059, %v6060
  %v6062 = vrot.slane %v5982, 5
  %v6063 = vrot.slane %v6062, 4
  %v6064 = vrot.slane %v5983, 5
  %v6065 = vsel %vm5068, %v6063, %v6064
  %v6066 = vrot.slane %v5984, 5
  %v6067 = vrot.slane %v6066, 4
  %v6068 = vrot.slane %v5985, 5
  %v6069 = vsel %vm5068, %v6067, %v6068
  %v6070 = vrot.slane %v5986, 5
  %v6071 = vrot.slane %v6070, 4
  %v6072 = vrot.slane %v5987, 5
  %v6073 = vsel %vm5068, %v6071, %v6072
  %v6074 = vrot.slane %v5988, 5
  %v6075 = vrot.slane %v6074, 4
  %v6076 = vrot.slane %v5989, 5
  %v6077 = vsel %vm5068, %v6075, %v6076
  %v6078 = vrot.slane %v5990, 5
  %v6079 = vrot.slane %v6078, 4
  %v6080 = vrot.slane %v5991, 5
  %v6081 = vsel %vm5068, %v6079, %v6080
  %v6082 = vrot.slane %v5992, 5
  %v6083 = vrot.slane %v6082, 4
  %v6084 = vrot.slane %v5993, 5
  %v6085 = vsel %vm5068, %v6083, %v6084
  %v6086 = vrot.slane %v5994, 5
  %v6087 = vrot.slane %v6086, 4
  %v6088 = vrot.slane %v5995, 5
  %v6089 = vsel %vm5068, %v6087, %v6088
  %v6090 = vrot.slane %v5996, 5
  %v6091 = vrot.slane %v6090, 4
  %v6092 = vrot.slane %v5997, 5
  %v6093 = vsel %vm5068, %v6091, %v6092
  %6110 = vst [vmem:[#allocation5 + $0x20] sm:$0xf] %v6033
  %6111 = vst [vmem:[#allocation5 + $0x44] sm:$0xf] %v6037
  %6112 = vst [vmem:[#allocation5 + $0x68] sm:$0xf] %v6041
  %6113 = vst [vmem:[#allocation5 + $0x8c] sm:$0xf] %v6045
  %6114 = vst [vmem:[#allocation5 + $0xb0] sm:$0xf] %v6049
  %6115 = vst [vmem:[#allocation5 + $0xd4] sm:$0xf] %v6053
  %6116 = vst [vmem:[#allocation5 + $0xf8] sm:$0xf] %v6057
  %6117 = vst [vmem:[#allocation5 + $0x11c] sm:$0xf] %v6061
  %6118 = vst [vmem:[#allocation5 + $0x140] sm:$0xf] %v6065
  %6119 = vst [vmem:[#allocation5 + $0x164] sm:$0xf] %v6069
  %6120 = vst [vmem:[#allocation5 + $0x188] sm:$0xf] %v6073
  %6121 = vst [vmem:[#allocation5 + $0x1ac] sm:$0xf] %v6077
  %6122 = vst [vmem:[#allocation5 + $0x1d0] sm:$0xf] %v6081
  %6123 = vst [vmem:[#allocation5 + $0x1f4] sm:$0xf] %v6085
  %6124 = vst [vmem:[#allocation5 + $0x218] sm:$0xf] %v6089
  %6125 = vst [vmem:[#allocation5 + $0x23c] sm:$0xf] %v6093
  %v6126 = vld [vmem:[#allocation5] sm:$0xff]
  %v6127 = vld [vmem:[#allocation5 + $0x8] sm:$0xff]
  %v6128 = vld [vmem:[#allocation5 + $0x10] sm:$0xff]
  %v6129 = vld [vmem:[#allocation5 + $0x18] sm:$0xff]
  %v6130 = vld [vmem:[#allocation5 + $0x20] sm:$0xf]
  %v6131 = vld [vmem:[#allocation5 + $0x24] sm:$0xff]
  %v6132 = vld [vmem:[#allocation5 + $0x2c] sm:$0xff]
  %v6133 = vld [vmem:[#allocation5 + $0x34] sm:$0xff]
  %v6134 = vld [vmem:[#allocation5 + $0x3c] sm:$0xff]
  %v6135 = vld [vmem:[#allocation5 + $0x44] sm:$0xf]
  %v6136 = vld [vmem:[#allocation5 + $0x48] sm:$0xff]
  %v6137 = vld [vmem:[#allocation5 + $0x50] sm:$0xff]
  %v6138 = vld [vmem:[#allocation5 + $0x58] sm:$0xff]
  %v6139 = vld [vmem:[#allocation5 + $0x60] sm:$0xff]
  %v6140 = vld [vmem:[#allocation5 + $0x68] sm:$0xf]
  %v6141 = vld [vmem:[#allocation5 + $0x6c] sm:$0xff]
  %v6142 = vld [vmem:[#allocation5 + $0x74] sm:$0xff]
  %v6143 = vld [vmem:[#allocation5 + $0x7c] sm:$0xff]
  %v6144 = vld [vmem:[#allocation5 + $0x84] sm:$0xff]
  %v6145 = vld [vmem:[#allocation5 + $0x8c] sm:$0xf]
  %v6146 = vld [vmem:[#allocation5 + $0x90] sm:$0xff]
  %v6147 = vld [vmem:[#allocation5 + $0x98] sm:$0xff]
  %v6148 = vld [vmem:[#allocation5 + $0xa0] sm:$0xff]
  %v6149 = vld [vmem:[#allocation5 + $0xa8] sm:$0xff]
  %v6150 = vld [vmem:[#allocation5 + $0xb0] sm:$0xf]
  %v6151 = vld [vmem:[#allocation5 + $0xb4] sm:$0xff]
  %v6152 = vld [vmem:[#allocation5 + $0xbc] sm:$0xff]
  %v6153 = vld [vmem:[#allocation5 + $0xc4] sm:$0xff]
  %v6154 = vld [vmem:[#allocation5 + $0xcc] sm:$0xff]
  %v6155 = vld [vmem:[#allocation5 + $0xd4] sm:$0xf]
  %v6156 = vld [vmem:[#allocation5 + $0xd8] sm:$0xff]
  %v6157 = vld [vmem:[#allocation5 + $0xe0] sm:$0xff]
  %v6158 = vld [vmem:[#allocation5 + $0xe8] sm:$0xff]
  %v6159 = vld [vmem:[#allocation5 + $0xf0] sm:$0xff]
  %v6160 = vld [vmem:[#allocation5 + $0xf8] sm:$0xf]
  %v6161 = vld [vmem:[#allocation5 + $0xfc] sm:$0xff]
  %v6162 = vld [vmem:[#allocation5 + $0x104] sm:$0xff]
  %v6163 = vld [vmem:[#allocation5 + $0x10c] sm:$0xff]
  %v6164 = vld [vmem:[#allocation5 + $0x114] sm:$0xff]
  %v6165 = vld [vmem:[#allocation5 + $0x11c] sm:$0xf]
  %v6166 = vld [vmem:[#allocation5 + $0x120] sm:$0xff]
  %v6167 = vld [vmem:[#allocation5 + $0x128] sm:$0xff]
  %v6168 = vld [vmem:[#allocation5 + $0x130] sm:$0xff]
  %v6169 = vld [vmem:[#allocation5 + $0x138] sm:$0xff]
  %v6170 = vld [vmem:[#allocation5 + $0x140] sm:$0xf]
  %v6171 = vld [vmem:[#allocation5 + $0x144] sm:$0xff]
  %v6172 = vld [vmem:[#allocation5 + $0x14c] sm:$0xff]
  %v6173 = vld [vmem:[#allocation5 + $0x154] sm:$0xff]
  %v6174 = vld [vmem:[#allocation5 + $0x15c] sm:$0xff]
  %v6175 = vld [vmem:[#allocation5 + $0x164] sm:$0xf]
  %v6176 = vld [vmem:[#allocation5 + $0x168] sm:$0xff]
  %v6177 = vld [vmem:[#allocation5 + $0x170] sm:$0xff]
  %v6178 = vld [vmem:[#allocation5 + $0x178] sm:$0xff]
  %v6179 = vld [vmem:[#allocation5 + $0x180] sm:$0xff]
  %v6180 = vld [vmem:[#allocation5 + $0x188] sm:$0xf]
  %v6181 = vld [vmem:[#allocation5 + $0x18c] sm:$0xff]
  %v6182 = vld [vmem:[#allocation5 + $0x194] sm:$0xff]
  %v6183 = vld [vmem:[#allocation5 + $0x19c] sm:$0xff]
  %v6184 = vld [vmem:[#allocation5 + $0x1a4] sm:$0xff]
  %v6185 = vld [vmem:[#allocation5 + $0x1ac] sm:$0xf]
  %v6186 = vld [vmem:[#allocation5 + $0x1b0] sm:$0xff]
  %v6187 = vld [vmem:[#allocation5 + $0x1b8] sm:$0xff]
  %v6188 = vld [vmem:[#allocation5 + $0x1c0] sm:$0xff]
  %v6189 = vld [vmem:[#allocation5 + $0x1c8] sm:$0xff]
  %v6190 = vld [vmem:[#allocation5 + $0x1d0] sm:$0xf]
  %v6191 = vld [vmem:[#allocation5 + $0x1d4] sm:$0xff]
  %v6192 = vld [vmem:[#allocation5 + $0x1dc] sm:$0xff]
  %v6193 = vld [vmem:[#allocation5 + $0x1e4] sm:$0xff]
  %v6194 = vld [vmem:[#allocation5 + $0x1ec] sm:$0xff]
  %v6195 = vld [vmem:[#allocation5 + $0x1f4] sm:$0xf]
  %v6196 = vld [vmem:[#allocation5 + $0x1f8] sm:$0xff]
  %v6197 = vld [vmem:[#allocation5 + $0x200] sm:$0xff]
  %v6198 = vld [vmem:[#allocation5 + $0x208] sm:$0xff]
  %v6199 = vld [vmem:[#allocation5 + $0x210] sm:$0xff]
  %v6200 = vld [vmem:[#allocation5 + $0x218] sm:$0xf]
  %v6201 = vld [vmem:[#allocation5 + $0x21c] sm:$0xff]
  %v6202 = vld [vmem:[#allocation5 + $0x224] sm:$0xff]
  %v6203 = vld [vmem:[#allocation5 + $0x22c] sm:$0xff]
  %v6204 = vld [vmem:[#allocation5 + $0x234] sm:$0xff]
  %v6205 = vld [vmem:[#allocation5 + $0x23c] sm:$0xf]
  %v6206 = vld [vmem:[%s6] sm:$0xf]
  %v6207 = vld [vmem:[%s6 + $0x4] sm:$0xf]
  %v6208 = vld [vmem:[%s6 + $0x8] sm:$0xf]
  %v6209 = vld [vmem:[%s6 + $0xc] sm:$0xf]
  %v6210 = vld [vmem:[%s6 + $0x10] sm:$0xf]
  %v6211 = vld [vmem:[%s6 + $0x14] sm:$0xf]
  %v6212 = vld [vmem:[%s6 + $0x18] sm:$0xf]
  %v6213 = vld [vmem:[%s6 + $0x1c] sm:$0xf]
  %v6214 = vld [vmem:[%s6 + $0x20] sm:$0xf]
  %v6215 = vld [vmem:[%s6 + $0x24] sm:$0xf]
  %v6216 = vld [vmem:[%s6 + $0x28] sm:$0xf]
  %v6217 = vld [vmem:[%s6 + $0x2c] sm:$0xf]
  %v6218 = vld [vmem:[%s6 + $0x30] sm:$0xf]
  %v6219 = vld [vmem:[%s6 + $0x34] sm:$0xf]
  %v6220 = vld [vmem:[%s6 + $0x38] sm:$0xf]
  %v6221 = vld [vmem:[%s6 + $0x3c] sm:$0xf]
  %v6222 = vld [vmem:[%s6 + $0x40] sm:$0xf]
  %v6223 = vld [vmem:[%s6 + $0x44] sm:$0xf]
  %v6224 = vld [vmem:[%s6 + $0x48] sm:$0xf]
  %v6225 = vld [vmem:[%s6 + $0x4c] sm:$0xf]
  %v6226 = vld [vmem:[%s6 + $0x50] sm:$0xf]
  %v6227 = vld [vmem:[%s6 + $0x54] sm:$0xf]
  %v6228 = vld [vmem:[%s6 + $0x58] sm:$0xf]
  %v6229 = vld [vmem:[%s6 + $0x5c] sm:$0xf]
  %v6230 = vld [vmem:[%s6 + $0x60] sm:$0xf]
  %v6231 = vld [vmem:[%s6 + $0x64] sm:$0xf]
  %v6232 = vld [vmem:[%s6 + $0x68] sm:$0xf]
  %v6233 = vld [vmem:[%s6 + $0x6c] sm:$0xf]
  %v6234 = vld [vmem:[%s6 + $0x70] sm:$0xf]
  %v6235 = vld [vmem:[%s6 + $0x74] sm:$0xf]
  %v6236 = vld [vmem:[%s6 + $0x78] sm:$0xf]
  %v6237 = vld [vmem:[%s6 + $0x7c] sm:$0xf]
  %v6238 = vld [vmem:[%s6 + $0x80] sm:$0xf]
  %v6239 = vld [vmem:[%s6 + $0x84] sm:$0xf]
  %v6240 = vld [vmem:[%s6 + $0x88] sm:$0xf]
  %v6241 = vld [vmem:[%s6 + $0x8c] sm:$0xf]
  %v6242 = vld [vmem:[%s6 + $0x90] sm:$0xf]
  %v6243 = vld [vmem:[%s6 + $0x94] sm:$0xf]
  %v6244 = vld [vmem:[%s6 + $0x98] sm:$0xf]
  %v6245 = vld [vmem:[%s6 + $0x9c] sm:$0xf]
  %v6246 = vld [vmem:[%s6 + $0xa0] sm:$0xf]
  %v6247 = vld [vmem:[%s6 + $0xa4] sm:$0xf]
  %v6248 = vld [vmem:[%s6 + $0xa8] sm:$0xf]
  %v6249 = vld [vmem:[%s6 + $0xac] sm:$0xf]
  %v6250 = vld [vmem:[%s6 + $0xb0] sm:$0xf]
  %v6251 = vld [vmem:[%s6 + $0xb4] sm:$0xf]
  %v6252 = vld [vmem:[%s6 + $0xb8] sm:$0xf]
  %v6253 = vld [vmem:[%s6 + $0xbc] sm:$0xf]
  %v6254 = vld [vmem:[%s6 + $0xc0] sm:$0xf]
  %v6255 = vld [vmem:[%s6 + $0xc4] sm:$0xf]
  %v6256 = vld [vmem:[%s6 + $0xc8] sm:$0xf]
  %v6257 = vld [vmem:[%s6 + $0xcc] sm:$0xf]
  %v6258 = vld [vmem:[%s6 + $0xd0] sm:$0xf]
  %v6259 = vld [vmem:[%s6 + $0xd4] sm:$0xf]
  %v6260 = vld [vmem:[%s6 + $0xd8] sm:$0xf]
  %v6261 = vld [vmem:[%s6 + $0xdc] sm:$0xf]
  %v6262 = vld [vmem:[%s6 + $0xe0] sm:$0xf]
  %v6263 = vld [vmem:[%s6 + $0xe4] sm:$0xf]
  %v6264 = vld [vmem:[%s6 + $0xe8] sm:$0xf]
  %v6265 = vld [vmem:[%s6 + $0xec] sm:$0xf]
  %v6266 = vld [vmem:[%s6 + $0xf0] sm:$0xf]
  %v6267 = vld [vmem:[%s6 + $0xf4] sm:$0xf]
  %v6268 = vld [vmem:[%s6 + $0xf8] sm:$0xf]
  %v6269 = vld [vmem:[%s6 + $0xfc] sm:$0xf]
  %v6270 = vld [vmem:[%s6 + $0x100] sm:$0xf]
  %v6271 = vld [vmem:[%s6 + $0x104] sm:$0xf]
  %v6272 = vld [vmem:[%s6 + $0x108] sm:$0xf]
  %v6273 = vld [vmem:[%s6 + $0x10c] sm:$0xf]
  %v6274 = vld [vmem:[%s6 + $0x110] sm:$0xf]
  %v6275 = vld [vmem:[%s6 + $0x114] sm:$0xf]
  %v6276 = vld [vmem:[%s6 + $0x118] sm:$0xf]
  %v6277 = vld [vmem:[%s6 + $0x11c] sm:$0xf]
  %v6278 = vld [vmem:[%s6 + $0x120] sm:$0xf]
  %v6279 = vld [vmem:[%s6 + $0x124] sm:$0xf]
  %v6280 = vld [vmem:[%s6 + $0x128] sm:$0xf]
  %v6281 = vld [vmem:[%s6 + $0x12c] sm:$0xf]
  %v6282 = vld [vmem:[%s6 + $0x130] sm:$0xf]
  %v6283 = vld [vmem:[%s6 + $0x134] sm:$0xf]
  %v6284 = vld [vmem:[%s6 + $0x138] sm:$0xf]
  %v6285 = vld [vmem:[%s6 + $0x13c] sm:$0xf]
  %v6286 = vld [vmem:[%s6 + $0x140] sm:$0xf]
  %v6287 = vld [vmem:[%s6 + $0x144] sm:$0xf]
  %v6288 = vld [vmem:[%s6 + $0x148] sm:$0xf]
  %v6289 = vld [vmem:[%s6 + $0x14c] sm:$0xf]
  %v6290 = vld [vmem:[%s6 + $0x150] sm:$0xf]
  %v6291 = vld [vmem:[%s6 + $0x154] sm:$0xf]
  %v6292 = vld [vmem:[%s6 + $0x158] sm:$0xf]
  %v6293 = vld [vmem:[%s6 + $0x15c] sm:$0xf]
  %v6294 = vld [vmem:[%s6 + $0x160] sm:$0xf]
  %v6295 = vld [vmem:[%s6 + $0x164] sm:$0xf]
  %v6296 = vld [vmem:[%s6 + $0x168] sm:$0xf]
  %v6297 = vld [vmem:[%s6 + $0x16c] sm:$0xf]
  %v6298 = vld [vmem:[%s6 + $0x170] sm:$0xf]
  %v6299 = vld [vmem:[%s6 + $0x174] sm:$0xf]
  %v6300 = vld [vmem:[%s6 + $0x178] sm:$0xf]
  %v6301 = vld [vmem:[%s6 + $0x17c] sm:$0xf]
  %v6302 = vld [vmem:[%s6 + $0x180] sm:$0xf]
  %v6303 = vld [vmem:[%s6 + $0x184] sm:$0xf]
  %v6304 = vld [vmem:[%s6 + $0x188] sm:$0xf]
  %v6305 = vld [vmem:[%s6 + $0x18c] sm:$0xf]
  %v6306 = vld [vmem:[%s6 + $0x190] sm:$0xf]
  %v6307 = vld [vmem:[%s6 + $0x194] sm:$0xf]
  %v6308 = vld [vmem:[%s6 + $0x198] sm:$0xf]
  %v6309 = vld [vmem:[%s6 + $0x19c] sm:$0xf]
  %v6310 = vld [vmem:[%s6 + $0x1a0] sm:$0xf]
  %v6311 = vld [vmem:[%s6 + $0x1a4] sm:$0xf]
  %v6312 = vld [vmem:[%s6 + $0x1a8] sm:$0xf]
  %v6313 = vld [vmem:[%s6 + $0x1ac] sm:$0xf]
  %v6314 = vld [vmem:[%s6 + $0x1b0] sm:$0xf]
  %v6315 = vld [vmem:[%s6 + $0x1b4] sm:$0xf]
  %v6316 = vld [vmem:[%s6 + $0x1b8] sm:$0xf]
  %v6317 = vld [vmem:[%s6 + $0x1bc] sm:$0xf]
  %v6318 = vld [vmem:[%s6 + $0x1c0] sm:$0xf]
  %v6319 = vld [vmem:[%s6 + $0x1c4] sm:$0xf]
  %v6320 = vld [vmem:[%s6 + $0x1c8] sm:$0xf]
  %v6321 = vld [vmem:[%s6 + $0x1cc] sm:$0xf]
  %v6322 = vld [vmem:[%s6 + $0x1d0] sm:$0xf]
  %v6323 = vld [vmem:[%s6 + $0x1d4] sm:$0xf]
  %v6324 = vld [vmem:[%s6 + $0x1d8] sm:$0xf]
  %v6325 = vld [vmem:[%s6 + $0x1dc] sm:$0xf]
  %v6326 = vld [vmem:[%s6 + $0x1e0] sm:$0xf]
  %v6327 = vld [vmem:[%s6 + $0x1e4] sm:$0xf]
  %v6328 = vld [vmem:[%s6 + $0x1e8] sm:$0xf]
  %v6329 = vld [vmem:[%s6 + $0x1ec] sm:$0xf]
  %v6330 = vld [vmem:[%s6 + $0x1f0] sm:$0xf]
  %v6331 = vld [vmem:[%s6 + $0x1f4] sm:$0xf]
  %v6332 = vld [vmem:[%s6 + $0x1f8] sm:$0xf]
  %v6333 = vld [vmem:[%s6 + $0x1fc] sm:$0xf]
  %v6334 = vld [vmem:[%s6 + $0x200] sm:$0xf]
  %v6335 = vld [vmem:[%s6 + $0x204] sm:$0xf]
  %v6336 = vld [vmem:[%s6 + $0x208] sm:$0xf]
  %v6337 = vld [vmem:[%s6 + $0x20c] sm:$0xf]
  %v6338 = vld [vmem:[%s6 + $0x210] sm:$0xf]
  %v6339 = vld [vmem:[%s6 + $0x214] sm:$0xf]
  %v6340 = vld [vmem:[%s6 + $0x218] sm:$0xf]
  %v6341 = vld [vmem:[%s6 + $0x21c] sm:$0xf]
  %v6342 = vld [vmem:[%s6 + $0x220] sm:$0xf]
  %v6343 = vld [vmem:[%s6 + $0x224] sm:$0xf]
  %v6344 = vld [vmem:[%s6 + $0x228] sm:$0xf]
  %v6345 = vld [vmem:[%s6 + $0x22c] sm:$0xf]
  %v6346 = vld [vmem:[%s6 + $0x230] sm:$0xf]
  %v6347 = vld [vmem:[%s6 + $0x234] sm:$0xf]
  %v6348 = vld [vmem:[%s6 + $0x238] sm:$0xf]
  %v6349 = vld [vmem:[%s6 + $0x23c] sm:$0xf]
  %v6350 = vld [vmem:[%s0] sm:$0xff]
  %v6351 = vld [vmem:[%s0 + $0x8] sm:$0xff]
  %v6352 = vld [vmem:[%s0 + $0x10] sm:$0xff]
  %v6353 = vld [vmem:[%s0 + $0x18] sm:$0xff]
  %v6354 = vld [vmem:[%s0 + $0x20] sm:$0xff]
  %v6355 = vld [vmem:[%s0 + $0x28] sm:$0xff]
  %v6356 = vld [vmem:[%s0 + $0x30] sm:$0xff]
  %v6357 = vld [vmem:[%s0 + $0x38] sm:$0xff]
  %v6358 = vld [vmem:[%s0 + $0x40] sm:$0xff]
  %v6359 = vld [vmem:[%s0 + $0x48] sm:$0xff]
  %v6360 = vld [vmem:[%s0 + $0x50] sm:$0xff]
  %v6361 = vld [vmem:[%s0 + $0x58] sm:$0xff]
  %v6362 = vld [vmem:[%s0 + $0x60] sm:$0xff]
  %v6363 = vld [vmem:[%s0 + $0x68] sm:$0xff]
  %v6364 = vld [vmem:[%s0 + $0x70] sm:$0xff]
  %v6365 = vld [vmem:[%s0 + $0x78] sm:$0xff]
  %v6366 = vpack.c.bf16 %v6351, %v6350
  %v6367 = vpack.c.bf16 %v6353, %v6352
  %v6368 = vpack.c.bf16 %v6355, %v6354
  %v6369 = vpack.c.bf16 %v6357, %v6356
  %v6370 = vpack.c.bf16 %v6359, %v6358
  %v6371 = vpack.c.bf16 %v6361, %v6360
  %v6372 = vpack.c.bf16 %v6363, %v6362
  %v6373 = vpack.c.bf16 %v6365, %v6364
  %v6374 = vld [vmem:[%s7] sm:$0x3]
  %vm6375 = vcmask 31744
  %v6377 = vsel %vm6375, %v6366, 0
  %v6380 = vsel %vm6375, %v6367, 0
  %v6383 = vsel %vm6375, %v6368, 0
  %v6386 = vsel %vm6375, %v6369, 0
  %v6389 = vsel %vm6375, %v6370, 0
  %v6392 = vsel %vm6375, %v6371, 0
  %v6395 = vsel %vm6375, %v6372, 0
  %v6398 = vsel %vm6375, %v6373, 0
  %v6401 = vsel %vm4298, %v6374, 0
  %6403 = vmatpush.bf16.msra.mxu0 0
  %6404 = vmatpush.bf16.msra.mxu0 0
  %6405 = vmatpush.bf16.msra.mxu0 0
  %6406 = vmatpush.bf16.msra.mxu0 0
  %6407 = vmatpush.bf16.msra.mxu0 0
  %6408 = vmatpush.bf16.msra.mxu0 0
  %6409 = vmatpush.bf16.msra.mxu0 0
  %6410 = vmatpush.bf16.msra.mxu0 %v6401
  %6411 = vmatmul.bf16.gmra.mxu0 %v6377
  %v6412 = vpop.f32.mrf.mxu0
  %v6413 = vadd.f32 0.0, %v6412
  %v6414 = vpop.f32.mrf.mxu0
  %v6415 = vadd.f32 0.0, %v6414
  %6416 = vmatmul.bf16.gmra.mxu0 %v6380
  %v6417 = vpop.f32.mrf.mxu0
  %v6418 = vadd.f32 0.0, %v6417
  %v6419 = vpop.f32.mrf.mxu0
  %v6420 = vadd.f32 0.0, %v6419
  %6421 = vmatmul.bf16.gmra.mxu0 %v6383
  %v6422 = vpop.f32.mrf.mxu0
  %v6423 = vadd.f32 0.0, %v6422
  %v6424 = vpop.f32.mrf.mxu0
  %v6425 = vadd.f32 0.0, %v6424
  %6426 = vmatmul.bf16.gmra.mxu0 %v6386
  %v6427 = vpop.f32.mrf.mxu0
  %v6428 = vadd.f32 0.0, %v6427
  %v6429 = vpop.f32.mrf.mxu0
  %v6430 = vadd.f32 0.0, %v6429
  %6431 = vmatmul.bf16.gmra.mxu0 %v6389
  %v6432 = vpop.f32.mrf.mxu0
  %v6433 = vadd.f32 0.0, %v6432
  %v6434 = vpop.f32.mrf.mxu0
  %v6435 = vadd.f32 0.0, %v6434
  %6436 = vmatmul.bf16.gmra.mxu0 %v6392
  %v6437 = vpop.f32.mrf.mxu0
  %v6438 = vadd.f32 0.0, %v6437
  %v6439 = vpop.f32.mrf.mxu0
  %v6440 = vadd.f32 0.0, %v6439
  %6441 = vmatmul.bf16.gmra.mxu0 %v6395
  %v6442 = vpop.f32.mrf.mxu0
  %v6443 = vadd.f32 0.0, %v6442
  %v6444 = vpop.f32.mrf.mxu0
  %v6445 = vadd.f32 0.0, %v6444
  %6446 = vmatmul.bf16.gmra.mxu0 %v6398
  %v6447 = vpop.f32.mrf.mxu0
  %v6448 = vadd.f32 0.0, %v6447
  %v6449 = vpop.f32.mrf.mxu0
  %v6450 = vadd.f32 0.0, %v6449
  %6451 = vdwg.mxu0
  %v6532 = vunpack.c.l.b16 %v6126
  %v6533 = vunpack.c.h.b16 %v6126
  %v6534 = vunpack.c.l.b16 %v6127
  %v6535 = vunpack.c.h.b16 %v6127
  %v6536 = vunpack.c.l.b16 %v6128
  %v6537 = vunpack.c.h.b16 %v6128
  %v6538 = vunpack.c.l.b16 %v6129
  %v6539 = vunpack.c.h.b16 %v6129
  %v6540 = vunpack.c.l.b16 %v6130
  %v6541 = vunpack.c.l.b16 %v6131
  %v6542 = vunpack.c.h.b16 %v6131
  %v6543 = vunpack.c.l.b16 %v6132
  %v6544 = vunpack.c.h.b16 %v6132
  %v6545 = vunpack.c.l.b16 %v6133
  %v6546 = vunpack.c.h.b16 %v6133
  %v6547 = vunpack.c.l.b16 %v6134
  %v6548 = vunpack.c.h.b16 %v6134
  %v6549 = vunpack.c.l.b16 %v6135
  %v6550 = vunpack.c.l.b16 %v6136
  %v6551 = vunpack.c.h.b16 %v6136
  %v6552 = vunpack.c.l.b16 %v6137
  %v6553 = vunpack.c.h.b16 %v6137
  %v6554 = vunpack.c.l.b16 %v6138
  %v6555 = vunpack.c.h.b16 %v6138
  %v6556 = vunpack.c.l.b16 %v6139
  %v6557 = vunpack.c.h.b16 %v6139
  %v6558 = vunpack.c.l.b16 %v6140
  %v6559 = vunpack.c.l.b16 %v6141
  %v6560 = vunpack.c.h.b16 %v6141
  %v6561 = vunpack.c.l.b16 %v6142
  %v6562 = vunpack.c.h.b16 %v6142
  %v6563 = vunpack.c.l.b16 %v6143
  %v6564 = vunpack.c.h.b16 %v6143
  %v6565 = vunpack.c.l.b16 %v6144
  %v6566 = vunpack.c.h.b16 %v6144
  %v6567 = vunpack.c.l.b16 %v6145
  %v6568 = vunpack.c.l.b16 %v6146
  %v6569 = vunpack.c.h.b16 %v6146
  %v6570 = vunpack.c.l.b16 %v6147
  %v6571 = vunpack.c.h.b16 %v6147
  %v6572 = vunpack.c.l.b16 %v6148
  %v6573 = vunpack.c.h.b16 %v6148
  %v6574 = vunpack.c.l.b16 %v6149
  %v6575 = vunpack.c.h.b16 %v6149
  %v6576 = vunpack.c.l.b16 %v6150
  %v6577 = vunpack.c.l.b16 %v6151
  %v6578 = vunpack.c.h.b16 %v6151
  %v6579 = vunpack.c.l.b16 %v6152
  %v6580 = vunpack.c.h.b16 %v6152
  %v6581 = vunpack.c.l.b16 %v6153
  %v6582 = vunpack.c.h.b16 %v6153
  %v6583 = vunpack.c.l.b16 %v6154
  %v6584 = vunpack.c.h.b16 %v6154
  %v6585 = vunpack.c.l.b16 %v6155
  %v6586 = vunpack.c.l.b16 %v6156
  %v6587 = vunpack.c.h.b16 %v6156
  %v6588 = vunpack.c.l.b16 %v6157
  %v6589 = vunpack.c.h.b16 %v6157
  %v6590 = vunpack.c.l.b16 %v6158
  %v6591 = vunpack.c.h.b16 %v6158
  %v6592 = vunpack.c.l.b16 %v6159
  %v6593 = vunpack.c.h.b16 %v6159
  %v6594 = vunpack.c.l.b16 %v6160
  %v6595 = vunpack.c.l.b16 %v6161
  %v6596 = vunpack.c.h.b16 %v6161
  %v6597 = vunpack.c.l.b16 %v6162
  %v6598 = vunpack.c.h.b16 %v6162
  %v6599 = vunpack.c.l.b16 %v6163
  %v6600 = vunpack.c.h.b16 %v6163
  %v6601 = vunpack.c.l.b16 %v6164
  %v6602 = vunpack.c.h.b16 %v6164
  %v6603 = vunpack.c.l.b16 %v6165
  %v6604 = vunpack.c.l.b16 %v6166
  %v6605 = vunpack.c.h.b16 %v6166
  %v6606 = vunpack.c.l.b16 %v6167
  %v6607 = vunpack.c.h.b16 %v6167
  %v6608 = vunpack.c.l.b16 %v6168
  %v6609 = vunpack.c.h.b16 %v6168
  %v6610 = vunpack.c.l.b16 %v6169
  %v6611 = vunpack.c.h.b16 %v6169
  %v6612 = vunpack.c.l.b16 %v6170
  %v6613 = vunpack.c.l.b16 %v6171
  %v6614 = vunpack.c.h.b16 %v6171
  %v6615 = vunpack.c.l.b16 %v6172
  %v6616 = vunpack.c.h.b16 %v6172
  %v6617 = vunpack.c.l.b16 %v6173
  %v6618 = vunpack.c.h.b16 %v6173
  %v6619 = vunpack.c.l.b16 %v6174
  %v6620 = vunpack.c.h.b16 %v6174
  %v6621 = vunpack.c.l.b16 %v6175
  %v6622 = vunpack.c.l.b16 %v6176
  %v6623 = vunpack.c.h.b16 %v6176
  %v6624 = vunpack.c.l.b16 %v6177
  %v6625 = vunpack.c.h.b16 %v6177
  %v6626 = vunpack.c.l.b16 %v6178
  %v6627 = vunpack.c.h.b16 %v6178
  %v6628 = vunpack.c.l.b16 %v6179
  %v6629 = vunpack.c.h.b16 %v6179
  %v6630 = vunpack.c.l.b16 %v6180
  %v6631 = vunpack.c.l.b16 %v6181
  %v6632 = vunpack.c.h.b16 %v6181
  %v6633 = vunpack.c.l.b16 %v6182
  %v6634 = vunpack.c.h.b16 %v6182
  %v6635 = vunpack.c.l.b16 %v6183
  %v6636 = vunpack.c.h.b16 %v6183
  %v6637 = vunpack.c.l.b16 %v6184
  %v6638 = vunpack.c.h.b16 %v6184
  %v6639 = vunpack.c.l.b16 %v6185
  %v6640 = vunpack.c.l.b16 %v6186
  %v6641 = vunpack.c.h.b16 %v6186
  %v6642 = vunpack.c.l.b16 %v6187
  %v6643 = vunpack.c.h.b16 %v6187
  %v6644 = vunpack.c.l.b16 %v6188
  %v6645 = vunpack.c.h.b16 %v6188
  %v6646 = vunpack.c.l.b16 %v6189
  %v6647 = vunpack.c.h.b16 %v6189
  %v6648 = vunpack.c.l.b16 %v6190
  %v6649 = vunpack.c.l.b16 %v6191
  %v6650 = vunpack.c.h.b16 %v6191
  %v6651 = vunpack.c.l.b16 %v6192
  %v6652 = vunpack.c.h.b16 %v6192
  %v6653 = vunpack.c.l.b16 %v6193
  %v6654 = vunpack.c.h.b16 %v6193
  %v6655 = vunpack.c.l.b16 %v6194
  %v6656 = vunpack.c.h.b16 %v6194
  %v6657 = vunpack.c.l.b16 %v6195
  %v6658 = vunpack.c.l.b16 %v6196
  %v6659 = vunpack.c.h.b16 %v6196
  %v6660 = vunpack.c.l.b16 %v6197
  %v6661 = vunpack.c.h.b16 %v6197
  %v6662 = vunpack.c.l.b16 %v6198
  %v6663 = vunpack.c.h.b16 %v6198
  %v6664 = vunpack.c.l.b16 %v6199
  %v6665 = vunpack.c.h.b16 %v6199
  %v6666 = vunpack.c.l.b16 %v6200
  %v6667 = vunpack.c.l.b16 %v6201
  %v6668 = vunpack.c.h.b16 %v6201
  %v6669 = vunpack.c.l.b16 %v6202
  %v6670 = vunpack.c.h.b16 %v6202
  %v6671 = vunpack.c.l.b16 %v6203
  %v6672 = vunpack.c.h.b16 %v6203
  %v6673 = vunpack.c.l.b16 %v6204
  %v6674 = vunpack.c.h.b16 %v6204
  %v6675 = vunpack.c.l.b16 %v6205
  %v6676 = vpack.c.b16 %v6541, %v6532
  %v6677 = vpack.c.b16 %v6542, %v6533
  %v6678 = vpack.c.b16 %v6543, %v6534
  %v6679 = vpack.c.b16 %v6544, %v6535
  %v6680 = vpack.c.b16 %v6545, %v6536
  %v6681 = vpack.c.b16 %v6546, %v6537
  %v6682 = vpack.c.b16 %v6547, %v6538
  %v6683 = vpack.c.b16 %v6548, %v6539
  %v6684 = vpack.c.b16 %v6549, %v6540
  %v6685 = vpack.c.b16 %v6559, %v6550
  %v6686 = vpack.c.b16 %v6560, %v6551
  %v6687 = vpack.c.b16 %v6561, %v6552
  %v6688 = vpack.c.b16 %v6562, %v6553
  %v6689 = vpack.c.b16 %v6563, %v6554
  %v6690 = vpack.c.b16 %v6564, %v6555
  %v6691 = vpack.c.b16 %v6565, %v6556
  %v6692 = vpack.c.b16 %v6566, %v6557
  %v6693 = vpack.c.b16 %v6567, %v6558
  %v6694 = vpack.c.b16 %v6577, %v6568
  %v6695 = vpack.c.b16 %v6578, %v6569
  %v6696 = vpack.c.b16 %v6579, %v6570
  %v6697 = vpack.c.b16 %v6580, %v6571
  %v6698 = vpack.c.b16 %v6581, %v6572
  %v6699 = vpack.c.b16 %v6582, %v6573
  %v6700 = vpack.c.b16 %v6583, %v6574
  %v6701 = vpack.c.b16 %v6584, %v6575
  %v6702 = vpack.c.b16 %v6585, %v6576
  %v6703 = vpack.c.b16 %v6595, %v6586
  %v6704 = vpack.c.b16 %v6596, %v6587
  %v6705 = vpack.c.b16 %v6597, %v6588
  %v6706 = vpack.c.b16 %v6598, %v6589
  %v6707 = vpack.c.b16 %v6599, %v6590
  %v6708 = vpack.c.b16 %v6600, %v6591
  %v6709 = vpack.c.b16 %v6601, %v6592
  %v6710 = vpack.c.b16 %v6602, %v6593
  %v6711 = vpack.c.b16 %v6603, %v6594
  %v6712 = vpack.c.b16 %v6613, %v6604
  %v6713 = vpack.c.b16 %v6614, %v6605
  %v6714 = vpack.c.b16 %v6615, %v6606
  %v6715 = vpack.c.b16 %v6616, %v6607
  %v6716 = vpack.c.b16 %v6617, %v6608
  %v6717 = vpack.c.b16 %v6618, %v6609
  %v6718 = vpack.c.b16 %v6619, %v6610
  %v6719 = vpack.c.b16 %v6620, %v6611
  %v6720 = vpack.c.b16 %v6621, %v6612
  %v6721 = vpack.c.b16 %v6631, %v6622
  %v6722 = vpack.c.b16 %v6632, %v6623
  %v6723 = vpack.c.b16 %v6633, %v6624
  %v6724 = vpack.c.b16 %v6634, %v6625
  %v6725 = vpack.c.b16 %v6635, %v6626
  %v6726 = vpack.c.b16 %v6636, %v6627
  %v6727 = vpack.c.b16 %v6637, %v6628
  %v6728 = vpack.c.b16 %v6638, %v6629
  %v6729 = vpack.c.b16 %v6639, %v6630
  %v6730 = vpack.c.b16 %v6649, %v6640
  %v6731 = vpack.c.b16 %v6650, %v6641
  %v6732 = vpack.c.b16 %v6651, %v6642
  %v6733 = vpack.c.b16 %v6652, %v6643
  %v6734 = vpack.c.b16 %v6653, %v6644
  %v6735 = vpack.c.b16 %v6654, %v6645
  %v6736 = vpack.c.b16 %v6655, %v6646
  %v6737 = vpack.c.b16 %v6656, %v6647
  %v6738 = vpack.c.b16 %v6657, %v6648
  %v6739 = vpack.c.b16 %v6667, %v6658
  %v6740 = vpack.c.b16 %v6668, %v6659
  %v6741 = vpack.c.b16 %v6669, %v6660
  %v6742 = vpack.c.b16 %v6670, %v6661
  %v6743 = vpack.c.b16 %v6671, %v6662
  %v6744 = vpack.c.b16 %v6672, %v6663
  %v6745 = vpack.c.b16 %v6673, %v6664
  %v6746 = vpack.c.b16 %v6674, %v6665
  %v6747 = vpack.c.b16 %v6675, %v6666
  %v6964 = vunpack.c.l.b16 %v6206
  %v6965 = vunpack.c.l.b16 %v6207
  %v6966 = vunpack.c.l.b16 %v6208
  %v6967 = vunpack.c.l.b16 %v6209
  %v6968 = vunpack.c.l.b16 %v6210
  %v6969 = vunpack.c.l.b16 %v6211
  %v6970 = vunpack.c.l.b16 %v6212
  %v6971 = vunpack.c.l.b16 %v6213
  %v6972 = vunpack.c.l.b16 %v6214
  %v6973 = vunpack.c.l.b16 %v6215
  %v6974 = vunpack.c.l.b16 %v6216
  %v6975 = vunpack.c.l.b16 %v6217
  %v6976 = vunpack.c.l.b16 %v6218
  %v6977 = vunpack.c.l.b16 %v6219
  %v6978 = vunpack.c.l.b16 %v6220
  %v6979 = vunpack.c.l.b16 %v6221
  %v6980 = vunpack.c.l.b16 %v6222
  %v6981 = vunpack.c.l.b16 %v6223
  %v6982 = vunpack.c.l.b16 %v6224
  %v6983 = vunpack.c.l.b16 %v6225
  %v6984 = vunpack.c.l.b16 %v6226
  %v6985 = vunpack.c.l.b16 %v6227
  %v6986 = vunpack.c.l.b16 %v6228
  %v6987 = vunpack.c.l.b16 %v6229
  %v6988 = vunpack.c.l.b16 %v6230
  %v6989 = vunpack.c.l.b16 %v6231
  %v6990 = vunpack.c.l.b16 %v6232
  %v6991 = vunpack.c.l.b16 %v6233
  %v6992 = vunpack.c.l.b16 %v6234
  %v6993 = vunpack.c.l.b16 %v6235
  %v6994 = vunpack.c.l.b16 %v6236
  %v6995 = vunpack.c.l.b16 %v6237
  %v6996 = vunpack.c.l.b16 %v6238
  %v6997 = vunpack.c.l.b16 %v6239
  %v6998 = vunpack.c.l.b16 %v6240
  %v6999 = vunpack.c.l.b16 %v6241
  %v7000 = vunpack.c.l.b16 %v6242
  %v7001 = vunpack.c.l.b16 %v6243
  %v7002 = vunpack.c.l.b16 %v6244
  %v7003 = vunpack.c.l.b16 %v6245
  %v7004 = vunpack.c.l.b16 %v6246
  %v7005 = vunpack.c.l.b16 %v6247
  %v7006 = vunpack.c.l.b16 %v6248
  %v7007 = vunpack.c.l.b16 %v6249
  %v7008 = vunpack.c.l.b16 %v6250
  %v7009 = vunpack.c.l.b16 %v6251
  %v7010 = vunpack.c.l.b16 %v6252
  %v7011 = vunpack.c.l.b16 %v6253
  %v7012 = vunpack.c.l.b16 %v6254
  %v7013 = vunpack.c.l.b16 %v6255
  %v7014 = vunpack.c.l.b16 %v6256
  %v7015 = vunpack.c.l.b16 %v6257
  %v7016 = vunpack.c.l.b16 %v6258
  %v7017 = vunpack.c.l.b16 %v6259
  %v7018 = vunpack.c.l.b16 %v6260
  %v7019 = vunpack.c.l.b16 %v6261
  %v7020 = vunpack.c.l.b16 %v6262
  %v7021 = vunpack.c.l.b16 %v6263
  %v7022 = vunpack.c.l.b16 %v6264
  %v7023 = vunpack.c.l.b16 %v6265
  %v7024 = vunpack.c.l.b16 %v6266
  %v7025 = vunpack.c.l.b16 %v6267
  %v7026 = vunpack.c.l.b16 %v6268
  %v7027 = vunpack.c.l.b16 %v6269
  %v7028 = vunpack.c.l.b16 %v6270
  %v7029 = vunpack.c.l.b16 %v6271
  %v7030 = vunpack.c.l.b16 %v6272
  %v7031 = vunpack.c.l.b16 %v6273
  %v7032 = vunpack.c.l.b16 %v6274
  %v7033 = vunpack.c.l.b16 %v6275
  %v7034 = vunpack.c.l.b16 %v6276
  %v7035 = vunpack.c.l.b16 %v6277
  %v7036 = vunpack.c.l.b16 %v6278
  %v7037 = vunpack.c.l.b16 %v6279
  %v7038 = vunpack.c.l.b16 %v6280
  %v7039 = vunpack.c.l.b16 %v6281
  %v7040 = vunpack.c.l.b16 %v6282
  %v7041 = vunpack.c.l.b16 %v6283
  %v7042 = vunpack.c.l.b16 %v6284
  %v7043 = vunpack.c.l.b16 %v6285
  %v7044 = vunpack.c.l.b16 %v6286
  %v7045 = vunpack.c.l.b16 %v6287
  %v7046 = vunpack.c.l.b16 %v6288
  %v7047 = vunpack.c.l.b16 %v6289
  %v7048 = vunpack.c.l.b16 %v6290
  %v7049 = vunpack.c.l.b16 %v6291
  %v7050 = vunpack.c.l.b16 %v6292
  %v7051 = vunpack.c.l.b16 %v6293
  %v7052 = vunpack.c.l.b16 %v6294
  %v7053 = vunpack.c.l.b16 %v6295
  %v7054 = vunpack.c.l.b16 %v6296
  %v7055 = vunpack.c.l.b16 %v6297
  %v7056 = vunpack.c.l.b16 %v6298
  %v7057 = vunpack.c.l.b16 %v6299
  %v7058 = vunpack.c.l.b16 %v6300
  %v7059 = vunpack.c.l.b16 %v6301
  %v7060 = vunpack.c.l.b16 %v6302
  %v7061 = vunpack.c.l.b16 %v6303
  %v7062 = vunpack.c.l.b16 %v6304
  %v7063 = vunpack.c.l.b16 %v6305
  %v7064 = vunpack.c.l.b16 %v6306
  %v7065 = vunpack.c.l.b16 %v6307
  %v7066 = vunpack.c.l.b16 %v6308
  %v7067 = vunpack.c.l.b16 %v6309
  %v7068 = vunpack.c.l.b16 %v6310
  %v7069 = vunpack.c.l.b16 %v6311
  %v7070 = vunpack.c.l.b16 %v6312
  %v7071 = vunpack.c.l.b16 %v6313
  %v7072 = vunpack.c.l.b16 %v6314
  %v7073 = vunpack.c.l.b16 %v6315
  %v7074 = vunpack.c.l.b16 %v6316
  %v7075 = vunpack.c.l.b16 %v6317
  %v7076 = vunpack.c.l.b16 %v6318
  %v7077 = vunpack.c.l.b16 %v6319
  %v7078 = vunpack.c.l.b16 %v6320
  %v7079 = vunpack.c.l.b16 %v6321
  %v7080 = vunpack.c.l.b16 %v6322
  %v7081 = vunpack.c.l.b16 %v6323
  %v7082 = vunpack.c.l.b16 %v6324
  %v7083 = vunpack.c.l.b16 %v6325
  %v7084 = vunpack.c.l.b16 %v6326
  %v7085 = vunpack.c.l.b16 %v6327
  %v7086 = vunpack.c.l.b16 %v6328
  %v7087 = vunpack.c.l.b16 %v6329
  %v7088 = vunpack.c.l.b16 %v6330
  %v7089 = vunpack.c.l.b16 %v6331
  %v7090 = vunpack.c.l.b16 %v6332
  %v7091 = vunpack.c.l.b16 %v6333
  %v7092 = vunpack.c.l.b16 %v6334
  %v7093 = vunpack.c.l.b16 %v6335
  %v7094 = vunpack.c.l.b16 %v6336
  %v7095 = vunpack.c.l.b16 %v6337
  %v7096 = vunpack.c.l.b16 %v6338
  %v7097 = vunpack.c.l.b16 %v6339
  %v7098 = vunpack.c.l.b16 %v6340
  %v7099 = vunpack.c.l.b16 %v6341
  %v7100 = vunpack.c.l.b16 %v6342
  %v7101 = vunpack.c.l.b16 %v6343
  %v7102 = vunpack.c.l.b16 %v6344
  %v7103 = vunpack.c.l.b16 %v6345
  %v7104 = vunpack.c.l.b16 %v6346
  %v7105 = vunpack.c.l.b16 %v6347
  %v7106 = vunpack.c.l.b16 %v6348
  %v7107 = vunpack.c.l.b16 %v6349
  %v7108 = vpack.c.b16 %v6965, %v6964
  %v7109 = vpack.c.b16 %v6967, %v6966
  %v7110 = vpack.c.b16 %v6969, %v6968
  %v7111 = vpack.c.b16 %v6971, %v6970
  %v7112 = vpack.c.b16 %v6973, %v6972
  %v7113 = vpack.c.b16 %v6975, %v6974
  %v7114 = vpack.c.b16 %v6977, %v6976
  %v7115 = vpack.c.b16 %v6979, %v6978
  %v7116 = vpack.c.b16 %v6981, %v6980
  %v7117 = vpack.c.b16 %v6983, %v6982
  %v7118 = vpack.c.b16 %v6985, %v6984
  %v7119 = vpack.c.b16 %v6987, %v6986
  %v7120 = vpack.c.b16 %v6989, %v6988
  %v7121 = vpack.c.b16 %v6991, %v6990
  %v7122 = vpack.c.b16 %v6993, %v6992
  %v7123 = vpack.c.b16 %v6995, %v6994
  %v7124 = vpack.c.b16 %v6997, %v6996
  %v7125 = vpack.c.b16 %v6999, %v6998
  %v7126 = vpack.c.b16 %v7001, %v7000
  %v7127 = vpack.c.b16 %v7003, %v7002
  %v7128 = vpack.c.b16 %v7005, %v7004
  %v7129 = vpack.c.b16 %v7007, %v7006
  %v7130 = vpack.c.b16 %v7009, %v7008
  %v7131 = vpack.c.b16 %v7011, %v7010
  %v7132 = vpack.c.b16 %v7013, %v7012
  %v7133 = vpack.c.b16 %v7015, %v7014
  %v7134 = vpack.c.b16 %v7017, %v7016
  %v7135 = vpack.c.b16 %v7019, %v7018
  %v7136 = vpack.c.b16 %v7021, %v7020
  %v7137 = vpack.c.b16 %v7023, %v7022
  %v7138 = vpack.c.b16 %v7025, %v7024
  %v7139 = vpack.c.b16 %v7027, %v7026
  %v7140 = vpack.c.b16 %v7029, %v7028
  %v7141 = vpack.c.b16 %v7031, %v7030
  %v7142 = vpack.c.b16 %v7033, %v7032
  %v7143 = vpack.c.b16 %v7035, %v7034
  %v7144 = vpack.c.b16 %v7037, %v7036
  %v7145 = vpack.c.b16 %v7039, %v7038
  %v7146 = vpack.c.b16 %v7041, %v7040
  %v7147 = vpack.c.b16 %v7043, %v7042
  %v7148 = vpack.c.b16 %v7045, %v7044
  %v7149 = vpack.c.b16 %v7047, %v7046
  %v7150 = vpack.c.b16 %v7049, %v7048
  %v7151 = vpack.c.b16 %v7051, %v7050
  %v7152 = vpack.c.b16 %v7053, %v7052
  %v7153 = vpack.c.b16 %v7055, %v7054
  %v7154 = vpack.c.b16 %v7057, %v7056
  %v7155 = vpack.c.b16 %v7059, %v7058
  %v7156 = vpack.c.b16 %v7061, %v7060
  %v7157 = vpack.c.b16 %v7063, %v7062
  %v7158 = vpack.c.b16 %v7065, %v7064
  %v7159 = vpack.c.b16 %v7067, %v7066
  %v7160 = vpack.c.b16 %v7069, %v7068
  %v7161 = vpack.c.b16 %v7071, %v7070
  %v7162 = vpack.c.b16 %v7073, %v7072
  %v7163 = vpack.c.b16 %v7075, %v7074
  %v7164 = vpack.c.b16 %v7077, %v7076
  %v7165 = vpack.c.b16 %v7079, %v7078
  %v7166 = vpack.c.b16 %v7081, %v7080
  %v7167 = vpack.c.b16 %v7083, %v7082
  %v7168 = vpack.c.b16 %v7085, %v7084
  %v7169 = vpack.c.b16 %v7087, %v7086
  %v7170 = vpack.c.b16 %v7089, %v7088
  %v7171 = vpack.c.b16 %v7091, %v7090
  %v7172 = vpack.c.b16 %v7093, %v7092
  %v7173 = vpack.c.b16 %v7095, %v7094
  %v7174 = vpack.c.b16 %v7097, %v7096
  %v7175 = vpack.c.b16 %v7099, %v7098
  %v7176 = vpack.c.b16 %v7101, %v7100
  %v7177 = vpack.c.b16 %v7103, %v7102
  %v7178 = vpack.c.b16 %v7105, %v7104
  %v7179 = vpack.c.b16 %v7107, %v7106
  %7252 = vmatpush.bf16.msra.mxu0 %v7115
  %7253 = vmatpush.bf16.msra.mxu0 %v7114
  %7254 = vmatpush.bf16.msra.mxu0 %v7113
  %7255 = vmatpush.bf16.msra.mxu0 %v7112
  %7256 = vmatpush.bf16.msra.mxu0 %v7111
  %7257 = vmatpush.bf16.msra.mxu0 %v7110
  %7258 = vmatpush.bf16.msra.mxu0 %v7109
  %7259 = vmatpush.bf16.msra.mxu0 %v7108
  %7260 = vmatmul.bf16.gmra.mxu0 %v6676
  %v7261 = vpop.f32.mrf.mxu0
  %v7262 = vadd.f32 %v6413, %v7261
  %v7263 = vpop.f32.mrf.mxu0
  %v7264 = vadd.f32 %v6415, %v7263
  %7265 = vmatmul.bf16.gmra.mxu0 %v6685
  %v7266 = vpop.f32.mrf.mxu0
  %v7267 = vadd.f32 %v6418, %v7266
  %v7268 = vpop.f32.mrf.mxu0
  %v7269 = vadd.f32 %v6420, %v7268
  %7270 = vmatmul.bf16.gmra.mxu0 %v6694
  %v7271 = vpop.f32.mrf.mxu0
  %v7272 = vadd.f32 %v6423, %v7271
  %v7273 = vpop.f32.mrf.mxu0
  %v7274 = vadd.f32 %v6425, %v7273
  %7275 = vmatmul.bf16.gmra.mxu0 %v6703
  %v7276 = vpop.f32.mrf.mxu0
  %v7277 = vadd.f32 %v6428, %v7276
  %v7278 = vpop.f32.mrf.mxu0
  %v7279 = vadd.f32 %v6430, %v7278
  %7280 = vmatmul.bf16.gmra.mxu0 %v6712
  %v7281 = vpop.f32.mrf.mxu0
  %v7282 = vadd.f32 %v6433, %v7281
  %v7283 = vpop.f32.mrf.mxu0
  %v7284 = vadd.f32 %v6435, %v7283
  %7285 = vmatmul.bf16.gmra.mxu0 %v6721
  %v7286 = vpop.f32.mrf.mxu0
  %v7287 = vadd.f32 %v6438, %v7286
  %v7288 = vpop.f32.mrf.mxu0
  %v7289 = vadd.f32 %v6440, %v7288
  %7290 = vmatmul.bf16.gmra.mxu0 %v6730
  %v7291 = vpop.f32.mrf.mxu0
  %v7292 = vadd.f32 %v6443, %v7291
  %v7293 = vpop.f32.mrf.mxu0
  %v7294 = vadd.f32 %v6445, %v7293
  %7295 = vmatmul.bf16.gmra.mxu0 %v6739
  %v7296 = vpop.f32.mrf.mxu0
  %v7297 = vadd.f32 %v6448, %v7296
  %v7298 = vpop.f32.mrf.mxu0
  %v7299 = vadd.f32 %v6450, %v7298
  %7300 = vdwg.mxu0
  %7301 = vmatpush.bf16.msra.mxu0 %v7123
  %7302 = vmatpush.bf16.msra.mxu0 %v7122
  %7303 = vmatpush.bf16.msra.mxu0 %v7121
  %7304 = vmatpush.bf16.msra.mxu0 %v7120
  %7305 = vmatpush.bf16.msra.mxu0 %v7119
  %7306 = vmatpush.bf16.msra.mxu0 %v7118
  %7307 = vmatpush.bf16.msra.mxu0 %v7117
  %7308 = vmatpush.bf16.msra.mxu0 %v7116
  %7309 = vmatmul.bf16.gmra.mxu0 %v6677
  %v7310 = vpop.f32.mrf.mxu0
  %v7311 = vadd.f32 %v7262, %v7310
  %v7312 = vpop.f32.mrf.mxu0
  %v7313 = vadd.f32 %v7264, %v7312
  %7314 = vmatmul.bf16.gmra.mxu0 %v6686
  %v7315 = vpop.f32.mrf.mxu0
  %v7316 = vadd.f32 %v7267, %v7315
  %v7317 = vpop.f32.mrf.mxu0
  %v7318 = vadd.f32 %v7269, %v7317
  %7319 = vmatmul.bf16.gmra.mxu0 %v6695
  %v7320 = vpop.f32.mrf.mxu0
  %v7321 = vadd.f32 %v7272, %v7320
  %v7322 = vpop.f32.mrf.mxu0
  %v7323 = vadd.f32 %v7274, %v7322
  %7324 = vmatmul.bf16.gmra.mxu0 %v6704
  %v7325 = vpop.f32.mrf.mxu0
  %v7326 = vadd.f32 %v7277, %v7325
  %v7327 = vpop.f32.mrf.mxu0
  %v7328 = vadd.f32 %v7279, %v7327
  %7329 = vmatmul.bf16.gmra.mxu0 %v6713
  %v7330 = vpop.f32.mrf.mxu0
  %v7331 = vadd.f32 %v7282, %v7330
  %v7332 = vpop.f32.mrf.mxu0
  %v7333 = vadd.f32 %v7284, %v7332
  %7334 = vmatmul.bf16.gmra.mxu0 %v6722
  %v7335 = vpop.f32.mrf.mxu0
  %v7336 = vadd.f32 %v7287, %v7335
  %v7337 = vpop.f32.mrf.mxu0
  %v7338 = vadd.f32 %v7289, %v7337
  %7339 = vmatmul.bf16.gmra.mxu0 %v6731
  %v7340 = vpop.f32.mrf.mxu0
  %v7341 = vadd.f32 %v7292, %v7340
  %v7342 = vpop.f32.mrf.mxu0
  %v7343 = vadd.f32 %v7294, %v7342
  %7344 = vmatmul.bf16.gmra.mxu0 %v6740
  %v7345 = vpop.f32.mrf.mxu0
  %v7346 = vadd.f32 %v7297, %v7345
  %v7347 = vpop.f32.mrf.mxu0
  %v7348 = vadd.f32 %v7299, %v7347
  %7349 = vdwg.mxu0
  %7350 = vmatpush.bf16.msra.mxu0 %v7131
  %7351 = vmatpush.bf16.msra.mxu0 %v7130
  %7352 = vmatpush.bf16.msra.mxu0 %v7129
  %7353 = vmatpush.bf16.msra.mxu0 %v7128
  %7354 = vmatpush.bf16.msra.mxu0 %v7127
  %7355 = vmatpush.bf16.msra.mxu0 %v7126
  %7356 = vmatpush.bf16.msra.mxu0 %v7125
  %7357 = vmatpush.bf16.msra.mxu0 %v7124
  %7358 = vmatmul.bf16.gmra.mxu0 %v6678
  %v7359 = vpop.f32.mrf.mxu0
  %v7360 = vadd.f32 %v7311, %v7359
  %v7361 = vpop.f32.mrf.mxu0
  %v7362 = vadd.f32 %v7313, %v7361
  %7363 = vmatmul.bf16.gmra.mxu0 %v6687
  %v7364 = vpop.f32.mrf.mxu0
  %v7365 = vadd.f32 %v7316, %v7364
  %v7366 = vpop.f32.mrf.mxu0
  %v7367 = vadd.f32 %v7318, %v7366
  %7368 = vmatmul.bf16.gmra.mxu0 %v6696
  %v7369 = vpop.f32.mrf.mxu0
  %v7370 = vadd.f32 %v7321, %v7369
  %v7371 = vpop.f32.mrf.mxu0
  %v7372 = vadd.f32 %v7323, %v7371
  %7373 = vmatmul.bf16.gmra.mxu0 %v6705
  %v7374 = vpop.f32.mrf.mxu0
  %v7375 = vadd.f32 %v7326, %v7374
  %v7376 = vpop.f32.mrf.mxu0
  %v7377 = vadd.f32 %v7328, %v7376
  %7378 = vmatmul.bf16.gmra.mxu0 %v6714
  %v7379 = vpop.f32.mrf.mxu0
  %v7380 = vadd.f32 %v7331, %v7379
  %v7381 = vpop.f32.mrf.mxu0
  %v7382 = vadd.f32 %v7333, %v7381
  %7383 = vmatmul.bf16.gmra.mxu0 %v6723
  %v7384 = vpop.f32.mrf.mxu0
  %v7385 = vadd.f32 %v7336, %v7384
  %v7386 = vpop.f32.mrf.mxu0
  %v7387 = vadd.f32 %v7338, %v7386
  %7388 = vmatmul.bf16.gmra.mxu0 %v6732
  %v7389 = vpop.f32.mrf.mxu0
  %v7390 = vadd.f32 %v7341, %v7389
  %v7391 = vpop.f32.mrf.mxu0
  %v7392 = vadd.f32 %v7343, %v7391
  %7393 = vmatmul.bf16.gmra.mxu0 %v6741
  %v7394 = vpop.f32.mrf.mxu0
  %v7395 = vadd.f32 %v7346, %v7394
  %v7396 = vpop.f32.mrf.mxu0
  %v7397 = vadd.f32 %v7348, %v7396
  %7398 = vdwg.mxu0
  %7399 = vmatpush.bf16.msra.mxu0 %v7139
  %7400 = vmatpush.bf16.msra.mxu0 %v7138
  %7401 = vmatpush.bf16.msra.mxu0 %v7137
  %7402 = vmatpush.bf16.msra.mxu0 %v7136
  %7403 = vmatpush.bf16.msra.mxu0 %v7135
  %7404 = vmatpush.bf16.msra.mxu0 %v7134
  %7405 = vmatpush.bf16.msra.mxu0 %v7133
  %7406 = vmatpush.bf16.msra.mxu0 %v7132
  %7407 = vmatmul.bf16.gmra.mxu0 %v6679
  %v7408 = vpop.f32.mrf.mxu0
  %v7409 = vadd.f32 %v7360, %v7408
  %v7410 = vpop.f32.mrf.mxu0
  %v7411 = vadd.f32 %v7362, %v7410
  %7412 = vmatmul.bf16.gmra.mxu0 %v6688
  %v7413 = vpop.f32.mrf.mxu0
  %v7414 = vadd.f32 %v7365, %v7413
  %v7415 = vpop.f32.mrf.mxu0
  %v7416 = vadd.f32 %v7367, %v7415
  %7417 = vmatmul.bf16.gmra.mxu0 %v6697
  %v7418 = vpop.f32.mrf.mxu0
  %v7419 = vadd.f32 %v7370, %v7418
  %v7420 = vpop.f32.mrf.mxu0
  %v7421 = vadd.f32 %v7372, %v7420
  %7422 = vmatmul.bf16.gmra.mxu0 %v6706
  %v7423 = vpop.f32.mrf.mxu0
  %v7424 = vadd.f32 %v7375, %v7423
  %v7425 = vpop.f32.mrf.mxu0
  %v7426 = vadd.f32 %v7377, %v7425
  %7427 = vmatmul.bf16.gmra.mxu0 %v6715
  %v7428 = vpop.f32.mrf.mxu0
  %v7429 = vadd.f32 %v7380, %v7428
  %v7430 = vpop.f32.mrf.mxu0
  %v7431 = vadd.f32 %v7382, %v7430
  %7432 = vmatmul.bf16.gmra.mxu0 %v6724
  %v7433 = vpop.f32.mrf.mxu0
  %v7434 = vadd.f32 %v7385, %v7433
  %v7435 = vpop.f32.mrf.mxu0
  %v7436 = vadd.f32 %v7387, %v7435
  %7437 = vmatmul.bf16.gmra.mxu0 %v6733
  %v7438 = vpop.f32.mrf.mxu0
  %v7439 = vadd.f32 %v7390, %v7438
  %v7440 = vpop.f32.mrf.mxu0
  %v7441 = vadd.f32 %v7392, %v7440
  %7442 = vmatmul.bf16.gmra.mxu0 %v6742
  %v7443 = vpop.f32.mrf.mxu0
  %v7444 = vadd.f32 %v7395, %v7443
  %v7445 = vpop.f32.mrf.mxu0
  %v7446 = vadd.f32 %v7397, %v7445
  %7447 = vdwg.mxu0
  %7448 = vmatpush.bf16.msra.mxu0 %v7147
  %7449 = vmatpush.bf16.msra.mxu0 %v7146
  %7450 = vmatpush.bf16.msra.mxu0 %v7145
  %7451 = vmatpush.bf16.msra.mxu0 %v7144
  %7452 = vmatpush.bf16.msra.mxu0 %v7143
  %7453 = vmatpush.bf16.msra.mxu0 %v7142
  %7454 = vmatpush.bf16.msra.mxu0 %v7141
  %7455 = vmatpush.bf16.msra.mxu0 %v7140
  %7456 = vmatmul.bf16.gmra.mxu0 %v6680
  %v7457 = vpop.f32.mrf.mxu0
  %v7458 = vadd.f32 %v7409, %v7457
  %v7459 = vpop.f32.mrf.mxu0
  %v7460 = vadd.f32 %v7411, %v7459
  %7461 = vmatmul.bf16.gmra.mxu0 %v6689
  %v7462 = vpop.f32.mrf.mxu0
  %v7463 = vadd.f32 %v7414, %v7462
  %v7464 = vpop.f32.mrf.mxu0
  %v7465 = vadd.f32 %v7416, %v7464
  %7466 = vmatmul.bf16.gmra.mxu0 %v6698
  %v7467 = vpop.f32.mrf.mxu0
  %v7468 = vadd.f32 %v7419, %v7467
  %v7469 = vpop.f32.mrf.mxu0
  %v7470 = vadd.f32 %v7421, %v7469
  %7471 = vmatmul.bf16.gmra.mxu0 %v6707
  %v7472 = vpop.f32.mrf.mxu0
  %v7473 = vadd.f32 %v7424, %v7472
  %v7474 = vpop.f32.mrf.mxu0
  %v7475 = vadd.f32 %v7426, %v7474
  %7476 = vmatmul.bf16.gmra.mxu0 %v6716
  %v7477 = vpop.f32.mrf.mxu0
  %v7478 = vadd.f32 %v7429, %v7477
  %v7479 = vpop.f32.mrf.mxu0
  %v7480 = vadd.f32 %v7431, %v7479
  %7481 = vmatmul.bf16.gmra.mxu0 %v6725
  %v7482 = vpop.f32.mrf.mxu0
  %v7483 = vadd.f32 %v7434, %v7482
  %v7484 = vpop.f32.mrf.mxu0
  %v7485 = vadd.f32 %v7436, %v7484
  %7486 = vmatmul.bf16.gmra.mxu0 %v6734
  %v7487 = vpop.f32.mrf.mxu0
  %v7488 = vadd.f32 %v7439, %v7487
  %v7489 = vpop.f32.mrf.mxu0
  %v7490 = vadd.f32 %v7441, %v7489
  %7491 = vmatmul.bf16.gmra.mxu0 %v6743
  %v7492 = vpop.f32.mrf.mxu0
  %v7493 = vadd.f32 %v7444, %v7492
  %v7494 = vpop.f32.mrf.mxu0
  %v7495 = vadd.f32 %v7446, %v7494
  %7496 = vdwg.mxu0
  %7497 = vmatpush.bf16.msra.mxu0 %v7155
  %7498 = vmatpush.bf16.msra.mxu0 %v7154
  %7499 = vmatpush.bf16.msra.mxu0 %v7153
  %7500 = vmatpush.bf16.msra.mxu0 %v7152
  %7501 = vmatpush.bf16.msra.mxu0 %v7151
  %7502 = vmatpush.bf16.msra.mxu0 %v7150
  %7503 = vmatpush.bf16.msra.mxu0 %v7149
  %7504 = vmatpush.bf16.msra.mxu0 %v7148
  %7505 = vmatmul.bf16.gmra.mxu0 %v6681
  %v7506 = vpop.f32.mrf.mxu0
  %v7507 = vadd.f32 %v7458, %v7506
  %v7508 = vpop.f32.mrf.mxu0
  %v7509 = vadd.f32 %v7460, %v7508
  %7510 = vmatmul.bf16.gmra.mxu0 %v6690
  %v7511 = vpop.f32.mrf.mxu0
  %v7512 = vadd.f32 %v7463, %v7511
  %v7513 = vpop.f32.mrf.mxu0
  %v7514 = vadd.f32 %v7465, %v7513
  %7515 = vmatmul.bf16.gmra.mxu0 %v6699
  %v7516 = vpop.f32.mrf.mxu0
  %v7517 = vadd.f32 %v7468, %v7516
  %v7518 = vpop.f32.mrf.mxu0
  %v7519 = vadd.f32 %v7470, %v7518
  %7520 = vmatmul.bf16.gmra.mxu0 %v6708
  %v7521 = vpop.f32.mrf.mxu0
  %v7522 = vadd.f32 %v7473, %v7521
  %v7523 = vpop.f32.mrf.mxu0
  %v7524 = vadd.f32 %v7475, %v7523
  %7525 = vmatmul.bf16.gmra.mxu0 %v6717
  %v7526 = vpop.f32.mrf.mxu0
  %v7527 = vadd.f32 %v7478, %v7526
  %v7528 = vpop.f32.mrf.mxu0
  %v7529 = vadd.f32 %v7480, %v7528
  %7530 = vmatmul.bf16.gmra.mxu0 %v6726
  %v7531 = vpop.f32.mrf.mxu0
  %v7532 = vadd.f32 %v7483, %v7531
  %v7533 = vpop.f32.mrf.mxu0
  %v7534 = vadd.f32 %v7485, %v7533
  %7535 = vmatmul.bf16.gmra.mxu0 %v6735
  %v7536 = vpop.f32.mrf.mxu0
  %v7537 = vadd.f32 %v7488, %v7536
  %v7538 = vpop.f32.mrf.mxu0
  %v7539 = vadd.f32 %v7490, %v7538
  %7540 = vmatmul.bf16.gmra.mxu0 %v6744
  %v7541 = vpop.f32.mrf.mxu0
  %v7542 = vadd.f32 %v7493, %v7541
  %v7543 = vpop.f32.mrf.mxu0
  %v7544 = vadd.f32 %v7495, %v7543
  %7545 = vdwg.mxu0
  %7546 = vmatpush.bf16.msra.mxu0 %v7163
  %7547 = vmatpush.bf16.msra.mxu0 %v7162
  %7548 = vmatpush.bf16.msra.mxu0 %v7161
  %7549 = vmatpush.bf16.msra.mxu0 %v7160
  %7550 = vmatpush.bf16.msra.mxu0 %v7159
  %7551 = vmatpush.bf16.msra.mxu0 %v7158
  %7552 = vmatpush.bf16.msra.mxu0 %v7157
  %7553 = vmatpush.bf16.msra.mxu0 %v7156
  %7554 = vmatmul.bf16.gmra.mxu0 %v6682
  %v7555 = vpop.f32.mrf.mxu0
  %v7556 = vadd.f32 %v7507, %v7555
  %v7557 = vpop.f32.mrf.mxu0
  %v7558 = vadd.f32 %v7509, %v7557
  %7559 = vmatmul.bf16.gmra.mxu0 %v6691
  %v7560 = vpop.f32.mrf.mxu0
  %v7561 = vadd.f32 %v7512, %v7560
  %v7562 = vpop.f32.mrf.mxu0
  %v7563 = vadd.f32 %v7514, %v7562
  %7564 = vmatmul.bf16.gmra.mxu0 %v6700
  %v7565 = vpop.f32.mrf.mxu0
  %v7566 = vadd.f32 %v7517, %v7565
  %v7567 = vpop.f32.mrf.mxu0
  %v7568 = vadd.f32 %v7519, %v7567
  %7569 = vmatmul.bf16.gmra.mxu0 %v6709
  %v7570 = vpop.f32.mrf.mxu0
  %v7571 = vadd.f32 %v7522, %v7570
  %v7572 = vpop.f32.mrf.mxu0
  %v7573 = vadd.f32 %v7524, %v7572
  %7574 = vmatmul.bf16.gmra.mxu0 %v6718
  %v7575 = vpop.f32.mrf.mxu0
  %v7576 = vadd.f32 %v7527, %v7575
  %v7577 = vpop.f32.mrf.mxu0
  %v7578 = vadd.f32 %v7529, %v7577
  %7579 = vmatmul.bf16.gmra.mxu0 %v6727
  %v7580 = vpop.f32.mrf.mxu0
  %v7581 = vadd.f32 %v7532, %v7580
  %v7582 = vpop.f32.mrf.mxu0
  %v7583 = vadd.f32 %v7534, %v7582
  %7584 = vmatmul.bf16.gmra.mxu0 %v6736
  %v7585 = vpop.f32.mrf.mxu0
  %v7586 = vadd.f32 %v7537, %v7585
  %v7587 = vpop.f32.mrf.mxu0
  %v7588 = vadd.f32 %v7539, %v7587
  %7589 = vmatmul.bf16.gmra.mxu0 %v6745
  %v7590 = vpop.f32.mrf.mxu0
  %v7591 = vadd.f32 %v7542, %v7590
  %v7592 = vpop.f32.mrf.mxu0
  %v7593 = vadd.f32 %v7544, %v7592
  %7594 = vdwg.mxu0
  %7595 = vmatpush.bf16.msra.mxu0 %v7171
  %7596 = vmatpush.bf16.msra.mxu0 %v7170
  %7597 = vmatpush.bf16.msra.mxu0 %v7169
  %7598 = vmatpush.bf16.msra.mxu0 %v7168
  %7599 = vmatpush.bf16.msra.mxu0 %v7167
  %7600 = vmatpush.bf16.msra.mxu0 %v7166
  %7601 = vmatpush.bf16.msra.mxu0 %v7165
  %7602 = vmatpush.bf16.msra.mxu0 %v7164
  %7603 = vmatmul.bf16.gmra.mxu0 %v6683
  %v7604 = vpop.f32.mrf.mxu0
  %v7605 = vadd.f32 %v7556, %v7604
  %v7606 = vpop.f32.mrf.mxu0
  %v7607 = vadd.f32 %v7558, %v7606
  %7608 = vmatmul.bf16.gmra.mxu0 %v6692
  %v7609 = vpop.f32.mrf.mxu0
  %v7610 = vadd.f32 %v7561, %v7609
  %v7611 = vpop.f32.mrf.mxu0
  %v7612 = vadd.f32 %v7563, %v7611
  %7613 = vmatmul.bf16.gmra.mxu0 %v6701
  %v7614 = vpop.f32.mrf.mxu0
  %v7615 = vadd.f32 %v7566, %v7614
  %v7616 = vpop.f32.mrf.mxu0
  %v7617 = vadd.f32 %v7568, %v7616
  %7618 = vmatmul.bf16.gmra.mxu0 %v6710
  %v7619 = vpop.f32.mrf.mxu0
  %v7620 = vadd.f32 %v7571, %v7619
  %v7621 = vpop.f32.mrf.mxu0
  %v7622 = vadd.f32 %v7573, %v7621
  %7623 = vmatmul.bf16.gmra.mxu0 %v6719
  %v7624 = vpop.f32.mrf.mxu0
  %v7625 = vadd.f32 %v7576, %v7624
  %v7626 = vpop.f32.mrf.mxu0
  %v7627 = vadd.f32 %v7578, %v7626
  %7628 = vmatmul.bf16.gmra.mxu0 %v6728
  %v7629 = vpop.f32.mrf.mxu0
  %v7630 = vadd.f32 %v7581, %v7629
  %v7631 = vpop.f32.mrf.mxu0
  %v7632 = vadd.f32 %v7583, %v7631
  %7633 = vmatmul.bf16.gmra.mxu0 %v6737
  %v7634 = vpop.f32.mrf.mxu0
  %v7635 = vadd.f32 %v7586, %v7634
  %v7636 = vpop.f32.mrf.mxu0
  %v7637 = vadd.f32 %v7588, %v7636
  %7638 = vmatmul.bf16.gmra.mxu0 %v6746
  %v7639 = vpop.f32.mrf.mxu0
  %v7640 = vadd.f32 %v7591, %v7639
  %v7641 = vpop.f32.mrf.mxu0
  %v7642 = vadd.f32 %v7593, %v7641
  %7643 = vdwg.mxu0
  %7644 = vmatpush.bf16.msra.mxu0 %v7179
  %7645 = vmatpush.bf16.msra.mxu0 %v7178
  %7646 = vmatpush.bf16.msra.mxu0 %v7177
  %7647 = vmatpush.bf16.msra.mxu0 %v7176
  %7648 = vmatpush.bf16.msra.mxu0 %v7175
  %7649 = vmatpush.bf16.msra.mxu0 %v7174
  %7650 = vmatpush.bf16.msra.mxu0 %v7173
  %7651 = vmatpush.bf16.msra.mxu0 %v7172
  %7652 = vmatmul.bf16.gmra.mxu0 %v6684
  %v7653 = vpop.f32.mrf.mxu0
  %v7654 = vadd.f32 %v7605, %v7653
  %v7655 = vpop.f32.mrf.mxu0
  %v7656 = vadd.f32 %v7607, %v7655
  %7657 = vmatmul.bf16.gmra.mxu0 %v6693
  %v7658 = vpop.f32.mrf.mxu0
  %v7659 = vadd.f32 %v7610, %v7658
  %v7660 = vpop.f32.mrf.mxu0
  %v7661 = vadd.f32 %v7612, %v7660
  %7662 = vmatmul.bf16.gmra.mxu0 %v6702
  %v7663 = vpop.f32.mrf.mxu0
  %v7664 = vadd.f32 %v7615, %v7663
  %v7665 = vpop.f32.mrf.mxu0
  %v7666 = vadd.f32 %v7617, %v7665
  %7667 = vmatmul.bf16.gmra.mxu0 %v6711
  %v7668 = vpop.f32.mrf.mxu0
  %v7669 = vadd.f32 %v7620, %v7668
  %v7670 = vpop.f32.mrf.mxu0
  %v7671 = vadd.f32 %v7622, %v7670
  %7672 = vmatmul.bf16.gmra.mxu0 %v6720
  %v7673 = vpop.f32.mrf.mxu0
  %v7674 = vadd.f32 %v7625, %v7673
  %v7675 = vpop.f32.mrf.mxu0
  %v7676 = vadd.f32 %v7627, %v7675
  %7677 = vmatmul.bf16.gmra.mxu0 %v6729
  %v7678 = vpop.f32.mrf.mxu0
  %v7679 = vadd.f32 %v7630, %v7678
  %v7680 = vpop.f32.mrf.mxu0
  %v7681 = vadd.f32 %v7632, %v7680
  %7682 = vmatmul.bf16.gmra.mxu0 %v6738
  %v7683 = vpop.f32.mrf.mxu0
  %v7684 = vadd.f32 %v7635, %v7683
  %v7685 = vpop.f32.mrf.mxu0
  %v7686 = vadd.f32 %v7637, %v7685
  %7687 = vmatmul.bf16.gmra.mxu0 %v6747
  %v7688 = vpop.f32.mrf.mxu0
  %v7689 = vadd.f32 %v7640, %v7688
  %v7690 = vpop.f32.mrf.mxu0
  %v7691 = vadd.f32 %v7642, %v7690
  %7692 = vdwg.mxu0
  %7693 = vst [vmem:[%s8] sm:$0xff] %v7654
  %7694 = vst [vmem:[%s8 + $0x8] sm:$0xff] %v7656
  %7695 = vst [vmem:[%s8 + $0x10] sm:$0xff] %v7659
  %7696 = vst [vmem:[%s8 + $0x18] sm:$0xff] %v7661
  %7697 = vst [vmem:[%s8 + $0x20] sm:$0xff] %v7664
  %7698 = vst [vmem:[%s8 + $0x28] sm:$0xff] %v7666
  %7699 = vst [vmem:[%s8 + $0x30] sm:$0xff] %v7669
  %7700 = vst [vmem:[%s8 + $0x38] sm:$0xff] %v7671
  %7701 = vst [vmem:[%s8 + $0x40] sm:$0xff] %v7674
  %7702 = vst [vmem:[%s8 + $0x48] sm:$0xff] %v7676
  %7703 = vst [vmem:[%s8 + $0x50] sm:$0xff] %v7679
  %7704 = vst [vmem:[%s8 + $0x58] sm:$0xff] %v7681
  %7705 = vst [vmem:[%s8 + $0x60] sm:$0xff] %v7684
  %7706 = vst [vmem:[%s8 + $0x68] sm:$0xff] %v7686
  %7707 = vst [vmem:[%s8 + $0x70] sm:$0xff] %v7689
  %7708 = vst [vmem:[%s8 + $0x78] sm:$0xff] %v7691
  // Predicated region
  $region34: #{preact_basic_block_forward.1} parent=0 // pred_check
    _
  $region35: #{preact_basic_block_forward.1} parent=0 // pred_check_branch
    %7710 = sbr.rel (0) target = $region37
  $region36: #{preact_basic_block_forward.1} parent=0 // pred_region
    _
  $region37: #{preact_basic_block_forward.1} parent=0 // pred_fallthru
    _
  // Predicated region
  $region38: #{preact_basic_block_forward.1} parent=0 // pred_check
    _
  $region39: #{preact_basic_block_forward.1} parent=0 // pred_check_branch
    %7712 = sbr.rel (0) target = $region41
  $region40: #{preact_basic_block_forward.1} parent=0 // pred_region
    _
  $region41: #{preact_basic_block_forward.1} parent=0 // pred_fallthru
    _

</llo_original>
